<compile_context>
chip_gen: v6e
topology: v6e:2x2x1
jax: 0.10.0
libtpu: 0.0.40
codegen_flags: <defaults>
</compile_context>

<pallas_src>
import functools

import jax
import jax.numpy as jnp
from jax import lax
from jax.experimental import pallas as pl
from jax.experimental.pallas import tpu as pltpu
import numpy as np


def _residual_block_kernel(W,
                           x_ref,
                           wis_l_ref, wis_c_ref, wis_r_ref, b_gate_ref,
                           wss_l_ref, wss_c_ref, wss_r_ref,
                           wc_ref, bc_ref,
                           o_ref,
                           gate_ref, hid_ref):
    # x_ref    : (H, Bt*W, 2h) image slab, f32.  Sublane order = (batch, width).
    # wis_*    : (2h, 4h) bf16 x3     input-to-state 1x3 conv taps
    # b_gate   : (1, 4h)  f32         b_is + b_ss (biases commute -> hoisted)
    # wss_*    : (h, 4h)  bf16 x3     state-to-state 1x3 conv taps
    # wc, bc   : (h, 2h) bf16, (1, 2h) f32   the 1x1 conv of ResidualBlock
    # o_ref    : (H, Bt*W, 2h) f32
    # gate_ref : (H*Bt*W, 4h) f32 VMEM scratch (hoisted input-to-state pre-acts)
    # hid_ref  : (H*Bt*W, h)  f32 VMEM scratch (RowLSTM hidden, all rows)
    H, BW, C2 = x_ref.shape
    h = wc_ref.shape[0]
    HBW = H * BW
    f32 = jnp.float32
    bf16 = jnp.bfloat16

    # ---------- phase 1: hoisted input-to-state conv (big MXU matmuls) ------
    xf = x_ref[...].reshape(HBW, C2)                           # (H*Bt*W, C2)
    wpos = lax.broadcasted_iota(jnp.int32, (HBW, 1), 0) % W
    # width shifts via XLU roll (non-negative shifts only); zero the
    # per-image-row boundary columns (also handles batch/row crossovers).
    x_m1 = jnp.where(wpos == 0, 0.0, pltpu.roll(xf, shift=1, axis=0))
    x_p1 = jnp.where(wpos == W - 1, 0.0,
                     pltpu.roll(xf, shift=HBW - 1, axis=0))    # == shift -1

    i_s = (jnp.dot(x_m1.astype(bf16), wis_l_ref[...], preferred_element_type=f32)
           + jnp.dot(xf.astype(bf16), wis_c_ref[...], preferred_element_type=f32)
           + jnp.dot(x_p1.astype(bf16), wis_r_ref[...], preferred_element_type=f32)
           + b_gate_ref[...])                                  # (HBW, 4h) f32
    gate_ref[...] = i_s

    # ---------- loop invariants hoisted out of the recurrence ---------------
    wss_l = wss_l_ref[...]
    wss_c = wss_c_ref[...]
    wss_r = wss_r_ref[...]
    pos = lax.broadcasted_iota(jnp.int32, (BW, 1), 0) % W
    first_mask = pos == 0
    last_mask = pos == W - 1

    # ---------- phase 2: row recurrence (state-to-state path only) ----------
    # Fully unrolled: H is small and static, so all slices below are static
    # and the scheduler sees across iterations.  No bias add in the loop.
    h_prev = jnp.zeros((BW, h), f32)
    c_prev = jnp.zeros((BW, h), f32)
    for r in range(H):
        h_m1 = jnp.where(first_mask, 0.0, pltpu.roll(h_prev, shift=1, axis=0))
        h_p1 = jnp.where(last_mask, 0.0,
                         pltpu.roll(h_prev, shift=BW - 1, axis=0))
        s_s = (jnp.dot(h_m1.astype(bf16), wss_l, preferred_element_type=f32)
               + jnp.dot(h_prev.astype(bf16), wss_c, preferred_element_type=f32)
               + jnp.dot(h_p1.astype(bf16), wss_r, preferred_element_type=f32))
        gates = gate_ref[r * BW:(r + 1) * BW, :] + s_s         # (BW, 4h) f32
        sig = jax.nn.sigmoid(gates[:, 0:3 * h])                # fused o,f,i
        o_g = sig[:, 0:h]
        f_g = sig[:, h:2 * h]
        i_g = sig[:, 2 * h:3 * h]
        g_g = jnp.tanh(gates[:, 3 * h:4 * h])
        c_prev = f_g * c_prev + i_g * g_g
        h_prev = o_g * jnp.tanh(c_prev)                        # (BW, h)
        hid_ref[r * BW:(r + 1) * BW, :] = h_prev

    # ---------- phase 3: hoisted 1x1 conv + residual, single store ----------
    conv = (jnp.dot(hid_ref[...].astype(bf16), wc_ref[...],
                    preferred_element_type=f32) + bc_ref[...])  # (HBW, C2)
    o_ref[...] = x_ref[...] + conv.reshape(H, BW, C2)


def _pick_batch_tile(B):
    # Keep the grid length >= 2 so a "parallel" batch axis still feeds both
    # v7x TensorCores; otherwise pack as many images per step as possible.
    if B >= 4 and B % 2 == 0:
        return B // 2
    return 1


def residual_block(image_nchw, params, batch_tile=None):
    """image_nchw: (B, 2h, H, W) float32. Returns (B, 2h, H, W) float32."""
    w_is, b_is, w_ss, b_ss, w_c, b_c = params
    B, C2, H, W = image_nchw.shape
    h = C2 // 2

    Bt = _pick_batch_tile(B) if batch_tile is None else batch_tile
    assert B % Bt == 0
    n_steps = B // Bt

    # glue: NCHW -> (H, B*W, C2)  (rows leading, (batch,width) on sublanes,
    # channels on lanes) -- free layout plumbing outside the kernel.
    x = jnp.transpose(image_nchw.astype(jnp.float32), (2, 0, 3, 1))  # (H,B,W,C)
    x = x.reshape(H, B * W, C2)

    # split the 1x3 conv weights into their three width taps host-side and
    # pre-cast all matmul weights to bf16 (f32 accumulation in-kernel).
    bf16 = jnp.bfloat16
    wis_l = w_is[0:C2].astype(bf16)
    wis_c = w_is[C2:2 * C2].astype(bf16)
    wis_r = w_is[2 * C2:3 * C2].astype(bf16)
    wss_l = w_ss[0:h].astype(bf16)
    wss_c = w_ss[h:2 * h].astype(bf16)
    wss_r = w_ss[2 * h:3 * h].astype(bf16)
    wc = w_c.astype(bf16)
    # biases commute: fold the state-to-state bias into the hoisted
    # input-to-state bias so the serial row loop carries no bias add.
    b_gate = (b_is + b_ss).astype(jnp.float32)
    bc = b_c.astype(jnp.float32)

    HW = H * W
    flops = 2 * B * HW * (3 * C2 * 4 * h + 3 * h * 4 * h + h * C2)
    transcendentals = 4 * B * HW * h + B * HW * h
    bytes_accessed = (2 * B * HW * C2 * 4
                      + 2 * int(w_is.size + w_ss.size + w_c.size)
                      + 4 * int(b_gate.size + bc.size))

    def full_spec(a):
        return pl.BlockSpec(a.shape, lambda b: (0, 0))

    out = pl.pallas_call(
        functools.partial(_residual_block_kernel, W),
        out_shape=jax.ShapeDtypeStruct((H, B * W, C2), jnp.float32),
        grid=(n_steps,),
        in_specs=[
            pl.BlockSpec((H, Bt * W, C2), lambda b: (0, b, 0)),
            full_spec(wis_l), full_spec(wis_c), full_spec(wis_r),
            full_spec(b_gate),
            full_spec(wss_l), full_spec(wss_c), full_spec(wss_r),
            full_spec(wc), full_spec(bc),
        ],
        out_specs=pl.BlockSpec((H, Bt * W, C2), lambda b: (0, b, 0)),
        scratch_shapes=[
            pltpu.VMEM((H * Bt * W, 4 * h), jnp.float32),  # hoisted gate pre-acts
            pltpu.VMEM((H * Bt * W, h), jnp.float32),      # RowLSTM hidden rows
        ],
        compiler_params=pltpu.CompilerParams(
            dimension_semantics=("parallel",)),
        cost_estimate=pl.CostEstimate(
            flops=int(flops),
            transcendentals=int(transcendentals),
            bytes_accessed=int(bytes_accessed)),
    )(x, wis_l, wis_c, wis_r, b_gate, wss_l, wss_c, wss_r, wc, bc)

    out = out.reshape(H, B, W, C2)
    return jnp.transpose(out, (1, 3, 0, 2))            # -> (B, C2, H, W)


def residual_block_ref(image_nchw, params):
    """Pure-JAX reference with identical semantics (for correctness check)."""
    w_is, b_is, w_ss, b_ss, w_c, b_c = params
    B, C2, H, W = image_nchw.shape
    h = C2 // 2
    x = jnp.transpose(image_nchw, (0, 2, 3, 1)).astype(jnp.float32)
    x_m1 = jnp.pad(x, ((0, 0), (0, 0), (1, 0), (0, 0)))[:, :, :W, :]
    x_p1 = jnp.pad(x, ((0, 0), (0, 0), (0, 1), (0, 0)))[:, :, 1:, :]
    x_cat = jnp.concatenate([x_m1, x, x_p1], axis=-1)
    i_s_all = jnp.einsum("bhwc,cg->bhwg", x_cat, w_is,
                         precision="highest") + b_is[0]

    def row_step(carry, i_s_row):
        h_prev, c_prev = carry                           # (B, W, h)
        zrow = jnp.zeros((B, 1, h), jnp.float32)
        h_m1 = jnp.concatenate([zrow, h_prev[:, :-1]], axis=1)
        h_p1 = jnp.concatenate([h_prev[:, 1:], zrow], axis=1)
        h_cat = jnp.concatenate([h_m1, h_prev, h_p1], axis=-1)
        s_s = jnp.einsum("bwc,cg->bwg", h_cat, w_ss,
                         precision="highest") + b_ss[0]
        gates = i_s_row + s_s
        o_g = jax.nn.sigmoid(gates[..., 0:h])
        f_g = jax.nn.sigmoid(gates[..., h:2 * h])
        i_g = jax.nn.sigmoid(gates[..., 2 * h:3 * h])
        g_g = jnp.tanh(gates[..., 3 * h:4 * h])
        c_new = f_g * c_prev + i_g * g_g
        h_new = o_g * jnp.tanh(c_new)
        return (h_new, c_new), h_new

    init = (jnp.zeros((B, W, h), jnp.float32), jnp.zeros((B, W, h), jnp.float32))
    _, hid = lax.scan(row_step, init, jnp.transpose(i_s_all, (1, 0, 2, 3)))
    hid = jnp.transpose(hid, (1, 0, 2, 3))               # (B, H, W, h)
    conv = jnp.einsum("bhwc,cd->bhwd", hid, w_c, precision="highest") + b_c[0]
    return image_nchw + jnp.transpose(conv, (0, 3, 1, 2))


def init_params(key, h, c_in):
    ks = jax.random.split(key, 6)
    scale = 0.1
    w_is = scale * jax.random.normal(ks[0], (3 * c_in, 4 * h), jnp.float32)
    b_is = scale * jax.random.normal(ks[1], (1, 4 * h), jnp.float32)
    w_ss = scale * jax.random.normal(ks[2], (3 * h, 4 * h), jnp.float32)
    b_ss = scale * jax.random.normal(ks[3], (1, 4 * h), jnp.float32)
    w_c = scale * jax.random.normal(ks[4], (h, 2 * h), jnp.float32)   # 1x1 conv
    b_c = scale * jax.random.normal(ks[5], (1, 2 * h), jnp.float32)
    return (w_is, b_is, w_ss, b_ss, w_c, b_c)


if __name__ == "__main__":
    key = jax.random.PRNGKey(0)
    h = 4                    # LSTM hidden size
    C = 2 * h                # image / residual channels (= conv out_channels)
    B, H, W = 2, 16, 16

    k_img, k_par, k_img2 = jax.random.split(key, 3)
    image = jax.random.normal(k_img, (B, C, H, W), jnp.float32)
    params = init_params(k_par, h, C)

    out = jax.block_until_ready(residual_block(image, params))
    ref = jax.block_until_ready(residual_block_ref(image, params))
    # Tolerance accounts for bf16 MXU operands (gate/cell math stays f32).
    np.testing.assert_allclose(np.asarray(out), np.asarray(ref),
                               rtol=2e-2, atol=2e-2)
    assert out.shape == image.shape and out.dtype == jnp.float32

    # Also exercise the multi-image-per-grid-step path (Bt = 2, grid = 2).
    image4 = jax.random.normal(k_img2, (4, C, H, W), jnp.float32)
    out4 = jax.block_until_ready(residual_block(image4, params))
    ref4 = jax.block_until_ready(residual_block_ref(image4, params))
    np.testing.assert_allclose(np.asarray(out4), np.asarray(ref4),
                               rtol=2e-2, atol=2e-2)

    print("KERNEL_OK")
</pallas_src>

<mosaic_0001>
module attributes {stable_mosaic.version = 11 : i64} {
  func.func @_residual_block_kernel(%arg0: i32, %arg1: memref<16x16x8xf32, #tpu.memory_space<vmem>>, %arg2: memref<8x16xbf16, #tpu.memory_space<vmem>>, %arg3: memref<8x16xbf16, #tpu.memory_space<vmem>>, %arg4: memref<8x16xbf16, #tpu.memory_space<vmem>>, %arg5: memref<1x16xf32, #tpu.memory_space<vmem>>, %arg6: memref<4x16xbf16, #tpu.memory_space<vmem>>, %arg7: memref<4x16xbf16, #tpu.memory_space<vmem>>, %arg8: memref<4x16xbf16, #tpu.memory_space<vmem>>, %arg9: memref<4x8xbf16, #tpu.memory_space<vmem>>, %arg10: memref<1x8xf32, #tpu.memory_space<vmem>>, %arg11: memref<16x16x8xf32, #tpu.memory_space<vmem>>, %arg12: memref<256x16xf32, #tpu.memory_space<vmem>>, %arg13: memref<256x4xf32, #tpu.memory_space<vmem>>) attributes {dimension_semantics = [#tpu.dimension_semantics<parallel>], iteration_bounds = array<i64: 2>, scalar_prefetch = 0 : i64, scratch_operands = 2 : i64, tpu.core_type = #tpu.core_type<tc>, window_params = [{transform_indices = @transform_0, window_bounds = array<i64: 16, 16, 8>}, {pipeline_mode = #tpu.pipeline_mode<synchronous>, transform_indices = @transform_1, window_bounds = array<i64: 8, 16>}, {pipeline_mode = #tpu.pipeline_mode<synchronous>, transform_indices = @transform_2, window_bounds = array<i64: 8, 16>}, {pipeline_mode = #tpu.pipeline_mode<synchronous>, transform_indices = @transform_3, window_bounds = array<i64: 8, 16>}, {pipeline_mode = #tpu.pipeline_mode<synchronous>, transform_indices = @transform_4, window_bounds = array<i64: 1, 16>}, {pipeline_mode = #tpu.pipeline_mode<synchronous>, transform_indices = @transform_5, window_bounds = array<i64: 4, 16>}, {pipeline_mode = #tpu.pipeline_mode<synchronous>, transform_indices = @transform_6, window_bounds = array<i64: 4, 16>}, {pipeline_mode = #tpu.pipeline_mode<synchronous>, transform_indices = @transform_7, window_bounds = array<i64: 4, 16>}, {pipeline_mode = #tpu.pipeline_mode<synchronous>, transform_indices = @transform_8, window_bounds = array<i64: 4, 8>}, {pipeline_mode = #tpu.pipeline_mode<synchronous>, transform_indices = @transform_9, window_bounds = array<i64: 1, 8>}, {transform_indices = @transform_10, window_bounds = array<i64: 16, 16, 8>}]} {
    %c0 = arith.constant 0 : index
    %c0_0 = arith.constant 0 : index
    %c0_1 = arith.constant 0 : index
    %0 = vector.load %arg1[%c0, %c0_0, %c0_1] : memref<16x16x8xf32, #tpu.memory_space<vmem>>, vector<16x16x8xf32>
    %1 = vector.shape_cast %0 : vector<16x16x8xf32> to vector<256x8xf32>
    %2 = tpu.iota {dimensions = array<i32: 0>} : vector<256x1xi32>
    %c16_i32 = arith.constant 16 : i32
    %c0_i32 = arith.constant 0 : i32
    %3 = arith.cmpi eq, %c16_i32, %c0_i32 : i32
    %c1_i32 = arith.constant 1 : i32
    %4 = arith.select %3, %c1_i32, %c16_i32 : i32
    %5 = vector.broadcast %4 : i32 to vector<256x1xi32>
    %6 = arith.remsi %2, %5 : vector<256x1xi32>
    %c0_i32_2 = arith.constant 0 : i32
    %7 = vector.broadcast %c0_i32_2 : i32 to vector<256x1xi32>
    %8 = arith.cmpi ne, %6, %7 : vector<256x1xi32>
    %c0_i32_3 = arith.constant 0 : i32
    %9 = vector.broadcast %c0_i32_3 : i32 to vector<256x1xi32>
    %10 = arith.cmpi slt, %6, %9 : vector<256x1xi32>
    %c0_i32_4 = arith.constant 0 : i32
    %11 = arith.cmpi slt, %4, %c0_i32_4 : i32
    %12 = vector.broadcast %11 : i1 to vector<256x1xi1>
    %13 = vector.broadcast %12 : vector<256x1xi1> to vector<256x1xi1>
    %14 = arith.xori %10, %13 : vector<256x1xi1>
    %15 = arith.andi %14, %8 : vector<256x1xi1>
    %16 = vector.broadcast %4 : i32 to vector<256x1xi32>
    %17 = arith.addi %6, %16 : vector<256x1xi32>
    %18 = arith.select %15, %17, %6 : vector<256x1xi1>, vector<256x1xi32>
    %c0_i32_5 = arith.constant 0 : i32
    %19 = vector.broadcast %c0_i32_5 : i32 to vector<256x1xi32>
    %20 = arith.cmpi eq, %18, %19 : vector<256x1xi32>
    %c1_i32_6 = arith.constant 1 : i32
    %21 = tpu.dynamic_rotate %1 by %c1_i32_6 dim 0 : vector<256x8xf32>, i32 -> vector<256x8xf32>
    %cst = arith.constant 0.000000e+00 : f32
    %22 = vector.shape_cast %20 : vector<256x1xi1> to vector<256x1xi1>
    %23 = vector.broadcast %22 : vector<256x1xi1> to vector<256x8xi1>
    %24 = vector.broadcast %cst : f32 to vector<256x8xf32>
    %25 = arith.select %23, %24, %21 : vector<256x8xi1>, vector<256x8xf32>
    %c15_i32 = arith.constant 15 : i32
    %26 = vector.broadcast %c15_i32 : i32 to vector<256x1xi32>
    %27 = arith.cmpi eq, %18, %26 : vector<256x1xi32>
    %c255_i32 = arith.constant 255 : i32
    %28 = tpu.dynamic_rotate %1 by %c255_i32 dim 0 : vector<256x8xf32>, i32 -> vector<256x8xf32>
    %cst_7 = arith.constant 0.000000e+00 : f32
    %29 = vector.shape_cast %27 : vector<256x1xi1> to vector<256x1xi1>
    %30 = vector.broadcast %29 : vector<256x1xi1> to vector<256x8xi1>
    %31 = vector.broadcast %cst_7 : f32 to vector<256x8xf32>
    %32 = arith.select %30, %31, %28 : vector<256x8xi1>, vector<256x8xf32>
    %33 = arith.truncf %25 : vector<256x8xf32> to vector<256x8xbf16>
    %c0_8 = arith.constant 0 : index
    %c0_9 = arith.constant 0 : index
    %34 = vector.load %arg2[%c0_8, %c0_9] : memref<8x16xbf16, #tpu.memory_space<vmem>>, vector<8x16xbf16>
    %cst_10 = arith.constant dense<0.000000e+00> : vector<256x16xf32>
    %35 = tpu.matmul %33, %34, %cst_10 {dimension_numbers = #tpu.dot_dimension_numbers<[1], [0], [0], [1], [0, 0, 1, 1], [], []>} : vector<256x8xbf16>, vector<8x16xbf16>, vector<256x16xf32> -> vector<256x16xf32>
    %36 = arith.truncf %1 : vector<256x8xf32> to vector<256x8xbf16>
    %c0_11 = arith.constant 0 : index
    %c0_12 = arith.constant 0 : index
    %37 = vector.load %arg3[%c0_11, %c0_12] : memref<8x16xbf16, #tpu.memory_space<vmem>>, vector<8x16xbf16>
    %cst_13 = arith.constant dense<0.000000e+00> : vector<256x16xf32>
    %38 = tpu.matmul %36, %37, %cst_13 {dimension_numbers = #tpu.dot_dimension_numbers<[1], [0], [0], [1], [0, 0, 1, 1], [], []>} : vector<256x8xbf16>, vector<8x16xbf16>, vector<256x16xf32> -> vector<256x16xf32>
    %39 = arith.addf %35, %38 : vector<256x16xf32>
    %40 = arith.truncf %32 : vector<256x8xf32> to vector<256x8xbf16>
    %c0_14 = arith.constant 0 : index
    %c0_15 = arith.constant 0 : index
    %41 = vector.load %arg4[%c0_14, %c0_15] : memref<8x16xbf16, #tpu.memory_space<vmem>>, vector<8x16xbf16>
    %cst_16 = arith.constant dense<0.000000e+00> : vector<256x16xf32>
    %42 = tpu.matmul %40, %41, %cst_16 {dimension_numbers = #tpu.dot_dimension_numbers<[1], [0], [0], [1], [0, 0, 1, 1], [], []>} : vector<256x8xbf16>, vector<8x16xbf16>, vector<256x16xf32> -> vector<256x16xf32>
    %43 = arith.addf %39, %42 : vector<256x16xf32>
    %c0_17 = arith.constant 0 : index
    %c0_18 = arith.constant 0 : index
    %44 = vector.load %arg5[%c0_17, %c0_18] : memref<1x16xf32, #tpu.memory_space<vmem>>, vector<1x16xf32>
    %45 = vector.broadcast %44 : vector<1x16xf32> to vector<256x16xf32>
    %46 = arith.addf %43, %45 : vector<256x16xf32>
    %c0_19 = arith.constant 0 : index
    %c0_20 = arith.constant 0 : index
    %47 = vector.load %arg12[%c0_19, %c0_20] : memref<256x16xf32, #tpu.memory_space<vmem>>, vector<256x16xf32>
    tpu.vector_store %arg12[%c0_19, %c0_20], %46 {strides = array<i32>} : memref<256x16xf32, #tpu.memory_space<vmem>>, vector<256x16xf32>,
    %c0_21 = arith.constant 0 : index
    %c0_22 = arith.constant 0 : index
    %48 = vector.load %arg6[%c0_21, %c0_22] : memref<4x16xbf16, #tpu.memory_space<vmem>>, vector<4x16xbf16>
    %c0_23 = arith.constant 0 : index
    %c0_24 = arith.constant 0 : index
    %49 = vector.load %arg7[%c0_23, %c0_24] : memref<4x16xbf16, #tpu.memory_space<vmem>>, vector<4x16xbf16>
    %c0_25 = arith.constant 0 : index
    %c0_26 = arith.constant 0 : index
    %50 = vector.load %arg8[%c0_25, %c0_26] : memref<4x16xbf16, #tpu.memory_space<vmem>>, vector<4x16xbf16>
    %51 = tpu.iota {dimensions = array<i32: 0>} : vector<16x1xi32>
    %c16_i32_27 = arith.constant 16 : i32
    %c0_i32_28 = arith.constant 0 : i32
    %52 = arith.cmpi eq, %c16_i32_27, %c0_i32_28 : i32
    %c1_i32_29 = arith.constant 1 : i32
    %53 = arith.select %52, %c1_i32_29, %c16_i32_27 : i32
    %54 = vector.broadcast %53 : i32 to vector<16x1xi32>
    %55 = arith.remsi %51, %54 : vector<16x1xi32>
    %c0_i32_30 = arith.constant 0 : i32
    %56 = vector.broadcast %c0_i32_30 : i32 to vector<16x1xi32>
    %57 = arith.cmpi ne, %55, %56 : vector<16x1xi32>
    %c0_i32_31 = arith.constant 0 : i32
    %58 = vector.broadcast %c0_i32_31 : i32 to vector<16x1xi32>
    %59 = arith.cmpi slt, %55, %58 : vector<16x1xi32>
    %c0_i32_32 = arith.constant 0 : i32
    %60 = arith.cmpi slt, %53, %c0_i32_32 : i32
    %61 = vector.broadcast %60 : i1 to vector<16x1xi1>
    %62 = vector.broadcast %61 : vector<16x1xi1> to vector<16x1xi1>
    %63 = arith.xori %59, %62 : vector<16x1xi1>
    %64 = arith.andi %63, %57 : vector<16x1xi1>
    %65 = vector.broadcast %53 : i32 to vector<16x1xi32>
    %66 = arith.addi %55, %65 : vector<16x1xi32>
    %67 = arith.select %64, %66, %55 : vector<16x1xi1>, vector<16x1xi32>
    %c0_i32_33 = arith.constant 0 : i32
    %68 = vector.broadcast %c0_i32_33 : i32 to vector<16x1xi32>
    %69 = arith.cmpi eq, %67, %68 : vector<16x1xi32>
    %c15_i32_34 = arith.constant 15 : i32
    %70 = vector.broadcast %c15_i32_34 : i32 to vector<16x1xi32>
    %71 = arith.cmpi eq, %67, %70 : vector<16x1xi32>
    %cst_35 = arith.constant 0.000000e+00 : f32
    %72 = vector.broadcast %cst_35 : f32 to vector<16x4xf32>
    %cst_36 = arith.constant 0.000000e+00 : f32
    %73 = vector.broadcast %cst_36 : f32 to vector<16x4xf32>
    %c1_i32_37 = arith.constant 1 : i32
    %74 = tpu.dynamic_rotate %72 by %c1_i32_37 dim 0 : vector<16x4xf32>, i32 -> vector<16x4xf32>
    %cst_38 = arith.constant 0.000000e+00 : f32
    %75 = vector.shape_cast %69 : vector<16x1xi1> to vector<16x1xi1>
    %76 = vector.broadcast %75 : vector<16x1xi1> to vector<16x4xi1>
    %77 = vector.broadcast %cst_38 : f32 to vector<16x4xf32>
    %78 = arith.select %76, %77, %74 : vector<16x4xi1>, vector<16x4xf32>
    %c15_i32_39 = arith.constant 15 : i32
    %79 = tpu.dynamic_rotate %72 by %c15_i32_39 dim 0 : vector<16x4xf32>, i32 -> vector<16x4xf32>
    %cst_40 = arith.constant 0.000000e+00 : f32
    %80 = vector.shape_cast %71 : vector<16x1xi1> to vector<16x1xi1>
    %81 = vector.broadcast %80 : vector<16x1xi1> to vector<16x4xi1>
    %82 = vector.broadcast %cst_40 : f32 to vector<16x4xf32>
    %83 = arith.select %81, %82, %79 : vector<16x4xi1>, vector<16x4xf32>
    %84 = arith.truncf %78 : vector<16x4xf32> to vector<16x4xbf16>
    %cst_41 = arith.constant dense<0.000000e+00> : vector<16x16xf32>
    %85 = tpu.matmul %84, %48, %cst_41 {dimension_numbers = #tpu.dot_dimension_numbers<[1], [0], [0], [1], [0, 0, 1, 1], [], []>} : vector<16x4xbf16>, vector<4x16xbf16>, vector<16x16xf32> -> vector<16x16xf32>
    %86 = arith.truncf %72 : vector<16x4xf32> to vector<16x4xbf16>
    %cst_42 = arith.constant dense<0.000000e+00> : vector<16x16xf32>
    %87 = tpu.matmul %86, %49, %cst_42 {dimension_numbers = #tpu.dot_dimension_numbers<[1], [0], [0], [1], [0, 0, 1, 1], [], []>} : vector<16x4xbf16>, vector<4x16xbf16>, vector<16x16xf32> -> vector<16x16xf32>
    %88 = arith.addf %85, %87 : vector<16x16xf32>
    %89 = arith.truncf %83 : vector<16x4xf32> to vector<16x4xbf16>
    %cst_43 = arith.constant dense<0.000000e+00> : vector<16x16xf32>
    %90 = tpu.matmul %89, %50, %cst_43 {dimension_numbers = #tpu.dot_dimension_numbers<[1], [0], [0], [1], [0, 0, 1, 1], [], []>} : vector<16x4xbf16>, vector<4x16xbf16>, vector<16x16xf32> -> vector<16x16xf32>
    %91 = arith.addf %88, %90 : vector<16x16xf32>
    %c0_44 = arith.constant 0 : index
    %c0_45 = arith.constant 0 : index
    %92 = vector.load %arg12[%c0_44, %c0_45] : memref<256x16xf32, #tpu.memory_space<vmem>>, vector<16x16xf32>
    %93 = arith.addf %92, %91 : vector<16x16xf32>
    %94 = vector.extract_strided_slice %93 {offsets = [0, 0], sizes = [16, 12], strides = [1, 1]} : vector<16x16xf32> to vector<16x12xf32>
    %95 = arith.negf %94 : vector<16x12xf32>
    %96 = math.exp %95 : vector<16x12xf32>
    %cst_46 = arith.constant 1.000000e+00 : f32
    %97 = vector.broadcast %cst_46 : f32 to vector<16x12xf32>
    %98 = arith.addf %97, %96 : vector<16x12xf32>
    %99 = arith.divf %97, %98 : vector<16x12xf32>
    %100 = vector.extract_strided_slice %99 {offsets = [0, 0], sizes = [16, 4], strides = [1, 1]} : vector<16x12xf32> to vector<16x4xf32>
    %101 = vector.extract_strided_slice %99 {offsets = [0, 4], sizes = [16, 4], strides = [1, 1]} : vector<16x12xf32> to vector<16x4xf32>
    %102 = vector.extract_strided_slice %99 {offsets = [0, 8], sizes = [16, 4], strides = [1, 1]} : vector<16x12xf32> to vector<16x4xf32>
    %103 = vector.extract_strided_slice %93 {offsets = [0, 12], sizes = [16, 4], strides = [1, 1]} : vector<16x16xf32> to vector<16x4xf32>
    %104 = math.tanh %103 : vector<16x4xf32>
    %105 = arith.mulf %101, %73 : vector<16x4xf32>
    %106 = arith.mulf %102, %104 : vector<16x4xf32>
    %107 = arith.addf %105, %106 : vector<16x4xf32>
    %108 = math.tanh %107 : vector<16x4xf32>
    %109 = arith.mulf %100, %108 : vector<16x4xf32>
    %c0_47 = arith.constant 0 : index
    %c0_48 = arith.constant 0 : index
    %110 = vector.load %arg13[%c0_47, %c0_48] : memref<256x4xf32, #tpu.memory_space<vmem>>, vector<16x4xf32>
    tpu.vector_store %arg13[%c0_47, %c0_48], %109 {strides = array<i32>} : memref<256x4xf32, #tpu.memory_space<vmem>>, vector<16x4xf32>,
    %c1_i32_49 = arith.constant 1 : i32
    %111 = tpu.dynamic_rotate %109 by %c1_i32_49 dim 0 : vector<16x4xf32>, i32 -> vector<16x4xf32>
    %cst_50 = arith.constant 0.000000e+00 : f32
    %112 = vector.shape_cast %69 : vector<16x1xi1> to vector<16x1xi1>
    %113 = vector.broadcast %112 : vector<16x1xi1> to vector<16x4xi1>
    %114 = vector.broadcast %cst_50 : f32 to vector<16x4xf32>
    %115 = arith.select %113, %114, %111 : vector<16x4xi1>, vector<16x4xf32>
    %c15_i32_51 = arith.constant 15 : i32
    %116 = tpu.dynamic_rotate %109 by %c15_i32_51 dim 0 : vector<16x4xf32>, i32 -> vector<16x4xf32>
    %cst_52 = arith.constant 0.000000e+00 : f32
    %117 = vector.shape_cast %71 : vector<16x1xi1> to vector<16x1xi1>
    %118 = vector.broadcast %117 : vector<16x1xi1> to vector<16x4xi1>
    %119 = vector.broadcast %cst_52 : f32 to vector<16x4xf32>
    %120 = arith.select %118, %119, %116 : vector<16x4xi1>, vector<16x4xf32>
    %121 = arith.truncf %115 : vector<16x4xf32> to vector<16x4xbf16>
    %cst_53 = arith.constant dense<0.000000e+00> : vector<16x16xf32>
    %122 = tpu.matmul %121, %48, %cst_53 {dimension_numbers = #tpu.dot_dimension_numbers<[1], [0], [0], [1], [0, 0, 1, 1], [], []>} : vector<16x4xbf16>, vector<4x16xbf16>, vector<16x16xf32> -> vector<16x16xf32>
    %123 = arith.truncf %109 : vector<16x4xf32> to vector<16x4xbf16>
    %cst_54 = arith.constant dense<0.000000e+00> : vector<16x16xf32>
    %124 = tpu.matmul %123, %49, %cst_54 {dimension_numbers = #tpu.dot_dimension_numbers<[1], [0], [0], [1], [0, 0, 1, 1], [], []>} : vector<16x4xbf16>, vector<4x16xbf16>, vector<16x16xf32> -> vector<16x16xf32>
    %125 = arith.addf %122, %124 : vector<16x16xf32>
    %126 = arith.truncf %120 : vector<16x4xf32> to vector<16x4xbf16>
    %cst_55 = arith.constant dense<0.000000e+00> : vector<16x16xf32>
    %127 = tpu.matmul %126, %50, %cst_55 {dimension_numbers = #tpu.dot_dimension_numbers<[1], [0], [0], [1], [0, 0, 1, 1], [], []>} : vector<16x4xbf16>, vector<4x16xbf16>, vector<16x16xf32> -> vector<16x16xf32>
    %128 = arith.addf %125, %127 : vector<16x16xf32>
    %c16 = arith.constant 16 : index
    %c0_56 = arith.constant 0 : index
    %129 = vector.load %arg12[%c16, %c0_56] : memref<256x16xf32, #tpu.memory_space<vmem>>, vector<16x16xf32>
    %130 = arith.addf %129, %128 : vector<16x16xf32>
    %131 = vector.extract_strided_slice %130 {offsets = [0, 0], sizes = [16, 12], strides = [1, 1]} : vector<16x16xf32> to vector<16x12xf32>
    %132 = arith.negf %131 : vector<16x12xf32>
    %133 = math.exp %132 : vector<16x12xf32>
    %cst_57 = arith.constant 1.000000e+00 : f32
    %134 = vector.broadcast %cst_57 : f32 to vector<16x12xf32>
    %135 = arith.addf %134, %133 : vector<16x12xf32>
    %136 = arith.divf %134, %135 : vector<16x12xf32>
    %137 = vector.extract_strided_slice %136 {offsets = [0, 0], sizes = [16, 4], strides = [1, 1]} : vector<16x12xf32> to vector<16x4xf32>
    %138 = vector.extract_strided_slice %136 {offsets = [0, 4], sizes = [16, 4], strides = [1, 1]} : vector<16x12xf32> to vector<16x4xf32>
    %139 = vector.extract_strided_slice %136 {offsets = [0, 8], sizes = [16, 4], strides = [1, 1]} : vector<16x12xf32> to vector<16x4xf32>
    %140 = vector.extract_strided_slice %130 {offsets = [0, 12], sizes = [16, 4], strides = [1, 1]} : vector<16x16xf32> to vector<16x4xf32>
    %141 = math.tanh %140 : vector<16x4xf32>
    %142 = arith.mulf %138, %107 : vector<16x4xf32>
    %143 = arith.mulf %139, %141 : vector<16x4xf32>
    %144 = arith.addf %142, %143 : vector<16x4xf32>
    %145 = math.tanh %144 : vector<16x4xf32>
    %146 = arith.mulf %137, %145 : vector<16x4xf32>
    %c16_58 = arith.constant 16 : index
    %c0_59 = arith.constant 0 : index
    %147 = vector.load %arg13[%c16_58, %c0_59] : memref<256x4xf32, #tpu.memory_space<vmem>>, vector<16x4xf32>
    tpu.vector_store %arg13[%c16_58, %c0_59], %146 {strides = array<i32>} : memref<256x4xf32, #tpu.memory_space<vmem>>, vector<16x4xf32>,
    %c1_i32_60 = arith.constant 1 : i32
    %148 = tpu.dynamic_rotate %146 by %c1_i32_60 dim 0 : vector<16x4xf32>, i32 -> vector<16x4xf32>
    %cst_61 = arith.constant 0.000000e+00 : f32
    %149 = vector.shape_cast %69 : vector<16x1xi1> to vector<16x1xi1>
    %150 = vector.broadcast %149 : vector<16x1xi1> to vector<16x4xi1>
    %151 = vector.broadcast %cst_61 : f32 to vector<16x4xf32>
    %152 = arith.select %150, %151, %148 : vector<16x4xi1>, vector<16x4xf32>
    %c15_i32_62 = arith.constant 15 : i32
    %153 = tpu.dynamic_rotate %146 by %c15_i32_62 dim 0 : vector<16x4xf32>, i32 -> vector<16x4xf32>
    %cst_63 = arith.constant 0.000000e+00 : f32
    %154 = vector.shape_cast %71 : vector<16x1xi1> to vector<16x1xi1>
    %155 = vector.broadcast %154 : vector<16x1xi1> to vector<16x4xi1>
    %156 = vector.broadcast %cst_63 : f32 to vector<16x4xf32>
    %157 = arith.select %155, %156, %153 : vector<16x4xi1>, vector<16x4xf32>
    %158 = arith.truncf %152 : vector<16x4xf32> to vector<16x4xbf16>
    %cst_64 = arith.constant dense<0.000000e+00> : vector<16x16xf32>
    %159 = tpu.matmul %158, %48, %cst_64 {dimension_numbers = #tpu.dot_dimension_numbers<[1], [0], [0], [1], [0, 0, 1, 1], [], []>} : vector<16x4xbf16>, vector<4x16xbf16>, vector<16x16xf32> -> vector<16x16xf32>
    %160 = arith.truncf %146 : vector<16x4xf32> to vector<16x4xbf16>
    %cst_65 = arith.constant dense<0.000000e+00> : vector<16x16xf32>
    %161 = tpu.matmul %160, %49, %cst_65 {dimension_numbers = #tpu.dot_dimension_numbers<[1], [0], [0], [1], [0, 0, 1, 1], [], []>} : vector<16x4xbf16>, vector<4x16xbf16>, vector<16x16xf32> -> vector<16x16xf32>
    %162 = arith.addf %159, %161 : vector<16x16xf32>
    %163 = arith.truncf %157 : vector<16x4xf32> to vector<16x4xbf16>
    %cst_66 = arith.constant dense<0.000000e+00> : vector<16x16xf32>
    %164 = tpu.matmul %163, %50, %cst_66 {dimension_numbers = #tpu.dot_dimension_numbers<[1], [0], [0], [1], [0, 0, 1, 1], [], []>} : vector<16x4xbf16>, vector<4x16xbf16>, vector<16x16xf32> -> vector<16x16xf32>
    %165 = arith.addf %162, %164 : vector<16x16xf32>
    %c32 = arith.constant 32 : index
    %c0_67 = arith.constant 0 : index
    %166 = vector.load %arg12[%c32, %c0_67] : memref<256x16xf32, #tpu.memory_space<vmem>>, vector<16x16xf32>
    %167 = arith.addf %166, %165 : vector<16x16xf32>
    %168 = vector.extract_strided_slice %167 {offsets = [0, 0], sizes = [16, 12], strides = [1, 1]} : vector<16x16xf32> to vector<16x12xf32>
    %169 = arith.negf %168 : vector<16x12xf32>
    %170 = math.exp %169 : vector<16x12xf32>
    %cst_68 = arith.constant 1.000000e+00 : f32
    %171 = vector.broadcast %cst_68 : f32 to vector<16x12xf32>
    %172 = arith.addf %171, %170 : vector<16x12xf32>
    %173 = arith.divf %171, %172 : vector<16x12xf32>
    %174 = vector.extract_strided_slice %173 {offsets = [0, 0], sizes = [16, 4], strides = [1, 1]} : vector<16x12xf32> to vector<16x4xf32>
    %175 = vector.extract_strided_slice %173 {offsets = [0, 4], sizes = [16, 4], strides = [1, 1]} : vector<16x12xf32> to vector<16x4xf32>
    %176 = vector.extract_strided_slice %173 {offsets = [0, 8], sizes = [16, 4], strides = [1, 1]} : vector<16x12xf32> to vector<16x4xf32>
    %177 = vector.extract_strided_slice %167 {offsets = [0, 12], sizes = [16, 4], strides = [1, 1]} : vector<16x16xf32> to vector<16x4xf32>
    %178 = math.tanh %177 : vector<16x4xf32>
    %179 = arith.mulf %175, %144 : vector<16x4xf32>
    %180 = arith.mulf %176, %178 : vector<16x4xf32>
    %181 = arith.addf %179, %180 : vector<16x4xf32>
    %182 = math.tanh %181 : vector<16x4xf32>
    %183 = arith.mulf %174, %182 : vector<16x4xf32>
    %c32_69 = arith.constant 32 : index
    %c0_70 = arith.constant 0 : index
    %184 = vector.load %arg13[%c32_69, %c0_70] : memref<256x4xf32, #tpu.memory_space<vmem>>, vector<16x4xf32>
    tpu.vector_store %arg13[%c32_69, %c0_70], %183 {strides = array<i32>} : memref<256x4xf32, #tpu.memory_space<vmem>>, vector<16x4xf32>,
    %c1_i32_71 = arith.constant 1 : i32
    %185 = tpu.dynamic_rotate %183 by %c1_i32_71 dim 0 : vector<16x4xf32>, i32 -> vector<16x4xf32>
    %cst_72 = arith.constant 0.000000e+00 : f32
    %186 = vector.shape_cast %69 : vector<16x1xi1> to vector<16x1xi1>
    %187 = vector.broadcast %186 : vector<16x1xi1> to vector<16x4xi1>
    %188 = vector.broadcast %cst_72 : f32 to vector<16x4xf32>
    %189 = arith.select %187, %188, %185 : vector<16x4xi1>, vector<16x4xf32>
    %c15_i32_73 = arith.constant 15 : i32
    %190 = tpu.dynamic_rotate %183 by %c15_i32_73 dim 0 : vector<16x4xf32>, i32 -> vector<16x4xf32>
    %cst_74 = arith.constant 0.000000e+00 : f32
    %191 = vector.shape_cast %71 : vector<16x1xi1> to vector<16x1xi1>
    %192 = vector.broadcast %191 : vector<16x1xi1> to vector<16x4xi1>
    %193 = vector.broadcast %cst_74 : f32 to vector<16x4xf32>
    %194 = arith.select %192, %193, %190 : vector<16x4xi1>, vector<16x4xf32>
    %195 = arith.truncf %189 : vector<16x4xf32> to vector<16x4xbf16>
    %cst_75 = arith.constant dense<0.000000e+00> : vector<16x16xf32>
    %196 = tpu.matmul %195, %48, %cst_75 {dimension_numbers = #tpu.dot_dimension_numbers<[1], [0], [0], [1], [0, 0, 1, 1], [], []>} : vector<16x4xbf16>, vector<4x16xbf16>, vector<16x16xf32> -> vector<16x16xf32>
    %197 = arith.truncf %183 : vector<16x4xf32> to vector<16x4xbf16>
    %cst_76 = arith.constant dense<0.000000e+00> : vector<16x16xf32>
    %198 = tpu.matmul %197, %49, %cst_76 {dimension_numbers = #tpu.dot_dimension_numbers<[1], [0], [0], [1], [0, 0, 1, 1], [], []>} : vector<16x4xbf16>, vector<4x16xbf16>, vector<16x16xf32> -> vector<16x16xf32>
    %199 = arith.addf %196, %198 : vector<16x16xf32>
    %200 = arith.truncf %194 : vector<16x4xf32> to vector<16x4xbf16>
    %cst_77 = arith.constant dense<0.000000e+00> : vector<16x16xf32>
    %201 = tpu.matmul %200, %50, %cst_77 {dimension_numbers = #tpu.dot_dimension_numbers<[1], [0], [0], [1], [0, 0, 1, 1], [], []>} : vector<16x4xbf16>, vector<4x16xbf16>, vector<16x16xf32> -> vector<16x16xf32>
    %202 = arith.addf %199, %201 : vector<16x16xf32>
    %c48 = arith.constant 48 : index
    %c0_78 = arith.constant 0 : index
    %203 = vector.load %arg12[%c48, %c0_78] : memref<256x16xf32, #tpu.memory_space<vmem>>, vector<16x16xf32>
    %204 = arith.addf %203, %202 : vector<16x16xf32>
    %205 = vector.extract_strided_slice %204 {offsets = [0, 0], sizes = [16, 12], strides = [1, 1]} : vector<16x16xf32> to vector<16x12xf32>
    %206 = arith.negf %205 : vector<16x12xf32>
    %207 = math.exp %206 : vector<16x12xf32>
    %cst_79 = arith.constant 1.000000e+00 : f32
    %208 = vector.broadcast %cst_79 : f32 to vector<16x12xf32>
    %209 = arith.addf %208, %207 : vector<16x12xf32>
    %210 = arith.divf %208, %209 : vector<16x12xf32>
    %211 = vector.extract_strided_slice %210 {offsets = [0, 0], sizes = [16, 4], strides = [1, 1]} : vector<16x12xf32> to vector<16x4xf32>
    %212 = vector.extract_strided_slice %210 {offsets = [0, 4], sizes = [16, 4], strides = [1, 1]} : vector<16x12xf32> to vector<16x4xf32>
    %213 = vector.extract_strided_slice %210 {offsets = [0, 8], sizes = [16, 4], strides = [1, 1]} : vector<16x12xf32> to vector<16x4xf32>
    %214 = vector.extract_strided_slice %204 {offsets = [0, 12], sizes = [16, 4], strides = [1, 1]} : vector<16x16xf32> to vector<16x4xf32>
    %215 = math.tanh %214 : vector<16x4xf32>
    %216 = arith.mulf %212, %181 : vector<16x4xf32>
    %217 = arith.mulf %213, %215 : vector<16x4xf32>
    %218 = arith.addf %216, %217 : vector<16x4xf32>
    %219 = math.tanh %218 : vector<16x4xf32>
    %220 = arith.mulf %211, %219 : vector<16x4xf32>
    %c48_80 = arith.constant 48 : index
    %c0_81 = arith.constant 0 : index
    %221 = vector.load %arg13[%c48_80, %c0_81] : memref<256x4xf32, #tpu.memory_space<vmem>>, vector<16x4xf32>
    tpu.vector_store %arg13[%c48_80, %c0_81], %220 {strides = array<i32>} : memref<256x4xf32, #tpu.memory_space<vmem>>, vector<16x4xf32>,
    %c1_i32_82 = arith.constant 1 : i32
    %222 = tpu.dynamic_rotate %220 by %c1_i32_82 dim 0 : vector<16x4xf32>, i32 -> vector<16x4xf32>
    %cst_83 = arith.constant 0.000000e+00 : f32
    %223 = vector.shape_cast %69 : vector<16x1xi1> to vector<16x1xi1>
    %224 = vector.broadcast %223 : vector<16x1xi1> to vector<16x4xi1>
    %225 = vector.broadcast %cst_83 : f32 to vector<16x4xf32>
    %226 = arith.select %224, %225, %222 : vector<16x4xi1>, vector<16x4xf32>
    %c15_i32_84 = arith.constant 15 : i32
    %227 = tpu.dynamic_rotate %220 by %c15_i32_84 dim 0 : vector<16x4xf32>, i32 -> vector<16x4xf32>
    %cst_85 = arith.constant 0.000000e+00 : f32
    %228 = vector.shape_cast %71 : vector<16x1xi1> to vector<16x1xi1>
    %229 = vector.broadcast %228 : vector<16x1xi1> to vector<16x4xi1>
    %230 = vector.broadcast %cst_85 : f32 to vector<16x4xf32>
    %231 = arith.select %229, %230, %227 : vector<16x4xi1>, vector<16x4xf32>
    %232 = arith.truncf %226 : vector<16x4xf32> to vector<16x4xbf16>
    %cst_86 = arith.constant dense<0.000000e+00> : vector<16x16xf32>
    %233 = tpu.matmul %232, %48, %cst_86 {dimension_numbers = #tpu.dot_dimension_numbers<[1], [0], [0], [1], [0, 0, 1, 1], [], []>} : vector<16x4xbf16>, vector<4x16xbf16>, vector<16x16xf32> -> vector<16x16xf32>
    %234 = arith.truncf %220 : vector<16x4xf32> to vector<16x4xbf16>
    %cst_87 = arith.constant dense<0.000000e+00> : vector<16x16xf32>
    %235 = tpu.matmul %234, %49, %cst_87 {dimension_numbers = #tpu.dot_dimension_numbers<[1], [0], [0], [1], [0, 0, 1, 1], [], []>} : vector<16x4xbf16>, vector<4x16xbf16>, vector<16x16xf32> -> vector<16x16xf32>
    %236 = arith.addf %233, %235 : vector<16x16xf32>
    %237 = arith.truncf %231 : vector<16x4xf32> to vector<16x4xbf16>
    %cst_88 = arith.constant dense<0.000000e+00> : vector<16x16xf32>
    %238 = tpu.matmul %237, %50, %cst_88 {dimension_numbers = #tpu.dot_dimension_numbers<[1], [0], [0], [1], [0, 0, 1, 1], [], []>} : vector<16x4xbf16>, vector<4x16xbf16>, vector<16x16xf32> -> vector<16x16xf32>
    %239 = arith.addf %236, %238 : vector<16x16xf32>
    %c64 = arith.constant 64 : index
    %c0_89 = arith.constant 0 : index
    %240 = vector.load %arg12[%c64, %c0_89] : memref<256x16xf32, #tpu.memory_space<vmem>>, vector<16x16xf32>
    %241 = arith.addf %240, %239 : vector<16x16xf32>
    %242 = vector.extract_strided_slice %241 {offsets = [0, 0], sizes = [16, 12], strides = [1, 1]} : vector<16x16xf32> to vector<16x12xf32>
    %243 = arith.negf %242 : vector<16x12xf32>
    %244 = math.exp %243 : vector<16x12xf32>
    %cst_90 = arith.constant 1.000000e+00 : f32
    %245 = vector.broadcast %cst_90 : f32 to vector<16x12xf32>
    %246 = arith.addf %245, %244 : vector<16x12xf32>
    %247 = arith.divf %245, %246 : vector<16x12xf32>
    %248 = vector.extract_strided_slice %247 {offsets = [0, 0], sizes = [16, 4], strides = [1, 1]} : vector<16x12xf32> to vector<16x4xf32>
    %249 = vector.extract_strided_slice %247 {offsets = [0, 4], sizes = [16, 4], strides = [1, 1]} : vector<16x12xf32> to vector<16x4xf32>
    %250 = vector.extract_strided_slice %247 {offsets = [0, 8], sizes = [16, 4], strides = [1, 1]} : vector<16x12xf32> to vector<16x4xf32>
    %251 = vector.extract_strided_slice %241 {offsets = [0, 12], sizes = [16, 4], strides = [1, 1]} : vector<16x16xf32> to vector<16x4xf32>
    %252 = math.tanh %251 : vector<16x4xf32>
    %253 = arith.mulf %249, %218 : vector<16x4xf32>
    %254 = arith.mulf %250, %252 : vector<16x4xf32>
    %255 = arith.addf %253, %254 : vector<16x4xf32>
    %256 = math.tanh %255 : vector<16x4xf32>
    %257 = arith.mulf %248, %256 : vector<16x4xf32>
    %c64_91 = arith.constant 64 : index
    %c0_92 = arith.constant 0 : index
    %258 = vector.load %arg13[%c64_91, %c0_92] : memref<256x4xf32, #tpu.memory_space<vmem>>, vector<16x4xf32>
    tpu.vector_store %arg13[%c64_91, %c0_92], %257 {strides = array<i32>} : memref<256x4xf32, #tpu.memory_space<vmem>>, vector<16x4xf32>,
    %c1_i32_93 = arith.constant 1 : i32
    %259 = tpu.dynamic_rotate %257 by %c1_i32_93 dim 0 : vector<16x4xf32>, i32 -> vector<16x4xf32>
    %cst_94 = arith.constant 0.000000e+00 : f32
    %260 = vector.shape_cast %69 : vector<16x1xi1> to vector<16x1xi1>
    %261 = vector.broadcast %260 : vector<16x1xi1> to vector<16x4xi1>
    %262 = vector.broadcast %cst_94 : f32 to vector<16x4xf32>
    %263 = arith.select %261, %262, %259 : vector<16x4xi1>, vector<16x4xf32>
    %c15_i32_95 = arith.constant 15 : i32
    %264 = tpu.dynamic_rotate %257 by %c15_i32_95 dim 0 : vector<16x4xf32>, i32 -> vector<16x4xf32>
    %cst_96 = arith.constant 0.000000e+00 : f32
    %265 = vector.shape_cast %71 : vector<16x1xi1> to vector<16x1xi1>
    %266 = vector.broadcast %265 : vector<16x1xi1> to vector<16x4xi1>
    %267 = vector.broadcast %cst_96 : f32 to vector<16x4xf32>
    %268 = arith.select %266, %267, %264 : vector<16x4xi1>, vector<16x4xf32>
    %269 = arith.truncf %263 : vector<16x4xf32> to vector<16x4xbf16>
    %cst_97 = arith.constant dense<0.000000e+00> : vector<16x16xf32>
    %270 = tpu.matmul %269, %48, %cst_97 {dimension_numbers = #tpu.dot_dimension_numbers<[1], [0], [0], [1], [0, 0, 1, 1], [], []>} : vector<16x4xbf16>, vector<4x16xbf16>, vector<16x16xf32> -> vector<16x16xf32>
    %271 = arith.truncf %257 : vector<16x4xf32> to vector<16x4xbf16>
    %cst_98 = arith.constant dense<0.000000e+00> : vector<16x16xf32>
    %272 = tpu.matmul %271, %49, %cst_98 {dimension_numbers = #tpu.dot_dimension_numbers<[1], [0], [0], [1], [0, 0, 1, 1], [], []>} : vector<16x4xbf16>, vector<4x16xbf16>, vector<16x16xf32> -> vector<16x16xf32>
    %273 = arith.addf %270, %272 : vector<16x16xf32>
    %274 = arith.truncf %268 : vector<16x4xf32> to vector<16x4xbf16>
    %cst_99 = arith.constant dense<0.000000e+00> : vector<16x16xf32>
    %275 = tpu.matmul %274, %50, %cst_99 {dimension_numbers = #tpu.dot_dimension_numbers<[1], [0], [0], [1], [0, 0, 1, 1], [], []>} : vector<16x4xbf16>, vector<4x16xbf16>, vector<16x16xf32> -> vector<16x16xf32>
    %276 = arith.addf %273, %275 : vector<16x16xf32>
    %c80 = arith.constant 80 : index
    %c0_100 = arith.constant 0 : index
    %277 = vector.load %arg12[%c80, %c0_100] : memref<256x16xf32, #tpu.memory_space<vmem>>, vector<16x16xf32>
    %278 = arith.addf %277, %276 : vector<16x16xf32>
    %279 = vector.extract_strided_slice %278 {offsets = [0, 0], sizes = [16, 12], strides = [1, 1]} : vector<16x16xf32> to vector<16x12xf32>
    %280 = arith.negf %279 : vector<16x12xf32>
    %281 = math.exp %280 : vector<16x12xf32>
    %cst_101 = arith.constant 1.000000e+00 : f32
    %282 = vector.broadcast %cst_101 : f32 to vector<16x12xf32>
    %283 = arith.addf %282, %281 : vector<16x12xf32>
    %284 = arith.divf %282, %283 : vector<16x12xf32>
    %285 = vector.extract_strided_slice %284 {offsets = [0, 0], sizes = [16, 4], strides = [1, 1]} : vector<16x12xf32> to vector<16x4xf32>
    %286 = vector.extract_strided_slice %284 {offsets = [0, 4], sizes = [16, 4], strides = [1, 1]} : vector<16x12xf32> to vector<16x4xf32>
    %287 = vector.extract_strided_slice %284 {offsets = [0, 8], sizes = [16, 4], strides = [1, 1]} : vector<16x12xf32> to vector<16x4xf32>
    %288 = vector.extract_strided_slice %278 {offsets = [0, 12], sizes = [16, 4], strides = [1, 1]} : vector<16x16xf32> to vector<16x4xf32>
    %289 = math.tanh %288 : vector<16x4xf32>
    %290 = arith.mulf %286, %255 : vector<16x4xf32>
    %291 = arith.mulf %287, %289 : vector<16x4xf32>
    %292 = arith.addf %290, %291 : vector<16x4xf32>
    %293 = math.tanh %292 : vector<16x4xf32>
    %294 = arith.mulf %285, %293 : vector<16x4xf32>
    %c80_102 = arith.constant 80 : index
    %c0_103 = arith.constant 0 : index
    %295 = vector.load %arg13[%c80_102, %c0_103] : memref<256x4xf32, #tpu.memory_space<vmem>>, vector<16x4xf32>
    tpu.vector_store %arg13[%c80_102, %c0_103], %294 {strides = array<i32>} : memref<256x4xf32, #tpu.memory_space<vmem>>, vector<16x4xf32>,
    %c1_i32_104 = arith.constant 1 : i32
    %296 = tpu.dynamic_rotate %294 by %c1_i32_104 dim 0 : vector<16x4xf32>, i32 -> vector<16x4xf32>
    %cst_105 = arith.constant 0.000000e+00 : f32
    %297 = vector.shape_cast %69 : vector<16x1xi1> to vector<16x1xi1>
    %298 = vector.broadcast %297 : vector<16x1xi1> to vector<16x4xi1>
    %299 = vector.broadcast %cst_105 : f32 to vector<16x4xf32>
    %300 = arith.select %298, %299, %296 : vector<16x4xi1>, vector<16x4xf32>
    %c15_i32_106 = arith.constant 15 : i32
    %301 = tpu.dynamic_rotate %294 by %c15_i32_106 dim 0 : vector<16x4xf32>, i32 -> vector<16x4xf32>
    %cst_107 = arith.constant 0.000000e+00 : f32
    %302 = vector.shape_cast %71 : vector<16x1xi1> to vector<16x1xi1>
    %303 = vector.broadcast %302 : vector<16x1xi1> to vector<16x4xi1>
    %304 = vector.broadcast %cst_107 : f32 to vector<16x4xf32>
    %305 = arith.select %303, %304, %301 : vector<16x4xi1>, vector<16x4xf32>
    %306 = arith.truncf %300 : vector<16x4xf32> to vector<16x4xbf16>
    %cst_108 = arith.constant dense<0.000000e+00> : vector<16x16xf32>
    %307 = tpu.matmul %306, %48, %cst_108 {dimension_numbers = #tpu.dot_dimension_numbers<[1], [0], [0], [1], [0, 0, 1, 1], [], []>} : vector<16x4xbf16>, vector<4x16xbf16>, vector<16x16xf32> -> vector<16x16xf32>
    %308 = arith.truncf %294 : vector<16x4xf32> to vector<16x4xbf16>
    %cst_109 = arith.constant dense<0.000000e+00> : vector<16x16xf32>
    %309 = tpu.matmul %308, %49, %cst_109 {dimension_numbers = #tpu.dot_dimension_numbers<[1], [0], [0], [1], [0, 0, 1, 1], [], []>} : vector<16x4xbf16>, vector<4x16xbf16>, vector<16x16xf32> -> vector<16x16xf32>
    %310 = arith.addf %307, %309 : vector<16x16xf32>
    %311 = arith.truncf %305 : vector<16x4xf32> to vector<16x4xbf16>
    %cst_110 = arith.constant dense<0.000000e+00> : vector<16x16xf32>
    %312 = tpu.matmul %311, %50, %cst_110 {dimension_numbers = #tpu.dot_dimension_numbers<[1], [0], [0], [1], [0, 0, 1, 1], [], []>} : vector<16x4xbf16>, vector<4x16xbf16>, vector<16x16xf32> -> vector<16x16xf32>
    %313 = arith.addf %310, %312 : vector<16x16xf32>
    %c96 = arith.constant 96 : index
    %c0_111 = arith.constant 0 : index
    %314 = vector.load %arg12[%c96, %c0_111] : memref<256x16xf32, #tpu.memory_space<vmem>>, vector<16x16xf32>
    %315 = arith.addf %314, %313 : vector<16x16xf32>
    %316 = vector.extract_strided_slice %315 {offsets = [0, 0], sizes = [16, 12], strides = [1, 1]} : vector<16x16xf32> to vector<16x12xf32>
    %317 = arith.negf %316 : vector<16x12xf32>
    %318 = math.exp %317 : vector<16x12xf32>
    %cst_112 = arith.constant 1.000000e+00 : f32
    %319 = vector.broadcast %cst_112 : f32 to vector<16x12xf32>
    %320 = arith.addf %319, %318 : vector<16x12xf32>
    %321 = arith.divf %319, %320 : vector<16x12xf32>
    %322 = vector.extract_strided_slice %321 {offsets = [0, 0], sizes = [16, 4], strides = [1, 1]} : vector<16x12xf32> to vector<16x4xf32>
    %323 = vector.extract_strided_slice %321 {offsets = [0, 4], sizes = [16, 4], strides = [1, 1]} : vector<16x12xf32> to vector<16x4xf32>
    %324 = vector.extract_strided_slice %321 {offsets = [0, 8], sizes = [16, 4], strides = [1, 1]} : vector<16x12xf32> to vector<16x4xf32>
    %325 = vector.extract_strided_slice %315 {offsets = [0, 12], sizes = [16, 4], strides = [1, 1]} : vector<16x16xf32> to vector<16x4xf32>
    %326 = math.tanh %325 : vector<16x4xf32>
    %327 = arith.mulf %323, %292 : vector<16x4xf32>
    %328 = arith.mulf %324, %326 : vector<16x4xf32>
    %329 = arith.addf %327, %328 : vector<16x4xf32>
    %330 = math.tanh %329 : vector<16x4xf32>
    %331 = arith.mulf %322, %330 : vector<16x4xf32>
    %c96_113 = arith.constant 96 : index
    %c0_114 = arith.constant 0 : index
    %332 = vector.load %arg13[%c96_113, %c0_114] : memref<256x4xf32, #tpu.memory_space<vmem>>, vector<16x4xf32>
    tpu.vector_store %arg13[%c96_113, %c0_114], %331 {strides = array<i32>} : memref<256x4xf32, #tpu.memory_space<vmem>>, vector<16x4xf32>,
    %c1_i32_115 = arith.constant 1 : i32
    %333 = tpu.dynamic_rotate %331 by %c1_i32_115 dim 0 : vector<16x4xf32>, i32 -> vector<16x4xf32>
    %cst_116 = arith.constant 0.000000e+00 : f32
    %334 = vector.shape_cast %69 : vector<16x1xi1> to vector<16x1xi1>
    %335 = vector.broadcast %334 : vector<16x1xi1> to vector<16x4xi1>
    %336 = vector.broadcast %cst_116 : f32 to vector<16x4xf32>
    %337 = arith.select %335, %336, %333 : vector<16x4xi1>, vector<16x4xf32>
    %c15_i32_117 = arith.constant 15 : i32
    %338 = tpu.dynamic_rotate %331 by %c15_i32_117 dim 0 : vector<16x4xf32>, i32 -> vector<16x4xf32>
    %cst_118 = arith.constant 0.000000e+00 : f32
    %339 = vector.shape_cast %71 : vector<16x1xi1> to vector<16x1xi1>
    %340 = vector.broadcast %339 : vector<16x1xi1> to vector<16x4xi1>
    %341 = vector.broadcast %cst_118 : f32 to vector<16x4xf32>
    %342 = arith.select %340, %341, %338 : vector<16x4xi1>, vector<16x4xf32>
    %343 = arith.truncf %337 : vector<16x4xf32> to vector<16x4xbf16>
    %cst_119 = arith.constant dense<0.000000e+00> : vector<16x16xf32>
    %344 = tpu.matmul %343, %48, %cst_119 {dimension_numbers = #tpu.dot_dimension_numbers<[1], [0], [0], [1], [0, 0, 1, 1], [], []>} : vector<16x4xbf16>, vector<4x16xbf16>, vector<16x16xf32> -> vector<16x16xf32>
    %345 = arith.truncf %331 : vector<16x4xf32> to vector<16x4xbf16>
    %cst_120 = arith.constant dense<0.000000e+00> : vector<16x16xf32>
    %346 = tpu.matmul %345, %49, %cst_120 {dimension_numbers = #tpu.dot_dimension_numbers<[1], [0], [0], [1], [0, 0, 1, 1], [], []>} : vector<16x4xbf16>, vector<4x16xbf16>, vector<16x16xf32> -> vector<16x16xf32>
    %347 = arith.addf %344, %346 : vector<16x16xf32>
    %348 = arith.truncf %342 : vector<16x4xf32> to vector<16x4xbf16>
    %cst_121 = arith.constant dense<0.000000e+00> : vector<16x16xf32>
    %349 = tpu.matmul %348, %50, %cst_121 {dimension_numbers = #tpu.dot_dimension_numbers<[1], [0], [0], [1], [0, 0, 1, 1], [], []>} : vector<16x4xbf16>, vector<4x16xbf16>, vector<16x16xf32> -> vector<16x16xf32>
    %350 = arith.addf %347, %349 : vector<16x16xf32>
    %c112 = arith.constant 112 : index
    %c0_122 = arith.constant 0 : index
    %351 = vector.load %arg12[%c112, %c0_122] : memref<256x16xf32, #tpu.memory_space<vmem>>, vector<16x16xf32>
    %352 = arith.addf %351, %350 : vector<16x16xf32>
    %353 = vector.extract_strided_slice %352 {offsets = [0, 0], sizes = [16, 12], strides = [1, 1]} : vector<16x16xf32> to vector<16x12xf32>
    %354 = arith.negf %353 : vector<16x12xf32>
    %355 = math.exp %354 : vector<16x12xf32>
    %cst_123 = arith.constant 1.000000e+00 : f32
    %356 = vector.broadcast %cst_123 : f32 to vector<16x12xf32>
    %357 = arith.addf %356, %355 : vector<16x12xf32>
    %358 = arith.divf %356, %357 : vector<16x12xf32>
    %359 = vector.extract_strided_slice %358 {offsets = [0, 0], sizes = [16, 4], strides = [1, 1]} : vector<16x12xf32> to vector<16x4xf32>
    %360 = vector.extract_strided_slice %358 {offsets = [0, 4], sizes = [16, 4], strides = [1, 1]} : vector<16x12xf32> to vector<16x4xf32>
    %361 = vector.extract_strided_slice %358 {offsets = [0, 8], sizes = [16, 4], strides = [1, 1]} : vector<16x12xf32> to vector<16x4xf32>
    %362 = vector.extract_strided_slice %352 {offsets = [0, 12], sizes = [16, 4], strides = [1, 1]} : vector<16x16xf32> to vector<16x4xf32>
    %363 = math.tanh %362 : vector<16x4xf32>
    %364 = arith.mulf %360, %329 : vector<16x4xf32>
    %365 = arith.mulf %361, %363 : vector<16x4xf32>
    %366 = arith.addf %364, %365 : vector<16x4xf32>
    %367 = math.tanh %366 : vector<16x4xf32>
    %368 = arith.mulf %359, %367 : vector<16x4xf32>
    %c112_124 = arith.constant 112 : index
    %c0_125 = arith.constant 0 : index
    %369 = vector.load %arg13[%c112_124, %c0_125] : memref<256x4xf32, #tpu.memory_space<vmem>>, vector<16x4xf32>
    tpu.vector_store %arg13[%c112_124, %c0_125], %368 {strides = array<i32>} : memref<256x4xf32, #tpu.memory_space<vmem>>, vector<16x4xf32>,
    %c1_i32_126 = arith.constant 1 : i32
    %370 = tpu.dynamic_rotate %368 by %c1_i32_126 dim 0 : vector<16x4xf32>, i32 -> vector<16x4xf32>
    %cst_127 = arith.constant 0.000000e+00 : f32
    %371 = vector.shape_cast %69 : vector<16x1xi1> to vector<16x1xi1>
    %372 = vector.broadcast %371 : vector<16x1xi1> to vector<16x4xi1>
    %373 = vector.broadcast %cst_127 : f32 to vector<16x4xf32>
    %374 = arith.select %372, %373, %370 : vector<16x4xi1>, vector<16x4xf32>
    %c15_i32_128 = arith.constant 15 : i32
    %375 = tpu.dynamic_rotate %368 by %c15_i32_128 dim 0 : vector<16x4xf32>, i32 -> vector<16x4xf32>
    %cst_129 = arith.constant 0.000000e+00 : f32
    %376 = vector.shape_cast %71 : vector<16x1xi1> to vector<16x1xi1>
    %377 = vector.broadcast %376 : vector<16x1xi1> to vector<16x4xi1>
    %378 = vector.broadcast %cst_129 : f32 to vector<16x4xf32>
    %379 = arith.select %377, %378, %375 : vector<16x4xi1>, vector<16x4xf32>
    %380 = arith.truncf %374 : vector<16x4xf32> to vector<16x4xbf16>
    %cst_130 = arith.constant dense<0.000000e+00> : vector<16x16xf32>
    %381 = tpu.matmul %380, %48, %cst_130 {dimension_numbers = #tpu.dot_dimension_numbers<[1], [0], [0], [1], [0, 0, 1, 1], [], []>} : vector<16x4xbf16>, vector<4x16xbf16>, vector<16x16xf32> -> vector<16x16xf32>
    %382 = arith.truncf %368 : vector<16x4xf32> to vector<16x4xbf16>
    %cst_131 = arith.constant dense<0.000000e+00> : vector<16x16xf32>
    %383 = tpu.matmul %382, %49, %cst_131 {dimension_numbers = #tpu.dot_dimension_numbers<[1], [0], [0], [1], [0, 0, 1, 1], [], []>} : vector<16x4xbf16>, vector<4x16xbf16>, vector<16x16xf32> -> vector<16x16xf32>
    %384 = arith.addf %381, %383 : vector<16x16xf32>
    %385 = arith.truncf %379 : vector<16x4xf32> to vector<16x4xbf16>
    %cst_132 = arith.constant dense<0.000000e+00> : vector<16x16xf32>
    %386 = tpu.matmul %385, %50, %cst_132 {dimension_numbers = #tpu.dot_dimension_numbers<[1], [0], [0], [1], [0, 0, 1, 1], [], []>} : vector<16x4xbf16>, vector<4x16xbf16>, vector<16x16xf32> -> vector<16x16xf32>
    %387 = arith.addf %384, %386 : vector<16x16xf32>
    %c128 = arith.constant 128 : index
    %c0_133 = arith.constant 0 : index
    %388 = vector.load %arg12[%c128, %c0_133] : memref<256x16xf32, #tpu.memory_space<vmem>>, vector<16x16xf32>
    %389 = arith.addf %388, %387 : vector<16x16xf32>
    %390 = vector.extract_strided_slice %389 {offsets = [0, 0], sizes = [16, 12], strides = [1, 1]} : vector<16x16xf32> to vector<16x12xf32>
    %391 = arith.negf %390 : vector<16x12xf32>
    %392 = math.exp %391 : vector<16x12xf32>
    %cst_134 = arith.constant 1.000000e+00 : f32
    %393 = vector.broadcast %cst_134 : f32 to vector<16x12xf32>
    %394 = arith.addf %393, %392 : vector<16x12xf32>
    %395 = arith.divf %393, %394 : vector<16x12xf32>
    %396 = vector.extract_strided_slice %395 {offsets = [0, 0], sizes = [16, 4], strides = [1, 1]} : vector<16x12xf32> to vector<16x4xf32>
    %397 = vector.extract_strided_slice %395 {offsets = [0, 4], sizes = [16, 4], strides = [1, 1]} : vector<16x12xf32> to vector<16x4xf32>
    %398 = vector.extract_strided_slice %395 {offsets = [0, 8], sizes = [16, 4], strides = [1, 1]} : vector<16x12xf32> to vector<16x4xf32>
    %399 = vector.extract_strided_slice %389 {offsets = [0, 12], sizes = [16, 4], strides = [1, 1]} : vector<16x16xf32> to vector<16x4xf32>
    %400 = math.tanh %399 : vector<16x4xf32>
    %401 = arith.mulf %397, %366 : vector<16x4xf32>
    %402 = arith.mulf %398, %400 : vector<16x4xf32>
    %403 = arith.addf %401, %402 : vector<16x4xf32>
    %404 = math.tanh %403 : vector<16x4xf32>
    %405 = arith.mulf %396, %404 : vector<16x4xf32>
    %c128_135 = arith.constant 128 : index
    %c0_136 = arith.constant 0 : index
    %406 = vector.load %arg13[%c128_135, %c0_136] : memref<256x4xf32, #tpu.memory_space<vmem>>, vector<16x4xf32>
    tpu.vector_store %arg13[%c128_135, %c0_136], %405 {strides = array<i32>} : memref<256x4xf32, #tpu.memory_space<vmem>>, vector<16x4xf32>,
    %c1_i32_137 = arith.constant 1 : i32
    %407 = tpu.dynamic_rotate %405 by %c1_i32_137 dim 0 : vector<16x4xf32>, i32 -> vector<16x4xf32>
    %cst_138 = arith.constant 0.000000e+00 : f32
    %408 = vector.shape_cast %69 : vector<16x1xi1> to vector<16x1xi1>
    %409 = vector.broadcast %408 : vector<16x1xi1> to vector<16x4xi1>
    %410 = vector.broadcast %cst_138 : f32 to vector<16x4xf32>
    %411 = arith.select %409, %410, %407 : vector<16x4xi1>, vector<16x4xf32>
    %c15_i32_139 = arith.constant 15 : i32
    %412 = tpu.dynamic_rotate %405 by %c15_i32_139 dim 0 : vector<16x4xf32>, i32 -> vector<16x4xf32>
    %cst_140 = arith.constant 0.000000e+00 : f32
    %413 = vector.shape_cast %71 : vector<16x1xi1> to vector<16x1xi1>
    %414 = vector.broadcast %413 : vector<16x1xi1> to vector<16x4xi1>
    %415 = vector.broadcast %cst_140 : f32 to vector<16x4xf32>
    %416 = arith.select %414, %415, %412 : vector<16x4xi1>, vector<16x4xf32>
    %417 = arith.truncf %411 : vector<16x4xf32> to vector<16x4xbf16>
    %cst_141 = arith.constant dense<0.000000e+00> : vector<16x16xf32>
    %418 = tpu.matmul %417, %48, %cst_141 {dimension_numbers = #tpu.dot_dimension_numbers<[1], [0], [0], [1], [0, 0, 1, 1], [], []>} : vector<16x4xbf16>, vector<4x16xbf16>, vector<16x16xf32> -> vector<16x16xf32>
    %419 = arith.truncf %405 : vector<16x4xf32> to vector<16x4xbf16>
    %cst_142 = arith.constant dense<0.000000e+00> : vector<16x16xf32>
    %420 = tpu.matmul %419, %49, %cst_142 {dimension_numbers = #tpu.dot_dimension_numbers<[1], [0], [0], [1], [0, 0, 1, 1], [], []>} : vector<16x4xbf16>, vector<4x16xbf16>, vector<16x16xf32> -> vector<16x16xf32>
    %421 = arith.addf %418, %420 : vector<16x16xf32>
    %422 = arith.truncf %416 : vector<16x4xf32> to vector<16x4xbf16>
    %cst_143 = arith.constant dense<0.000000e+00> : vector<16x16xf32>
    %423 = tpu.matmul %422, %50, %cst_143 {dimension_numbers = #tpu.dot_dimension_numbers<[1], [0], [0], [1], [0, 0, 1, 1], [], []>} : vector<16x4xbf16>, vector<4x16xbf16>, vector<16x16xf32> -> vector<16x16xf32>
    %424 = arith.addf %421, %423 : vector<16x16xf32>
    %c144 = arith.constant 144 : index
    %c0_144 = arith.constant 0 : index
    %425 = vector.load %arg12[%c144, %c0_144] : memref<256x16xf32, #tpu.memory_space<vmem>>, vector<16x16xf32>
    %426 = arith.addf %425, %424 : vector<16x16xf32>
    %427 = vector.extract_strided_slice %426 {offsets = [0, 0], sizes = [16, 12], strides = [1, 1]} : vector<16x16xf32> to vector<16x12xf32>
    %428 = arith.negf %427 : vector<16x12xf32>
    %429 = math.exp %428 : vector<16x12xf32>
    %cst_145 = arith.constant 1.000000e+00 : f32
    %430 = vector.broadcast %cst_145 : f32 to vector<16x12xf32>
    %431 = arith.addf %430, %429 : vector<16x12xf32>
    %432 = arith.divf %430, %431 : vector<16x12xf32>
    %433 = vector.extract_strided_slice %432 {offsets = [0, 0], sizes = [16, 4], strides = [1, 1]} : vector<16x12xf32> to vector<16x4xf32>
    %434 = vector.extract_strided_slice %432 {offsets = [0, 4], sizes = [16, 4], strides = [1, 1]} : vector<16x12xf32> to vector<16x4xf32>
    %435 = vector.extract_strided_slice %432 {offsets = [0, 8], sizes = [16, 4], strides = [1, 1]} : vector<16x12xf32> to vector<16x4xf32>
    %436 = vector.extract_strided_slice %426 {offsets = [0, 12], sizes = [16, 4], strides = [1, 1]} : vector<16x16xf32> to vector<16x4xf32>
    %437 = math.tanh %436 : vector<16x4xf32>
    %438 = arith.mulf %434, %403 : vector<16x4xf32>
    %439 = arith.mulf %435, %437 : vector<16x4xf32>
    %440 = arith.addf %438, %439 : vector<16x4xf32>
    %441 = math.tanh %440 : vector<16x4xf32>
    %442 = arith.mulf %433, %441 : vector<16x4xf32>
    %c144_146 = arith.constant 144 : index
    %c0_147 = arith.constant 0 : index
    %443 = vector.load %arg13[%c144_146, %c0_147] : memref<256x4xf32, #tpu.memory_space<vmem>>, vector<16x4xf32>
    tpu.vector_store %arg13[%c144_146, %c0_147], %442 {strides = array<i32>} : memref<256x4xf32, #tpu.memory_space<vmem>>, vector<16x4xf32>,
    %c1_i32_148 = arith.constant 1 : i32
    %444 = tpu.dynamic_rotate %442 by %c1_i32_148 dim 0 : vector<16x4xf32>, i32 -> vector<16x4xf32>
    %cst_149 = arith.constant 0.000000e+00 : f32
    %445 = vector.shape_cast %69 : vector<16x1xi1> to vector<16x1xi1>
    %446 = vector.broadcast %445 : vector<16x1xi1> to vector<16x4xi1>
    %447 = vector.broadcast %cst_149 : f32 to vector<16x4xf32>
    %448 = arith.select %446, %447, %444 : vector<16x4xi1>, vector<16x4xf32>
    %c15_i32_150 = arith.constant 15 : i32
    %449 = tpu.dynamic_rotate %442 by %c15_i32_150 dim 0 : vector<16x4xf32>, i32 -> vector<16x4xf32>
    %cst_151 = arith.constant 0.000000e+00 : f32
    %450 = vector.shape_cast %71 : vector<16x1xi1> to vector<16x1xi1>
    %451 = vector.broadcast %450 : vector<16x1xi1> to vector<16x4xi1>
    %452 = vector.broadcast %cst_151 : f32 to vector<16x4xf32>
    %453 = arith.select %451, %452, %449 : vector<16x4xi1>, vector<16x4xf32>
    %454 = arith.truncf %448 : vector<16x4xf32> to vector<16x4xbf16>
    %cst_152 = arith.constant dense<0.000000e+00> : vector<16x16xf32>
    %455 = tpu.matmul %454, %48, %cst_152 {dimension_numbers = #tpu.dot_dimension_numbers<[1], [0], [0], [1], [0, 0, 1, 1], [], []>} : vector<16x4xbf16>, vector<4x16xbf16>, vector<16x16xf32> -> vector<16x16xf32>
    %456 = arith.truncf %442 : vector<16x4xf32> to vector<16x4xbf16>
    %cst_153 = arith.constant dense<0.000000e+00> : vector<16x16xf32>
    %457 = tpu.matmul %456, %49, %cst_153 {dimension_numbers = #tpu.dot_dimension_numbers<[1], [0], [0], [1], [0, 0, 1, 1], [], []>} : vector<16x4xbf16>, vector<4x16xbf16>, vector<16x16xf32> -> vector<16x16xf32>
    %458 = arith.addf %455, %457 : vector<16x16xf32>
    %459 = arith.truncf %453 : vector<16x4xf32> to vector<16x4xbf16>
    %cst_154 = arith.constant dense<0.000000e+00> : vector<16x16xf32>
    %460 = tpu.matmul %459, %50, %cst_154 {dimension_numbers = #tpu.dot_dimension_numbers<[1], [0], [0], [1], [0, 0, 1, 1], [], []>} : vector<16x4xbf16>, vector<4x16xbf16>, vector<16x16xf32> -> vector<16x16xf32>
    %461 = arith.addf %458, %460 : vector<16x16xf32>
    %c160 = arith.constant 160 : index
    %c0_155 = arith.constant 0 : index
    %462 = vector.load %arg12[%c160, %c0_155] : memref<256x16xf32, #tpu.memory_space<vmem>>, vector<16x16xf32>
    %463 = arith.addf %462, %461 : vector<16x16xf32>
    %464 = vector.extract_strided_slice %463 {offsets = [0, 0], sizes = [16, 12], strides = [1, 1]} : vector<16x16xf32> to vector<16x12xf32>
    %465 = arith.negf %464 : vector<16x12xf32>
    %466 = math.exp %465 : vector<16x12xf32>
    %cst_156 = arith.constant 1.000000e+00 : f32
    %467 = vector.broadcast %cst_156 : f32 to vector<16x12xf32>
    %468 = arith.addf %467, %466 : vector<16x12xf32>
    %469 = arith.divf %467, %468 : vector<16x12xf32>
    %470 = vector.extract_strided_slice %469 {offsets = [0, 0], sizes = [16, 4], strides = [1, 1]} : vector<16x12xf32> to vector<16x4xf32>
    %471 = vector.extract_strided_slice %469 {offsets = [0, 4], sizes = [16, 4], strides = [1, 1]} : vector<16x12xf32> to vector<16x4xf32>
    %472 = vector.extract_strided_slice %469 {offsets = [0, 8], sizes = [16, 4], strides = [1, 1]} : vector<16x12xf32> to vector<16x4xf32>
    %473 = vector.extract_strided_slice %463 {offsets = [0, 12], sizes = [16, 4], strides = [1, 1]} : vector<16x16xf32> to vector<16x4xf32>
    %474 = math.tanh %473 : vector<16x4xf32>
    %475 = arith.mulf %471, %440 : vector<16x4xf32>
    %476 = arith.mulf %472, %474 : vector<16x4xf32>
    %477 = arith.addf %475, %476 : vector<16x4xf32>
    %478 = math.tanh %477 : vector<16x4xf32>
    %479 = arith.mulf %470, %478 : vector<16x4xf32>
    %c160_157 = arith.constant 160 : index
    %c0_158 = arith.constant 0 : index
    %480 = vector.load %arg13[%c160_157, %c0_158] : memref<256x4xf32, #tpu.memory_space<vmem>>, vector<16x4xf32>
    tpu.vector_store %arg13[%c160_157, %c0_158], %479 {strides = array<i32>} : memref<256x4xf32, #tpu.memory_space<vmem>>, vector<16x4xf32>,
    %c1_i32_159 = arith.constant 1 : i32
    %481 = tpu.dynamic_rotate %479 by %c1_i32_159 dim 0 : vector<16x4xf32>, i32 -> vector<16x4xf32>
    %cst_160 = arith.constant 0.000000e+00 : f32
    %482 = vector.shape_cast %69 : vector<16x1xi1> to vector<16x1xi1>
    %483 = vector.broadcast %482 : vector<16x1xi1> to vector<16x4xi1>
    %484 = vector.broadcast %cst_160 : f32 to vector<16x4xf32>
    %485 = arith.select %483, %484, %481 : vector<16x4xi1>, vector<16x4xf32>
    %c15_i32_161 = arith.constant 15 : i32
    %486 = tpu.dynamic_rotate %479 by %c15_i32_161 dim 0 : vector<16x4xf32>, i32 -> vector<16x4xf32>
    %cst_162 = arith.constant 0.000000e+00 : f32
    %487 = vector.shape_cast %71 : vector<16x1xi1> to vector<16x1xi1>
    %488 = vector.broadcast %487 : vector<16x1xi1> to vector<16x4xi1>
    %489 = vector.broadcast %cst_162 : f32 to vector<16x4xf32>
    %490 = arith.select %488, %489, %486 : vector<16x4xi1>, vector<16x4xf32>
    %491 = arith.truncf %485 : vector<16x4xf32> to vector<16x4xbf16>
    %cst_163 = arith.constant dense<0.000000e+00> : vector<16x16xf32>
    %492 = tpu.matmul %491, %48, %cst_163 {dimension_numbers = #tpu.dot_dimension_numbers<[1], [0], [0], [1], [0, 0, 1, 1], [], []>} : vector<16x4xbf16>, vector<4x16xbf16>, vector<16x16xf32> -> vector<16x16xf32>
    %493 = arith.truncf %479 : vector<16x4xf32> to vector<16x4xbf16>
    %cst_164 = arith.constant dense<0.000000e+00> : vector<16x16xf32>
    %494 = tpu.matmul %493, %49, %cst_164 {dimension_numbers = #tpu.dot_dimension_numbers<[1], [0], [0], [1], [0, 0, 1, 1], [], []>} : vector<16x4xbf16>, vector<4x16xbf16>, vector<16x16xf32> -> vector<16x16xf32>
    %495 = arith.addf %492, %494 : vector<16x16xf32>
    %496 = arith.truncf %490 : vector<16x4xf32> to vector<16x4xbf16>
    %cst_165 = arith.constant dense<0.000000e+00> : vector<16x16xf32>
    %497 = tpu.matmul %496, %50, %cst_165 {dimension_numbers = #tpu.dot_dimension_numbers<[1], [0], [0], [1], [0, 0, 1, 1], [], []>} : vector<16x4xbf16>, vector<4x16xbf16>, vector<16x16xf32> -> vector<16x16xf32>
    %498 = arith.addf %495, %497 : vector<16x16xf32>
    %c176 = arith.constant 176 : index
    %c0_166 = arith.constant 0 : index
    %499 = vector.load %arg12[%c176, %c0_166] : memref<256x16xf32, #tpu.memory_space<vmem>>, vector<16x16xf32>
    %500 = arith.addf %499, %498 : vector<16x16xf32>
    %501 = vector.extract_strided_slice %500 {offsets = [0, 0], sizes = [16, 12], strides = [1, 1]} : vector<16x16xf32> to vector<16x12xf32>
    %502 = arith.negf %501 : vector<16x12xf32>
    %503 = math.exp %502 : vector<16x12xf32>
    %cst_167 = arith.constant 1.000000e+00 : f32
    %504 = vector.broadcast %cst_167 : f32 to vector<16x12xf32>
    %505 = arith.addf %504, %503 : vector<16x12xf32>
    %506 = arith.divf %504, %505 : vector<16x12xf32>
    %507 = vector.extract_strided_slice %506 {offsets = [0, 0], sizes = [16, 4], strides = [1, 1]} : vector<16x12xf32> to vector<16x4xf32>
    %508 = vector.extract_strided_slice %506 {offsets = [0, 4], sizes = [16, 4], strides = [1, 1]} : vector<16x12xf32> to vector<16x4xf32>
    %509 = vector.extract_strided_slice %506 {offsets = [0, 8], sizes = [16, 4], strides = [1, 1]} : vector<16x12xf32> to vector<16x4xf32>
    %510 = vector.extract_strided_slice %500 {offsets = [0, 12], sizes = [16, 4], strides = [1, 1]} : vector<16x16xf32> to vector<16x4xf32>
    %511 = math.tanh %510 : vector<16x4xf32>
    %512 = arith.mulf %508, %477 : vector<16x4xf32>
    %513 = arith.mulf %509, %511 : vector<16x4xf32>
    %514 = arith.addf %512, %513 : vector<16x4xf32>
    %515 = math.tanh %514 : vector<16x4xf32>
    %516 = arith.mulf %507, %515 : vector<16x4xf32>
    %c176_168 = arith.constant 176 : index
    %c0_169 = arith.constant 0 : index
    %517 = vector.load %arg13[%c176_168, %c0_169] : memref<256x4xf32, #tpu.memory_space<vmem>>, vector<16x4xf32>
    tpu.vector_store %arg13[%c176_168, %c0_169], %516 {strides = array<i32>} : memref<256x4xf32, #tpu.memory_space<vmem>>, vector<16x4xf32>,
    %c1_i32_170 = arith.constant 1 : i32
    %518 = tpu.dynamic_rotate %516 by %c1_i32_170 dim 0 : vector<16x4xf32>, i32 -> vector<16x4xf32>
    %cst_171 = arith.constant 0.000000e+00 : f32
    %519 = vector.shape_cast %69 : vector<16x1xi1> to vector<16x1xi1>
    %520 = vector.broadcast %519 : vector<16x1xi1> to vector<16x4xi1>
    %521 = vector.broadcast %cst_171 : f32 to vector<16x4xf32>
    %522 = arith.select %520, %521, %518 : vector<16x4xi1>, vector<16x4xf32>
    %c15_i32_172 = arith.constant 15 : i32
    %523 = tpu.dynamic_rotate %516 by %c15_i32_172 dim 0 : vector<16x4xf32>, i32 -> vector<16x4xf32>
    %cst_173 = arith.constant 0.000000e+00 : f32
    %524 = vector.shape_cast %71 : vector<16x1xi1> to vector<16x1xi1>
    %525 = vector.broadcast %524 : vector<16x1xi1> to vector<16x4xi1>
    %526 = vector.broadcast %cst_173 : f32 to vector<16x4xf32>
    %527 = arith.select %525, %526, %523 : vector<16x4xi1>, vector<16x4xf32>
    %528 = arith.truncf %522 : vector<16x4xf32> to vector<16x4xbf16>
    %cst_174 = arith.constant dense<0.000000e+00> : vector<16x16xf32>
    %529 = tpu.matmul %528, %48, %cst_174 {dimension_numbers = #tpu.dot_dimension_numbers<[1], [0], [0], [1], [0, 0, 1, 1], [], []>} : vector<16x4xbf16>, vector<4x16xbf16>, vector<16x16xf32> -> vector<16x16xf32>
    %530 = arith.truncf %516 : vector<16x4xf32> to vector<16x4xbf16>
    %cst_175 = arith.constant dense<0.000000e+00> : vector<16x16xf32>
    %531 = tpu.matmul %530, %49, %cst_175 {dimension_numbers = #tpu.dot_dimension_numbers<[1], [0], [0], [1], [0, 0, 1, 1], [], []>} : vector<16x4xbf16>, vector<4x16xbf16>, vector<16x16xf32> -> vector<16x16xf32>
    %532 = arith.addf %529, %531 : vector<16x16xf32>
    %533 = arith.truncf %527 : vector<16x4xf32> to vector<16x4xbf16>
    %cst_176 = arith.constant dense<0.000000e+00> : vector<16x16xf32>
    %534 = tpu.matmul %533, %50, %cst_176 {dimension_numbers = #tpu.dot_dimension_numbers<[1], [0], [0], [1], [0, 0, 1, 1], [], []>} : vector<16x4xbf16>, vector<4x16xbf16>, vector<16x16xf32> -> vector<16x16xf32>
    %535 = arith.addf %532, %534 : vector<16x16xf32>
    %c192 = arith.constant 192 : index
    %c0_177 = arith.constant 0 : index
    %536 = vector.load %arg12[%c192, %c0_177] : memref<256x16xf32, #tpu.memory_space<vmem>>, vector<16x16xf32>
    %537 = arith.addf %536, %535 : vector<16x16xf32>
    %538 = vector.extract_strided_slice %537 {offsets = [0, 0], sizes = [16, 12], strides = [1, 1]} : vector<16x16xf32> to vector<16x12xf32>
    %539 = arith.negf %538 : vector<16x12xf32>
    %540 = math.exp %539 : vector<16x12xf32>
    %cst_178 = arith.constant 1.000000e+00 : f32
    %541 = vector.broadcast %cst_178 : f32 to vector<16x12xf32>
    %542 = arith.addf %541, %540 : vector<16x12xf32>
    %543 = arith.divf %541, %542 : vector<16x12xf32>
    %544 = vector.extract_strided_slice %543 {offsets = [0, 0], sizes = [16, 4], strides = [1, 1]} : vector<16x12xf32> to vector<16x4xf32>
    %545 = vector.extract_strided_slice %543 {offsets = [0, 4], sizes = [16, 4], strides = [1, 1]} : vector<16x12xf32> to vector<16x4xf32>
    %546 = vector.extract_strided_slice %543 {offsets = [0, 8], sizes = [16, 4], strides = [1, 1]} : vector<16x12xf32> to vector<16x4xf32>
    %547 = vector.extract_strided_slice %537 {offsets = [0, 12], sizes = [16, 4], strides = [1, 1]} : vector<16x16xf32> to vector<16x4xf32>
    %548 = math.tanh %547 : vector<16x4xf32>
    %549 = arith.mulf %545, %514 : vector<16x4xf32>
    %550 = arith.mulf %546, %548 : vector<16x4xf32>
    %551 = arith.addf %549, %550 : vector<16x4xf32>
    %552 = math.tanh %551 : vector<16x4xf32>
    %553 = arith.mulf %544, %552 : vector<16x4xf32>
    %c192_179 = arith.constant 192 : index
    %c0_180 = arith.constant 0 : index
    %554 = vector.load %arg13[%c192_179, %c0_180] : memref<256x4xf32, #tpu.memory_space<vmem>>, vector<16x4xf32>
    tpu.vector_store %arg13[%c192_179, %c0_180], %553 {strides = array<i32>} : memref<256x4xf32, #tpu.memory_space<vmem>>, vector<16x4xf32>,
    %c1_i32_181 = arith.constant 1 : i32
    %555 = tpu.dynamic_rotate %553 by %c1_i32_181 dim 0 : vector<16x4xf32>, i32 -> vector<16x4xf32>
    %cst_182 = arith.constant 0.000000e+00 : f32
    %556 = vector.shape_cast %69 : vector<16x1xi1> to vector<16x1xi1>
    %557 = vector.broadcast %556 : vector<16x1xi1> to vector<16x4xi1>
    %558 = vector.broadcast %cst_182 : f32 to vector<16x4xf32>
    %559 = arith.select %557, %558, %555 : vector<16x4xi1>, vector<16x4xf32>
    %c15_i32_183 = arith.constant 15 : i32
    %560 = tpu.dynamic_rotate %553 by %c15_i32_183 dim 0 : vector<16x4xf32>, i32 -> vector<16x4xf32>
    %cst_184 = arith.constant 0.000000e+00 : f32
    %561 = vector.shape_cast %71 : vector<16x1xi1> to vector<16x1xi1>
    %562 = vector.broadcast %561 : vector<16x1xi1> to vector<16x4xi1>
    %563 = vector.broadcast %cst_184 : f32 to vector<16x4xf32>
    %564 = arith.select %562, %563, %560 : vector<16x4xi1>, vector<16x4xf32>
    %565 = arith.truncf %559 : vector<16x4xf32> to vector<16x4xbf16>
    %cst_185 = arith.constant dense<0.000000e+00> : vector<16x16xf32>
    %566 = tpu.matmul %565, %48, %cst_185 {dimension_numbers = #tpu.dot_dimension_numbers<[1], [0], [0], [1], [0, 0, 1, 1], [], []>} : vector<16x4xbf16>, vector<4x16xbf16>, vector<16x16xf32> -> vector<16x16xf32>
    %567 = arith.truncf %553 : vector<16x4xf32> to vector<16x4xbf16>
    %cst_186 = arith.constant dense<0.000000e+00> : vector<16x16xf32>
    %568 = tpu.matmul %567, %49, %cst_186 {dimension_numbers = #tpu.dot_dimension_numbers<[1], [0], [0], [1], [0, 0, 1, 1], [], []>} : vector<16x4xbf16>, vector<4x16xbf16>, vector<16x16xf32> -> vector<16x16xf32>
    %569 = arith.addf %566, %568 : vector<16x16xf32>
    %570 = arith.truncf %564 : vector<16x4xf32> to vector<16x4xbf16>
    %cst_187 = arith.constant dense<0.000000e+00> : vector<16x16xf32>
    %571 = tpu.matmul %570, %50, %cst_187 {dimension_numbers = #tpu.dot_dimension_numbers<[1], [0], [0], [1], [0, 0, 1, 1], [], []>} : vector<16x4xbf16>, vector<4x16xbf16>, vector<16x16xf32> -> vector<16x16xf32>
    %572 = arith.addf %569, %571 : vector<16x16xf32>
    %c208 = arith.constant 208 : index
    %c0_188 = arith.constant 0 : index
    %573 = vector.load %arg12[%c208, %c0_188] : memref<256x16xf32, #tpu.memory_space<vmem>>, vector<16x16xf32>
    %574 = arith.addf %573, %572 : vector<16x16xf32>
    %575 = vector.extract_strided_slice %574 {offsets = [0, 0], sizes = [16, 12], strides = [1, 1]} : vector<16x16xf32> to vector<16x12xf32>
    %576 = arith.negf %575 : vector<16x12xf32>
    %577 = math.exp %576 : vector<16x12xf32>
    %cst_189 = arith.constant 1.000000e+00 : f32
    %578 = vector.broadcast %cst_189 : f32 to vector<16x12xf32>
    %579 = arith.addf %578, %577 : vector<16x12xf32>
    %580 = arith.divf %578, %579 : vector<16x12xf32>
    %581 = vector.extract_strided_slice %580 {offsets = [0, 0], sizes = [16, 4], strides = [1, 1]} : vector<16x12xf32> to vector<16x4xf32>
    %582 = vector.extract_strided_slice %580 {offsets = [0, 4], sizes = [16, 4], strides = [1, 1]} : vector<16x12xf32> to vector<16x4xf32>
    %583 = vector.extract_strided_slice %580 {offsets = [0, 8], sizes = [16, 4], strides = [1, 1]} : vector<16x12xf32> to vector<16x4xf32>
    %584 = vector.extract_strided_slice %574 {offsets = [0, 12], sizes = [16, 4], strides = [1, 1]} : vector<16x16xf32> to vector<16x4xf32>
    %585 = math.tanh %584 : vector<16x4xf32>
    %586 = arith.mulf %582, %551 : vector<16x4xf32>
    %587 = arith.mulf %583, %585 : vector<16x4xf32>
    %588 = arith.addf %586, %587 : vector<16x4xf32>
    %589 = math.tanh %588 : vector<16x4xf32>
    %590 = arith.mulf %581, %589 : vector<16x4xf32>
    %c208_190 = arith.constant 208 : index
    %c0_191 = arith.constant 0 : index
    %591 = vector.load %arg13[%c208_190, %c0_191] : memref<256x4xf32, #tpu.memory_space<vmem>>, vector<16x4xf32>
    tpu.vector_store %arg13[%c208_190, %c0_191], %590 {strides = array<i32>} : memref<256x4xf32, #tpu.memory_space<vmem>>, vector<16x4xf32>,
    %c1_i32_192 = arith.constant 1 : i32
    %592 = tpu.dynamic_rotate %590 by %c1_i32_192 dim 0 : vector<16x4xf32>, i32 -> vector<16x4xf32>
    %cst_193 = arith.constant 0.000000e+00 : f32
    %593 = vector.shape_cast %69 : vector<16x1xi1> to vector<16x1xi1>
    %594 = vector.broadcast %593 : vector<16x1xi1> to vector<16x4xi1>
    %595 = vector.broadcast %cst_193 : f32 to vector<16x4xf32>
    %596 = arith.select %594, %595, %592 : vector<16x4xi1>, vector<16x4xf32>
    %c15_i32_194 = arith.constant 15 : i32
    %597 = tpu.dynamic_rotate %590 by %c15_i32_194 dim 0 : vector<16x4xf32>, i32 -> vector<16x4xf32>
    %cst_195 = arith.constant 0.000000e+00 : f32
    %598 = vector.shape_cast %71 : vector<16x1xi1> to vector<16x1xi1>
    %599 = vector.broadcast %598 : vector<16x1xi1> to vector<16x4xi1>
    %600 = vector.broadcast %cst_195 : f32 to vector<16x4xf32>
    %601 = arith.select %599, %600, %597 : vector<16x4xi1>, vector<16x4xf32>
    %602 = arith.truncf %596 : vector<16x4xf32> to vector<16x4xbf16>
    %cst_196 = arith.constant dense<0.000000e+00> : vector<16x16xf32>
    %603 = tpu.matmul %602, %48, %cst_196 {dimension_numbers = #tpu.dot_dimension_numbers<[1], [0], [0], [1], [0, 0, 1, 1], [], []>} : vector<16x4xbf16>, vector<4x16xbf16>, vector<16x16xf32> -> vector<16x16xf32>
    %604 = arith.truncf %590 : vector<16x4xf32> to vector<16x4xbf16>
    %cst_197 = arith.constant dense<0.000000e+00> : vector<16x16xf32>
    %605 = tpu.matmul %604, %49, %cst_197 {dimension_numbers = #tpu.dot_dimension_numbers<[1], [0], [0], [1], [0, 0, 1, 1], [], []>} : vector<16x4xbf16>, vector<4x16xbf16>, vector<16x16xf32> -> vector<16x16xf32>
    %606 = arith.addf %603, %605 : vector<16x16xf32>
    %607 = arith.truncf %601 : vector<16x4xf32> to vector<16x4xbf16>
    %cst_198 = arith.constant dense<0.000000e+00> : vector<16x16xf32>
    %608 = tpu.matmul %607, %50, %cst_198 {dimension_numbers = #tpu.dot_dimension_numbers<[1], [0], [0], [1], [0, 0, 1, 1], [], []>} : vector<16x4xbf16>, vector<4x16xbf16>, vector<16x16xf32> -> vector<16x16xf32>
    %609 = arith.addf %606, %608 : vector<16x16xf32>
    %c224 = arith.constant 224 : index
    %c0_199 = arith.constant 0 : index
    %610 = vector.load %arg12[%c224, %c0_199] : memref<256x16xf32, #tpu.memory_space<vmem>>, vector<16x16xf32>
    %611 = arith.addf %610, %609 : vector<16x16xf32>
    %612 = vector.extract_strided_slice %611 {offsets = [0, 0], sizes = [16, 12], strides = [1, 1]} : vector<16x16xf32> to vector<16x12xf32>
    %613 = arith.negf %612 : vector<16x12xf32>
    %614 = math.exp %613 : vector<16x12xf32>
    %cst_200 = arith.constant 1.000000e+00 : f32
    %615 = vector.broadcast %cst_200 : f32 to vector<16x12xf32>
    %616 = arith.addf %615, %614 : vector<16x12xf32>
    %617 = arith.divf %615, %616 : vector<16x12xf32>
    %618 = vector.extract_strided_slice %617 {offsets = [0, 0], sizes = [16, 4], strides = [1, 1]} : vector<16x12xf32> to vector<16x4xf32>
    %619 = vector.extract_strided_slice %617 {offsets = [0, 4], sizes = [16, 4], strides = [1, 1]} : vector<16x12xf32> to vector<16x4xf32>
    %620 = vector.extract_strided_slice %617 {offsets = [0, 8], sizes = [16, 4], strides = [1, 1]} : vector<16x12xf32> to vector<16x4xf32>
    %621 = vector.extract_strided_slice %611 {offsets = [0, 12], sizes = [16, 4], strides = [1, 1]} : vector<16x16xf32> to vector<16x4xf32>
    %622 = math.tanh %621 : vector<16x4xf32>
    %623 = arith.mulf %619, %588 : vector<16x4xf32>
    %624 = arith.mulf %620, %622 : vector<16x4xf32>
    %625 = arith.addf %623, %624 : vector<16x4xf32>
    %626 = math.tanh %625 : vector<16x4xf32>
    %627 = arith.mulf %618, %626 : vector<16x4xf32>
    %c224_201 = arith.constant 224 : index
    %c0_202 = arith.constant 0 : index
    %628 = vector.load %arg13[%c224_201, %c0_202] : memref<256x4xf32, #tpu.memory_space<vmem>>, vector<16x4xf32>
    tpu.vector_store %arg13[%c224_201, %c0_202], %627 {strides = array<i32>} : memref<256x4xf32, #tpu.memory_space<vmem>>, vector<16x4xf32>,
    %c1_i32_203 = arith.constant 1 : i32
    %629 = tpu.dynamic_rotate %627 by %c1_i32_203 dim 0 : vector<16x4xf32>, i32 -> vector<16x4xf32>
    %cst_204 = arith.constant 0.000000e+00 : f32
    %630 = vector.shape_cast %69 : vector<16x1xi1> to vector<16x1xi1>
    %631 = vector.broadcast %630 : vector<16x1xi1> to vector<16x4xi1>
    %632 = vector.broadcast %cst_204 : f32 to vector<16x4xf32>
    %633 = arith.select %631, %632, %629 : vector<16x4xi1>, vector<16x4xf32>
    %c15_i32_205 = arith.constant 15 : i32
    %634 = tpu.dynamic_rotate %627 by %c15_i32_205 dim 0 : vector<16x4xf32>, i32 -> vector<16x4xf32>
    %cst_206 = arith.constant 0.000000e+00 : f32
    %635 = vector.shape_cast %71 : vector<16x1xi1> to vector<16x1xi1>
    %636 = vector.broadcast %635 : vector<16x1xi1> to vector<16x4xi1>
    %637 = vector.broadcast %cst_206 : f32 to vector<16x4xf32>
    %638 = arith.select %636, %637, %634 : vector<16x4xi1>, vector<16x4xf32>
    %639 = arith.truncf %633 : vector<16x4xf32> to vector<16x4xbf16>
    %cst_207 = arith.constant dense<0.000000e+00> : vector<16x16xf32>
    %640 = tpu.matmul %639, %48, %cst_207 {dimension_numbers = #tpu.dot_dimension_numbers<[1], [0], [0], [1], [0, 0, 1, 1], [], []>} : vector<16x4xbf16>, vector<4x16xbf16>, vector<16x16xf32> -> vector<16x16xf32>
    %641 = arith.truncf %627 : vector<16x4xf32> to vector<16x4xbf16>
    %cst_208 = arith.constant dense<0.000000e+00> : vector<16x16xf32>
    %642 = tpu.matmul %641, %49, %cst_208 {dimension_numbers = #tpu.dot_dimension_numbers<[1], [0], [0], [1], [0, 0, 1, 1], [], []>} : vector<16x4xbf16>, vector<4x16xbf16>, vector<16x16xf32> -> vector<16x16xf32>
    %643 = arith.addf %640, %642 : vector<16x16xf32>
    %644 = arith.truncf %638 : vector<16x4xf32> to vector<16x4xbf16>
    %cst_209 = arith.constant dense<0.000000e+00> : vector<16x16xf32>
    %645 = tpu.matmul %644, %50, %cst_209 {dimension_numbers = #tpu.dot_dimension_numbers<[1], [0], [0], [1], [0, 0, 1, 1], [], []>} : vector<16x4xbf16>, vector<4x16xbf16>, vector<16x16xf32> -> vector<16x16xf32>
    %646 = arith.addf %643, %645 : vector<16x16xf32>
    %c240 = arith.constant 240 : index
    %c0_210 = arith.constant 0 : index
    %647 = vector.load %arg12[%c240, %c0_210] : memref<256x16xf32, #tpu.memory_space<vmem>>, vector<16x16xf32>
    %648 = arith.addf %647, %646 : vector<16x16xf32>
    %649 = vector.extract_strided_slice %648 {offsets = [0, 0], sizes = [16, 12], strides = [1, 1]} : vector<16x16xf32> to vector<16x12xf32>
    %650 = arith.negf %649 : vector<16x12xf32>
    %651 = math.exp %650 : vector<16x12xf32>
    %cst_211 = arith.constant 1.000000e+00 : f32
    %652 = vector.broadcast %cst_211 : f32 to vector<16x12xf32>
    %653 = arith.addf %652, %651 : vector<16x12xf32>
    %654 = arith.divf %652, %653 : vector<16x12xf32>
    %655 = vector.extract_strided_slice %654 {offsets = [0, 0], sizes = [16, 4], strides = [1, 1]} : vector<16x12xf32> to vector<16x4xf32>
    %656 = vector.extract_strided_slice %654 {offsets = [0, 4], sizes = [16, 4], strides = [1, 1]} : vector<16x12xf32> to vector<16x4xf32>
    %657 = vector.extract_strided_slice %654 {offsets = [0, 8], sizes = [16, 4], strides = [1, 1]} : vector<16x12xf32> to vector<16x4xf32>
    %658 = vector.extract_strided_slice %648 {offsets = [0, 12], sizes = [16, 4], strides = [1, 1]} : vector<16x16xf32> to vector<16x4xf32>
    %659 = math.tanh %658 : vector<16x4xf32>
    %660 = arith.mulf %656, %625 : vector<16x4xf32>
    %661 = arith.mulf %657, %659 : vector<16x4xf32>
    %662 = arith.addf %660, %661 : vector<16x4xf32>
    %663 = math.tanh %662 : vector<16x4xf32>
    %664 = arith.mulf %655, %663 : vector<16x4xf32>
    %c240_212 = arith.constant 240 : index
    %c0_213 = arith.constant 0 : index
    %665 = vector.load %arg13[%c240_212, %c0_213] : memref<256x4xf32, #tpu.memory_space<vmem>>, vector<16x4xf32>
    tpu.vector_store %arg13[%c240_212, %c0_213], %664 {strides = array<i32>} : memref<256x4xf32, #tpu.memory_space<vmem>>, vector<16x4xf32>,
    %c0_214 = arith.constant 0 : index
    %c0_215 = arith.constant 0 : index
    %666 = vector.load %arg13[%c0_214, %c0_215] : memref<256x4xf32, #tpu.memory_space<vmem>>, vector<256x4xf32>
    %667 = arith.truncf %666 : vector<256x4xf32> to vector<256x4xbf16>
    %c0_216 = arith.constant 0 : index
    %c0_217 = arith.constant 0 : index
    %668 = vector.load %arg9[%c0_216, %c0_217] : memref<4x8xbf16, #tpu.memory_space<vmem>>, vector<4x8xbf16>
    %cst_218 = arith.constant dense<0.000000e+00> : vector<256x8xf32>
    %669 = tpu.matmul %667, %668, %cst_218 {dimension_numbers = #tpu.dot_dimension_numbers<[1], [0], [0], [1], [0, 0, 1, 1], [], []>} : vector<256x4xbf16>, vector<4x8xbf16>, vector<256x8xf32> -> vector<256x8xf32>
    %c0_219 = arith.constant 0 : index
    %c0_220 = arith.constant 0 : index
    %670 = vector.load %arg10[%c0_219, %c0_220] : memref<1x8xf32, #tpu.memory_space<vmem>>, vector<1x8xf32>
    %671 = vector.broadcast %670 : vector<1x8xf32> to vector<256x8xf32>
    %672 = arith.addf %669, %671 : vector<256x8xf32>
    %c0_221 = arith.constant 0 : index
    %c0_222 = arith.constant 0 : index
    %c0_223 = arith.constant 0 : index
    %673 = vector.load %arg1[%c0_221, %c0_222, %c0_223] : memref<16x16x8xf32, #tpu.memory_space<vmem>>, vector<16x16x8xf32>
    %674 = vector.shape_cast %672 : vector<256x8xf32> to vector<16x16x8xf32>
    %675 = arith.addf %673, %674 : vector<16x16x8xf32>
    %c0_224 = arith.constant 0 : index
    %c0_225 = arith.constant 0 : index
    %c0_226 = arith.constant 0 : index
    %676 = vector.load %arg11[%c0_224, %c0_225, %c0_226] : memref<16x16x8xf32, #tpu.memory_space<vmem>>, vector<16x16x8xf32>
    tpu.vector_store %arg11[%c0_224, %c0_225, %c0_226], %675 {strides = array<i32>} : memref<16x16x8xf32, #tpu.memory_space<vmem>>, vector<16x16x8xf32>,
    return
  }
  func.func @transform_0(%arg0: i32) -> (i32, i32, i32) {
    %c0_i32 = arith.constant 0 : i32
    %c0_i32_0 = arith.constant 0 : i32
    %c0_i32_1 = arith.constant 0 : i32
    return %c0_i32, %arg0, %c0_i32_0 : i32, i32, i32
  }
  func.func @transform_1(%arg0: i32) -> (i32, i32) {
    %c0_i32 = arith.constant 0 : i32
    %c0_i32_0 = arith.constant 0 : i32
    %c0_i32_1 = arith.constant 0 : i32
    return %c0_i32, %c0_i32_0 : i32, i32
  }
  func.func @transform_2(%arg0: i32) -> (i32, i32) {
    %c0_i32 = arith.constant 0 : i32
    %c0_i32_0 = arith.constant 0 : i32
    %c0_i32_1 = arith.constant 0 : i32
    return %c0_i32, %c0_i32_0 : i32, i32
  }
  func.func @transform_3(%arg0: i32) -> (i32, i32) {
    %c0_i32 = arith.constant 0 : i32
    %c0_i32_0 = arith.constant 0 : i32
    %c0_i32_1 = arith.constant 0 : i32
    return %c0_i32, %c0_i32_0 : i32, i32
  }
  func.func @transform_4(%arg0: i32) -> (i32, i32) {
    %c0_i32 = arith.constant 0 : i32
    %c0_i32_0 = arith.constant 0 : i32
    %c0_i32_1 = arith.constant 0 : i32
    return %c0_i32, %c0_i32_0 : i32, i32
  }
  func.func @transform_5(%arg0: i32) -> (i32, i32) {
    %c0_i32 = arith.constant 0 : i32
    %c0_i32_0 = arith.constant 0 : i32
    %c0_i32_1 = arith.constant 0 : i32
    return %c0_i32, %c0_i32_0 : i32, i32
  }
  func.func @transform_6(%arg0: i32) -> (i32, i32) {
    %c0_i32 = arith.constant 0 : i32
    %c0_i32_0 = arith.constant 0 : i32
    %c0_i32_1 = arith.constant 0 : i32
    return %c0_i32, %c0_i32_0 : i32, i32
  }
  func.func @transform_7(%arg0: i32) -> (i32, i32) {
    %c0_i32 = arith.constant 0 : i32
    %c0_i32_0 = arith.constant 0 : i32
    %c0_i32_1 = arith.constant 0 : i32
    return %c0_i32, %c0_i32_0 : i32, i32
  }
  func.func @transform_8(%arg0: i32) -> (i32, i32) {
    %c0_i32 = arith.constant 0 : i32
    %c0_i32_0 = arith.constant 0 : i32
    %c0_i32_1 = arith.constant 0 : i32
    return %c0_i32, %c0_i32_0 : i32, i32
  }
  func.func @transform_9(%arg0: i32) -> (i32, i32) {
    %c0_i32 = arith.constant 0 : i32
    %c0_i32_0 = arith.constant 0 : i32
    %c0_i32_1 = arith.constant 0 : i32
    return %c0_i32, %c0_i32_0 : i32, i32
  }
  func.func @transform_10(%arg0: i32) -> (i32, i32, i32) {
    %c0_i32 = arith.constant 0 : i32
    %c0_i32_0 = arith.constant 0 : i32
    %c0_i32_1 = arith.constant 0 : i32
    return %c0_i32, %arg0, %c0_i32_0 : i32, i32, i32
  }
}

</mosaic_0001>

<llo_original>
// kernel: tpu_custom_call.1
$region0: #{tpu_custom_call.1}
  #allocation0 [shape = 'u32[]', space=smem, size = 0x4, offset = 0x4, fixed_abs, tag = 'smem constant byte address 0x4 - core index']
  #allocation1 [shape = 'u32[144,128]{1,0:T(1,128)}', space=vmem, size = 0x12000, scoped, tag = 'internal scratch']
  #allocation2 [shape = 'f32[256,16]{1,0:T(8,128)}', space=vmem, size = 0x20000, scoped, tag = 'scratch operand']
  #allocation3 [shape = 'f32[256,4]{1,0:T(8,128)}', space=vmem, size = 0x20000, scoped, tag = 'scratch operand']
  %s0 = inlined_call_operand.vmem [shape: f32[16,32,8], index: 0, kind: input, shape index: {}]
  %s1 = inlined_call_operand.vmem [shape: bf16[8,16], index: 1, kind: input, shape index: {}]
  %s2 = inlined_call_operand.vmem [shape: bf16[8,16], index: 2, kind: input, shape index: {}]
  %s3 = inlined_call_operand.vmem [shape: bf16[8,16], index: 3, kind: input, shape index: {}]
  %s4 = inlined_call_operand.vmem [shape: f32[1,16], index: 4, kind: input, shape index: {}]
  %s5 = inlined_call_operand.vmem [shape: bf16[4,16], index: 5, kind: input, shape index: {}]
  %s6 = inlined_call_operand.vmem [shape: bf16[4,16], index: 6, kind: input, shape index: {}]
  %s7 = inlined_call_operand.vmem [shape: bf16[4,16], index: 7, kind: input, shape index: {}]
  %s8 = inlined_call_operand.vmem [shape: bf16[4,8], index: 8, kind: input, shape index: {}]
  %s9 = inlined_call_operand.vmem [shape: f32[1,8], index: 9, kind: input, shape index: {}]
  %s10 = inlined_call_operand.vmem [shape: f32[16,32,8], index: 10, kind: output, shape index: {}]
  %s11 = sld [smem:[#allocation0]]
  $region145: #{tpu_custom_call.1} parent=0
    _
  %s13 = ssub.s32 1, %s11
  %s14 = scalar_select 0, %s13, %s11
  $region1: #{tpu_custom_call.1} parent=0
    #allocation4 [shape = 'u8[262144]{0}', space=vmem, size = 0x40000, scoped, tag = 'input window, operand 0']
    #allocation5 [shape = 'u8[262144]{0}', space=vmem, size = 0x40000, scoped, tag = 'output window, operand 0']
    loop: start=0, step=1, limit=4
    $region2: #{tpu_custom_call.1} parent=1 // loop_pre_header
      _
    $region3: #{tpu_custom_call.1} parent=1 // loop_header
      %s16 = sphi 0, %s20
      %p17 = scmp.ge.s32.totalorder %s16, 4
      %s26 = sphi 0, %s28
      %s29 = sphi 0, %s26
      %s30 = sphi 0, %s29
      %s46 = sphi 0, %s30
      %s50 = sphi 0, %s50
      %s52 = sphi 0, %s50
      %s53 = sphi 0, %s52
      %s67 = sphi 0, %s53
      %s71 = sphi 0, %s71
      %s73 = sphi 0, %s71
      %s74 = sphi 0, %s73
      %s88 = sphi 0, %s74
      %s92 = sphi 0, %s92
      %s94 = sphi 0, %s92
      %s95 = sphi 0, %s94
      %s109 = sphi 0, %s95
      %s113 = sphi 0, %s113
      %s115 = sphi 0, %s113
      %s116 = sphi 0, %s115
      %s130 = sphi 0, %s116
      %s134 = sphi 0, %s134
      %s136 = sphi 0, %s134
      %s137 = sphi 0, %s136
      %s151 = sphi 0, %s137
      %s155 = sphi 0, %s155
      %s157 = sphi 0, %s155
      %s158 = sphi 0, %s157
      %s172 = sphi 0, %s158
      %s176 = sphi 0, %s176
      %s178 = sphi 0, %s176
      %s179 = sphi 0, %s178
      %s193 = sphi 0, %s179
      %s197 = sphi 0, %s197
      %s199 = sphi 0, %s197
      %s200 = sphi 0, %s199
      %s214 = sphi 0, %s200
      %s218 = sphi 0, %s218
      %s220 = sphi 0, %s218
      %s221 = sphi 0, %s220
      %s235 = sphi 0, %s221
      %s241 = sphi 0, %s243
      %s244 = sphi 0, %s241
      %s245 = sphi 0, %s244
      %s261 = sphi 0, %s245
    $region4: #{tpu_custom_call.1} parent=1 // loop_header_branch
      %19 = sbr.rel (%p17) target = $region8
    $region5: #{tpu_custom_call.1} parent=1 // loop_body
      %s21 = ssub.s32 %s16, 1
      %s22 = ssub.s32 %s16, 2
      %s23 = sadd.s32 %s16, 1
      %s24 = ssub.s32 %s16, %s23
      %p25 = scmp.eq.s32.totalorder %s24, 0
      %s27 = sadd.s32 %s26, 1
      %s28 = scalar_select %p25, %s26, %s27
      %p31 = pneg %p25
      %p32 = scmp.eq.s32.totalorder %s16, 1
      %p33 = por %p31, %p32
      %p34 = scmp.ne.s32.totalorder %s26, %s29
      %p35 = scmp.eq.s32.totalorder %s16, 0
      %p36 = por %p34, %p35
      %p37 = scmp.ne.s32.totalorder %s26, %s29
      %p38 = scmp.eq.s32.totalorder %s21, 1
      %p39 = por %p37, %p38
      %p40 = scmp.ne.s32.totalorder %s29, %s30
      %p41 = scmp.eq.s32.totalorder %s21, 0
      %p42 = por %p40, %p41
      %p43 = scmp.ne.s32.totalorder %s29, %s30
      %p44 = scmp.eq.s32.totalorder %s22, 1
      %p45 = por %p43, %p44
      %p47 = scmp.ne.s32.totalorder %s30, %s46
      %p48 = scmp.eq.s32.totalorder %s22, 0
      %p49 = por %p47, %p48
      %s51 = sadd.s32 %s50, 1
      %p54 = scmp.eq.s32.totalorder %s16, 1
      %p55 = scmp.ne.s32.totalorder %s50, %s52
      %p56 = scmp.eq.s32.totalorder %s16, 0
      %p57 = por %p55, %p56
      %p58 = scmp.ne.s32.totalorder %s50, %s52
      %p59 = scmp.eq.s32.totalorder %s21, 1
      %p60 = por %p58, %p59
      %p61 = scmp.ne.s32.totalorder %s52, %s53
      %p62 = scmp.eq.s32.totalorder %s21, 0
      %p63 = por %p61, %p62
      %p64 = scmp.ne.s32.totalorder %s52, %s53
      %p65 = scmp.eq.s32.totalorder %s22, 1
      %p66 = por %p64, %p65
      %p68 = scmp.ne.s32.totalorder %s53, %s67
      %p69 = scmp.eq.s32.totalorder %s22, 0
      %p70 = por %p68, %p69
      %s72 = sadd.s32 %s71, 1
      %p75 = scmp.eq.s32.totalorder %s16, 1
      %p76 = scmp.ne.s32.totalorder %s71, %s73
      %p77 = scmp.eq.s32.totalorder %s16, 0
      %p78 = por %p76, %p77
      %p79 = scmp.ne.s32.totalorder %s71, %s73
      %p80 = scmp.eq.s32.totalorder %s21, 1
      %p81 = por %p79, %p80
      %p82 = scmp.ne.s32.totalorder %s73, %s74
      %p83 = scmp.eq.s32.totalorder %s21, 0
      %p84 = por %p82, %p83
      %p85 = scmp.ne.s32.totalorder %s73, %s74
      %p86 = scmp.eq.s32.totalorder %s22, 1
      %p87 = por %p85, %p86
      %p89 = scmp.ne.s32.totalorder %s74, %s88
      %p90 = scmp.eq.s32.totalorder %s22, 0
      %p91 = por %p89, %p90
      %s93 = sadd.s32 %s92, 1
      %p96 = scmp.eq.s32.totalorder %s16, 1
      %p97 = scmp.ne.s32.totalorder %s92, %s94
      %p98 = scmp.eq.s32.totalorder %s16, 0
      %p99 = por %p97, %p98
      %p100 = scmp.ne.s32.totalorder %s92, %s94
      %p101 = scmp.eq.s32.totalorder %s21, 1
      %p102 = por %p100, %p101
      %p103 = scmp.ne.s32.totalorder %s94, %s95
      %p104 = scmp.eq.s32.totalorder %s21, 0
      %p105 = por %p103, %p104
      %p106 = scmp.ne.s32.totalorder %s94, %s95
      %p107 = scmp.eq.s32.totalorder %s22, 1
      %p108 = por %p106, %p107
      %p110 = scmp.ne.s32.totalorder %s95, %s109
      %p111 = scmp.eq.s32.totalorder %s22, 0
      %p112 = por %p110, %p111
      %s114 = sadd.s32 %s113, 1
      %p117 = scmp.eq.s32.totalorder %s16, 1
      %p118 = scmp.ne.s32.totalorder %s113, %s115
      %p119 = scmp.eq.s32.totalorder %s16, 0
      %p120 = por %p118, %p119
      %p121 = scmp.ne.s32.totalorder %s113, %s115
      %p122 = scmp.eq.s32.totalorder %s21, 1
      %p123 = por %p121, %p122
      %p124 = scmp.ne.s32.totalorder %s115, %s116
      %p125 = scmp.eq.s32.totalorder %s21, 0
      %p126 = por %p124, %p125
      %p127 = scmp.ne.s32.totalorder %s115, %s116
      %p128 = scmp.eq.s32.totalorder %s22, 1
      %p129 = por %p127, %p128
      %p131 = scmp.ne.s32.totalorder %s116, %s130
      %p132 = scmp.eq.s32.totalorder %s22, 0
      %p133 = por %p131, %p132
      %s135 = sadd.s32 %s134, 1
      %p138 = scmp.eq.s32.totalorder %s16, 1
      %p139 = scmp.ne.s32.totalorder %s134, %s136
      %p140 = scmp.eq.s32.totalorder %s16, 0
      %p141 = por %p139, %p140
      %p142 = scmp.ne.s32.totalorder %s134, %s136
      %p143 = scmp.eq.s32.totalorder %s21, 1
      %p144 = por %p142, %p143
      %p145 = scmp.ne.s32.totalorder %s136, %s137
      %p146 = scmp.eq.s32.totalorder %s21, 0
      %p147 = por %p145, %p146
      %p148 = scmp.ne.s32.totalorder %s136, %s137
      %p149 = scmp.eq.s32.totalorder %s22, 1
      %p150 = por %p148, %p149
      %p152 = scmp.ne.s32.totalorder %s137, %s151
      %p153 = scmp.eq.s32.totalorder %s22, 0
      %p154 = por %p152, %p153
      %s156 = sadd.s32 %s155, 1
      %p159 = scmp.eq.s32.totalorder %s16, 1
      %p160 = scmp.ne.s32.totalorder %s155, %s157
      %p161 = scmp.eq.s32.totalorder %s16, 0
      %p162 = por %p160, %p161
      %p163 = scmp.ne.s32.totalorder %s155, %s157
      %p164 = scmp.eq.s32.totalorder %s21, 1
      %p165 = por %p163, %p164
      %p166 = scmp.ne.s32.totalorder %s157, %s158
      %p167 = scmp.eq.s32.totalorder %s21, 0
      %p168 = por %p166, %p167
      %p169 = scmp.ne.s32.totalorder %s157, %s158
      %p170 = scmp.eq.s32.totalorder %s22, 1
      %p171 = por %p169, %p170
      %p173 = scmp.ne.s32.totalorder %s158, %s172
      %p174 = scmp.eq.s32.totalorder %s22, 0
      %p175 = por %p173, %p174
      %s177 = sadd.s32 %s176, 1
      %p180 = scmp.eq.s32.totalorder %s16, 1
      %p181 = scmp.ne.s32.totalorder %s176, %s178
      %p182 = scmp.eq.s32.totalorder %s16, 0
      %p183 = por %p181, %p182
      %p184 = scmp.ne.s32.totalorder %s176, %s178
      %p185 = scmp.eq.s32.totalorder %s21, 1
      %p186 = por %p184, %p185
      %p187 = scmp.ne.s32.totalorder %s178, %s179
      %p188 = scmp.eq.s32.totalorder %s21, 0
      %p189 = por %p187, %p188
      %p190 = scmp.ne.s32.totalorder %s178, %s179
      %p191 = scmp.eq.s32.totalorder %s22, 1
      %p192 = por %p190, %p191
      %p194 = scmp.ne.s32.totalorder %s179, %s193
      %p195 = scmp.eq.s32.totalorder %s22, 0
      %p196 = por %p194, %p195
      %s198 = sadd.s32 %s197, 1
      %p201 = scmp.eq.s32.totalorder %s16, 1
      %p202 = scmp.ne.s32.totalorder %s197, %s199
      %p203 = scmp.eq.s32.totalorder %s16, 0
      %p204 = por %p202, %p203
      %p205 = scmp.ne.s32.totalorder %s197, %s199
      %p206 = scmp.eq.s32.totalorder %s21, 1
      %p207 = por %p205, %p206
      %p208 = scmp.ne.s32.totalorder %s199, %s200
      %p209 = scmp.eq.s32.totalorder %s21, 0
      %p210 = por %p208, %p209
      %p211 = scmp.ne.s32.totalorder %s199, %s200
      %p212 = scmp.eq.s32.totalorder %s22, 1
      %p213 = por %p211, %p212
      %p215 = scmp.ne.s32.totalorder %s200, %s214
      %p216 = scmp.eq.s32.totalorder %s22, 0
      %p217 = por %p215, %p216
      %s219 = sadd.s32 %s218, 1
      %p222 = scmp.eq.s32.totalorder %s16, 1
      %p223 = scmp.ne.s32.totalorder %s218, %s220
      %p224 = scmp.eq.s32.totalorder %s16, 0
      %p225 = por %p223, %p224
      %p226 = scmp.ne.s32.totalorder %s218, %s220
      %p227 = scmp.eq.s32.totalorder %s21, 1
      %p228 = por %p226, %p227
      %p229 = scmp.ne.s32.totalorder %s220, %s221
      %p230 = scmp.eq.s32.totalorder %s21, 0
      %p231 = por %p229, %p230
      %p232 = scmp.ne.s32.totalorder %s220, %s221
      %p233 = scmp.eq.s32.totalorder %s22, 1
      %p234 = por %p232, %p233
      %p236 = scmp.ne.s32.totalorder %s221, %s235
      %p237 = scmp.eq.s32.totalorder %s22, 0
      %p238 = por %p236, %p237
      %s239 = ssub.s32 %s16, %s23
      %p240 = scmp.eq.s32.totalorder %s239, 0
      %s242 = sadd.s32 %s241, 1
      %s243 = scalar_select %p240, %s241, %s242
      %p246 = pneg %p240
      %p247 = scmp.eq.s32.totalorder %s16, 1
      %p248 = por %p246, %p247
      %p249 = scmp.ne.s32.totalorder %s241, %s244
      %p250 = scmp.eq.s32.totalorder %s16, 0
      %p251 = por %p249, %p250
      %p252 = scmp.ne.s32.totalorder %s241, %s244
      %p253 = scmp.eq.s32.totalorder %s21, 1
      %p254 = por %p252, %p253
      %p255 = scmp.ne.s32.totalorder %s244, %s245
      %p256 = scmp.eq.s32.totalorder %s21, 0
      %p257 = por %p255, %p256
      %p258 = scmp.ne.s32.totalorder %s244, %s245
      %p259 = scmp.eq.s32.totalorder %s22, 1
      %p260 = por %p258, %p259
      %p262 = scmp.ne.s32.totalorder %s245, %s261
      %p263 = scmp.eq.s32.totalorder %s22, 0
      %p264 = por %p262, %p263
      %p265 = scmp.le.s32.totalorder 1, %s16
      %p266 = scmp.lt.s32.totalorder %s16, 3
      %p267 = pnand %p265, %p266
      %p268 = pneg %p267
      // Predicated region
      $region9: #{tpu_custom_call.1} parent=5 // pred_check
        _
      $region10: #{tpu_custom_call.1} parent=5 // pred_check_branch
        %270 = sbr.rel (%p267) target = $region12
      $region11: #{tpu_custom_call.1} parent=5 // pred_region
        %s271 = ssub.s32 %s16, 1
        // Predicated region
        $region13: #{tpu_custom_call.1} parent=11 // pred_check
          %p272 = pneg %p63
        $region14: #{tpu_custom_call.1} parent=11 // pred_check_branch
          %274 = sbr.rel (%p272) target = $region16
        $region15: #{tpu_custom_call.1} parent=11 // pred_region
          _
        $region16: #{tpu_custom_call.1} parent=11 // pred_fallthru
          _
        // Predicated region
        $region17: #{tpu_custom_call.1} parent=11 // pred_check
          %p275 = pneg %p84
        $region18: #{tpu_custom_call.1} parent=11 // pred_check_branch
          %277 = sbr.rel (%p275) target = $region20
        $region19: #{tpu_custom_call.1} parent=11 // pred_region
          _
        $region20: #{tpu_custom_call.1} parent=11 // pred_fallthru
          _
        // Predicated region
        $region21: #{tpu_custom_call.1} parent=11 // pred_check
          %p278 = pneg %p105
        $region22: #{tpu_custom_call.1} parent=11 // pred_check_branch
          %280 = sbr.rel (%p278) target = $region24
        $region23: #{tpu_custom_call.1} parent=11 // pred_region
          _
        $region24: #{tpu_custom_call.1} parent=11 // pred_fallthru
          _
        // Predicated region
        $region25: #{tpu_custom_call.1} parent=11 // pred_check
          %p281 = pneg %p126
        $region26: #{tpu_custom_call.1} parent=11 // pred_check_branch
          %283 = sbr.rel (%p281) target = $region28
        $region27: #{tpu_custom_call.1} parent=11 // pred_region
          _
        $region28: #{tpu_custom_call.1} parent=11 // pred_fallthru
          _
        // Predicated region
        $region29: #{tpu_custom_call.1} parent=11 // pred_check
          %p284 = pneg %p147
        $region30: #{tpu_custom_call.1} parent=11 // pred_check_branch
          %286 = sbr.rel (%p284) target = $region32
        $region31: #{tpu_custom_call.1} parent=11 // pred_region
          _
        $region32: #{tpu_custom_call.1} parent=11 // pred_fallthru
          _
        // Predicated region
        $region33: #{tpu_custom_call.1} parent=11 // pred_check
          %p287 = pneg %p168
        $region34: #{tpu_custom_call.1} parent=11 // pred_check_branch
          %289 = sbr.rel (%p287) target = $region36
        $region35: #{tpu_custom_call.1} parent=11 // pred_region
          _
        $region36: #{tpu_custom_call.1} parent=11 // pred_fallthru
          _
        // Predicated region
        $region37: #{tpu_custom_call.1} parent=11 // pred_check
          %p290 = pneg %p189
        $region38: #{tpu_custom_call.1} parent=11 // pred_check_branch
          %292 = sbr.rel (%p290) target = $region40
        $region39: #{tpu_custom_call.1} parent=11 // pred_region
          _
        $region40: #{tpu_custom_call.1} parent=11 // pred_fallthru
          _
        // Predicated region
        $region41: #{tpu_custom_call.1} parent=11 // pred_check
          %p293 = pneg %p210
        $region42: #{tpu_custom_call.1} parent=11 // pred_check_branch
          %295 = sbr.rel (%p293) target = $region44
        $region43: #{tpu_custom_call.1} parent=11 // pred_region
          _
        $region44: #{tpu_custom_call.1} parent=11 // pred_fallthru
          _
        // Predicated region
        $region45: #{tpu_custom_call.1} parent=11 // pred_check
          %p296 = pneg %p231
        $region46: #{tpu_custom_call.1} parent=11 // pred_check_branch
          %298 = sbr.rel (%p296) target = $region48
        $region47: #{tpu_custom_call.1} parent=11 // pred_region
          _
        $region48: #{tpu_custom_call.1} parent=11 // pred_fallthru
          _
      $region12: #{tpu_custom_call.1} parent=5 // pred_fallthru
        _
      %p299 = scmp.lt.s32.totalorder %s16, 2
      // Predicated region
      $region49: #{tpu_custom_call.1} parent=5 // pred_check
        %p300 = pneg %p299
      $region50: #{tpu_custom_call.1} parent=5 // pred_check_branch
        %302 = sbr.rel (%p300) target = $region52
      $region51: #{tpu_custom_call.1} parent=5 // pred_region
        // Predicated region
        $region53: #{tpu_custom_call.1} parent=51 // pred_check
          %p303 = pneg %p36
        $region54: #{tpu_custom_call.1} parent=51 // pred_check_branch
          %305 = sbr.rel (%p303) target = $region56
        $region55: #{tpu_custom_call.1} parent=51 // pred_region
          %s306 = sand.u32 %s26, 1
          %s307 = sand.u32 %s26, 1
          %s308 = smul.addr %s307, 256
          %s309 = scalar_lea.vmem [#allocation4], %s308
          %s310 = smul.u32 2, %s16
          %s311 = smul.addr %s310, 8
          %s312 = scalar_lea.vmem %s0, %s311
          // Predicated region
          $region57: #{tpu_custom_call.1} parent=55 // pred_check
            _
          $region58: #{tpu_custom_call.1} parent=55 // pred_check_branch
            %314 = sbr.rel (0) target = $region60
          $region59: #{tpu_custom_call.1} parent=55 // pred_region
            // Predicated region
            $region61: #{tpu_custom_call.1} parent=59 // pred_check
              _
            $region62: #{tpu_custom_call.1} parent=59 // pred_check_branch
              %316 = sbr.rel (0) target = $region64
            $region63: #{tpu_custom_call.1} parent=59 // pred_region
              // Predicated region
              $region76: #{tpu_custom_call.1} parent=63 // pred_check
                _
              $region77: #{tpu_custom_call.1} parent=63 // pred_check_branch
                %394 = sbr.rel (0) target = $region79
              $region78: #{tpu_custom_call.1} parent=63 // pred_region
                loop: start=0, step=1, limit=1
                $region80: #{tpu_custom_call.1} parent=78 // loop_pre_header
                  _
                $region81: #{tpu_custom_call.1} parent=78 // loop_header
                  %s396 = sphi 0, %s400
                  %p397 = scmp.ge.s32.totalorder %s396, 1
                  %s401 = sphi %s312, %s312
                  %s402 = sphi %s309, %s309
                $region82: #{tpu_custom_call.1} parent=78 // loop_header_branch
                  %399 = sbr.rel (%p397) target = $region86
                $region83: #{tpu_custom_call.1} parent=78 // loop_body
                  %v403 = vld [vmem:[%s401] sm:$0xff]
                  %404 = vst [vmem:[%s402] sm:$0xff] %v403
                  %v405 = vld [vmem:[%s401 + $0x8] sm:$0xff]
                  %406 = vst [vmem:[%s402 + $0x8] sm:$0xff] %v405
                  %v407 = vld [vmem:[%s401 + $0x20] sm:$0xff]
                  %408 = vst [vmem:[%s402 + $0x10] sm:$0xff] %v407
                  %v409 = vld [vmem:[%s401 + $0x28] sm:$0xff]
                  %410 = vst [vmem:[%s402 + $0x18] sm:$0xff] %v409
                  %v411 = vld [vmem:[%s401 + $0x40] sm:$0xff]
                  %412 = vst [vmem:[%s402 + $0x20] sm:$0xff] %v411
                  %v413 = vld [vmem:[%s401 + $0x48] sm:$0xff]
                  %414 = vst [vmem:[%s402 + $0x28] sm:$0xff] %v413
                  %v415 = vld [vmem:[%s401 + $0x60] sm:$0xff]
                  %416 = vst [vmem:[%s402 + $0x30] sm:$0xff] %v415
                  %v417 = vld [vmem:[%s401 + $0x68] sm:$0xff]
                  %418 = vst [vmem:[%s402 + $0x38] sm:$0xff] %v417
                  %v419 = vld [vmem:[%s401 + $0x80] sm:$0xff]
                  %420 = vst [vmem:[%s402 + $0x40] sm:$0xff] %v419
                  %v421 = vld [vmem:[%s401 + $0x88] sm:$0xff]
                  %422 = vst [vmem:[%s402 + $0x48] sm:$0xff] %v421
                  %v423 = vld [vmem:[%s401 + $0xa0] sm:$0xff]
                  %424 = vst [vmem:[%s402 + $0x50] sm:$0xff] %v423
                  %v425 = vld [vmem:[%s401 + $0xa8] sm:$0xff]
                  %426 = vst [vmem:[%s402 + $0x58] sm:$0xff] %v425
                  %v427 = vld [vmem:[%s401 + $0xc0] sm:$0xff]
                  %428 = vst [vmem:[%s402 + $0x60] sm:$0xff] %v427
                  %v429 = vld [vmem:[%s401 + $0xc8] sm:$0xff]
                  %430 = vst [vmem:[%s402 + $0x68] sm:$0xff] %v429
                  %v431 = vld [vmem:[%s401 + $0xe0] sm:$0xff]
                  %432 = vst [vmem:[%s402 + $0x70] sm:$0xff] %v431
                  %v433 = vld [vmem:[%s401 + $0xe8] sm:$0xff]
                  %434 = vst [vmem:[%s402 + $0x78] sm:$0xff] %v433
                  %v435 = vld [vmem:[%s401 + $0x100] sm:$0xff]
                  %436 = vst [vmem:[%s402 + $0x80] sm:$0xff] %v435
                  %v437 = vld [vmem:[%s401 + $0x108] sm:$0xff]
                  %438 = vst [vmem:[%s402 + $0x88] sm:$0xff] %v437
                  %v439 = vld [vmem:[%s401 + $0x120] sm:$0xff]
                  %440 = vst [vmem:[%s402 + $0x90] sm:$0xff] %v439
                  %v441 = vld [vmem:[%s401 + $0x128] sm:$0xff]
                  %442 = vst [vmem:[%s402 + $0x98] sm:$0xff] %v441
                  %v443 = vld [vmem:[%s401 + $0x140] sm:$0xff]
                  %444 = vst [vmem:[%s402 + $0xa0] sm:$0xff] %v443
                  %v445 = vld [vmem:[%s401 + $0x148] sm:$0xff]
                  %446 = vst [vmem:[%s402 + $0xa8] sm:$0xff] %v445
                  %v447 = vld [vmem:[%s401 + $0x160] sm:$0xff]
                  %448 = vst [vmem:[%s402 + $0xb0] sm:$0xff] %v447
                  %v449 = vld [vmem:[%s401 + $0x168] sm:$0xff]
                  %450 = vst [vmem:[%s402 + $0xb8] sm:$0xff] %v449
                  %v451 = vld [vmem:[%s401 + $0x180] sm:$0xff]
                  %452 = vst [vmem:[%s402 + $0xc0] sm:$0xff] %v451
                  %v453 = vld [vmem:[%s401 + $0x188] sm:$0xff]
                  %454 = vst [vmem:[%s402 + $0xc8] sm:$0xff] %v453
                  %v455 = vld [vmem:[%s401 + $0x1a0] sm:$0xff]
                  %456 = vst [vmem:[%s402 + $0xd0] sm:$0xff] %v455
                  %v457 = vld [vmem:[%s401 + $0x1a8] sm:$0xff]
                  %458 = vst [vmem:[%s402 + $0xd8] sm:$0xff] %v457
                  %v459 = vld [vmem:[%s401 + $0x1c0] sm:$0xff]
                  %460 = vst [vmem:[%s402 + $0xe0] sm:$0xff] %v459
                  %v461 = vld [vmem:[%s401 + $0x1c8] sm:$0xff]
                  %462 = vst [vmem:[%s402 + $0xe8] sm:$0xff] %v461
                  %v463 = vld [vmem:[%s401 + $0x1e0] sm:$0xff]
                  %464 = vst [vmem:[%s402 + $0xf0] sm:$0xff] %v463
                  %v465 = vld [vmem:[%s401 + $0x1e8] sm:$0xff]
                  %466 = vst [vmem:[%s402 + $0xf8] sm:$0xff] %v465
                $region84: #{tpu_custom_call.1} parent=78 // loop_footer
                  %s400 = sadd.s32 1, %s396
                $region85: #{tpu_custom_call.1} parent=78 // loop_footer_branch
                  %395 = sbr.rel target = $region81
                $region86: #{tpu_custom_call.1} parent=78 // loop_exit
                  _
              $region79: #{tpu_custom_call.1} parent=63 // pred_fallthru
                _
              // Predicated region
              $region87: #{tpu_custom_call.1} parent=63 // pred_check
                _
              $region88: #{tpu_custom_call.1} parent=63 // pred_check_branch
                %468 = sbr.rel target = $region90
              $region89: #{tpu_custom_call.1} parent=63 // pred_region
                _
              $region90: #{tpu_custom_call.1} parent=63 // pred_fallthru
                _
            $region64: #{tpu_custom_call.1} parent=59 // pred_fallthru
              _
            // Predicated region
            $region65: #{tpu_custom_call.1} parent=59 // pred_check
              _
            $region66: #{tpu_custom_call.1} parent=59 // pred_check_branch
              %318 = sbr.rel target = $region68
            $region67: #{tpu_custom_call.1} parent=59 // pred_region
              %s320 = ssub.s32 256, 1
              loop: start=0, step=1, limit=1
              $region69: #{tpu_custom_call.1} parent=67 // loop_pre_header
                _
              $region70: #{tpu_custom_call.1} parent=67 // loop_header
                %s322 = sphi 0, %s326
                %p323 = scmp.ge.s32.totalorder %s322, 1
                %s327 = sphi %s312, %s312
                %s328 = sphi %s309, %s309
              $region71: #{tpu_custom_call.1} parent=67 // loop_header_branch
                %325 = sbr.rel (%p323) target = $region75
              $region72: #{tpu_custom_call.1} parent=67 // loop_body
                %v329 = vld [vmem:[%s327] sm:%s320]
                %330 = vst [vmem:[%s328] sm:%s320] %v329
                %v331 = vld [vmem:[%s327 + $0x8] sm:%s320]
                %332 = vst [vmem:[%s328 + $0x8] sm:%s320] %v331
                %v333 = vld [vmem:[%s327 + $0x20] sm:%s320]
                %334 = vst [vmem:[%s328 + $0x10] sm:%s320] %v333
                %v335 = vld [vmem:[%s327 + $0x28] sm:%s320]
                %336 = vst [vmem:[%s328 + $0x18] sm:%s320] %v335
                %v337 = vld [vmem:[%s327 + $0x40] sm:%s320]
                %338 = vst [vmem:[%s328 + $0x20] sm:%s320] %v337
                %v339 = vld [vmem:[%s327 + $0x48] sm:%s320]
                %340 = vst [vmem:[%s328 + $0x28] sm:%s320] %v339
                %v341 = vld [vmem:[%s327 + $0x60] sm:%s320]
                %342 = vst [vmem:[%s328 + $0x30] sm:%s320] %v341
                %v343 = vld [vmem:[%s327 + $0x68] sm:%s320]
                %344 = vst [vmem:[%s328 + $0x38] sm:%s320] %v343
                %v345 = vld [vmem:[%s327 + $0x80] sm:%s320]
                %346 = vst [vmem:[%s328 + $0x40] sm:%s320] %v345
                %v347 = vld [vmem:[%s327 + $0x88] sm:%s320]
                %348 = vst [vmem:[%s328 + $0x48] sm:%s320] %v347
                %v349 = vld [vmem:[%s327 + $0xa0] sm:%s320]
                %350 = vst [vmem:[%s328 + $0x50] sm:%s320] %v349
                %v351 = vld [vmem:[%s327 + $0xa8] sm:%s320]
                %352 = vst [vmem:[%s328 + $0x58] sm:%s320] %v351
                %v353 = vld [vmem:[%s327 + $0xc0] sm:%s320]
                %354 = vst [vmem:[%s328 + $0x60] sm:%s320] %v353
                %v355 = vld [vmem:[%s327 + $0xc8] sm:%s320]
                %356 = vst [vmem:[%s328 + $0x68] sm:%s320] %v355
                %v357 = vld [vmem:[%s327 + $0xe0] sm:%s320]
                %358 = vst [vmem:[%s328 + $0x70] sm:%s320] %v357
                %v359 = vld [vmem:[%s327 + $0xe8] sm:%s320]
                %360 = vst [vmem:[%s328 + $0x78] sm:%s320] %v359
                %v361 = vld [vmem:[%s327 + $0x100] sm:%s320]
                %362 = vst [vmem:[%s328 + $0x80] sm:%s320] %v361
                %v363 = vld [vmem:[%s327 + $0x108] sm:%s320]
                %364 = vst [vmem:[%s328 + $0x88] sm:%s320] %v363
                %v365 = vld [vmem:[%s327 + $0x120] sm:%s320]
                %366 = vst [vmem:[%s328 + $0x90] sm:%s320] %v365
                %v367 = vld [vmem:[%s327 + $0x128] sm:%s320]
                %368 = vst [vmem:[%s328 + $0x98] sm:%s320] %v367
                %v369 = vld [vmem:[%s327 + $0x140] sm:%s320]
                %370 = vst [vmem:[%s328 + $0xa0] sm:%s320] %v369
                %v371 = vld [vmem:[%s327 + $0x148] sm:%s320]
                %372 = vst [vmem:[%s328 + $0xa8] sm:%s320] %v371
                %v373 = vld [vmem:[%s327 + $0x160] sm:%s320]
                %374 = vst [vmem:[%s328 + $0xb0] sm:%s320] %v373
                %v375 = vld [vmem:[%s327 + $0x168] sm:%s320]
                %376 = vst [vmem:[%s328 + $0xb8] sm:%s320] %v375
                %v377 = vld [vmem:[%s327 + $0x180] sm:%s320]
                %378 = vst [vmem:[%s328 + $0xc0] sm:%s320] %v377
                %v379 = vld [vmem:[%s327 + $0x188] sm:%s320]
                %380 = vst [vmem:[%s328 + $0xc8] sm:%s320] %v379
                %v381 = vld [vmem:[%s327 + $0x1a0] sm:%s320]
                %382 = vst [vmem:[%s328 + $0xd0] sm:%s320] %v381
                %v383 = vld [vmem:[%s327 + $0x1a8] sm:%s320]
                %384 = vst [vmem:[%s328 + $0xd8] sm:%s320] %v383
                %v385 = vld [vmem:[%s327 + $0x1c0] sm:%s320]
                %386 = vst [vmem:[%s328 + $0xe0] sm:%s320] %v385
                %v387 = vld [vmem:[%s327 + $0x1c8] sm:%s320]
                %388 = vst [vmem:[%s328 + $0xe8] sm:%s320] %v387
                %v389 = vld [vmem:[%s327 + $0x1e0] sm:%s320]
                %390 = vst [vmem:[%s328 + $0xf0] sm:%s320] %v389
                %v391 = vld [vmem:[%s327 + $0x1e8] sm:%s320]
                %392 = vst [vmem:[%s328 + $0xf8] sm:%s320] %v391
              $region73: #{tpu_custom_call.1} parent=67 // loop_footer
                %s326 = sadd.s32 1, %s322
              $region74: #{tpu_custom_call.1} parent=67 // loop_footer_branch
                %321 = sbr.rel target = $region70
              $region75: #{tpu_custom_call.1} parent=67 // loop_exit
                _
            $region68: #{tpu_custom_call.1} parent=59 // pred_fallthru
              _
          $region60: #{tpu_custom_call.1} parent=55 // pred_fallthru
            _
          %469 = vnop
        $region56: #{tpu_custom_call.1} parent=51 // pred_fallthru
          _
      $region52: #{tpu_custom_call.1} parent=5 // pred_fallthru
        _
      %p470 = scmp.le.s32.totalorder 1, %s16
      %p471 = scmp.lt.s32.totalorder %s16, 3
      %p472 = pnand %p470, %p471
      %p473 = pneg %p472
      // Predicated region
      $region91: #{tpu_custom_call.1} parent=5 // pred_check
        _
      $region92: #{tpu_custom_call.1} parent=5 // pred_check_branch
        %475 = sbr.rel (%p472) target = $region94
      $region93: #{tpu_custom_call.1} parent=5 // pred_region
        %s476 = ssub.s32 %s16, 1
        %s477 = sand.u32 %s29, 1
        %s478 = sand.u32 %s29, 1
        %s479 = smul.addr %s478, 256
        %s480 = scalar_lea.vmem [#allocation4], %s479
        // Predicated region
        $region95: #{tpu_custom_call.1} parent=93 // pred_check
          %p481 = pneg %p42
        $region96: #{tpu_custom_call.1} parent=93 // pred_check_branch
          %483 = sbr.rel (%p481) target = $region98
        $region97: #{tpu_custom_call.1} parent=93 // pred_region
          _
        $region98: #{tpu_custom_call.1} parent=93 // pred_fallthru
          _
        %s484 = sand.u32 %s29, 1
        %s485 = sand.u32 %s29, 1
        %s486 = smul.addr %s485, 256
        %s487 = scalar_lea.vmem [#allocation4], %s486
        %p488 = pneg %p42
        %p489 = pneg %p39
        %p490 = pneg %p63
        %p491 = pneg %p60
        %p492 = pneg %p84
        %p493 = pneg %p81
        %p494 = pneg %p105
        %p495 = pneg %p102
        %p496 = pneg %p126
        %p497 = pneg %p123
        %p498 = pneg %p147
        %p499 = pneg %p144
        %p500 = pneg %p168
        %p501 = pneg %p165
        %p502 = pneg %p189
        %p503 = pneg %p186
        %p504 = pneg %p210
        %p505 = pneg %p207
        %p506 = pneg %p231
        %p507 = pneg %p228
        %p508 = pneg %p257
        %p509 = pneg %p254
        %s510 = sand.u32 %s244, 1
        %s511 = sand.u32 %s244, 1
        %s512 = smul.addr %s511, 256
        %s513 = scalar_lea.vmem [#allocation5], %s512
        %s514 = smul.u32 2, %s21
        %s515 = smul.u32 2, %s21
        %v517 = vld [vmem:[%s480] sm:$0xff]
        %v518 = vld [vmem:[%s480 + $0x8] sm:$0xff]
        %v519 = vld [vmem:[%s480 + $0x10] sm:$0xff]
        %v520 = vld [vmem:[%s480 + $0x18] sm:$0xff]
        %v521 = vld [vmem:[%s480 + $0x20] sm:$0xff]
        %v522 = vld [vmem:[%s480 + $0x28] sm:$0xff]
        %v523 = vld [vmem:[%s480 + $0x30] sm:$0xff]
        %v524 = vld [vmem:[%s480 + $0x38] sm:$0xff]
        %v525 = vld [vmem:[%s480 + $0x40] sm:$0xff]
        %v526 = vld [vmem:[%s480 + $0x48] sm:$0xff]
        %v527 = vld [vmem:[%s480 + $0x50] sm:$0xff]
        %v528 = vld [vmem:[%s480 + $0x58] sm:$0xff]
        %v529 = vld [vmem:[%s480 + $0x60] sm:$0xff]
        %v530 = vld [vmem:[%s480 + $0x68] sm:$0xff]
        %v531 = vld [vmem:[%s480 + $0x70] sm:$0xff]
        %v532 = vld [vmem:[%s480 + $0x78] sm:$0xff]
        %v533 = vld [vmem:[%s480 + $0x80] sm:$0xff]
        %v534 = vld [vmem:[%s480 + $0x88] sm:$0xff]
        %v535 = vld [vmem:[%s480 + $0x90] sm:$0xff]
        %v536 = vld [vmem:[%s480 + $0x98] sm:$0xff]
        %v537 = vld [vmem:[%s480 + $0xa0] sm:$0xff]
        %v538 = vld [vmem:[%s480 + $0xa8] sm:$0xff]
        %v539 = vld [vmem:[%s480 + $0xb0] sm:$0xff]
        %v540 = vld [vmem:[%s480 + $0xb8] sm:$0xff]
        %v541 = vld [vmem:[%s480 + $0xc0] sm:$0xff]
        %v542 = vld [vmem:[%s480 + $0xc8] sm:$0xff]
        %v543 = vld [vmem:[%s480 + $0xd0] sm:$0xff]
        %v544 = vld [vmem:[%s480 + $0xd8] sm:$0xff]
        %v545 = vld [vmem:[%s480 + $0xe0] sm:$0xff]
        %v546 = vld [vmem:[%s480 + $0xe8] sm:$0xff]
        %v547 = vld [vmem:[%s480 + $0xf0] sm:$0xff]
        %v548 = vld [vmem:[%s480 + $0xf8] sm:$0xff]
        %v549 = vlaneseq
        %v550 = vshrl.u32 %v549, 7
        %v551 = vadd.s32 %v550, 8
        %v552 = vadd.s32 %v550, 16
        %v553 = vadd.s32 %v550, 24
        %v554 = vadd.s32 %v550, 32
        %v555 = vadd.s32 %v550, 40
        %v556 = vadd.s32 %v550, 48
        %v557 = vadd.s32 %v550, 56
        %v558 = vadd.s32 %v550, 64
        %v559 = vadd.s32 %v550, 72
        %v560 = vadd.s32 %v550, 80
        %v561 = vadd.s32 %v550, 88
        %v562 = vadd.s32 %v550, 96
        %v563 = vadd.s32 %v550, 104
        %v564 = vadd.s32 %v550, 112
        %v565 = vadd.s32 %v550, 120
        %v566 = vadd.s32 %v550, 128
        %v567 = vadd.s32 %v550, 136
        %v568 = vadd.s32 %v550, 144
        %v569 = vadd.s32 %v550, 152
        %v570 = vadd.s32 %v550, 160
        %v571 = vadd.s32 %v550, 168
        %v572 = vadd.s32 %v550, 176
        %v573 = vadd.s32 %v550, 184
        %v574 = vadd.s32 %v550, 192
        %v575 = vadd.s32 %v550, 200
        %v576 = vadd.s32 %v550, 208
        %v577 = vadd.s32 %v550, 216
        %v578 = vadd.s32 %v550, 224
        %v579 = vadd.s32 %v550, 232
        %v580 = vadd.s32 %v550, 240
        %v581 = vadd.s32 %v550, 248
        %vm582 = vcmp.lt.s32.totalorder %v550, 0
        %v583 = vsub.s32 0, %v550
        %v584 = vsel %vm582, %v583, %v550
        %v585 = vshrl.u32 %v584, 4
        %v586 = vand.u32 %v584, 15
        %v587 = vsub.s32 0, %v586
        %v588 = vsel %vm582, %v587, %v586
        %vm589 = vcmp.lt.s32.totalorder %v551, 0
        %v590 = vsub.s32 0, %v551
        %v591 = vsel %vm589, %v590, %v551
        %v592 = vshrl.u32 %v591, 4
        %v593 = vand.u32 %v591, 15
        %v594 = vsub.s32 0, %v593
        %v595 = vsel %vm589, %v594, %v593
        %vm596 = vcmp.lt.s32.totalorder %v552, 0
        %v597 = vsub.s32 0, %v552
        %v598 = vsel %vm596, %v597, %v552
        %v599 = vshrl.u32 %v598, 4
        %v600 = vand.u32 %v598, 15
        %v601 = vsub.s32 0, %v600
        %v602 = vsel %vm596, %v601, %v600
        %vm603 = vcmp.lt.s32.totalorder %v553, 0
        %v604 = vsub.s32 0, %v553
        %v605 = vsel %vm603, %v604, %v553
        %v606 = vshrl.u32 %v605, 4
        %v607 = vand.u32 %v605, 15
        %v608 = vsub.s32 0, %v607
        %v609 = vsel %vm603, %v608, %v607
        %vm610 = vcmp.lt.s32.totalorder %v554, 0
        %v611 = vsub.s32 0, %v554
        %v612 = vsel %vm610, %v611, %v554
        %v613 = vshrl.u32 %v612, 4
        %v614 = vand.u32 %v612, 15
        %v615 = vsub.s32 0, %v614
        %v616 = vsel %vm610, %v615, %v614
        %vm617 = vcmp.lt.s32.totalorder %v555, 0
        %v618 = vsub.s32 0, %v555
        %v619 = vsel %vm617, %v618, %v555
        %v620 = vshrl.u32 %v619, 4
        %v621 = vand.u32 %v619, 15
        %v622 = vsub.s32 0, %v621
        %v623 = vsel %vm617, %v622, %v621
        %vm624 = vcmp.lt.s32.totalorder %v556, 0
        %v625 = vsub.s32 0, %v556
        %v626 = vsel %vm624, %v625, %v556
        %v627 = vshrl.u32 %v626, 4
        %v628 = vand.u32 %v626, 15
        %v629 = vsub.s32 0, %v628
        %v630 = vsel %vm624, %v629, %v628
        %vm631 = vcmp.lt.s32.totalorder %v557, 0
        %v632 = vsub.s32 0, %v557
        %v633 = vsel %vm631, %v632, %v557
        %v634 = vshrl.u32 %v633, 4
        %v635 = vand.u32 %v633, 15
        %v636 = vsub.s32 0, %v635
        %v637 = vsel %vm631, %v636, %v635
        %vm638 = vcmp.lt.s32.totalorder %v558, 0
        %v639 = vsub.s32 0, %v558
        %v640 = vsel %vm638, %v639, %v558
        %v641 = vshrl.u32 %v640, 4
        %v642 = vand.u32 %v640, 15
        %v643 = vsub.s32 0, %v642
        %v644 = vsel %vm638, %v643, %v642
        %vm645 = vcmp.lt.s32.totalorder %v559, 0
        %v646 = vsub.s32 0, %v559
        %v647 = vsel %vm645, %v646, %v559
        %v648 = vshrl.u32 %v647, 4
        %v649 = vand.u32 %v647, 15
        %v650 = vsub.s32 0, %v649
        %v651 = vsel %vm645, %v650, %v649
        %vm652 = vcmp.lt.s32.totalorder %v560, 0
        %v653 = vsub.s32 0, %v560
        %v654 = vsel %vm652, %v653, %v560
        %v655 = vshrl.u32 %v654, 4
        %v656 = vand.u32 %v654, 15
        %v657 = vsub.s32 0, %v656
        %v658 = vsel %vm652, %v657, %v656
        %vm659 = vcmp.lt.s32.totalorder %v561, 0
        %v660 = vsub.s32 0, %v561
        %v661 = vsel %vm659, %v660, %v561
        %v662 = vshrl.u32 %v661, 4
        %v663 = vand.u32 %v661, 15
        %v664 = vsub.s32 0, %v663
        %v665 = vsel %vm659, %v664, %v663
        %vm666 = vcmp.lt.s32.totalorder %v562, 0
        %v667 = vsub.s32 0, %v562
        %v668 = vsel %vm666, %v667, %v562
        %v669 = vshrl.u32 %v668, 4
        %v670 = vand.u32 %v668, 15
        %v671 = vsub.s32 0, %v670
        %v672 = vsel %vm666, %v671, %v670
        %vm673 = vcmp.lt.s32.totalorder %v563, 0
        %v674 = vsub.s32 0, %v563
        %v675 = vsel %vm673, %v674, %v563
        %v676 = vshrl.u32 %v675, 4
        %v677 = vand.u32 %v675, 15
        %v678 = vsub.s32 0, %v677
        %v679 = vsel %vm673, %v678, %v677
        %vm680 = vcmp.lt.s32.totalorder %v564, 0
        %v681 = vsub.s32 0, %v564
        %v682 = vsel %vm680, %v681, %v564
        %v683 = vshrl.u32 %v682, 4
        %v684 = vand.u32 %v682, 15
        %v685 = vsub.s32 0, %v684
        %v686 = vsel %vm680, %v685, %v684
        %vm687 = vcmp.lt.s32.totalorder %v565, 0
        %v688 = vsub.s32 0, %v565
        %v689 = vsel %vm687, %v688, %v565
        %v690 = vshrl.u32 %v689, 4
        %v691 = vand.u32 %v689, 15
        %v692 = vsub.s32 0, %v691
        %v693 = vsel %vm687, %v692, %v691
        %vm694 = vcmp.lt.s32.totalorder %v566, 0
        %v695 = vsub.s32 0, %v566
        %v696 = vsel %vm694, %v695, %v566
        %v697 = vshrl.u32 %v696, 4
        %v698 = vand.u32 %v696, 15
        %v699 = vsub.s32 0, %v698
        %v700 = vsel %vm694, %v699, %v698
        %vm701 = vcmp.lt.s32.totalorder %v567, 0
        %v702 = vsub.s32 0, %v567
        %v703 = vsel %vm701, %v702, %v567
        %v704 = vshrl.u32 %v703, 4
        %v705 = vand.u32 %v703, 15
        %v706 = vsub.s32 0, %v705
        %v707 = vsel %vm701, %v706, %v705
        %vm708 = vcmp.lt.s32.totalorder %v568, 0
        %v709 = vsub.s32 0, %v568
        %v710 = vsel %vm708, %v709, %v568
        %v711 = vshrl.u32 %v710, 4
        %v712 = vand.u32 %v710, 15
        %v713 = vsub.s32 0, %v712
        %v714 = vsel %vm708, %v713, %v712
        %vm715 = vcmp.lt.s32.totalorder %v569, 0
        %v716 = vsub.s32 0, %v569
        %v717 = vsel %vm715, %v716, %v569
        %v718 = vshrl.u32 %v717, 4
        %v719 = vand.u32 %v717, 15
        %v720 = vsub.s32 0, %v719
        %v721 = vsel %vm715, %v720, %v719
        %vm722 = vcmp.lt.s32.totalorder %v570, 0
        %v723 = vsub.s32 0, %v570
        %v724 = vsel %vm722, %v723, %v570
        %v725 = vshrl.u32 %v724, 4
        %v726 = vand.u32 %v724, 15
        %v727 = vsub.s32 0, %v726
        %v728 = vsel %vm722, %v727, %v726
        %vm729 = vcmp.lt.s32.totalorder %v571, 0
        %v730 = vsub.s32 0, %v571
        %v731 = vsel %vm729, %v730, %v571
        %v732 = vshrl.u32 %v731, 4
        %v733 = vand.u32 %v731, 15
        %v734 = vsub.s32 0, %v733
        %v735 = vsel %vm729, %v734, %v733
        %vm736 = vcmp.lt.s32.totalorder %v572, 0
        %v737 = vsub.s32 0, %v572
        %v738 = vsel %vm736, %v737, %v572
        %v739 = vshrl.u32 %v738, 4
        %v740 = vand.u32 %v738, 15
        %v741 = vsub.s32 0, %v740
        %v742 = vsel %vm736, %v741, %v740
        %vm743 = vcmp.lt.s32.totalorder %v573, 0
        %v744 = vsub.s32 0, %v573
        %v745 = vsel %vm743, %v744, %v573
        %v746 = vshrl.u32 %v745, 4
        %v747 = vand.u32 %v745, 15
        %v748 = vsub.s32 0, %v747
        %v749 = vsel %vm743, %v748, %v747
        %vm750 = vcmp.lt.s32.totalorder %v574, 0
        %v751 = vsub.s32 0, %v574
        %v752 = vsel %vm750, %v751, %v574
        %v753 = vshrl.u32 %v752, 4
        %v754 = vand.u32 %v752, 15
        %v755 = vsub.s32 0, %v754
        %v756 = vsel %vm750, %v755, %v754
        %vm757 = vcmp.lt.s32.totalorder %v575, 0
        %v758 = vsub.s32 0, %v575
        %v759 = vsel %vm757, %v758, %v575
        %v760 = vshrl.u32 %v759, 4
        %v761 = vand.u32 %v759, 15
        %v762 = vsub.s32 0, %v761
        %v763 = vsel %vm757, %v762, %v761
        %vm764 = vcmp.lt.s32.totalorder %v576, 0
        %v765 = vsub.s32 0, %v576
        %v766 = vsel %vm764, %v765, %v576
        %v767 = vshrl.u32 %v766, 4
        %v768 = vand.u32 %v766, 15
        %v769 = vsub.s32 0, %v768
        %v770 = vsel %vm764, %v769, %v768
        %vm771 = vcmp.lt.s32.totalorder %v577, 0
        %v772 = vsub.s32 0, %v577
        %v773 = vsel %vm771, %v772, %v577
        %v774 = vshrl.u32 %v773, 4
        %v775 = vand.u32 %v773, 15
        %v776 = vsub.s32 0, %v775
        %v777 = vsel %vm771, %v776, %v775
        %vm778 = vcmp.lt.s32.totalorder %v578, 0
        %v779 = vsub.s32 0, %v578
        %v780 = vsel %vm778, %v779, %v578
        %v781 = vshrl.u32 %v780, 4
        %v782 = vand.u32 %v780, 15
        %v783 = vsub.s32 0, %v782
        %v784 = vsel %vm778, %v783, %v782
        %vm785 = vcmp.lt.s32.totalorder %v579, 0
        %v786 = vsub.s32 0, %v579
        %v787 = vsel %vm785, %v786, %v579
        %v788 = vshrl.u32 %v787, 4
        %v789 = vand.u32 %v787, 15
        %v790 = vsub.s32 0, %v789
        %v791 = vsel %vm785, %v790, %v789
        %vm792 = vcmp.lt.s32.totalorder %v580, 0
        %v793 = vsub.s32 0, %v580
        %v794 = vsel %vm792, %v793, %v580
        %v795 = vshrl.u32 %v794, 4
        %v796 = vand.u32 %v794, 15
        %v797 = vsub.s32 0, %v796
        %v798 = vsel %vm792, %v797, %v796
        %vm799 = vcmp.lt.s32.totalorder %v581, 0
        %v800 = vsub.s32 0, %v581
        %v801 = vsel %vm799, %v800, %v581
        %v802 = vshrl.u32 %v801, 4
        %v803 = vand.u32 %v801, 15
        %v804 = vsub.s32 0, %v803
        %v805 = vsel %vm799, %v804, %v803
        %vm806 = vcmp.ne.s32.totalorder %v588, 0
        %vm807 = vcmp.ne.s32.totalorder %v595, 0
        %vm808 = vcmp.ne.s32.totalorder %v602, 0
        %vm809 = vcmp.ne.s32.totalorder %v609, 0
        %vm810 = vcmp.ne.s32.totalorder %v616, 0
        %vm811 = vcmp.ne.s32.totalorder %v623, 0
        %vm812 = vcmp.ne.s32.totalorder %v630, 0
        %vm813 = vcmp.ne.s32.totalorder %v637, 0
        %vm814 = vcmp.ne.s32.totalorder %v644, 0
        %vm815 = vcmp.ne.s32.totalorder %v651, 0
        %vm816 = vcmp.ne.s32.totalorder %v658, 0
        %vm817 = vcmp.ne.s32.totalorder %v665, 0
        %vm818 = vcmp.ne.s32.totalorder %v672, 0
        %vm819 = vcmp.ne.s32.totalorder %v679, 0
        %vm820 = vcmp.ne.s32.totalorder %v686, 0
        %vm821 = vcmp.ne.s32.totalorder %v693, 0
        %vm822 = vcmp.ne.s32.totalorder %v700, 0
        %vm823 = vcmp.ne.s32.totalorder %v707, 0
        %vm824 = vcmp.ne.s32.totalorder %v714, 0
        %vm825 = vcmp.ne.s32.totalorder %v721, 0
        %vm826 = vcmp.ne.s32.totalorder %v728, 0
        %vm827 = vcmp.ne.s32.totalorder %v735, 0
        %vm828 = vcmp.ne.s32.totalorder %v742, 0
        %vm829 = vcmp.ne.s32.totalorder %v749, 0
        %vm830 = vcmp.ne.s32.totalorder %v756, 0
        %vm831 = vcmp.ne.s32.totalorder %v763, 0
        %vm832 = vcmp.ne.s32.totalorder %v770, 0
        %vm833 = vcmp.ne.s32.totalorder %v777, 0
        %vm834 = vcmp.ne.s32.totalorder %v784, 0
        %vm835 = vcmp.ne.s32.totalorder %v791, 0
        %vm836 = vcmp.ne.s32.totalorder %v798, 0
        %vm837 = vcmp.ne.s32.totalorder %v805, 0
        %vm838 = vcmp.lt.s32.totalorder %v588, 0
        %vm839 = vcmp.lt.s32.totalorder %v595, 0
        %vm840 = vcmp.lt.s32.totalorder %v602, 0
        %vm841 = vcmp.lt.s32.totalorder %v609, 0
        %vm842 = vcmp.lt.s32.totalorder %v616, 0
        %vm843 = vcmp.lt.s32.totalorder %v623, 0
        %vm844 = vcmp.lt.s32.totalorder %v630, 0
        %vm845 = vcmp.lt.s32.totalorder %v637, 0
        %vm846 = vcmp.lt.s32.totalorder %v644, 0
        %vm847 = vcmp.lt.s32.totalorder %v651, 0
        %vm848 = vcmp.lt.s32.totalorder %v658, 0
        %vm849 = vcmp.lt.s32.totalorder %v665, 0
        %vm850 = vcmp.lt.s32.totalorder %v672, 0
        %vm851 = vcmp.lt.s32.totalorder %v679, 0
        %vm852 = vcmp.lt.s32.totalorder %v686, 0
        %vm853 = vcmp.lt.s32.totalorder %v693, 0
        %vm854 = vcmp.lt.s32.totalorder %v700, 0
        %vm855 = vcmp.lt.s32.totalorder %v707, 0
        %vm856 = vcmp.lt.s32.totalorder %v714, 0
        %vm857 = vcmp.lt.s32.totalorder %v721, 0
        %vm858 = vcmp.lt.s32.totalorder %v728, 0
        %vm859 = vcmp.lt.s32.totalorder %v735, 0
        %vm860 = vcmp.lt.s32.totalorder %v742, 0
        %vm861 = vcmp.lt.s32.totalorder %v749, 0
        %vm862 = vcmp.lt.s32.totalorder %v756, 0
        %vm863 = vcmp.lt.s32.totalorder %v763, 0
        %vm864 = vcmp.lt.s32.totalorder %v770, 0
        %vm865 = vcmp.lt.s32.totalorder %v777, 0
        %vm866 = vcmp.lt.s32.totalorder %v784, 0
        %vm867 = vcmp.lt.s32.totalorder %v791, 0
        %vm868 = vcmp.lt.s32.totalorder %v798, 0
        %vm869 = vcmp.lt.s32.totalorder %v805, 0
        %vm870 = vmand %vm838, %vm806
        %vm871 = vmand %vm839, %vm807
        %vm872 = vmand %vm840, %vm808
        %vm873 = vmand %vm841, %vm809
        %vm874 = vmand %vm842, %vm810
        %vm875 = vmand %vm843, %vm811
        %vm876 = vmand %vm844, %vm812
        %vm877 = vmand %vm845, %vm813
        %vm878 = vmand %vm846, %vm814
        %vm879 = vmand %vm847, %vm815
        %vm880 = vmand %vm848, %vm816
        %vm881 = vmand %vm849, %vm817
        %vm882 = vmand %vm850, %vm818
        %vm883 = vmand %vm851, %vm819
        %vm884 = vmand %vm852, %vm820
        %vm885 = vmand %vm853, %vm821
        %vm886 = vmand %vm854, %vm822
        %vm887 = vmand %vm855, %vm823
        %vm888 = vmand %vm856, %vm824
        %vm889 = vmand %vm857, %vm825
        %vm890 = vmand %vm858, %vm826
        %vm891 = vmand %vm859, %vm827
        %vm892 = vmand %vm860, %vm828
        %vm893 = vmand %vm861, %vm829
        %vm894 = vmand %vm862, %vm830
        %vm895 = vmand %vm863, %vm831
        %vm896 = vmand %vm864, %vm832
        %vm897 = vmand %vm865, %vm833
        %vm898 = vmand %vm866, %vm834
        %vm899 = vmand %vm867, %vm835
        %vm900 = vmand %vm868, %vm836
        %vm901 = vmand %vm869, %vm837
        %v902 = vadd.s32 %v588, 16
        %v903 = vadd.s32 %v595, 16
        %v904 = vadd.s32 %v602, 16
        %v905 = vadd.s32 %v609, 16
        %v906 = vadd.s32 %v616, 16
        %v907 = vadd.s32 %v623, 16
        %v908 = vadd.s32 %v630, 16
        %v909 = vadd.s32 %v637, 16
        %v910 = vadd.s32 %v644, 16
        %v911 = vadd.s32 %v651, 16
        %v912 = vadd.s32 %v658, 16
        %v913 = vadd.s32 %v665, 16
        %v914 = vadd.s32 %v672, 16
        %v915 = vadd.s32 %v679, 16
        %v916 = vadd.s32 %v686, 16
        %v917 = vadd.s32 %v693, 16
        %v918 = vadd.s32 %v700, 16
        %v919 = vadd.s32 %v707, 16
        %v920 = vadd.s32 %v714, 16
        %v921 = vadd.s32 %v721, 16
        %v922 = vadd.s32 %v728, 16
        %v923 = vadd.s32 %v735, 16
        %v924 = vadd.s32 %v742, 16
        %v925 = vadd.s32 %v749, 16
        %v926 = vadd.s32 %v756, 16
        %v927 = vadd.s32 %v763, 16
        %v928 = vadd.s32 %v770, 16
        %v929 = vadd.s32 %v777, 16
        %v930 = vadd.s32 %v784, 16
        %v931 = vadd.s32 %v791, 16
        %v932 = vadd.s32 %v798, 16
        %v933 = vadd.s32 %v805, 16
        %v934 = vsel %vm870, %v902, %v588
        %v935 = vsel %vm871, %v903, %v595
        %v936 = vsel %vm872, %v904, %v602
        %v937 = vsel %vm873, %v905, %v609
        %v938 = vsel %vm874, %v906, %v616
        %v939 = vsel %vm875, %v907, %v623
        %v940 = vsel %vm876, %v908, %v630
        %v941 = vsel %vm877, %v909, %v637
        %v942 = vsel %vm878, %v910, %v644
        %v943 = vsel %vm879, %v911, %v651
        %v944 = vsel %vm880, %v912, %v658
        %v945 = vsel %vm881, %v913, %v665
        %v946 = vsel %vm882, %v914, %v672
        %v947 = vsel %vm883, %v915, %v679
        %v948 = vsel %vm884, %v916, %v686
        %v949 = vsel %vm885, %v917, %v693
        %v950 = vsel %vm886, %v918, %v700
        %v951 = vsel %vm887, %v919, %v707
        %v952 = vsel %vm888, %v920, %v714
        %v953 = vsel %vm889, %v921, %v721
        %v954 = vsel %vm890, %v922, %v728
        %v955 = vsel %vm891, %v923, %v735
        %v956 = vsel %vm892, %v924, %v742
        %v957 = vsel %vm893, %v925, %v749
        %v958 = vsel %vm894, %v926, %v756
        %v959 = vsel %vm895, %v927, %v763
        %v960 = vsel %vm896, %v928, %v770
        %v961 = vsel %vm897, %v929, %v777
        %v962 = vsel %vm898, %v930, %v784
        %v963 = vsel %vm899, %v931, %v791
        %v964 = vsel %vm900, %v932, %v798
        %v965 = vsel %vm901, %v933, %v805
        %vm966 = vcmp.eq.s32.totalorder %v934, 0
        %vm967 = vcmp.eq.s32.totalorder %v935, 0
        %vm968 = vcmp.eq.s32.totalorder %v936, 0
        %vm969 = vcmp.eq.s32.totalorder %v937, 0
        %vm970 = vcmp.eq.s32.totalorder %v938, 0
        %vm971 = vcmp.eq.s32.totalorder %v939, 0
        %vm972 = vcmp.eq.s32.totalorder %v940, 0
        %vm973 = vcmp.eq.s32.totalorder %v941, 0
        %vm974 = vcmp.eq.s32.totalorder %v942, 0
        %vm975 = vcmp.eq.s32.totalorder %v943, 0
        %vm976 = vcmp.eq.s32.totalorder %v944, 0
        %vm977 = vcmp.eq.s32.totalorder %v945, 0
        %vm978 = vcmp.eq.s32.totalorder %v946, 0
        %vm979 = vcmp.eq.s32.totalorder %v947, 0
        %vm980 = vcmp.eq.s32.totalorder %v948, 0
        %vm981 = vcmp.eq.s32.totalorder %v949, 0
        %vm982 = vcmp.eq.s32.totalorder %v950, 0
        %vm983 = vcmp.eq.s32.totalorder %v951, 0
        %vm984 = vcmp.eq.s32.totalorder %v952, 0
        %vm985 = vcmp.eq.s32.totalorder %v953, 0
        %vm986 = vcmp.eq.s32.totalorder %v954, 0
        %vm987 = vcmp.eq.s32.totalorder %v955, 0
        %vm988 = vcmp.eq.s32.totalorder %v956, 0
        %vm989 = vcmp.eq.s32.totalorder %v957, 0
        %vm990 = vcmp.eq.s32.totalorder %v958, 0
        %vm991 = vcmp.eq.s32.totalorder %v959, 0
        %vm992 = vcmp.eq.s32.totalorder %v960, 0
        %vm993 = vcmp.eq.s32.totalorder %v961, 0
        %vm994 = vcmp.eq.s32.totalorder %v962, 0
        %vm995 = vcmp.eq.s32.totalorder %v963, 0
        %vm996 = vcmp.eq.s32.totalorder %v964, 0
        %vm997 = vcmp.eq.s32.totalorder %v965, 0
        %v998 = vrot.slane %v517, 7
        %v999 = vrot.slane %v518, 7
        %v1000 = vrot.slane %v519, 7
        %v1001 = vrot.slane %v520, 7
        %v1002 = vrot.slane %v521, 7
        %v1003 = vrot.slane %v522, 7
        %v1004 = vrot.slane %v523, 7
        %v1005 = vrot.slane %v524, 7
        %v1006 = vrot.slane %v525, 7
        %v1007 = vrot.slane %v526, 7
        %v1008 = vrot.slane %v527, 7
        %v1009 = vrot.slane %v528, 7
        %v1010 = vrot.slane %v529, 7
        %v1011 = vrot.slane %v530, 7
        %v1012 = vrot.slane %v531, 7
        %v1013 = vrot.slane %v532, 7
        %v1014 = vrot.slane %v533, 7
        %v1015 = vrot.slane %v534, 7
        %v1016 = vrot.slane %v535, 7
        %v1017 = vrot.slane %v536, 7
        %v1018 = vrot.slane %v537, 7
        %v1019 = vrot.slane %v538, 7
        %v1020 = vrot.slane %v539, 7
        %v1021 = vrot.slane %v540, 7
        %v1022 = vrot.slane %v541, 7
        %v1023 = vrot.slane %v542, 7
        %v1024 = vrot.slane %v543, 7
        %v1025 = vrot.slane %v544, 7
        %v1026 = vrot.slane %v545, 7
        %v1027 = vrot.slane %v546, 7
        %v1028 = vrot.slane %v547, 7
        %v1029 = vrot.slane %v548, 7
        %vm1030 = vcmp.lt.s32.totalorder %v550, 1
        %v1031 = vsel %vm1030, %v1028, %v1029
        %v1032 = vsel %vm1030, %v1027, %v1028
        %v1033 = vsel %vm1030, %v1026, %v1027
        %v1034 = vsel %vm1030, %v1025, %v1026
        %v1035 = vsel %vm1030, %v1024, %v1025
        %v1036 = vsel %vm1030, %v1023, %v1024
        %v1037 = vsel %vm1030, %v1022, %v1023
        %v1038 = vsel %vm1030, %v1021, %v1022
        %v1039 = vsel %vm1030, %v1020, %v1021
        %v1040 = vsel %vm1030, %v1019, %v1020
        %v1041 = vsel %vm1030, %v1018, %v1019
        %v1042 = vsel %vm1030, %v1017, %v1018
        %v1043 = vsel %vm1030, %v1016, %v1017
        %v1044 = vsel %vm1030, %v1015, %v1016
        %v1045 = vsel %vm1030, %v1014, %v1015
        %v1046 = vsel %vm1030, %v1013, %v1014
        %v1047 = vsel %vm1030, %v1012, %v1013
        %v1048 = vsel %vm1030, %v1011, %v1012
        %v1049 = vsel %vm1030, %v1010, %v1011
        %v1050 = vsel %vm1030, %v1009, %v1010
        %v1051 = vsel %vm1030, %v1008, %v1009
        %v1052 = vsel %vm1030, %v1007, %v1008
        %v1053 = vsel %vm1030, %v1006, %v1007
        %v1054 = vsel %vm1030, %v1005, %v1006
        %v1055 = vsel %vm1030, %v1004, %v1005
        %v1056 = vsel %vm1030, %v1003, %v1004
        %v1057 = vsel %vm1030, %v1002, %v1003
        %v1058 = vsel %vm1030, %v1001, %v1002
        %v1059 = vsel %vm1030, %v1000, %v1001
        %v1060 = vsel %vm1030, %v999, %v1000
        %v1061 = vsel %vm1030, %v998, %v999
        %v1062 = vsel %vm1030, %v1029, %v998
        %v1063 = vsel %vm966, 1, 0
        %v1064 = vsel %vm967, 1, 0
        %v1065 = vsel %vm968, 1, 0
        %v1066 = vsel %vm969, 1, 0
        %v1067 = vsel %vm970, 1, 0
        %v1068 = vsel %vm971, 1, 0
        %v1069 = vsel %vm972, 1, 0
        %v1070 = vsel %vm973, 1, 0
        %v1071 = vsel %vm974, 1, 0
        %v1072 = vsel %vm975, 1, 0
        %v1073 = vsel %vm976, 1, 0
        %v1074 = vsel %vm977, 1, 0
        %v1075 = vsel %vm978, 1, 0
        %v1076 = vsel %vm979, 1, 0
        %v1077 = vsel %vm980, 1, 0
        %v1078 = vsel %vm981, 1, 0
        %v1079 = vsel %vm982, 1, 0
        %v1080 = vsel %vm983, 1, 0
        %v1081 = vsel %vm984, 1, 0
        %v1082 = vsel %vm985, 1, 0
        %v1083 = vsel %vm986, 1, 0
        %v1084 = vsel %vm987, 1, 0
        %v1085 = vsel %vm988, 1, 0
        %v1086 = vsel %vm989, 1, 0
        %v1087 = vsel %vm990, 1, 0
        %v1088 = vsel %vm991, 1, 0
        %v1089 = vsel %vm992, 1, 0
        %v1090 = vsel %vm993, 1, 0
        %v1091 = vsel %vm994, 1, 0
        %v1092 = vsel %vm995, 1, 0
        %v1093 = vsel %vm996, 1, 0
        %v1094 = vsel %vm997, 1, 0
        %vm1095 = vcmp.eq.s32.totalorder %v1063, 1
        %vm1096 = vcmp.eq.s32.totalorder %v1064, 1
        %vm1097 = vcmp.eq.s32.totalorder %v1065, 1
        %vm1098 = vcmp.eq.s32.totalorder %v1066, 1
        %vm1099 = vcmp.eq.s32.totalorder %v1067, 1
        %vm1100 = vcmp.eq.s32.totalorder %v1068, 1
        %vm1101 = vcmp.eq.s32.totalorder %v1069, 1
        %vm1102 = vcmp.eq.s32.totalorder %v1070, 1
        %vm1103 = vcmp.eq.s32.totalorder %v1071, 1
        %vm1104 = vcmp.eq.s32.totalorder %v1072, 1
        %vm1105 = vcmp.eq.s32.totalorder %v1073, 1
        %vm1106 = vcmp.eq.s32.totalorder %v1074, 1
        %vm1107 = vcmp.eq.s32.totalorder %v1075, 1
        %vm1108 = vcmp.eq.s32.totalorder %v1076, 1
        %vm1109 = vcmp.eq.s32.totalorder %v1077, 1
        %vm1110 = vcmp.eq.s32.totalorder %v1078, 1
        %vm1111 = vcmp.eq.s32.totalorder %v1079, 1
        %vm1112 = vcmp.eq.s32.totalorder %v1080, 1
        %vm1113 = vcmp.eq.s32.totalorder %v1081, 1
        %vm1114 = vcmp.eq.s32.totalorder %v1082, 1
        %vm1115 = vcmp.eq.s32.totalorder %v1083, 1
        %vm1116 = vcmp.eq.s32.totalorder %v1084, 1
        %vm1117 = vcmp.eq.s32.totalorder %v1085, 1
        %vm1118 = vcmp.eq.s32.totalorder %v1086, 1
        %vm1119 = vcmp.eq.s32.totalorder %v1087, 1
        %vm1120 = vcmp.eq.s32.totalorder %v1088, 1
        %vm1121 = vcmp.eq.s32.totalorder %v1089, 1
        %vm1122 = vcmp.eq.s32.totalorder %v1090, 1
        %vm1123 = vcmp.eq.s32.totalorder %v1091, 1
        %vm1124 = vcmp.eq.s32.totalorder %v1092, 1
        %vm1125 = vcmp.eq.s32.totalorder %v1093, 1
        %vm1126 = vcmp.eq.s32.totalorder %v1094, 1
        %v1127 = vsel %vm1095, 0.0, %v1062
        %v1128 = vsel %vm1096, 0.0, %v1061
        %v1129 = vsel %vm1097, 0.0, %v1060
        %v1130 = vsel %vm1098, 0.0, %v1059
        %v1131 = vsel %vm1099, 0.0, %v1058
        %v1132 = vsel %vm1100, 0.0, %v1057
        %v1133 = vsel %vm1101, 0.0, %v1056
        %v1134 = vsel %vm1102, 0.0, %v1055
        %v1135 = vsel %vm1103, 0.0, %v1054
        %v1136 = vsel %vm1104, 0.0, %v1053
        %v1137 = vsel %vm1105, 0.0, %v1052
        %v1138 = vsel %vm1106, 0.0, %v1051
        %v1139 = vsel %vm1107, 0.0, %v1050
        %v1140 = vsel %vm1108, 0.0, %v1049
        %v1141 = vsel %vm1109, 0.0, %v1048
        %v1142 = vsel %vm1110, 0.0, %v1047
        %v1143 = vsel %vm1111, 0.0, %v1046
        %v1144 = vsel %vm1112, 0.0, %v1045
        %v1145 = vsel %vm1113, 0.0, %v1044
        %v1146 = vsel %vm1114, 0.0, %v1043
        %v1147 = vsel %vm1115, 0.0, %v1042
        %v1148 = vsel %vm1116, 0.0, %v1041
        %v1149 = vsel %vm1117, 0.0, %v1040
        %v1150 = vsel %vm1118, 0.0, %v1039
        %v1151 = vsel %vm1119, 0.0, %v1038
        %v1152 = vsel %vm1120, 0.0, %v1037
        %v1153 = vsel %vm1121, 0.0, %v1036
        %v1154 = vsel %vm1122, 0.0, %v1035
        %v1155 = vsel %vm1123, 0.0, %v1034
        %v1156 = vsel %vm1124, 0.0, %v1033
        %v1157 = vsel %vm1125, 0.0, %v1032
        %v1158 = vsel %vm1126, 0.0, %v1031
        %vm1159 = vcmp.eq.s32.totalorder %v934, 15
        %vm1160 = vcmp.eq.s32.totalorder %v935, 15
        %vm1161 = vcmp.eq.s32.totalorder %v936, 15
        %vm1162 = vcmp.eq.s32.totalorder %v937, 15
        %vm1163 = vcmp.eq.s32.totalorder %v938, 15
        %vm1164 = vcmp.eq.s32.totalorder %v939, 15
        %vm1165 = vcmp.eq.s32.totalorder %v940, 15
        %vm1166 = vcmp.eq.s32.totalorder %v941, 15
        %vm1167 = vcmp.eq.s32.totalorder %v942, 15
        %vm1168 = vcmp.eq.s32.totalorder %v943, 15
        %vm1169 = vcmp.eq.s32.totalorder %v944, 15
        %vm1170 = vcmp.eq.s32.totalorder %v945, 15
        %vm1171 = vcmp.eq.s32.totalorder %v946, 15
        %vm1172 = vcmp.eq.s32.totalorder %v947, 15
        %vm1173 = vcmp.eq.s32.totalorder %v948, 15
        %vm1174 = vcmp.eq.s32.totalorder %v949, 15
        %vm1175 = vcmp.eq.s32.totalorder %v950, 15
        %vm1176 = vcmp.eq.s32.totalorder %v951, 15
        %vm1177 = vcmp.eq.s32.totalorder %v952, 15
        %vm1178 = vcmp.eq.s32.totalorder %v953, 15
        %vm1179 = vcmp.eq.s32.totalorder %v954, 15
        %vm1180 = vcmp.eq.s32.totalorder %v955, 15
        %vm1181 = vcmp.eq.s32.totalorder %v956, 15
        %vm1182 = vcmp.eq.s32.totalorder %v957, 15
        %vm1183 = vcmp.eq.s32.totalorder %v958, 15
        %vm1184 = vcmp.eq.s32.totalorder %v959, 15
        %vm1185 = vcmp.eq.s32.totalorder %v960, 15
        %vm1186 = vcmp.eq.s32.totalorder %v961, 15
        %vm1187 = vcmp.eq.s32.totalorder %v962, 15
        %vm1188 = vcmp.eq.s32.totalorder %v963, 15
        %vm1189 = vcmp.eq.s32.totalorder %v964, 15
        %vm1190 = vcmp.eq.s32.totalorder %v965, 15
        %v1191 = vrot.slane %v517, 1
        %v1192 = vrot.slane %v518, 1
        %v1193 = vrot.slane %v519, 1
        %v1194 = vrot.slane %v520, 1
        %v1195 = vrot.slane %v521, 1
        %v1196 = vrot.slane %v522, 1
        %v1197 = vrot.slane %v523, 1
        %v1198 = vrot.slane %v524, 1
        %v1199 = vrot.slane %v525, 1
        %v1200 = vrot.slane %v526, 1
        %v1201 = vrot.slane %v527, 1
        %v1202 = vrot.slane %v528, 1
        %v1203 = vrot.slane %v529, 1
        %v1204 = vrot.slane %v530, 1
        %v1205 = vrot.slane %v531, 1
        %v1206 = vrot.slane %v532, 1
        %v1207 = vrot.slane %v533, 1
        %v1208 = vrot.slane %v534, 1
        %v1209 = vrot.slane %v535, 1
        %v1210 = vrot.slane %v536, 1
        %v1211 = vrot.slane %v537, 1
        %v1212 = vrot.slane %v538, 1
        %v1213 = vrot.slane %v539, 1
        %v1214 = vrot.slane %v540, 1
        %v1215 = vrot.slane %v541, 1
        %v1216 = vrot.slane %v542, 1
        %v1217 = vrot.slane %v543, 1
        %v1218 = vrot.slane %v544, 1
        %v1219 = vrot.slane %v545, 1
        %v1220 = vrot.slane %v546, 1
        %v1221 = vrot.slane %v547, 1
        %v1222 = vrot.slane %v548, 1
        %vm1223 = vcmp.lt.s32.totalorder %v550, 7
        %v1224 = vsel %vm1223, %v1221, %v1222
        %v1225 = vsel %vm1223, %v1220, %v1221
        %v1226 = vsel %vm1223, %v1219, %v1220
        %v1227 = vsel %vm1223, %v1218, %v1219
        %v1228 = vsel %vm1223, %v1217, %v1218
        %v1229 = vsel %vm1223, %v1216, %v1217
        %v1230 = vsel %vm1223, %v1215, %v1216
        %v1231 = vsel %vm1223, %v1214, %v1215
        %v1232 = vsel %vm1223, %v1213, %v1214
        %v1233 = vsel %vm1223, %v1212, %v1213
        %v1234 = vsel %vm1223, %v1211, %v1212
        %v1235 = vsel %vm1223, %v1210, %v1211
        %v1236 = vsel %vm1223, %v1209, %v1210
        %v1237 = vsel %vm1223, %v1208, %v1209
        %v1238 = vsel %vm1223, %v1207, %v1208
        %v1239 = vsel %vm1223, %v1206, %v1207
        %v1240 = vsel %vm1223, %v1205, %v1206
        %v1241 = vsel %vm1223, %v1204, %v1205
        %v1242 = vsel %vm1223, %v1203, %v1204
        %v1243 = vsel %vm1223, %v1202, %v1203
        %v1244 = vsel %vm1223, %v1201, %v1202
        %v1245 = vsel %vm1223, %v1200, %v1201
        %v1246 = vsel %vm1223, %v1199, %v1200
        %v1247 = vsel %vm1223, %v1198, %v1199
        %v1248 = vsel %vm1223, %v1197, %v1198
        %v1249 = vsel %vm1223, %v1196, %v1197
        %v1250 = vsel %vm1223, %v1195, %v1196
        %v1251 = vsel %vm1223, %v1194, %v1195
        %v1252 = vsel %vm1223, %v1193, %v1194
        %v1253 = vsel %vm1223, %v1192, %v1193
        %v1254 = vsel %vm1223, %v1191, %v1192
        %v1255 = vsel %vm1223, %v1222, %v1191
        %v1256 = vsel %vm1159, 1, 0
        %v1257 = vsel %vm1160, 1, 0
        %v1258 = vsel %vm1161, 1, 0
        %v1259 = vsel %vm1162, 1, 0
        %v1260 = vsel %vm1163, 1, 0
        %v1261 = vsel %vm1164, 1, 0
        %v1262 = vsel %vm1165, 1, 0
        %v1263 = vsel %vm1166, 1, 0
        %v1264 = vsel %vm1167, 1, 0
        %v1265 = vsel %vm1168, 1, 0
        %v1266 = vsel %vm1169, 1, 0
        %v1267 = vsel %vm1170, 1, 0
        %v1268 = vsel %vm1171, 1, 0
        %v1269 = vsel %vm1172, 1, 0
        %v1270 = vsel %vm1173, 1, 0
        %v1271 = vsel %vm1174, 1, 0
        %v1272 = vsel %vm1175, 1, 0
        %v1273 = vsel %vm1176, 1, 0
        %v1274 = vsel %vm1177, 1, 0
        %v1275 = vsel %vm1178, 1, 0
        %v1276 = vsel %vm1179, 1, 0
        %v1277 = vsel %vm1180, 1, 0
        %v1278 = vsel %vm1181, 1, 0
        %v1279 = vsel %vm1182, 1, 0
        %v1280 = vsel %vm1183, 1, 0
        %v1281 = vsel %vm1184, 1, 0
        %v1282 = vsel %vm1185, 1, 0
        %v1283 = vsel %vm1186, 1, 0
        %v1284 = vsel %vm1187, 1, 0
        %v1285 = vsel %vm1188, 1, 0
        %v1286 = vsel %vm1189, 1, 0
        %v1287 = vsel %vm1190, 1, 0
        %vm1288 = vcmp.eq.s32.totalorder %v1256, 1
        %vm1289 = vcmp.eq.s32.totalorder %v1257, 1
        %vm1290 = vcmp.eq.s32.totalorder %v1258, 1
        %vm1291 = vcmp.eq.s32.totalorder %v1259, 1
        %vm1292 = vcmp.eq.s32.totalorder %v1260, 1
        %vm1293 = vcmp.eq.s32.totalorder %v1261, 1
        %vm1294 = vcmp.eq.s32.totalorder %v1262, 1
        %vm1295 = vcmp.eq.s32.totalorder %v1263, 1
        %vm1296 = vcmp.eq.s32.totalorder %v1264, 1
        %vm1297 = vcmp.eq.s32.totalorder %v1265, 1
        %vm1298 = vcmp.eq.s32.totalorder %v1266, 1
        %vm1299 = vcmp.eq.s32.totalorder %v1267, 1
        %vm1300 = vcmp.eq.s32.totalorder %v1268, 1
        %vm1301 = vcmp.eq.s32.totalorder %v1269, 1
        %vm1302 = vcmp.eq.s32.totalorder %v1270, 1
        %vm1303 = vcmp.eq.s32.totalorder %v1271, 1
        %vm1304 = vcmp.eq.s32.totalorder %v1272, 1
        %vm1305 = vcmp.eq.s32.totalorder %v1273, 1
        %vm1306 = vcmp.eq.s32.totalorder %v1274, 1
        %vm1307 = vcmp.eq.s32.totalorder %v1275, 1
        %vm1308 = vcmp.eq.s32.totalorder %v1276, 1
        %vm1309 = vcmp.eq.s32.totalorder %v1277, 1
        %vm1310 = vcmp.eq.s32.totalorder %v1278, 1
        %vm1311 = vcmp.eq.s32.totalorder %v1279, 1
        %vm1312 = vcmp.eq.s32.totalorder %v1280, 1
        %vm1313 = vcmp.eq.s32.totalorder %v1281, 1
        %vm1314 = vcmp.eq.s32.totalorder %v1282, 1
        %vm1315 = vcmp.eq.s32.totalorder %v1283, 1
        %vm1316 = vcmp.eq.s32.totalorder %v1284, 1
        %vm1317 = vcmp.eq.s32.totalorder %v1285, 1
        %vm1318 = vcmp.eq.s32.totalorder %v1286, 1
        %vm1319 = vcmp.eq.s32.totalorder %v1287, 1
        %v1320 = vsel %vm1288, 0.0, %v1254
        %v1321 = vsel %vm1289, 0.0, %v1253
        %v1322 = vsel %vm1290, 0.0, %v1252
        %v1323 = vsel %vm1291, 0.0, %v1251
        %v1324 = vsel %vm1292, 0.0, %v1250
        %v1325 = vsel %vm1293, 0.0, %v1249
        %v1326 = vsel %vm1294, 0.0, %v1248
        %v1327 = vsel %vm1295, 0.0, %v1247
        %v1328 = vsel %vm1296, 0.0, %v1246
        %v1329 = vsel %vm1297, 0.0, %v1245
        %v1330 = vsel %vm1298, 0.0, %v1244
        %v1331 = vsel %vm1299, 0.0, %v1243
        %v1332 = vsel %vm1300, 0.0, %v1242
        %v1333 = vsel %vm1301, 0.0, %v1241
        %v1334 = vsel %vm1302, 0.0, %v1240
        %v1335 = vsel %vm1303, 0.0, %v1239
        %v1336 = vsel %vm1304, 0.0, %v1238
        %v1337 = vsel %vm1305, 0.0, %v1237
        %v1338 = vsel %vm1306, 0.0, %v1236
        %v1339 = vsel %vm1307, 0.0, %v1235
        %v1340 = vsel %vm1308, 0.0, %v1234
        %v1341 = vsel %vm1309, 0.0, %v1233
        %v1342 = vsel %vm1310, 0.0, %v1232
        %v1343 = vsel %vm1311, 0.0, %v1231
        %v1344 = vsel %vm1312, 0.0, %v1230
        %v1345 = vsel %vm1313, 0.0, %v1229
        %v1346 = vsel %vm1314, 0.0, %v1228
        %v1347 = vsel %vm1315, 0.0, %v1227
        %v1348 = vsel %vm1316, 0.0, %v1226
        %v1349 = vsel %vm1317, 0.0, %v1225
        %v1350 = vsel %vm1318, 0.0, %v1224
        %v1351 = vsel %vm1319, 0.0, %v1255
        %v1352 = vpack.c.bf16 %v1128, %v1127
        %v1353 = vpack.c.bf16 %v1130, %v1129
        %v1354 = vpack.c.bf16 %v1132, %v1131
        %v1355 = vpack.c.bf16 %v1134, %v1133
        %v1356 = vpack.c.bf16 %v1136, %v1135
        %v1357 = vpack.c.bf16 %v1138, %v1137
        %v1358 = vpack.c.bf16 %v1140, %v1139
        %v1359 = vpack.c.bf16 %v1142, %v1141
        %v1360 = vpack.c.bf16 %v1144, %v1143
        %v1361 = vpack.c.bf16 %v1146, %v1145
        %v1362 = vpack.c.bf16 %v1148, %v1147
        %v1363 = vpack.c.bf16 %v1150, %v1149
        %v1364 = vpack.c.bf16 %v1152, %v1151
        %v1365 = vpack.c.bf16 %v1154, %v1153
        %v1366 = vpack.c.bf16 %v1156, %v1155
        %v1367 = vpack.c.bf16 %v1158, %v1157
        %v1368 = vld [vmem:[%s1] sm:$0xf]
        %v1369 = vpack.c.bf16 %v518, %v517
        %v1370 = vpack.c.bf16 %v520, %v519
        %v1371 = vpack.c.bf16 %v522, %v521
        %v1372 = vpack.c.bf16 %v524, %v523
        %v1373 = vpack.c.bf16 %v526, %v525
        %v1374 = vpack.c.bf16 %v528, %v527
        %v1375 = vpack.c.bf16 %v530, %v529
        %v1376 = vpack.c.bf16 %v532, %v531
        %v1377 = vpack.c.bf16 %v534, %v533
        %v1378 = vpack.c.bf16 %v536, %v535
        %v1379 = vpack.c.bf16 %v538, %v537
        %v1380 = vpack.c.bf16 %v540, %v539
        %v1381 = vpack.c.bf16 %v542, %v541
        %v1382 = vpack.c.bf16 %v544, %v543
        %v1383 = vpack.c.bf16 %v546, %v545
        %v1384 = vpack.c.bf16 %v548, %v547
        %v1385 = vld [vmem:[%s2] sm:$0xf]
        %vm1386 = vcmask 64512
        %v1388 = vsel %vm1386, %v1369, 0
        %v1391 = vsel %vm1386, %v1370, 0
        %v1394 = vsel %vm1386, %v1371, 0
        %v1397 = vsel %vm1386, %v1372, 0
        %v1400 = vsel %vm1386, %v1373, 0
        %v1403 = vsel %vm1386, %v1374, 0
        %v1406 = vsel %vm1386, %v1375, 0
        %v1409 = vsel %vm1386, %v1376, 0
        %v1412 = vsel %vm1386, %v1377, 0
        %v1415 = vsel %vm1386, %v1378, 0
        %v1418 = vsel %vm1386, %v1379, 0
        %v1421 = vsel %vm1386, %v1380, 0
        %v1424 = vsel %vm1386, %v1381, 0
        %v1427 = vsel %vm1386, %v1382, 0
        %v1430 = vsel %vm1386, %v1383, 0
        %v1433 = vsel %vm1386, %v1384, 0
        %vm1435 = vcmask 1043456
        %v1437 = vsel %vm1435, %v1385, 0
        %1439 = vmatprep.subr.bf16.mxu0 0
        %1440 = vmatpush1.bf16.msra.mxu0 0
        %1441 = vmatprep.subr.bf16.mxu0 0
        %1442 = vmatpush1.bf16.msra.mxu0 0
        %1443 = vmatprep.subr.bf16.mxu0 0
        %1444 = vmatpush1.bf16.msra.mxu0 0
        %1445 = vmatprep.subr.bf16.mxu0 0
        %1446 = vmatpush1.bf16.msra.mxu0 0
        %1447 = vmatprep.subr.bf16.mxu0 0
        %1448 = vmatpush1.bf16.msra.mxu0 0
        %1449 = vmatprep.subr.bf16.mxu0 0
        %1450 = vmatpush1.bf16.msra.mxu0 0
        %1451 = vmatprep.subr.bf16.mxu0 0
        %1452 = vmatpush1.bf16.msra.mxu0 0
        %1453 = vmatprep.subr.bf16.mxu0 0
        %1454 = vmatpush1.bf16.msra.mxu0 %v1437
        %1455 = vmatprep.subr.bf16.mxu0 0
        %1456 = vmatpush2.bf16.msra.mxu0 0
        %1457 = vmatprep.subr.bf16.mxu0 0
        %1458 = vmatpush2.bf16.msra.mxu0 0
        %1459 = vmatprep.subr.bf16.mxu0 0
        %1460 = vmatpush2.bf16.msra.mxu0 0
        %1461 = vmatprep.subr.bf16.mxu0 0
        %1462 = vmatpush2.bf16.msra.mxu0 0
        %1463 = vmatprep.subr.bf16.mxu0 0
        %1464 = vmatpush2.bf16.msra.mxu0 0
        %1465 = vmatprep.subr.bf16.mxu0 0
        %1466 = vmatpush2.bf16.msra.mxu0 0
        %1467 = vmatprep.subr.bf16.mxu0 0
        %1468 = vmatpush2.bf16.msra.mxu0 0
        %1469 = vmatprep.subr.bf16.mxu0 0
        %1470 = vmatpush2.bf16.msra.mxu0 0
        %1471 = vmatprep.mubr.bf16.mxu0 0
        %1472 = vmatmul.mubr.bf16.gmra.mxu0 %v1388
        %v1473 = vpop.f32.mrf.mxu0
        %v1474 = vadd.f32 0.0, %v1473
        %v1475 = vpop.f32.mrf.mxu0
        %v1476 = vpop.f32.mrf.mxu0
        %v1477 = vadd.f32 0.0, %v1476
        %v1478 = vpop.f32.mrf.mxu0
        %1479 = vmatprep.mubr.bf16.mxu0 0
        %1480 = vmatmul.mubr.bf16.gmra.mxu0 %v1391
        %v1481 = vpop.f32.mrf.mxu0
        %v1482 = vadd.f32 0.0, %v1481
        %v1483 = vpop.f32.mrf.mxu0
        %v1484 = vpop.f32.mrf.mxu0
        %v1485 = vadd.f32 0.0, %v1484
        %v1486 = vpop.f32.mrf.mxu0
        %1487 = vmatprep.mubr.bf16.mxu0 0
        %1488 = vmatmul.mubr.bf16.gmra.mxu0 %v1394
        %v1489 = vpop.f32.mrf.mxu0
        %v1490 = vadd.f32 0.0, %v1489
        %v1491 = vpop.f32.mrf.mxu0
        %v1492 = vpop.f32.mrf.mxu0
        %v1493 = vadd.f32 0.0, %v1492
        %v1494 = vpop.f32.mrf.mxu0
        %1495 = vmatprep.mubr.bf16.mxu0 0
        %1496 = vmatmul.mubr.bf16.gmra.mxu0 %v1397
        %v1497 = vpop.f32.mrf.mxu0
        %v1498 = vadd.f32 0.0, %v1497
        %v1499 = vpop.f32.mrf.mxu0
        %v1500 = vpop.f32.mrf.mxu0
        %v1501 = vadd.f32 0.0, %v1500
        %v1502 = vpop.f32.mrf.mxu0
        %1503 = vmatprep.mubr.bf16.mxu0 0
        %1504 = vmatmul.mubr.bf16.gmra.mxu0 %v1400
        %v1505 = vpop.f32.mrf.mxu0
        %v1506 = vadd.f32 0.0, %v1505
        %v1507 = vpop.f32.mrf.mxu0
        %v1508 = vpop.f32.mrf.mxu0
        %v1509 = vadd.f32 0.0, %v1508
        %v1510 = vpop.f32.mrf.mxu0
        %1511 = vmatprep.mubr.bf16.mxu0 0
        %1512 = vmatmul.mubr.bf16.gmra.mxu0 %v1403
        %v1513 = vpop.f32.mrf.mxu0
        %v1514 = vadd.f32 0.0, %v1513
        %v1515 = vpop.f32.mrf.mxu0
        %v1516 = vpop.f32.mrf.mxu0
        %v1517 = vadd.f32 0.0, %v1516
        %v1518 = vpop.f32.mrf.mxu0
        %1519 = vmatprep.mubr.bf16.mxu0 0
        %1520 = vmatmul.mubr.bf16.gmra.mxu0 %v1406
        %v1521 = vpop.f32.mrf.mxu0
        %v1522 = vadd.f32 0.0, %v1521
        %v1523 = vpop.f32.mrf.mxu0
        %v1524 = vpop.f32.mrf.mxu0
        %v1525 = vadd.f32 0.0, %v1524
        %v1526 = vpop.f32.mrf.mxu0
        %1527 = vmatprep.mubr.bf16.mxu0 0
        %1528 = vmatmul.mubr.bf16.gmra.mxu0 %v1409
        %v1529 = vpop.f32.mrf.mxu0
        %v1530 = vadd.f32 0.0, %v1529
        %v1531 = vpop.f32.mrf.mxu0
        %v1532 = vpop.f32.mrf.mxu0
        %v1533 = vadd.f32 0.0, %v1532
        %v1534 = vpop.f32.mrf.mxu0
        %1535 = vmatprep.mubr.bf16.mxu0 0
        %1536 = vmatmul.mubr.bf16.gmra.mxu0 %v1412
        %v1537 = vpop.f32.mrf.mxu0
        %v1538 = vadd.f32 0.0, %v1537
        %v1539 = vpop.f32.mrf.mxu0
        %v1540 = vpop.f32.mrf.mxu0
        %v1541 = vadd.f32 0.0, %v1540
        %v1542 = vpop.f32.mrf.mxu0
        %1543 = vmatprep.mubr.bf16.mxu0 0
        %1544 = vmatmul.mubr.bf16.gmra.mxu0 %v1415
        %v1545 = vpop.f32.mrf.mxu0
        %v1546 = vadd.f32 0.0, %v1545
        %v1547 = vpop.f32.mrf.mxu0
        %v1548 = vpop.f32.mrf.mxu0
        %v1549 = vadd.f32 0.0, %v1548
        %v1550 = vpop.f32.mrf.mxu0
        %1551 = vmatprep.mubr.bf16.mxu0 0
        %1552 = vmatmul.mubr.bf16.gmra.mxu0 %v1418
        %v1553 = vpop.f32.mrf.mxu0
        %v1554 = vadd.f32 0.0, %v1553
        %v1555 = vpop.f32.mrf.mxu0
        %v1556 = vpop.f32.mrf.mxu0
        %v1557 = vadd.f32 0.0, %v1556
        %v1558 = vpop.f32.mrf.mxu0
        %1559 = vmatprep.mubr.bf16.mxu0 0
        %1560 = vmatmul.mubr.bf16.gmra.mxu0 %v1421
        %v1561 = vpop.f32.mrf.mxu0
        %v1562 = vadd.f32 0.0, %v1561
        %v1563 = vpop.f32.mrf.mxu0
        %v1564 = vpop.f32.mrf.mxu0
        %v1565 = vadd.f32 0.0, %v1564
        %v1566 = vpop.f32.mrf.mxu0
        %1567 = vmatprep.mubr.bf16.mxu0 0
        %1568 = vmatmul.mubr.bf16.gmra.mxu0 %v1424
        %v1569 = vpop.f32.mrf.mxu0
        %v1570 = vadd.f32 0.0, %v1569
        %v1571 = vpop.f32.mrf.mxu0
        %v1572 = vpop.f32.mrf.mxu0
        %v1573 = vadd.f32 0.0, %v1572
        %v1574 = vpop.f32.mrf.mxu0
        %1575 = vmatprep.mubr.bf16.mxu0 0
        %1576 = vmatmul.mubr.bf16.gmra.mxu0 %v1427
        %v1577 = vpop.f32.mrf.mxu0
        %v1578 = vadd.f32 0.0, %v1577
        %v1579 = vpop.f32.mrf.mxu0
        %v1580 = vpop.f32.mrf.mxu0
        %v1581 = vadd.f32 0.0, %v1580
        %v1582 = vpop.f32.mrf.mxu0
        %1583 = vmatprep.mubr.bf16.mxu0 0
        %1584 = vmatmul.mubr.bf16.gmra.mxu0 %v1430
        %v1585 = vpop.f32.mrf.mxu0
        %v1586 = vadd.f32 0.0, %v1585
        %v1587 = vpop.f32.mrf.mxu0
        %v1588 = vpop.f32.mrf.mxu0
        %v1589 = vadd.f32 0.0, %v1588
        %v1590 = vpop.f32.mrf.mxu0
        %1591 = vmatprep.mubr.bf16.mxu0 0
        %1592 = vmatmul.mubr.bf16.gmra.mxu0 %v1433
        %v1593 = vpop.f32.mrf.mxu0
        %v1594 = vadd.f32 0.0, %v1593
        %v1595 = vpop.f32.mrf.mxu0
        %v1596 = vpop.f32.mrf.mxu0
        %v1597 = vadd.f32 0.0, %v1596
        %v1598 = vpop.f32.mrf.mxu0
        %1599 = vdwg.mxu0
        %v1601 = vsel %vm1386, %v1352, 0
        %v1604 = vsel %vm1386, %v1353, 0
        %v1607 = vsel %vm1386, %v1354, 0
        %v1610 = vsel %vm1386, %v1355, 0
        %v1613 = vsel %vm1386, %v1356, 0
        %v1616 = vsel %vm1386, %v1357, 0
        %v1619 = vsel %vm1386, %v1358, 0
        %v1622 = vsel %vm1386, %v1359, 0
        %v1625 = vsel %vm1386, %v1360, 0
        %v1628 = vsel %vm1386, %v1361, 0
        %v1631 = vsel %vm1386, %v1362, 0
        %v1634 = vsel %vm1386, %v1363, 0
        %v1637 = vsel %vm1386, %v1364, 0
        %v1640 = vsel %vm1386, %v1365, 0
        %v1643 = vsel %vm1386, %v1366, 0
        %v1646 = vsel %vm1386, %v1367, 0
        %v1649 = vsel %vm1435, %v1368, 0
        %1651 = vmatprep.subr.bf16.mxu0 0
        %1652 = vmatpush1.bf16.msra.mxu0 0
        %1653 = vmatprep.subr.bf16.mxu0 0
        %1654 = vmatpush1.bf16.msra.mxu0 0
        %1655 = vmatprep.subr.bf16.mxu0 0
        %1656 = vmatpush1.bf16.msra.mxu0 0
        %1657 = vmatprep.subr.bf16.mxu0 0
        %1658 = vmatpush1.bf16.msra.mxu0 0
        %1659 = vmatprep.subr.bf16.mxu0 0
        %1660 = vmatpush1.bf16.msra.mxu0 0
        %1661 = vmatprep.subr.bf16.mxu0 0
        %1662 = vmatpush1.bf16.msra.mxu0 0
        %1663 = vmatprep.subr.bf16.mxu0 0
        %1664 = vmatpush1.bf16.msra.mxu0 0
        %1665 = vmatprep.subr.bf16.mxu0 0
        %1666 = vmatpush1.bf16.msra.mxu0 %v1649
        %1667 = vmatprep.subr.bf16.mxu0 0
        %1668 = vmatpush2.bf16.msra.mxu0 0
        %1669 = vmatprep.subr.bf16.mxu0 0
        %1670 = vmatpush2.bf16.msra.mxu0 0
        %1671 = vmatprep.subr.bf16.mxu0 0
        %1672 = vmatpush2.bf16.msra.mxu0 0
        %1673 = vmatprep.subr.bf16.mxu0 0
        %1674 = vmatpush2.bf16.msra.mxu0 0
        %1675 = vmatprep.subr.bf16.mxu0 0
        %1676 = vmatpush2.bf16.msra.mxu0 0
        %1677 = vmatprep.subr.bf16.mxu0 0
        %1678 = vmatpush2.bf16.msra.mxu0 0
        %1679 = vmatprep.subr.bf16.mxu0 0
        %1680 = vmatpush2.bf16.msra.mxu0 0
        %1681 = vmatprep.subr.bf16.mxu0 0
        %1682 = vmatpush2.bf16.msra.mxu0 0
        %1683 = vmatprep.mubr.bf16.mxu0 0
        %1684 = vmatmul.mubr.bf16.gmra.mxu0 %v1601
        %v1685 = vpop.f32.mrf.mxu0
        %v1686 = vadd.f32 %v1474, %v1685
        %v1687 = vpop.f32.mrf.mxu0
        %v1688 = vpop.f32.mrf.mxu0
        %v1689 = vadd.f32 %v1477, %v1688
        %v1690 = vpop.f32.mrf.mxu0
        %1691 = vmatprep.mubr.bf16.mxu0 0
        %1692 = vmatmul.mubr.bf16.gmra.mxu0 %v1604
        %v1693 = vpop.f32.mrf.mxu0
        %v1694 = vadd.f32 %v1482, %v1693
        %v1695 = vpop.f32.mrf.mxu0
        %v1696 = vpop.f32.mrf.mxu0
        %v1697 = vadd.f32 %v1485, %v1696
        %v1698 = vpop.f32.mrf.mxu0
        %1699 = vmatprep.mubr.bf16.mxu0 0
        %1700 = vmatmul.mubr.bf16.gmra.mxu0 %v1607
        %v1701 = vpop.f32.mrf.mxu0
        %v1702 = vadd.f32 %v1490, %v1701
        %v1703 = vpop.f32.mrf.mxu0
        %v1704 = vpop.f32.mrf.mxu0
        %v1705 = vadd.f32 %v1493, %v1704
        %v1706 = vpop.f32.mrf.mxu0
        %1707 = vmatprep.mubr.bf16.mxu0 0
        %1708 = vmatmul.mubr.bf16.gmra.mxu0 %v1610
        %v1709 = vpop.f32.mrf.mxu0
        %v1710 = vadd.f32 %v1498, %v1709
        %v1711 = vpop.f32.mrf.mxu0
        %v1712 = vpop.f32.mrf.mxu0
        %v1713 = vadd.f32 %v1501, %v1712
        %v1714 = vpop.f32.mrf.mxu0
        %1715 = vmatprep.mubr.bf16.mxu0 0
        %1716 = vmatmul.mubr.bf16.gmra.mxu0 %v1613
        %v1717 = vpop.f32.mrf.mxu0
        %v1718 = vadd.f32 %v1506, %v1717
        %v1719 = vpop.f32.mrf.mxu0
        %v1720 = vpop.f32.mrf.mxu0
        %v1721 = vadd.f32 %v1509, %v1720
        %v1722 = vpop.f32.mrf.mxu0
        %1723 = vmatprep.mubr.bf16.mxu0 0
        %1724 = vmatmul.mubr.bf16.gmra.mxu0 %v1616
        %v1725 = vpop.f32.mrf.mxu0
        %v1726 = vadd.f32 %v1514, %v1725
        %v1727 = vpop.f32.mrf.mxu0
        %v1728 = vpop.f32.mrf.mxu0
        %v1729 = vadd.f32 %v1517, %v1728
        %v1730 = vpop.f32.mrf.mxu0
        %1731 = vmatprep.mubr.bf16.mxu0 0
        %1732 = vmatmul.mubr.bf16.gmra.mxu0 %v1619
        %v1733 = vpop.f32.mrf.mxu0
        %v1734 = vadd.f32 %v1522, %v1733
        %v1735 = vpop.f32.mrf.mxu0
        %v1736 = vpop.f32.mrf.mxu0
        %v1737 = vadd.f32 %v1525, %v1736
        %v1738 = vpop.f32.mrf.mxu0
        %1739 = vmatprep.mubr.bf16.mxu0 0
        %1740 = vmatmul.mubr.bf16.gmra.mxu0 %v1622
        %v1741 = vpop.f32.mrf.mxu0
        %v1742 = vadd.f32 %v1530, %v1741
        %v1743 = vpop.f32.mrf.mxu0
        %v1744 = vpop.f32.mrf.mxu0
        %v1745 = vadd.f32 %v1533, %v1744
        %v1746 = vpop.f32.mrf.mxu0
        %1747 = vmatprep.mubr.bf16.mxu0 0
        %1748 = vmatmul.mubr.bf16.gmra.mxu0 %v1625
        %v1749 = vpop.f32.mrf.mxu0
        %v1750 = vadd.f32 %v1538, %v1749
        %v1751 = vpop.f32.mrf.mxu0
        %v1752 = vpop.f32.mrf.mxu0
        %v1753 = vadd.f32 %v1541, %v1752
        %v1754 = vpop.f32.mrf.mxu0
        %1755 = vmatprep.mubr.bf16.mxu0 0
        %1756 = vmatmul.mubr.bf16.gmra.mxu0 %v1628
        %v1757 = vpop.f32.mrf.mxu0
        %v1758 = vadd.f32 %v1546, %v1757
        %v1759 = vpop.f32.mrf.mxu0
        %v1760 = vpop.f32.mrf.mxu0
        %v1761 = vadd.f32 %v1549, %v1760
        %v1762 = vpop.f32.mrf.mxu0
        %1763 = vmatprep.mubr.bf16.mxu0 0
        %1764 = vmatmul.mubr.bf16.gmra.mxu0 %v1631
        %v1765 = vpop.f32.mrf.mxu0
        %v1766 = vadd.f32 %v1554, %v1765
        %v1767 = vpop.f32.mrf.mxu0
        %v1768 = vpop.f32.mrf.mxu0
        %v1769 = vadd.f32 %v1557, %v1768
        %v1770 = vpop.f32.mrf.mxu0
        %1771 = vmatprep.mubr.bf16.mxu0 0
        %1772 = vmatmul.mubr.bf16.gmra.mxu0 %v1634
        %v1773 = vpop.f32.mrf.mxu0
        %v1774 = vadd.f32 %v1562, %v1773
        %v1775 = vpop.f32.mrf.mxu0
        %v1776 = vpop.f32.mrf.mxu0
        %v1777 = vadd.f32 %v1565, %v1776
        %v1778 = vpop.f32.mrf.mxu0
        %1779 = vmatprep.mubr.bf16.mxu0 0
        %1780 = vmatmul.mubr.bf16.gmra.mxu0 %v1637
        %v1781 = vpop.f32.mrf.mxu0
        %v1782 = vadd.f32 %v1570, %v1781
        %v1783 = vpop.f32.mrf.mxu0
        %v1784 = vpop.f32.mrf.mxu0
        %v1785 = vadd.f32 %v1573, %v1784
        %v1786 = vpop.f32.mrf.mxu0
        %1787 = vmatprep.mubr.bf16.mxu0 0
        %1788 = vmatmul.mubr.bf16.gmra.mxu0 %v1640
        %v1789 = vpop.f32.mrf.mxu0
        %v1790 = vadd.f32 %v1578, %v1789
        %v1791 = vpop.f32.mrf.mxu0
        %v1792 = vpop.f32.mrf.mxu0
        %v1793 = vadd.f32 %v1581, %v1792
        %v1794 = vpop.f32.mrf.mxu0
        %1795 = vmatprep.mubr.bf16.mxu0 0
        %1796 = vmatmul.mubr.bf16.gmra.mxu0 %v1643
        %v1797 = vpop.f32.mrf.mxu0
        %v1798 = vadd.f32 %v1586, %v1797
        %v1799 = vpop.f32.mrf.mxu0
        %v1800 = vpop.f32.mrf.mxu0
        %v1801 = vadd.f32 %v1589, %v1800
        %v1802 = vpop.f32.mrf.mxu0
        %1803 = vmatprep.mubr.bf16.mxu0 0
        %1804 = vmatmul.mubr.bf16.gmra.mxu0 %v1646
        %v1805 = vpop.f32.mrf.mxu0
        %v1806 = vadd.f32 %v1594, %v1805
        %v1807 = vpop.f32.mrf.mxu0
        %v1808 = vpop.f32.mrf.mxu0
        %v1809 = vadd.f32 %v1597, %v1808
        %v1810 = vpop.f32.mrf.mxu0
        %1811 = vdwg.mxu0
        %v1812 = vpack.c.bf16 %v1321, %v1320
        %v1813 = vpack.c.bf16 %v1323, %v1322
        %v1814 = vpack.c.bf16 %v1325, %v1324
        %v1815 = vpack.c.bf16 %v1327, %v1326
        %v1816 = vpack.c.bf16 %v1329, %v1328
        %v1817 = vpack.c.bf16 %v1331, %v1330
        %v1818 = vpack.c.bf16 %v1333, %v1332
        %v1819 = vpack.c.bf16 %v1335, %v1334
        %v1820 = vpack.c.bf16 %v1337, %v1336
        %v1821 = vpack.c.bf16 %v1339, %v1338
        %v1822 = vpack.c.bf16 %v1341, %v1340
        %v1823 = vpack.c.bf16 %v1343, %v1342
        %v1824 = vpack.c.bf16 %v1345, %v1344
        %v1825 = vpack.c.bf16 %v1347, %v1346
        %v1826 = vpack.c.bf16 %v1349, %v1348
        %v1827 = vpack.c.bf16 %v1351, %v1350
        %v1828 = vld [vmem:[%s3] sm:$0xf]
        %v1830 = vsel %vm1386, %v1812, 0
        %v1833 = vsel %vm1386, %v1813, 0
        %v1836 = vsel %vm1386, %v1814, 0
        %v1839 = vsel %vm1386, %v1815, 0
        %v1842 = vsel %vm1386, %v1816, 0
        %v1845 = vsel %vm1386, %v1817, 0
        %v1848 = vsel %vm1386, %v1818, 0
        %v1851 = vsel %vm1386, %v1819, 0
        %v1854 = vsel %vm1386, %v1820, 0
        %v1857 = vsel %vm1386, %v1821, 0
        %v1860 = vsel %vm1386, %v1822, 0
        %v1863 = vsel %vm1386, %v1823, 0
        %v1866 = vsel %vm1386, %v1824, 0
        %v1869 = vsel %vm1386, %v1825, 0
        %v1872 = vsel %vm1386, %v1826, 0
        %v1875 = vsel %vm1386, %v1827, 0
        %v1878 = vsel %vm1435, %v1828, 0
        %1880 = vmatprep.subr.bf16.mxu0 0
        %1881 = vmatpush1.bf16.msra.mxu0 0
        %1882 = vmatprep.subr.bf16.mxu0 0
        %1883 = vmatpush1.bf16.msra.mxu0 0
        %1884 = vmatprep.subr.bf16.mxu0 0
        %1885 = vmatpush1.bf16.msra.mxu0 0
        %1886 = vmatprep.subr.bf16.mxu0 0
        %1887 = vmatpush1.bf16.msra.mxu0 0
        %1888 = vmatprep.subr.bf16.mxu0 0
        %1889 = vmatpush1.bf16.msra.mxu0 0
        %1890 = vmatprep.subr.bf16.mxu0 0
        %1891 = vmatpush1.bf16.msra.mxu0 0
        %1892 = vmatprep.subr.bf16.mxu0 0
        %1893 = vmatpush1.bf16.msra.mxu0 0
        %1894 = vmatprep.subr.bf16.mxu0 0
        %1895 = vmatpush1.bf16.msra.mxu0 %v1878
        %1896 = vmatprep.subr.bf16.mxu0 0
        %1897 = vmatpush2.bf16.msra.mxu0 0
        %1898 = vmatprep.subr.bf16.mxu0 0
        %1899 = vmatpush2.bf16.msra.mxu0 0
        %1900 = vmatprep.subr.bf16.mxu0 0
        %1901 = vmatpush2.bf16.msra.mxu0 0
        %1902 = vmatprep.subr.bf16.mxu0 0
        %1903 = vmatpush2.bf16.msra.mxu0 0
        %1904 = vmatprep.subr.bf16.mxu0 0
        %1905 = vmatpush2.bf16.msra.mxu0 0
        %1906 = vmatprep.subr.bf16.mxu0 0
        %1907 = vmatpush2.bf16.msra.mxu0 0
        %1908 = vmatprep.subr.bf16.mxu0 0
        %1909 = vmatpush2.bf16.msra.mxu0 0
        %1910 = vmatprep.subr.bf16.mxu0 0
        %1911 = vmatpush2.bf16.msra.mxu0 0
        %1912 = vmatprep.mubr.bf16.mxu0 0
        %1913 = vmatmul.mubr.bf16.gmra.mxu0 %v1830
        %v1914 = vpop.f32.mrf.mxu0
        %v1915 = vadd.f32 0.0, %v1914
        %v1916 = vpop.f32.mrf.mxu0
        %v1917 = vpop.f32.mrf.mxu0
        %v1918 = vadd.f32 0.0, %v1917
        %v1919 = vpop.f32.mrf.mxu0
        %1920 = vmatprep.mubr.bf16.mxu0 0
        %1921 = vmatmul.mubr.bf16.gmra.mxu0 %v1833
        %v1922 = vpop.f32.mrf.mxu0
        %v1923 = vadd.f32 0.0, %v1922
        %v1924 = vpop.f32.mrf.mxu0
        %v1925 = vpop.f32.mrf.mxu0
        %v1926 = vadd.f32 0.0, %v1925
        %v1927 = vpop.f32.mrf.mxu0
        %1928 = vmatprep.mubr.bf16.mxu0 0
        %1929 = vmatmul.mubr.bf16.gmra.mxu0 %v1836
        %v1930 = vpop.f32.mrf.mxu0
        %v1931 = vadd.f32 0.0, %v1930
        %v1932 = vpop.f32.mrf.mxu0
        %v1933 = vpop.f32.mrf.mxu0
        %v1934 = vadd.f32 0.0, %v1933
        %v1935 = vpop.f32.mrf.mxu0
        %1936 = vmatprep.mubr.bf16.mxu0 0
        %1937 = vmatmul.mubr.bf16.gmra.mxu0 %v1839
        %v1938 = vpop.f32.mrf.mxu0
        %v1939 = vadd.f32 0.0, %v1938
        %v1940 = vpop.f32.mrf.mxu0
        %v1941 = vpop.f32.mrf.mxu0
        %v1942 = vadd.f32 0.0, %v1941
        %v1943 = vpop.f32.mrf.mxu0
        %1944 = vmatprep.mubr.bf16.mxu0 0
        %1945 = vmatmul.mubr.bf16.gmra.mxu0 %v1842
        %v1946 = vpop.f32.mrf.mxu0
        %v1947 = vadd.f32 0.0, %v1946
        %v1948 = vpop.f32.mrf.mxu0
        %v1949 = vpop.f32.mrf.mxu0
        %v1950 = vadd.f32 0.0, %v1949
        %v1951 = vpop.f32.mrf.mxu0
        %1952 = vmatprep.mubr.bf16.mxu0 0
        %1953 = vmatmul.mubr.bf16.gmra.mxu0 %v1845
        %v1954 = vpop.f32.mrf.mxu0
        %v1955 = vadd.f32 0.0, %v1954
        %v1956 = vpop.f32.mrf.mxu0
        %v1957 = vpop.f32.mrf.mxu0
        %v1958 = vadd.f32 0.0, %v1957
        %v1959 = vpop.f32.mrf.mxu0
        %1960 = vmatprep.mubr.bf16.mxu0 0
        %1961 = vmatmul.mubr.bf16.gmra.mxu0 %v1848
        %v1962 = vpop.f32.mrf.mxu0
        %v1963 = vadd.f32 0.0, %v1962
        %v1964 = vpop.f32.mrf.mxu0
        %v1965 = vpop.f32.mrf.mxu0
        %v1966 = vadd.f32 0.0, %v1965
        %v1967 = vpop.f32.mrf.mxu0
        %1968 = vmatprep.mubr.bf16.mxu0 0
        %1969 = vmatmul.mubr.bf16.gmra.mxu0 %v1851
        %v1970 = vpop.f32.mrf.mxu0
        %v1971 = vadd.f32 0.0, %v1970
        %v1972 = vpop.f32.mrf.mxu0
        %v1973 = vpop.f32.mrf.mxu0
        %v1974 = vadd.f32 0.0, %v1973
        %v1975 = vpop.f32.mrf.mxu0
        %1976 = vmatprep.mubr.bf16.mxu0 0
        %1977 = vmatmul.mubr.bf16.gmra.mxu0 %v1854
        %v1978 = vpop.f32.mrf.mxu0
        %v1979 = vadd.f32 0.0, %v1978
        %v1980 = vpop.f32.mrf.mxu0
        %v1981 = vpop.f32.mrf.mxu0
        %v1982 = vadd.f32 0.0, %v1981
        %v1983 = vpop.f32.mrf.mxu0
        %1984 = vmatprep.mubr.bf16.mxu0 0
        %1985 = vmatmul.mubr.bf16.gmra.mxu0 %v1857
        %v1986 = vpop.f32.mrf.mxu0
        %v1987 = vadd.f32 0.0, %v1986
        %v1988 = vpop.f32.mrf.mxu0
        %v1989 = vpop.f32.mrf.mxu0
        %v1990 = vadd.f32 0.0, %v1989
        %v1991 = vpop.f32.mrf.mxu0
        %1992 = vmatprep.mubr.bf16.mxu0 0
        %1993 = vmatmul.mubr.bf16.gmra.mxu0 %v1860
        %v1994 = vpop.f32.mrf.mxu0
        %v1995 = vadd.f32 0.0, %v1994
        %v1996 = vpop.f32.mrf.mxu0
        %v1997 = vpop.f32.mrf.mxu0
        %v1998 = vadd.f32 0.0, %v1997
        %v1999 = vpop.f32.mrf.mxu0
        %2000 = vmatprep.mubr.bf16.mxu0 0
        %2001 = vmatmul.mubr.bf16.gmra.mxu0 %v1863
        %v2002 = vpop.f32.mrf.mxu0
        %v2003 = vadd.f32 0.0, %v2002
        %v2004 = vpop.f32.mrf.mxu0
        %v2005 = vpop.f32.mrf.mxu0
        %v2006 = vadd.f32 0.0, %v2005
        %v2007 = vpop.f32.mrf.mxu0
        %2008 = vmatprep.mubr.bf16.mxu0 0
        %2009 = vmatmul.mubr.bf16.gmra.mxu0 %v1866
        %v2010 = vpop.f32.mrf.mxu0
        %v2011 = vadd.f32 0.0, %v2010
        %v2012 = vpop.f32.mrf.mxu0
        %v2013 = vpop.f32.mrf.mxu0
        %v2014 = vadd.f32 0.0, %v2013
        %v2015 = vpop.f32.mrf.mxu0
        %2016 = vmatprep.mubr.bf16.mxu0 0
        %2017 = vmatmul.mubr.bf16.gmra.mxu0 %v1869
        %v2018 = vpop.f32.mrf.mxu0
        %v2019 = vadd.f32 0.0, %v2018
        %v2020 = vpop.f32.mrf.mxu0
        %v2021 = vpop.f32.mrf.mxu0
        %v2022 = vadd.f32 0.0, %v2021
        %v2023 = vpop.f32.mrf.mxu0
        %2024 = vmatprep.mubr.bf16.mxu0 0
        %2025 = vmatmul.mubr.bf16.gmra.mxu0 %v1872
        %v2026 = vpop.f32.mrf.mxu0
        %v2027 = vadd.f32 0.0, %v2026
        %v2028 = vpop.f32.mrf.mxu0
        %v2029 = vpop.f32.mrf.mxu0
        %v2030 = vadd.f32 0.0, %v2029
        %v2031 = vpop.f32.mrf.mxu0
        %2032 = vmatprep.mubr.bf16.mxu0 0
        %2033 = vmatmul.mubr.bf16.gmra.mxu0 %v1875
        %v2034 = vpop.f32.mrf.mxu0
        %v2035 = vadd.f32 0.0, %v2034
        %v2036 = vpop.f32.mrf.mxu0
        %v2037 = vpop.f32.mrf.mxu0
        %v2038 = vadd.f32 0.0, %v2037
        %v2039 = vpop.f32.mrf.mxu0
        %2040 = vdwg.mxu0
        %v2041 = vadd.f32 %v1686, %v1915
        %v2042 = vadd.f32 %v1689, %v1918
        %v2043 = vadd.f32 %v1694, %v1923
        %v2044 = vadd.f32 %v1697, %v1926
        %v2045 = vadd.f32 %v1702, %v1931
        %v2046 = vadd.f32 %v1705, %v1934
        %v2047 = vadd.f32 %v1710, %v1939
        %v2048 = vadd.f32 %v1713, %v1942
        %v2049 = vadd.f32 %v1718, %v1947
        %v2050 = vadd.f32 %v1721, %v1950
        %v2051 = vadd.f32 %v1726, %v1955
        %v2052 = vadd.f32 %v1729, %v1958
        %v2053 = vadd.f32 %v1734, %v1963
        %v2054 = vadd.f32 %v1737, %v1966
        %v2055 = vadd.f32 %v1742, %v1971
        %v2056 = vadd.f32 %v1745, %v1974
        %v2057 = vadd.f32 %v1750, %v1979
        %v2058 = vadd.f32 %v1753, %v1982
        %v2059 = vadd.f32 %v1758, %v1987
        %v2060 = vadd.f32 %v1761, %v1990
        %v2061 = vadd.f32 %v1766, %v1995
        %v2062 = vadd.f32 %v1769, %v1998
        %v2063 = vadd.f32 %v1774, %v2003
        %v2064 = vadd.f32 %v1777, %v2006
        %v2065 = vadd.f32 %v1782, %v2011
        %v2066 = vadd.f32 %v1785, %v2014
        %v2067 = vadd.f32 %v1790, %v2019
        %v2068 = vadd.f32 %v1793, %v2022
        %v2069 = vadd.f32 %v1798, %v2027
        %v2070 = vadd.f32 %v1801, %v2030
        %v2071 = vadd.f32 %v1806, %v2035
        %v2072 = vadd.f32 %v1809, %v2038
        %v2073 = vld [vmem:[%s4] sm:$0x1]
        %v2075 = vlaneseq
        %v2076 = vshrl.u32 %v2075, 7
        %v2077 = vsub.s32 0, %v2076
        %v2078 = vrot.slane %v2073, %v2077
        %v2080 = vadd.f32 %v2041, %v2078
        %v2081 = vadd.f32 %v2042, %v2078
        %v2082 = vadd.f32 %v2043, %v2078
        %v2083 = vadd.f32 %v2044, %v2078
        %v2084 = vadd.f32 %v2045, %v2078
        %v2085 = vadd.f32 %v2046, %v2078
        %v2086 = vadd.f32 %v2047, %v2078
        %v2087 = vadd.f32 %v2048, %v2078
        %v2088 = vadd.f32 %v2049, %v2078
        %v2089 = vadd.f32 %v2050, %v2078
        %v2090 = vadd.f32 %v2051, %v2078
        %v2091 = vadd.f32 %v2052, %v2078
        %v2092 = vadd.f32 %v2053, %v2078
        %v2093 = vadd.f32 %v2054, %v2078
        %v2094 = vadd.f32 %v2055, %v2078
        %v2095 = vadd.f32 %v2056, %v2078
        %v2096 = vadd.f32 %v2057, %v2078
        %v2097 = vadd.f32 %v2058, %v2078
        %v2098 = vadd.f32 %v2059, %v2078
        %v2099 = vadd.f32 %v2060, %v2078
        %v2100 = vadd.f32 %v2061, %v2078
        %v2101 = vadd.f32 %v2062, %v2078
        %v2102 = vadd.f32 %v2063, %v2078
        %v2103 = vadd.f32 %v2064, %v2078
        %v2104 = vadd.f32 %v2065, %v2078
        %v2105 = vadd.f32 %v2066, %v2078
        %v2106 = vadd.f32 %v2067, %v2078
        %v2107 = vadd.f32 %v2068, %v2078
        %v2108 = vadd.f32 %v2069, %v2078
        %v2109 = vadd.f32 %v2070, %v2078
        %v2110 = vadd.f32 %v2071, %v2078
        %v2111 = vadd.f32 %v2072, %v2078
        %vm2112 = vcmask 130048
        %2113 = vst.msk [vmem:[#allocation2] sm:$0xff] %vm2112, %v2080
        %2114 = vst.msk [vmem:[#allocation2 + $0x8] sm:$0xff] %vm2112, %v2081
        %2115 = vst.msk [vmem:[#allocation2 + $0x10] sm:$0xff] %vm2112, %v2082
        %2116 = vst.msk [vmem:[#allocation2 + $0x18] sm:$0xff] %vm2112, %v2083
        %2117 = vst.msk [vmem:[#allocation2 + $0x20] sm:$0xff] %vm2112, %v2084
        %2118 = vst.msk [vmem:[#allocation2 + $0x28] sm:$0xff] %vm2112, %v2085
        %2119 = vst.msk [vmem:[#allocation2 + $0x30] sm:$0xff] %vm2112, %v2086
        %2120 = vst.msk [vmem:[#allocation2 + $0x38] sm:$0xff] %vm2112, %v2087
        %2121 = vst.msk [vmem:[#allocation2 + $0x40] sm:$0xff] %vm2112, %v2088
        %2122 = vst.msk [vmem:[#allocation2 + $0x48] sm:$0xff] %vm2112, %v2089
        %2123 = vst.msk [vmem:[#allocation2 + $0x50] sm:$0xff] %vm2112, %v2090
        %2124 = vst.msk [vmem:[#allocation2 + $0x58] sm:$0xff] %vm2112, %v2091
        %2125 = vst.msk [vmem:[#allocation2 + $0x60] sm:$0xff] %vm2112, %v2092
        %2126 = vst.msk [vmem:[#allocation2 + $0x68] sm:$0xff] %vm2112, %v2093
        %2127 = vst.msk [vmem:[#allocation2 + $0x70] sm:$0xff] %vm2112, %v2094
        %2128 = vst.msk [vmem:[#allocation2 + $0x78] sm:$0xff] %vm2112, %v2095
        %2129 = vst.msk [vmem:[#allocation2 + $0x80] sm:$0xff] %vm2112, %v2096
        %2130 = vst.msk [vmem:[#allocation2 + $0x88] sm:$0xff] %vm2112, %v2097
        %2131 = vst.msk [vmem:[#allocation2 + $0x90] sm:$0xff] %vm2112, %v2098
        %2132 = vst.msk [vmem:[#allocation2 + $0x98] sm:$0xff] %vm2112, %v2099
        %2133 = vst.msk [vmem:[#allocation2 + $0xa0] sm:$0xff] %vm2112, %v2100
        %2134 = vst.msk [vmem:[#allocation2 + $0xa8] sm:$0xff] %vm2112, %v2101
        %2135 = vst.msk [vmem:[#allocation2 + $0xb0] sm:$0xff] %vm2112, %v2102
        %2136 = vst.msk [vmem:[#allocation2 + $0xb8] sm:$0xff] %vm2112, %v2103
        %2137 = vst.msk [vmem:[#allocation2 + $0xc0] sm:$0xff] %vm2112, %v2104
        %2138 = vst.msk [vmem:[#allocation2 + $0xc8] sm:$0xff] %vm2112, %v2105
        %2139 = vst.msk [vmem:[#allocation2 + $0xd0] sm:$0xff] %vm2112, %v2106
        %2140 = vst.msk [vmem:[#allocation2 + $0xd8] sm:$0xff] %vm2112, %v2107
        %2141 = vst.msk [vmem:[#allocation2 + $0xe0] sm:$0xff] %vm2112, %v2108
        %2142 = vst.msk [vmem:[#allocation2 + $0xe8] sm:$0xff] %vm2112, %v2109
        %2143 = vst.msk [vmem:[#allocation2 + $0xf0] sm:$0xff] %vm2112, %v2110
        %2144 = vst.msk [vmem:[#allocation2 + $0xf8] sm:$0xff] %vm2112, %v2111
        %v2145 = vld [vmem:[%s5] sm:$0x3]
        %v2146 = vld [vmem:[%s6] sm:$0x3]
        %v2147 = vld [vmem:[%s7] sm:$0x3]
        %v2148 = vsel %vm1095, 0.0, 0.0
        %v2149 = vsel %vm1096, 0.0, 0.0
        %v2150 = vsel %vm1288, 0.0, 0.0
        %v2151 = vsel %vm1289, 0.0, 0.0
        %v2152 = vpack.c.bf16 %v2149, %v2148
        %vm2153 = vcmask 31744
        %v2155 = vsel %vm2153, 0, 0
        %vm2157 = vcmask 1041408
        %v2159 = vsel %vm2157, %v2146, 0
        %2161 = vmatprep.subr.bf16.mxu0 0
        %2162 = vmatpush1.bf16.msra.mxu0 0
        %2163 = vmatprep.subr.bf16.mxu0 0
        %2164 = vmatpush1.bf16.msra.mxu0 0
        %2165 = vmatprep.subr.bf16.mxu0 0
        %2166 = vmatpush1.bf16.msra.mxu0 0
        %2167 = vmatprep.subr.bf16.mxu0 0
        %2168 = vmatpush1.bf16.msra.mxu0 0
        %2169 = vmatprep.subr.bf16.mxu0 0
        %2170 = vmatpush1.bf16.msra.mxu0 0
        %2171 = vmatprep.subr.bf16.mxu0 0
        %2172 = vmatpush1.bf16.msra.mxu0 0
        %2173 = vmatprep.subr.bf16.mxu0 0
        %2174 = vmatpush1.bf16.msra.mxu0 0
        %2175 = vmatprep.subr.bf16.mxu0 0
        %2176 = vmatpush1.bf16.msra.mxu0 %v2159
        %2177 = vmatprep.subr.bf16.mxu0 0
        %2178 = vmatpush2.bf16.msra.mxu0 0
        %2179 = vmatprep.subr.bf16.mxu0 0
        %2180 = vmatpush2.bf16.msra.mxu0 0
        %2181 = vmatprep.subr.bf16.mxu0 0
        %2182 = vmatpush2.bf16.msra.mxu0 0
        %2183 = vmatprep.subr.bf16.mxu0 0
        %2184 = vmatpush2.bf16.msra.mxu0 0
        %2185 = vmatprep.subr.bf16.mxu0 0
        %2186 = vmatpush2.bf16.msra.mxu0 0
        %2187 = vmatprep.subr.bf16.mxu0 0
        %2188 = vmatpush2.bf16.msra.mxu0 0
        %2189 = vmatprep.subr.bf16.mxu0 0
        %2190 = vmatpush2.bf16.msra.mxu0 0
        %2191 = vmatprep.subr.bf16.mxu0 0
        %2192 = vmatpush2.bf16.msra.mxu0 0
        %2193 = vmatprep.mubr.bf16.mxu0 0
        %2194 = vmatmul.mubr.bf16.gmra.mxu0 %v2155
        %v2195 = vpop.f32.mrf.mxu0
        %v2196 = vadd.f32 0.0, %v2195
        %v2197 = vpop.f32.mrf.mxu0
        %v2198 = vpop.f32.mrf.mxu0
        %v2199 = vadd.f32 0.0, %v2198
        %v2200 = vpop.f32.mrf.mxu0
        %2201 = vdwg.mxu0
        %v2203 = vsel %vm2153, %v2152, 0
        %v2206 = vsel %vm2157, %v2145, 0
        %2208 = vmatprep.subr.bf16.mxu0 0
        %2209 = vmatpush1.bf16.msra.mxu0 0
        %2210 = vmatprep.subr.bf16.mxu0 0
        %2211 = vmatpush1.bf16.msra.mxu0 0
        %2212 = vmatprep.subr.bf16.mxu0 0
        %2213 = vmatpush1.bf16.msra.mxu0 0
        %2214 = vmatprep.subr.bf16.mxu0 0
        %2215 = vmatpush1.bf16.msra.mxu0 0
        %2216 = vmatprep.subr.bf16.mxu0 0
        %2217 = vmatpush1.bf16.msra.mxu0 0
        %2218 = vmatprep.subr.bf16.mxu0 0
        %2219 = vmatpush1.bf16.msra.mxu0 0
        %2220 = vmatprep.subr.bf16.mxu0 0
        %2221 = vmatpush1.bf16.msra.mxu0 0
        %2222 = vmatprep.subr.bf16.mxu0 0
        %2223 = vmatpush1.bf16.msra.mxu0 %v2206
        %2224 = vmatprep.subr.bf16.mxu0 0
        %2225 = vmatpush2.bf16.msra.mxu0 0
        %2226 = vmatprep.subr.bf16.mxu0 0
        %2227 = vmatpush2.bf16.msra.mxu0 0
        %2228 = vmatprep.subr.bf16.mxu0 0
        %2229 = vmatpush2.bf16.msra.mxu0 0
        %2230 = vmatprep.subr.bf16.mxu0 0
        %2231 = vmatpush2.bf16.msra.mxu0 0
        %2232 = vmatprep.subr.bf16.mxu0 0
        %2233 = vmatpush2.bf16.msra.mxu0 0
        %2234 = vmatprep.subr.bf16.mxu0 0
        %2235 = vmatpush2.bf16.msra.mxu0 0
        %2236 = vmatprep.subr.bf16.mxu0 0
        %2237 = vmatpush2.bf16.msra.mxu0 0
        %2238 = vmatprep.subr.bf16.mxu0 0
        %2239 = vmatpush2.bf16.msra.mxu0 0
        %2240 = vmatprep.mubr.bf16.mxu0 0
        %2241 = vmatmul.mubr.bf16.gmra.mxu0 %v2203
        %v2242 = vpop.f32.mrf.mxu0
        %v2243 = vadd.f32 %v2196, %v2242
        %v2244 = vpop.f32.mrf.mxu0
        %v2245 = vpop.f32.mrf.mxu0
        %v2246 = vadd.f32 %v2199, %v2245
        %v2247 = vpop.f32.mrf.mxu0
        %2248 = vdwg.mxu0
        %v2249 = vpack.c.bf16 %v2151, %v2150
        %v2251 = vsel %vm2153, %v2249, 0
        %v2254 = vsel %vm2157, %v2147, 0
        %2256 = vmatprep.subr.bf16.mxu0 0
        %2257 = vmatpush1.bf16.msra.mxu0 0
        %2258 = vmatprep.subr.bf16.mxu0 0
        %2259 = vmatpush1.bf16.msra.mxu0 0
        %2260 = vmatprep.subr.bf16.mxu0 0
        %2261 = vmatpush1.bf16.msra.mxu0 0
        %2262 = vmatprep.subr.bf16.mxu0 0
        %2263 = vmatpush1.bf16.msra.mxu0 0
        %2264 = vmatprep.subr.bf16.mxu0 0
        %2265 = vmatpush1.bf16.msra.mxu0 0
        %2266 = vmatprep.subr.bf16.mxu0 0
        %2267 = vmatpush1.bf16.msra.mxu0 0
        %2268 = vmatprep.subr.bf16.mxu0 0
        %2269 = vmatpush1.bf16.msra.mxu0 0
        %2270 = vmatprep.subr.bf16.mxu0 0
        %2271 = vmatpush1.bf16.msra.mxu0 %v2254
        %2272 = vmatprep.subr.bf16.mxu0 0
        %2273 = vmatpush2.bf16.msra.mxu0 0
        %2274 = vmatprep.subr.bf16.mxu0 0
        %2275 = vmatpush2.bf16.msra.mxu0 0
        %2276 = vmatprep.subr.bf16.mxu0 0
        %2277 = vmatpush2.bf16.msra.mxu0 0
        %2278 = vmatprep.subr.bf16.mxu0 0
        %2279 = vmatpush2.bf16.msra.mxu0 0
        %2280 = vmatprep.subr.bf16.mxu0 0
        %2281 = vmatpush2.bf16.msra.mxu0 0
        %2282 = vmatprep.subr.bf16.mxu0 0
        %2283 = vmatpush2.bf16.msra.mxu0 0
        %2284 = vmatprep.subr.bf16.mxu0 0
        %2285 = vmatpush2.bf16.msra.mxu0 0
        %2286 = vmatprep.subr.bf16.mxu0 0
        %2287 = vmatpush2.bf16.msra.mxu0 0
        %2288 = vmatprep.mubr.bf16.mxu0 0
        %2289 = vmatmul.mubr.bf16.gmra.mxu0 %v2251
        %v2290 = vpop.f32.mrf.mxu0
        %v2291 = vadd.f32 0.0, %v2290
        %v2292 = vpop.f32.mrf.mxu0
        %v2293 = vpop.f32.mrf.mxu0
        %v2294 = vadd.f32 0.0, %v2293
        %v2295 = vpop.f32.mrf.mxu0
        %2296 = vdwg.mxu0
        %v2297 = vadd.f32 %v2243, %v2291
        %v2298 = vadd.f32 %v2246, %v2294
        %v2299 = vld [vmem:[#allocation2] sm:$0xff]
        %v2300 = vld [vmem:[#allocation2 + $0x8] sm:$0xff]
        %v2301 = vadd.f32 %v2299, %v2297
        %v2302 = vadd.f32 %v2300, %v2298
        %v2303 = vxor.u32 %v2301, 2147483648
        %v2304 = vxor.u32 %v2302, 2147483648
        %v2305 = vmul.f32 %v2303, 1.442695
        %v2306 = vpow.pop %v2305
        %v2307 = vmul.f32 %v2304, 1.442695
        %v2308 = vpow.pop %v2307
        %v2309 = vadd.f32 %v2306, 1.0
        %v2310 = vadd.f32 %v2308, 1.0
        %v2311 = vrcp.pop %v2309
        %v2312 = vmul.f32 1.0, %v2311
        %v2313 = vrcp.pop %v2310
        %v2314 = vmul.f32 1.0, %v2313
        %v2315 = vtanh.pop %v2301
        %v2316 = vtanh.pop %v2302
        %v2317 = vmul.f32 %v2312, 0.0
        %v2318 = vmul.f32 %v2314, 0.0
        %2321 = vrot.lane.b32.xlu0 %v2315, 124
        %v2322 = vpop.permute.xlu0 %2321
        %2323 = vrot.lane.b32.xlu0 %v2316, 124
        %v2324 = vpop.permute.xlu0 %2323
        %v2327 = vmul.f32 %v2312, %v2322
        %v2328 = vmul.f32 %v2314, %v2324
        %2331 = vrot.lane.b32.xlu0 %v2327, 124
        %v2332 = vpop.permute.xlu0 %2331
        %2333 = vrot.lane.b32.xlu0 %v2328, 124
        %v2334 = vpop.permute.xlu0 %2333
        %v2337 = vadd.f32 %v2317, %v2332
        %v2338 = vadd.f32 %v2318, %v2334
        %v2339 = vtanh.pop %v2337
        %v2340 = vtanh.pop %v2338
        %2343 = vrot.lane.b32.xlu0 %v2339, 124
        %v2344 = vpop.permute.xlu0 %2343
        %2345 = vrot.lane.b32.xlu0 %v2340, 124
        %v2346 = vpop.permute.xlu0 %2345
        %v2349 = vmul.f32 %v2312, %v2344
        %v2350 = vmul.f32 %v2314, %v2346
        %2351 = vst.msk [vmem:[#allocation3] sm:$0xff] %vm2153, %v2349
        %2352 = vst.msk [vmem:[#allocation3 + $0x8] sm:$0xff] %vm2153, %v2350
        %v2353 = vrot.slane %v2349, 7
        %v2354 = vrot.slane %v2350, 7
        %v2355 = vsel %vm1030, %v2353, %v2354
        %v2356 = vsel %vm1030, %v2354, %v2353
        %v2357 = vsel %vm1095, 0.0, %v2356
        %v2358 = vsel %vm1096, 0.0, %v2355
        %v2359 = vrot.slane %v2349, 1
        %v2360 = vrot.slane %v2350, 1
        %v2361 = vsel %vm1223, %v2359, %v2360
        %v2362 = vsel %vm1223, %v2360, %v2359
        %v2363 = vsel %vm1288, 0.0, %v2361
        %v2364 = vsel %vm1289, 0.0, %v2362
        %v2365 = vpack.c.bf16 %v2358, %v2357
        %v2366 = vpack.c.bf16 %v2350, %v2349
        %v2368 = vsel %vm2153, %v2366, 0
        %2370 = vmatprep.subr.bf16.mxu0 0
        %2371 = vmatpush1.bf16.msra.mxu0 0
        %2372 = vmatprep.subr.bf16.mxu0 0
        %2373 = vmatpush1.bf16.msra.mxu0 0
        %2374 = vmatprep.subr.bf16.mxu0 0
        %2375 = vmatpush1.bf16.msra.mxu0 0
        %2376 = vmatprep.subr.bf16.mxu0 0
        %2377 = vmatpush1.bf16.msra.mxu0 0
        %2378 = vmatprep.subr.bf16.mxu0 0
        %2379 = vmatpush1.bf16.msra.mxu0 0
        %2380 = vmatprep.subr.bf16.mxu0 0
        %2381 = vmatpush1.bf16.msra.mxu0 0
        %2382 = vmatprep.subr.bf16.mxu0 0
        %2383 = vmatpush1.bf16.msra.mxu0 0
        %2384 = vmatprep.subr.bf16.mxu0 0
        %2385 = vmatpush1.bf16.msra.mxu0 %v2159
        %2386 = vmatprep.subr.bf16.mxu0 0
        %2387 = vmatpush2.bf16.msra.mxu0 0
        %2388 = vmatprep.subr.bf16.mxu0 0
        %2389 = vmatpush2.bf16.msra.mxu0 0
        %2390 = vmatprep.subr.bf16.mxu0 0
        %2391 = vmatpush2.bf16.msra.mxu0 0
        %2392 = vmatprep.subr.bf16.mxu0 0
        %2393 = vmatpush2.bf16.msra.mxu0 0
        %2394 = vmatprep.subr.bf16.mxu0 0
        %2395 = vmatpush2.bf16.msra.mxu0 0
        %2396 = vmatprep.subr.bf16.mxu0 0
        %2397 = vmatpush2.bf16.msra.mxu0 0
        %2398 = vmatprep.subr.bf16.mxu0 0
        %2399 = vmatpush2.bf16.msra.mxu0 0
        %2400 = vmatprep.subr.bf16.mxu0 0
        %2401 = vmatpush2.bf16.msra.mxu0 0
        %2402 = vmatprep.mubr.bf16.mxu0 0
        %2403 = vmatmul.mubr.bf16.gmra.mxu0 %v2368
        %v2404 = vpop.f32.mrf.mxu0
        %v2405 = vadd.f32 0.0, %v2404
        %v2406 = vpop.f32.mrf.mxu0
        %v2407 = vpop.f32.mrf.mxu0
        %v2408 = vadd.f32 0.0, %v2407
        %v2409 = vpop.f32.mrf.mxu0
        %2410 = vdwg.mxu0
        %v2412 = vsel %vm2153, %v2365, 0
        %2414 = vmatprep.subr.bf16.mxu0 0
        %2415 = vmatpush1.bf16.msra.mxu0 0
        %2416 = vmatprep.subr.bf16.mxu0 0
        %2417 = vmatpush1.bf16.msra.mxu0 0
        %2418 = vmatprep.subr.bf16.mxu0 0
        %2419 = vmatpush1.bf16.msra.mxu0 0
        %2420 = vmatprep.subr.bf16.mxu0 0
        %2421 = vmatpush1.bf16.msra.mxu0 0
        %2422 = vmatprep.subr.bf16.mxu0 0
        %2423 = vmatpush1.bf16.msra.mxu0 0
        %2424 = vmatprep.subr.bf16.mxu0 0
        %2425 = vmatpush1.bf16.msra.mxu0 0
        %2426 = vmatprep.subr.bf16.mxu0 0
        %2427 = vmatpush1.bf16.msra.mxu0 0
        %2428 = vmatprep.subr.bf16.mxu0 0
        %2429 = vmatpush1.bf16.msra.mxu0 %v2206
        %2430 = vmatprep.subr.bf16.mxu0 0
        %2431 = vmatpush2.bf16.msra.mxu0 0
        %2432 = vmatprep.subr.bf16.mxu0 0
        %2433 = vmatpush2.bf16.msra.mxu0 0
        %2434 = vmatprep.subr.bf16.mxu0 0
        %2435 = vmatpush2.bf16.msra.mxu0 0
        %2436 = vmatprep.subr.bf16.mxu0 0
        %2437 = vmatpush2.bf16.msra.mxu0 0
        %2438 = vmatprep.subr.bf16.mxu0 0
        %2439 = vmatpush2.bf16.msra.mxu0 0
        %2440 = vmatprep.subr.bf16.mxu0 0
        %2441 = vmatpush2.bf16.msra.mxu0 0
        %2442 = vmatprep.subr.bf16.mxu0 0
        %2443 = vmatpush2.bf16.msra.mxu0 0
        %2444 = vmatprep.subr.bf16.mxu0 0
        %2445 = vmatpush2.bf16.msra.mxu0 0
        %2446 = vmatprep.mubr.bf16.mxu0 0
        %2447 = vmatmul.mubr.bf16.gmra.mxu0 %v2412
        %v2448 = vpop.f32.mrf.mxu0
        %v2449 = vadd.f32 %v2405, %v2448
        %v2450 = vpop.f32.mrf.mxu0
        %v2451 = vpop.f32.mrf.mxu0
        %v2452 = vadd.f32 %v2408, %v2451
        %v2453 = vpop.f32.mrf.mxu0
        %2454 = vdwg.mxu0
        %v2455 = vpack.c.bf16 %v2364, %v2363
        %v2457 = vsel %vm2153, %v2455, 0
        %2459 = vmatprep.subr.bf16.mxu0 0
        %2460 = vmatpush1.bf16.msra.mxu0 0
        %2461 = vmatprep.subr.bf16.mxu0 0
        %2462 = vmatpush1.bf16.msra.mxu0 0
        %2463 = vmatprep.subr.bf16.mxu0 0
        %2464 = vmatpush1.bf16.msra.mxu0 0
        %2465 = vmatprep.subr.bf16.mxu0 0
        %2466 = vmatpush1.bf16.msra.mxu0 0
        %2467 = vmatprep.subr.bf16.mxu0 0
        %2468 = vmatpush1.bf16.msra.mxu0 0
        %2469 = vmatprep.subr.bf16.mxu0 0
        %2470 = vmatpush1.bf16.msra.mxu0 0
        %2471 = vmatprep.subr.bf16.mxu0 0
        %2472 = vmatpush1.bf16.msra.mxu0 0
        %2473 = vmatprep.subr.bf16.mxu0 0
        %2474 = vmatpush1.bf16.msra.mxu0 %v2254
        %2475 = vmatprep.subr.bf16.mxu0 0
        %2476 = vmatpush2.bf16.msra.mxu0 0
        %2477 = vmatprep.subr.bf16.mxu0 0
        %2478 = vmatpush2.bf16.msra.mxu0 0
        %2479 = vmatprep.subr.bf16.mxu0 0
        %2480 = vmatpush2.bf16.msra.mxu0 0
        %2481 = vmatprep.subr.bf16.mxu0 0
        %2482 = vmatpush2.bf16.msra.mxu0 0
        %2483 = vmatprep.subr.bf16.mxu0 0
        %2484 = vmatpush2.bf16.msra.mxu0 0
        %2485 = vmatprep.subr.bf16.mxu0 0
        %2486 = vmatpush2.bf16.msra.mxu0 0
        %2487 = vmatprep.subr.bf16.mxu0 0
        %2488 = vmatpush2.bf16.msra.mxu0 0
        %2489 = vmatprep.subr.bf16.mxu0 0
        %2490 = vmatpush2.bf16.msra.mxu0 0
        %2491 = vmatprep.mubr.bf16.mxu0 0
        %2492 = vmatmul.mubr.bf16.gmra.mxu0 %v2457
        %v2493 = vpop.f32.mrf.mxu0
        %v2494 = vadd.f32 0.0, %v2493
        %v2495 = vpop.f32.mrf.mxu0
        %v2496 = vpop.f32.mrf.mxu0
        %v2497 = vadd.f32 0.0, %v2496
        %v2498 = vpop.f32.mrf.mxu0
        %2499 = vdwg.mxu0
        %v2500 = vadd.f32 %v2449, %v2494
        %v2501 = vadd.f32 %v2452, %v2497
        %v2502 = vld [vmem:[#allocation2 + $0x10] sm:$0xff]
        %v2503 = vld [vmem:[#allocation2 + $0x18] sm:$0xff]
        %v2504 = vadd.f32 %v2502, %v2500
        %v2505 = vadd.f32 %v2503, %v2501
        %v2506 = vxor.u32 %v2504, 2147483648
        %v2507 = vxor.u32 %v2505, 2147483648
        %v2508 = vmul.f32 %v2506, 1.442695
        %v2509 = vpow.pop %v2508
        %v2510 = vmul.f32 %v2507, 1.442695
        %v2511 = vpow.pop %v2510
        %v2512 = vadd.f32 %v2509, 1.0
        %v2513 = vadd.f32 %v2511, 1.0
        %v2514 = vrcp.pop %v2512
        %v2515 = vmul.f32 1.0, %v2514
        %v2516 = vrcp.pop %v2513
        %v2517 = vmul.f32 1.0, %v2516
        %v2518 = vtanh.pop %v2504
        %v2519 = vtanh.pop %v2505
        %v2520 = vmul.f32 %v2515, %v2337
        %v2521 = vmul.f32 %v2517, %v2338
        %2524 = vrot.lane.b32.xlu0 %v2518, 124
        %v2525 = vpop.permute.xlu0 %2524
        %2526 = vrot.lane.b32.xlu0 %v2519, 124
        %v2527 = vpop.permute.xlu0 %2526
        %v2530 = vmul.f32 %v2515, %v2525
        %v2531 = vmul.f32 %v2517, %v2527
        %2534 = vrot.lane.b32.xlu0 %v2530, 124
        %v2535 = vpop.permute.xlu0 %2534
        %2536 = vrot.lane.b32.xlu0 %v2531, 124
        %v2537 = vpop.permute.xlu0 %2536
        %v2540 = vadd.f32 %v2520, %v2535
        %v2541 = vadd.f32 %v2521, %v2537
        %v2542 = vtanh.pop %v2540
        %v2543 = vtanh.pop %v2541
        %2546 = vrot.lane.b32.xlu0 %v2542, 124
        %v2547 = vpop.permute.xlu0 %2546
        %2548 = vrot.lane.b32.xlu0 %v2543, 124
        %v2549 = vpop.permute.xlu0 %2548
        %v2552 = vmul.f32 %v2515, %v2547
        %v2553 = vmul.f32 %v2517, %v2549
        %2554 = vst.msk [vmem:[#allocation3 + $0x10] sm:$0xff] %vm2153, %v2552
        %2555 = vst.msk [vmem:[#allocation3 + $0x18] sm:$0xff] %vm2153, %v2553
        %v2556 = vrot.slane %v2552, 7
        %v2557 = vrot.slane %v2553, 7
        %v2558 = vsel %vm1030, %v2556, %v2557
        %v2559 = vsel %vm1030, %v2557, %v2556
        %v2560 = vsel %vm1095, 0.0, %v2559
        %v2561 = vsel %vm1096, 0.0, %v2558
        %v2562 = vrot.slane %v2552, 1
        %v2563 = vrot.slane %v2553, 1
        %v2564 = vsel %vm1223, %v2562, %v2563
        %v2565 = vsel %vm1223, %v2563, %v2562
        %v2566 = vsel %vm1288, 0.0, %v2564
        %v2567 = vsel %vm1289, 0.0, %v2565
        %v2568 = vpack.c.bf16 %v2561, %v2560
        %v2569 = vpack.c.bf16 %v2553, %v2552
        %v2571 = vsel %vm2153, %v2569, 0
        %2573 = vmatprep.subr.bf16.mxu0 0
        %2574 = vmatpush1.bf16.msra.mxu0 0
        %2575 = vmatprep.subr.bf16.mxu0 0
        %2576 = vmatpush1.bf16.msra.mxu0 0
        %2577 = vmatprep.subr.bf16.mxu0 0
        %2578 = vmatpush1.bf16.msra.mxu0 0
        %2579 = vmatprep.subr.bf16.mxu0 0
        %2580 = vmatpush1.bf16.msra.mxu0 0
        %2581 = vmatprep.subr.bf16.mxu0 0
        %2582 = vmatpush1.bf16.msra.mxu0 0
        %2583 = vmatprep.subr.bf16.mxu0 0
        %2584 = vmatpush1.bf16.msra.mxu0 0
        %2585 = vmatprep.subr.bf16.mxu0 0
        %2586 = vmatpush1.bf16.msra.mxu0 0
        %2587 = vmatprep.subr.bf16.mxu0 0
        %2588 = vmatpush1.bf16.msra.mxu0 %v2159
        %2589 = vmatprep.subr.bf16.mxu0 0
        %2590 = vmatpush2.bf16.msra.mxu0 0
        %2591 = vmatprep.subr.bf16.mxu0 0
        %2592 = vmatpush2.bf16.msra.mxu0 0
        %2593 = vmatprep.subr.bf16.mxu0 0
        %2594 = vmatpush2.bf16.msra.mxu0 0
        %2595 = vmatprep.subr.bf16.mxu0 0
        %2596 = vmatpush2.bf16.msra.mxu0 0
        %2597 = vmatprep.subr.bf16.mxu0 0
        %2598 = vmatpush2.bf16.msra.mxu0 0
        %2599 = vmatprep.subr.bf16.mxu0 0
        %2600 = vmatpush2.bf16.msra.mxu0 0
        %2601 = vmatprep.subr.bf16.mxu0 0
        %2602 = vmatpush2.bf16.msra.mxu0 0
        %2603 = vmatprep.subr.bf16.mxu0 0
        %2604 = vmatpush2.bf16.msra.mxu0 0
        %2605 = vmatprep.mubr.bf16.mxu0 0
        %2606 = vmatmul.mubr.bf16.gmra.mxu0 %v2571
        %v2607 = vpop.f32.mrf.mxu0
        %v2608 = vadd.f32 0.0, %v2607
        %v2609 = vpop.f32.mrf.mxu0
        %v2610 = vpop.f32.mrf.mxu0
        %v2611 = vadd.f32 0.0, %v2610
        %v2612 = vpop.f32.mrf.mxu0
        %2613 = vdwg.mxu0
        %v2615 = vsel %vm2153, %v2568, 0
        %2617 = vmatprep.subr.bf16.mxu0 0
        %2618 = vmatpush1.bf16.msra.mxu0 0
        %2619 = vmatprep.subr.bf16.mxu0 0
        %2620 = vmatpush1.bf16.msra.mxu0 0
        %2621 = vmatprep.subr.bf16.mxu0 0
        %2622 = vmatpush1.bf16.msra.mxu0 0
        %2623 = vmatprep.subr.bf16.mxu0 0
        %2624 = vmatpush1.bf16.msra.mxu0 0
        %2625 = vmatprep.subr.bf16.mxu0 0
        %2626 = vmatpush1.bf16.msra.mxu0 0
        %2627 = vmatprep.subr.bf16.mxu0 0
        %2628 = vmatpush1.bf16.msra.mxu0 0
        %2629 = vmatprep.subr.bf16.mxu0 0
        %2630 = vmatpush1.bf16.msra.mxu0 0
        %2631 = vmatprep.subr.bf16.mxu0 0
        %2632 = vmatpush1.bf16.msra.mxu0 %v2206
        %2633 = vmatprep.subr.bf16.mxu0 0
        %2634 = vmatpush2.bf16.msra.mxu0 0
        %2635 = vmatprep.subr.bf16.mxu0 0
        %2636 = vmatpush2.bf16.msra.mxu0 0
        %2637 = vmatprep.subr.bf16.mxu0 0
        %2638 = vmatpush2.bf16.msra.mxu0 0
        %2639 = vmatprep.subr.bf16.mxu0 0
        %2640 = vmatpush2.bf16.msra.mxu0 0
        %2641 = vmatprep.subr.bf16.mxu0 0
        %2642 = vmatpush2.bf16.msra.mxu0 0
        %2643 = vmatprep.subr.bf16.mxu0 0
        %2644 = vmatpush2.bf16.msra.mxu0 0
        %2645 = vmatprep.subr.bf16.mxu0 0
        %2646 = vmatpush2.bf16.msra.mxu0 0
        %2647 = vmatprep.subr.bf16.mxu0 0
        %2648 = vmatpush2.bf16.msra.mxu0 0
        %2649 = vmatprep.mubr.bf16.mxu0 0
        %2650 = vmatmul.mubr.bf16.gmra.mxu0 %v2615
        %v2651 = vpop.f32.mrf.mxu0
        %v2652 = vadd.f32 %v2608, %v2651
        %v2653 = vpop.f32.mrf.mxu0
        %v2654 = vpop.f32.mrf.mxu0
        %v2655 = vadd.f32 %v2611, %v2654
        %v2656 = vpop.f32.mrf.mxu0
        %2657 = vdwg.mxu0
        %v2658 = vpack.c.bf16 %v2567, %v2566
        %v2660 = vsel %vm2153, %v2658, 0
        %2662 = vmatprep.subr.bf16.mxu0 0
        %2663 = vmatpush1.bf16.msra.mxu0 0
        %2664 = vmatprep.subr.bf16.mxu0 0
        %2665 = vmatpush1.bf16.msra.mxu0 0
        %2666 = vmatprep.subr.bf16.mxu0 0
        %2667 = vmatpush1.bf16.msra.mxu0 0
        %2668 = vmatprep.subr.bf16.mxu0 0
        %2669 = vmatpush1.bf16.msra.mxu0 0
        %2670 = vmatprep.subr.bf16.mxu0 0
        %2671 = vmatpush1.bf16.msra.mxu0 0
        %2672 = vmatprep.subr.bf16.mxu0 0
        %2673 = vmatpush1.bf16.msra.mxu0 0
        %2674 = vmatprep.subr.bf16.mxu0 0
        %2675 = vmatpush1.bf16.msra.mxu0 0
        %2676 = vmatprep.subr.bf16.mxu0 0
        %2677 = vmatpush1.bf16.msra.mxu0 %v2254
        %2678 = vmatprep.subr.bf16.mxu0 0
        %2679 = vmatpush2.bf16.msra.mxu0 0
        %2680 = vmatprep.subr.bf16.mxu0 0
        %2681 = vmatpush2.bf16.msra.mxu0 0
        %2682 = vmatprep.subr.bf16.mxu0 0
        %2683 = vmatpush2.bf16.msra.mxu0 0
        %2684 = vmatprep.subr.bf16.mxu0 0
        %2685 = vmatpush2.bf16.msra.mxu0 0
        %2686 = vmatprep.subr.bf16.mxu0 0
        %2687 = vmatpush2.bf16.msra.mxu0 0
        %2688 = vmatprep.subr.bf16.mxu0 0
        %2689 = vmatpush2.bf16.msra.mxu0 0
        %2690 = vmatprep.subr.bf16.mxu0 0
        %2691 = vmatpush2.bf16.msra.mxu0 0
        %2692 = vmatprep.subr.bf16.mxu0 0
        %2693 = vmatpush2.bf16.msra.mxu0 0
        %2694 = vmatprep.mubr.bf16.mxu0 0
        %2695 = vmatmul.mubr.bf16.gmra.mxu0 %v2660
        %v2696 = vpop.f32.mrf.mxu0
        %v2697 = vadd.f32 0.0, %v2696
        %v2698 = vpop.f32.mrf.mxu0
        %v2699 = vpop.f32.mrf.mxu0
        %v2700 = vadd.f32 0.0, %v2699
        %v2701 = vpop.f32.mrf.mxu0
        %2702 = vdwg.mxu0
        %v2703 = vadd.f32 %v2652, %v2697
        %v2704 = vadd.f32 %v2655, %v2700
        %v2705 = vld [vmem:[#allocation2 + $0x20] sm:$0xff]
        %v2706 = vld [vmem:[#allocation2 + $0x28] sm:$0xff]
        %v2707 = vadd.f32 %v2705, %v2703
        %v2708 = vadd.f32 %v2706, %v2704
        %v2709 = vxor.u32 %v2707, 2147483648
        %v2710 = vxor.u32 %v2708, 2147483648
        %v2711 = vmul.f32 %v2709, 1.442695
        %v2712 = vpow.pop %v2711
        %v2713 = vmul.f32 %v2710, 1.442695
        %v2714 = vpow.pop %v2713
        %v2715 = vadd.f32 %v2712, 1.0
        %v2716 = vadd.f32 %v2714, 1.0
        %v2717 = vrcp.pop %v2715
        %v2718 = vmul.f32 1.0, %v2717
        %v2719 = vrcp.pop %v2716
        %v2720 = vmul.f32 1.0, %v2719
        %v2721 = vtanh.pop %v2707
        %v2722 = vtanh.pop %v2708
        %v2723 = vmul.f32 %v2718, %v2540
        %v2724 = vmul.f32 %v2720, %v2541
        %2727 = vrot.lane.b32.xlu0 %v2721, 124
        %v2728 = vpop.permute.xlu0 %2727
        %2729 = vrot.lane.b32.xlu0 %v2722, 124
        %v2730 = vpop.permute.xlu0 %2729
        %v2733 = vmul.f32 %v2718, %v2728
        %v2734 = vmul.f32 %v2720, %v2730
        %2737 = vrot.lane.b32.xlu0 %v2733, 124
        %v2738 = vpop.permute.xlu0 %2737
        %2739 = vrot.lane.b32.xlu0 %v2734, 124
        %v2740 = vpop.permute.xlu0 %2739
        %v2743 = vadd.f32 %v2723, %v2738
        %v2744 = vadd.f32 %v2724, %v2740
        %v2745 = vtanh.pop %v2743
        %v2746 = vtanh.pop %v2744
        %2749 = vrot.lane.b32.xlu0 %v2745, 124
        %v2750 = vpop.permute.xlu0 %2749
        %2751 = vrot.lane.b32.xlu0 %v2746, 124
        %v2752 = vpop.permute.xlu0 %2751
        %v2755 = vmul.f32 %v2718, %v2750
        %v2756 = vmul.f32 %v2720, %v2752
        %2757 = vst.msk [vmem:[#allocation3 + $0x20] sm:$0xff] %vm2153, %v2755
        %2758 = vst.msk [vmem:[#allocation3 + $0x28] sm:$0xff] %vm2153, %v2756
        %v2759 = vrot.slane %v2755, 7
        %v2760 = vrot.slane %v2756, 7
        %v2761 = vsel %vm1030, %v2759, %v2760
        %v2762 = vsel %vm1030, %v2760, %v2759
        %v2763 = vsel %vm1095, 0.0, %v2762
        %v2764 = vsel %vm1096, 0.0, %v2761
        %v2765 = vrot.slane %v2755, 1
        %v2766 = vrot.slane %v2756, 1
        %v2767 = vsel %vm1223, %v2765, %v2766
        %v2768 = vsel %vm1223, %v2766, %v2765
        %v2769 = vsel %vm1288, 0.0, %v2767
        %v2770 = vsel %vm1289, 0.0, %v2768
        %v2771 = vpack.c.bf16 %v2764, %v2763
        %v2772 = vpack.c.bf16 %v2756, %v2755
        %v2774 = vsel %vm2153, %v2772, 0
        %2776 = vmatprep.subr.bf16.mxu0 0
        %2777 = vmatpush1.bf16.msra.mxu0 0
        %2778 = vmatprep.subr.bf16.mxu0 0
        %2779 = vmatpush1.bf16.msra.mxu0 0
        %2780 = vmatprep.subr.bf16.mxu0 0
        %2781 = vmatpush1.bf16.msra.mxu0 0
        %2782 = vmatprep.subr.bf16.mxu0 0
        %2783 = vmatpush1.bf16.msra.mxu0 0
        %2784 = vmatprep.subr.bf16.mxu0 0
        %2785 = vmatpush1.bf16.msra.mxu0 0
        %2786 = vmatprep.subr.bf16.mxu0 0
        %2787 = vmatpush1.bf16.msra.mxu0 0
        %2788 = vmatprep.subr.bf16.mxu0 0
        %2789 = vmatpush1.bf16.msra.mxu0 0
        %2790 = vmatprep.subr.bf16.mxu0 0
        %2791 = vmatpush1.bf16.msra.mxu0 %v2159
        %2792 = vmatprep.subr.bf16.mxu0 0
        %2793 = vmatpush2.bf16.msra.mxu0 0
        %2794 = vmatprep.subr.bf16.mxu0 0
        %2795 = vmatpush2.bf16.msra.mxu0 0
        %2796 = vmatprep.subr.bf16.mxu0 0
        %2797 = vmatpush2.bf16.msra.mxu0 0
        %2798 = vmatprep.subr.bf16.mxu0 0
        %2799 = vmatpush2.bf16.msra.mxu0 0
        %2800 = vmatprep.subr.bf16.mxu0 0
        %2801 = vmatpush2.bf16.msra.mxu0 0
        %2802 = vmatprep.subr.bf16.mxu0 0
        %2803 = vmatpush2.bf16.msra.mxu0 0
        %2804 = vmatprep.subr.bf16.mxu0 0
        %2805 = vmatpush2.bf16.msra.mxu0 0
        %2806 = vmatprep.subr.bf16.mxu0 0
        %2807 = vmatpush2.bf16.msra.mxu0 0
        %2808 = vmatprep.mubr.bf16.mxu0 0
        %2809 = vmatmul.mubr.bf16.gmra.mxu0 %v2774
        %v2810 = vpop.f32.mrf.mxu0
        %v2811 = vadd.f32 0.0, %v2810
        %v2812 = vpop.f32.mrf.mxu0
        %v2813 = vpop.f32.mrf.mxu0
        %v2814 = vadd.f32 0.0, %v2813
        %v2815 = vpop.f32.mrf.mxu0
        %2816 = vdwg.mxu0
        %v2818 = vsel %vm2153, %v2771, 0
        %2820 = vmatprep.subr.bf16.mxu0 0
        %2821 = vmatpush1.bf16.msra.mxu0 0
        %2822 = vmatprep.subr.bf16.mxu0 0
        %2823 = vmatpush1.bf16.msra.mxu0 0
        %2824 = vmatprep.subr.bf16.mxu0 0
        %2825 = vmatpush1.bf16.msra.mxu0 0
        %2826 = vmatprep.subr.bf16.mxu0 0
        %2827 = vmatpush1.bf16.msra.mxu0 0
        %2828 = vmatprep.subr.bf16.mxu0 0
        %2829 = vmatpush1.bf16.msra.mxu0 0
        %2830 = vmatprep.subr.bf16.mxu0 0
        %2831 = vmatpush1.bf16.msra.mxu0 0
        %2832 = vmatprep.subr.bf16.mxu0 0
        %2833 = vmatpush1.bf16.msra.mxu0 0
        %2834 = vmatprep.subr.bf16.mxu0 0
        %2835 = vmatpush1.bf16.msra.mxu0 %v2206
        %2836 = vmatprep.subr.bf16.mxu0 0
        %2837 = vmatpush2.bf16.msra.mxu0 0
        %2838 = vmatprep.subr.bf16.mxu0 0
        %2839 = vmatpush2.bf16.msra.mxu0 0
        %2840 = vmatprep.subr.bf16.mxu0 0
        %2841 = vmatpush2.bf16.msra.mxu0 0
        %2842 = vmatprep.subr.bf16.mxu0 0
        %2843 = vmatpush2.bf16.msra.mxu0 0
        %2844 = vmatprep.subr.bf16.mxu0 0
        %2845 = vmatpush2.bf16.msra.mxu0 0
        %2846 = vmatprep.subr.bf16.mxu0 0
        %2847 = vmatpush2.bf16.msra.mxu0 0
        %2848 = vmatprep.subr.bf16.mxu0 0
        %2849 = vmatpush2.bf16.msra.mxu0 0
        %2850 = vmatprep.subr.bf16.mxu0 0
        %2851 = vmatpush2.bf16.msra.mxu0 0
        %2852 = vmatprep.mubr.bf16.mxu0 0
        %2853 = vmatmul.mubr.bf16.gmra.mxu0 %v2818
        %v2854 = vpop.f32.mrf.mxu0
        %v2855 = vadd.f32 %v2811, %v2854
        %v2856 = vpop.f32.mrf.mxu0
        %v2857 = vpop.f32.mrf.mxu0
        %v2858 = vadd.f32 %v2814, %v2857
        %v2859 = vpop.f32.mrf.mxu0
        %2860 = vdwg.mxu0
        %v2861 = vpack.c.bf16 %v2770, %v2769
        %v2863 = vsel %vm2153, %v2861, 0
        %2865 = vmatprep.subr.bf16.mxu0 0
        %2866 = vmatpush1.bf16.msra.mxu0 0
        %2867 = vmatprep.subr.bf16.mxu0 0
        %2868 = vmatpush1.bf16.msra.mxu0 0
        %2869 = vmatprep.subr.bf16.mxu0 0
        %2870 = vmatpush1.bf16.msra.mxu0 0
        %2871 = vmatprep.subr.bf16.mxu0 0
        %2872 = vmatpush1.bf16.msra.mxu0 0
        %2873 = vmatprep.subr.bf16.mxu0 0
        %2874 = vmatpush1.bf16.msra.mxu0 0
        %2875 = vmatprep.subr.bf16.mxu0 0
        %2876 = vmatpush1.bf16.msra.mxu0 0
        %2877 = vmatprep.subr.bf16.mxu0 0
        %2878 = vmatpush1.bf16.msra.mxu0 0
        %2879 = vmatprep.subr.bf16.mxu0 0
        %2880 = vmatpush1.bf16.msra.mxu0 %v2254
        %2881 = vmatprep.subr.bf16.mxu0 0
        %2882 = vmatpush2.bf16.msra.mxu0 0
        %2883 = vmatprep.subr.bf16.mxu0 0
        %2884 = vmatpush2.bf16.msra.mxu0 0
        %2885 = vmatprep.subr.bf16.mxu0 0
        %2886 = vmatpush2.bf16.msra.mxu0 0
        %2887 = vmatprep.subr.bf16.mxu0 0
        %2888 = vmatpush2.bf16.msra.mxu0 0
        %2889 = vmatprep.subr.bf16.mxu0 0
        %2890 = vmatpush2.bf16.msra.mxu0 0
        %2891 = vmatprep.subr.bf16.mxu0 0
        %2892 = vmatpush2.bf16.msra.mxu0 0
        %2893 = vmatprep.subr.bf16.mxu0 0
        %2894 = vmatpush2.bf16.msra.mxu0 0
        %2895 = vmatprep.subr.bf16.mxu0 0
        %2896 = vmatpush2.bf16.msra.mxu0 0
        %2897 = vmatprep.mubr.bf16.mxu0 0
        %2898 = vmatmul.mubr.bf16.gmra.mxu0 %v2863
        %v2899 = vpop.f32.mrf.mxu0
        %v2900 = vadd.f32 0.0, %v2899
        %v2901 = vpop.f32.mrf.mxu0
        %v2902 = vpop.f32.mrf.mxu0
        %v2903 = vadd.f32 0.0, %v2902
        %v2904 = vpop.f32.mrf.mxu0
        %2905 = vdwg.mxu0
        %v2906 = vadd.f32 %v2855, %v2900
        %v2907 = vadd.f32 %v2858, %v2903
        %v2908 = vld [vmem:[#allocation2 + $0x30] sm:$0xff]
        %v2909 = vld [vmem:[#allocation2 + $0x38] sm:$0xff]
        %v2910 = vadd.f32 %v2908, %v2906
        %v2911 = vadd.f32 %v2909, %v2907
        %v2912 = vxor.u32 %v2910, 2147483648
        %v2913 = vxor.u32 %v2911, 2147483648
        %v2914 = vmul.f32 %v2912, 1.442695
        %v2915 = vpow.pop %v2914
        %v2916 = vmul.f32 %v2913, 1.442695
        %v2917 = vpow.pop %v2916
        %v2918 = vadd.f32 %v2915, 1.0
        %v2919 = vadd.f32 %v2917, 1.0
        %v2920 = vrcp.pop %v2918
        %v2921 = vmul.f32 1.0, %v2920
        %v2922 = vrcp.pop %v2919
        %v2923 = vmul.f32 1.0, %v2922
        %v2924 = vtanh.pop %v2910
        %v2925 = vtanh.pop %v2911
        %v2926 = vmul.f32 %v2921, %v2743
        %v2927 = vmul.f32 %v2923, %v2744
        %2930 = vrot.lane.b32.xlu0 %v2924, 124
        %v2931 = vpop.permute.xlu0 %2930
        %2932 = vrot.lane.b32.xlu0 %v2925, 124
        %v2933 = vpop.permute.xlu0 %2932
        %v2936 = vmul.f32 %v2921, %v2931
        %v2937 = vmul.f32 %v2923, %v2933
        %2940 = vrot.lane.b32.xlu0 %v2936, 124
        %v2941 = vpop.permute.xlu0 %2940
        %2942 = vrot.lane.b32.xlu0 %v2937, 124
        %v2943 = vpop.permute.xlu0 %2942
        %v2946 = vadd.f32 %v2926, %v2941
        %v2947 = vadd.f32 %v2927, %v2943
        %v2948 = vtanh.pop %v2946
        %v2949 = vtanh.pop %v2947
        %2952 = vrot.lane.b32.xlu0 %v2948, 124
        %v2953 = vpop.permute.xlu0 %2952
        %2954 = vrot.lane.b32.xlu0 %v2949, 124
        %v2955 = vpop.permute.xlu0 %2954
        %v2958 = vmul.f32 %v2921, %v2953
        %v2959 = vmul.f32 %v2923, %v2955
        %2960 = vst.msk [vmem:[#allocation3 + $0x30] sm:$0xff] %vm2153, %v2958
        %2961 = vst.msk [vmem:[#allocation3 + $0x38] sm:$0xff] %vm2153, %v2959
        %v2962 = vrot.slane %v2958, 7
        %v2963 = vrot.slane %v2959, 7
        %v2964 = vsel %vm1030, %v2962, %v2963
        %v2965 = vsel %vm1030, %v2963, %v2962
        %v2966 = vsel %vm1095, 0.0, %v2965
        %v2967 = vsel %vm1096, 0.0, %v2964
        %v2968 = vrot.slane %v2958, 1
        %v2969 = vrot.slane %v2959, 1
        %v2970 = vsel %vm1223, %v2968, %v2969
        %v2971 = vsel %vm1223, %v2969, %v2968
        %v2972 = vsel %vm1288, 0.0, %v2970
        %v2973 = vsel %vm1289, 0.0, %v2971
        %v2974 = vpack.c.bf16 %v2967, %v2966
        %v2975 = vpack.c.bf16 %v2959, %v2958
        %v2977 = vsel %vm2153, %v2975, 0
        %2979 = vmatprep.subr.bf16.mxu0 0
        %2980 = vmatpush1.bf16.msra.mxu0 0
        %2981 = vmatprep.subr.bf16.mxu0 0
        %2982 = vmatpush1.bf16.msra.mxu0 0
        %2983 = vmatprep.subr.bf16.mxu0 0
        %2984 = vmatpush1.bf16.msra.mxu0 0
        %2985 = vmatprep.subr.bf16.mxu0 0
        %2986 = vmatpush1.bf16.msra.mxu0 0
        %2987 = vmatprep.subr.bf16.mxu0 0
        %2988 = vmatpush1.bf16.msra.mxu0 0
        %2989 = vmatprep.subr.bf16.mxu0 0
        %2990 = vmatpush1.bf16.msra.mxu0 0
        %2991 = vmatprep.subr.bf16.mxu0 0
        %2992 = vmatpush1.bf16.msra.mxu0 0
        %2993 = vmatprep.subr.bf16.mxu0 0
        %2994 = vmatpush1.bf16.msra.mxu0 %v2159
        %2995 = vmatprep.subr.bf16.mxu0 0
        %2996 = vmatpush2.bf16.msra.mxu0 0
        %2997 = vmatprep.subr.bf16.mxu0 0
        %2998 = vmatpush2.bf16.msra.mxu0 0
        %2999 = vmatprep.subr.bf16.mxu0 0
        %3000 = vmatpush2.bf16.msra.mxu0 0
        %3001 = vmatprep.subr.bf16.mxu0 0
        %3002 = vmatpush2.bf16.msra.mxu0 0
        %3003 = vmatprep.subr.bf16.mxu0 0
        %3004 = vmatpush2.bf16.msra.mxu0 0
        %3005 = vmatprep.subr.bf16.mxu0 0
        %3006 = vmatpush2.bf16.msra.mxu0 0
        %3007 = vmatprep.subr.bf16.mxu0 0
        %3008 = vmatpush2.bf16.msra.mxu0 0
        %3009 = vmatprep.subr.bf16.mxu0 0
        %3010 = vmatpush2.bf16.msra.mxu0 0
        %3011 = vmatprep.mubr.bf16.mxu0 0
        %3012 = vmatmul.mubr.bf16.gmra.mxu0 %v2977
        %v3013 = vpop.f32.mrf.mxu0
        %v3014 = vadd.f32 0.0, %v3013
        %v3015 = vpop.f32.mrf.mxu0
        %v3016 = vpop.f32.mrf.mxu0
        %v3017 = vadd.f32 0.0, %v3016
        %v3018 = vpop.f32.mrf.mxu0
        %3019 = vdwg.mxu0
        %v3021 = vsel %vm2153, %v2974, 0
        %3023 = vmatprep.subr.bf16.mxu0 0
        %3024 = vmatpush1.bf16.msra.mxu0 0
        %3025 = vmatprep.subr.bf16.mxu0 0
        %3026 = vmatpush1.bf16.msra.mxu0 0
        %3027 = vmatprep.subr.bf16.mxu0 0
        %3028 = vmatpush1.bf16.msra.mxu0 0
        %3029 = vmatprep.subr.bf16.mxu0 0
        %3030 = vmatpush1.bf16.msra.mxu0 0
        %3031 = vmatprep.subr.bf16.mxu0 0
        %3032 = vmatpush1.bf16.msra.mxu0 0
        %3033 = vmatprep.subr.bf16.mxu0 0
        %3034 = vmatpush1.bf16.msra.mxu0 0
        %3035 = vmatprep.subr.bf16.mxu0 0
        %3036 = vmatpush1.bf16.msra.mxu0 0
        %3037 = vmatprep.subr.bf16.mxu0 0
        %3038 = vmatpush1.bf16.msra.mxu0 %v2206
        %3039 = vmatprep.subr.bf16.mxu0 0
        %3040 = vmatpush2.bf16.msra.mxu0 0
        %3041 = vmatprep.subr.bf16.mxu0 0
        %3042 = vmatpush2.bf16.msra.mxu0 0
        %3043 = vmatprep.subr.bf16.mxu0 0
        %3044 = vmatpush2.bf16.msra.mxu0 0
        %3045 = vmatprep.subr.bf16.mxu0 0
        %3046 = vmatpush2.bf16.msra.mxu0 0
        %3047 = vmatprep.subr.bf16.mxu0 0
        %3048 = vmatpush2.bf16.msra.mxu0 0
        %3049 = vmatprep.subr.bf16.mxu0 0
        %3050 = vmatpush2.bf16.msra.mxu0 0
        %3051 = vmatprep.subr.bf16.mxu0 0
        %3052 = vmatpush2.bf16.msra.mxu0 0
        %3053 = vmatprep.subr.bf16.mxu0 0
        %3054 = vmatpush2.bf16.msra.mxu0 0
        %3055 = vmatprep.mubr.bf16.mxu0 0
        %3056 = vmatmul.mubr.bf16.gmra.mxu0 %v3021
        %v3057 = vpop.f32.mrf.mxu0
        %v3058 = vadd.f32 %v3014, %v3057
        %v3059 = vpop.f32.mrf.mxu0
        %v3060 = vpop.f32.mrf.mxu0
        %v3061 = vadd.f32 %v3017, %v3060
        %v3062 = vpop.f32.mrf.mxu0
        %3063 = vdwg.mxu0
        %v3064 = vpack.c.bf16 %v2973, %v2972
        %v3066 = vsel %vm2153, %v3064, 0
        %3068 = vmatprep.subr.bf16.mxu0 0
        %3069 = vmatpush1.bf16.msra.mxu0 0
        %3070 = vmatprep.subr.bf16.mxu0 0
        %3071 = vmatpush1.bf16.msra.mxu0 0
        %3072 = vmatprep.subr.bf16.mxu0 0
        %3073 = vmatpush1.bf16.msra.mxu0 0
        %3074 = vmatprep.subr.bf16.mxu0 0
        %3075 = vmatpush1.bf16.msra.mxu0 0
        %3076 = vmatprep.subr.bf16.mxu0 0
        %3077 = vmatpush1.bf16.msra.mxu0 0
        %3078 = vmatprep.subr.bf16.mxu0 0
        %3079 = vmatpush1.bf16.msra.mxu0 0
        %3080 = vmatprep.subr.bf16.mxu0 0
        %3081 = vmatpush1.bf16.msra.mxu0 0
        %3082 = vmatprep.subr.bf16.mxu0 0
        %3083 = vmatpush1.bf16.msra.mxu0 %v2254
        %3084 = vmatprep.subr.bf16.mxu0 0
        %3085 = vmatpush2.bf16.msra.mxu0 0
        %3086 = vmatprep.subr.bf16.mxu0 0
        %3087 = vmatpush2.bf16.msra.mxu0 0
        %3088 = vmatprep.subr.bf16.mxu0 0
        %3089 = vmatpush2.bf16.msra.mxu0 0
        %3090 = vmatprep.subr.bf16.mxu0 0
        %3091 = vmatpush2.bf16.msra.mxu0 0
        %3092 = vmatprep.subr.bf16.mxu0 0
        %3093 = vmatpush2.bf16.msra.mxu0 0
        %3094 = vmatprep.subr.bf16.mxu0 0
        %3095 = vmatpush2.bf16.msra.mxu0 0
        %3096 = vmatprep.subr.bf16.mxu0 0
        %3097 = vmatpush2.bf16.msra.mxu0 0
        %3098 = vmatprep.subr.bf16.mxu0 0
        %3099 = vmatpush2.bf16.msra.mxu0 0
        %3100 = vmatprep.mubr.bf16.mxu0 0
        %3101 = vmatmul.mubr.bf16.gmra.mxu0 %v3066
        %v3102 = vpop.f32.mrf.mxu0
        %v3103 = vadd.f32 0.0, %v3102
        %v3104 = vpop.f32.mrf.mxu0
        %v3105 = vpop.f32.mrf.mxu0
        %v3106 = vadd.f32 0.0, %v3105
        %v3107 = vpop.f32.mrf.mxu0
        %3108 = vdwg.mxu0
        %v3109 = vadd.f32 %v3058, %v3103
        %v3110 = vadd.f32 %v3061, %v3106
        %v3111 = vld [vmem:[#allocation2 + $0x40] sm:$0xff]
        %v3112 = vld [vmem:[#allocation2 + $0x48] sm:$0xff]
        %v3113 = vadd.f32 %v3111, %v3109
        %v3114 = vadd.f32 %v3112, %v3110
        %v3115 = vxor.u32 %v3113, 2147483648
        %v3116 = vxor.u32 %v3114, 2147483648
        %v3117 = vmul.f32 %v3115, 1.442695
        %v3118 = vpow.pop %v3117
        %v3119 = vmul.f32 %v3116, 1.442695
        %v3120 = vpow.pop %v3119
        %v3121 = vadd.f32 %v3118, 1.0
        %v3122 = vadd.f32 %v3120, 1.0
        %v3123 = vrcp.pop %v3121
        %v3124 = vmul.f32 1.0, %v3123
        %v3125 = vrcp.pop %v3122
        %v3126 = vmul.f32 1.0, %v3125
        %v3127 = vtanh.pop %v3113
        %v3128 = vtanh.pop %v3114
        %v3129 = vmul.f32 %v3124, %v2946
        %v3130 = vmul.f32 %v3126, %v2947
        %3133 = vrot.lane.b32.xlu0 %v3127, 124
        %v3134 = vpop.permute.xlu0 %3133
        %3135 = vrot.lane.b32.xlu0 %v3128, 124
        %v3136 = vpop.permute.xlu0 %3135
        %v3139 = vmul.f32 %v3124, %v3134
        %v3140 = vmul.f32 %v3126, %v3136
        %3143 = vrot.lane.b32.xlu0 %v3139, 124
        %v3144 = vpop.permute.xlu0 %3143
        %3145 = vrot.lane.b32.xlu0 %v3140, 124
        %v3146 = vpop.permute.xlu0 %3145
        %v3149 = vadd.f32 %v3129, %v3144
        %v3150 = vadd.f32 %v3130, %v3146
        %v3151 = vtanh.pop %v3149
        %v3152 = vtanh.pop %v3150
        %3155 = vrot.lane.b32.xlu0 %v3151, 124
        %v3156 = vpop.permute.xlu0 %3155
        %3157 = vrot.lane.b32.xlu0 %v3152, 124
        %v3158 = vpop.permute.xlu0 %3157
        %v3161 = vmul.f32 %v3124, %v3156
        %v3162 = vmul.f32 %v3126, %v3158
        %3163 = vst.msk [vmem:[#allocation3 + $0x40] sm:$0xff] %vm2153, %v3161
        %3164 = vst.msk [vmem:[#allocation3 + $0x48] sm:$0xff] %vm2153, %v3162
        %v3165 = vrot.slane %v3161, 7
        %v3166 = vrot.slane %v3162, 7
        %v3167 = vsel %vm1030, %v3165, %v3166
        %v3168 = vsel %vm1030, %v3166, %v3165
        %v3169 = vsel %vm1095, 0.0, %v3168
        %v3170 = vsel %vm1096, 0.0, %v3167
        %v3171 = vrot.slane %v3161, 1
        %v3172 = vrot.slane %v3162, 1
        %v3173 = vsel %vm1223, %v3171, %v3172
        %v3174 = vsel %vm1223, %v3172, %v3171
        %v3175 = vsel %vm1288, 0.0, %v3173
        %v3176 = vsel %vm1289, 0.0, %v3174
        %v3177 = vpack.c.bf16 %v3170, %v3169
        %v3178 = vpack.c.bf16 %v3162, %v3161
        %v3180 = vsel %vm2153, %v3178, 0
        %3182 = vmatprep.subr.bf16.mxu0 0
        %3183 = vmatpush1.bf16.msra.mxu0 0
        %3184 = vmatprep.subr.bf16.mxu0 0
        %3185 = vmatpush1.bf16.msra.mxu0 0
        %3186 = vmatprep.subr.bf16.mxu0 0
        %3187 = vmatpush1.bf16.msra.mxu0 0
        %3188 = vmatprep.subr.bf16.mxu0 0
        %3189 = vmatpush1.bf16.msra.mxu0 0
        %3190 = vmatprep.subr.bf16.mxu0 0
        %3191 = vmatpush1.bf16.msra.mxu0 0
        %3192 = vmatprep.subr.bf16.mxu0 0
        %3193 = vmatpush1.bf16.msra.mxu0 0
        %3194 = vmatprep.subr.bf16.mxu0 0
        %3195 = vmatpush1.bf16.msra.mxu0 0
        %3196 = vmatprep.subr.bf16.mxu0 0
        %3197 = vmatpush1.bf16.msra.mxu0 %v2159
        %3198 = vmatprep.subr.bf16.mxu0 0
        %3199 = vmatpush2.bf16.msra.mxu0 0
        %3200 = vmatprep.subr.bf16.mxu0 0
        %3201 = vmatpush2.bf16.msra.mxu0 0
        %3202 = vmatprep.subr.bf16.mxu0 0
        %3203 = vmatpush2.bf16.msra.mxu0 0
        %3204 = vmatprep.subr.bf16.mxu0 0
        %3205 = vmatpush2.bf16.msra.mxu0 0
        %3206 = vmatprep.subr.bf16.mxu0 0
        %3207 = vmatpush2.bf16.msra.mxu0 0
        %3208 = vmatprep.subr.bf16.mxu0 0
        %3209 = vmatpush2.bf16.msra.mxu0 0
        %3210 = vmatprep.subr.bf16.mxu0 0
        %3211 = vmatpush2.bf16.msra.mxu0 0
        %3212 = vmatprep.subr.bf16.mxu0 0
        %3213 = vmatpush2.bf16.msra.mxu0 0
        %3214 = vmatprep.mubr.bf16.mxu0 0
        %3215 = vmatmul.mubr.bf16.gmra.mxu0 %v3180
        %v3216 = vpop.f32.mrf.mxu0
        %v3217 = vadd.f32 0.0, %v3216
        %v3218 = vpop.f32.mrf.mxu0
        %v3219 = vpop.f32.mrf.mxu0
        %v3220 = vadd.f32 0.0, %v3219
        %v3221 = vpop.f32.mrf.mxu0
        %3222 = vdwg.mxu0
        %v3224 = vsel %vm2153, %v3177, 0
        %3226 = vmatprep.subr.bf16.mxu0 0
        %3227 = vmatpush1.bf16.msra.mxu0 0
        %3228 = vmatprep.subr.bf16.mxu0 0
        %3229 = vmatpush1.bf16.msra.mxu0 0
        %3230 = vmatprep.subr.bf16.mxu0 0
        %3231 = vmatpush1.bf16.msra.mxu0 0
        %3232 = vmatprep.subr.bf16.mxu0 0
        %3233 = vmatpush1.bf16.msra.mxu0 0
        %3234 = vmatprep.subr.bf16.mxu0 0
        %3235 = vmatpush1.bf16.msra.mxu0 0
        %3236 = vmatprep.subr.bf16.mxu0 0
        %3237 = vmatpush1.bf16.msra.mxu0 0
        %3238 = vmatprep.subr.bf16.mxu0 0
        %3239 = vmatpush1.bf16.msra.mxu0 0
        %3240 = vmatprep.subr.bf16.mxu0 0
        %3241 = vmatpush1.bf16.msra.mxu0 %v2206
        %3242 = vmatprep.subr.bf16.mxu0 0
        %3243 = vmatpush2.bf16.msra.mxu0 0
        %3244 = vmatprep.subr.bf16.mxu0 0
        %3245 = vmatpush2.bf16.msra.mxu0 0
        %3246 = vmatprep.subr.bf16.mxu0 0
        %3247 = vmatpush2.bf16.msra.mxu0 0
        %3248 = vmatprep.subr.bf16.mxu0 0
        %3249 = vmatpush2.bf16.msra.mxu0 0
        %3250 = vmatprep.subr.bf16.mxu0 0
        %3251 = vmatpush2.bf16.msra.mxu0 0
        %3252 = vmatprep.subr.bf16.mxu0 0
        %3253 = vmatpush2.bf16.msra.mxu0 0
        %3254 = vmatprep.subr.bf16.mxu0 0
        %3255 = vmatpush2.bf16.msra.mxu0 0
        %3256 = vmatprep.subr.bf16.mxu0 0
        %3257 = vmatpush2.bf16.msra.mxu0 0
        %3258 = vmatprep.mubr.bf16.mxu0 0
        %3259 = vmatmul.mubr.bf16.gmra.mxu0 %v3224
        %v3260 = vpop.f32.mrf.mxu0
        %v3261 = vadd.f32 %v3217, %v3260
        %v3262 = vpop.f32.mrf.mxu0
        %v3263 = vpop.f32.mrf.mxu0
        %v3264 = vadd.f32 %v3220, %v3263
        %v3265 = vpop.f32.mrf.mxu0
        %3266 = vdwg.mxu0
        %v3267 = vpack.c.bf16 %v3176, %v3175
        %v3269 = vsel %vm2153, %v3267, 0
        %3271 = vmatprep.subr.bf16.mxu0 0
        %3272 = vmatpush1.bf16.msra.mxu0 0
        %3273 = vmatprep.subr.bf16.mxu0 0
        %3274 = vmatpush1.bf16.msra.mxu0 0
        %3275 = vmatprep.subr.bf16.mxu0 0
        %3276 = vmatpush1.bf16.msra.mxu0 0
        %3277 = vmatprep.subr.bf16.mxu0 0
        %3278 = vmatpush1.bf16.msra.mxu0 0
        %3279 = vmatprep.subr.bf16.mxu0 0
        %3280 = vmatpush1.bf16.msra.mxu0 0
        %3281 = vmatprep.subr.bf16.mxu0 0
        %3282 = vmatpush1.bf16.msra.mxu0 0
        %3283 = vmatprep.subr.bf16.mxu0 0
        %3284 = vmatpush1.bf16.msra.mxu0 0
        %3285 = vmatprep.subr.bf16.mxu0 0
        %3286 = vmatpush1.bf16.msra.mxu0 %v2254
        %3287 = vmatprep.subr.bf16.mxu0 0
        %3288 = vmatpush2.bf16.msra.mxu0 0
        %3289 = vmatprep.subr.bf16.mxu0 0
        %3290 = vmatpush2.bf16.msra.mxu0 0
        %3291 = vmatprep.subr.bf16.mxu0 0
        %3292 = vmatpush2.bf16.msra.mxu0 0
        %3293 = vmatprep.subr.bf16.mxu0 0
        %3294 = vmatpush2.bf16.msra.mxu0 0
        %3295 = vmatprep.subr.bf16.mxu0 0
        %3296 = vmatpush2.bf16.msra.mxu0 0
        %3297 = vmatprep.subr.bf16.mxu0 0
        %3298 = vmatpush2.bf16.msra.mxu0 0
        %3299 = vmatprep.subr.bf16.mxu0 0
        %3300 = vmatpush2.bf16.msra.mxu0 0
        %3301 = vmatprep.subr.bf16.mxu0 0
        %3302 = vmatpush2.bf16.msra.mxu0 0
        %3303 = vmatprep.mubr.bf16.mxu0 0
        %3304 = vmatmul.mubr.bf16.gmra.mxu0 %v3269
        %v3305 = vpop.f32.mrf.mxu0
        %v3306 = vadd.f32 0.0, %v3305
        %v3307 = vpop.f32.mrf.mxu0
        %v3308 = vpop.f32.mrf.mxu0
        %v3309 = vadd.f32 0.0, %v3308
        %v3310 = vpop.f32.mrf.mxu0
        %3311 = vdwg.mxu0
        %v3312 = vadd.f32 %v3261, %v3306
        %v3313 = vadd.f32 %v3264, %v3309
        %v3314 = vld [vmem:[#allocation2 + $0x50] sm:$0xff]
        %v3315 = vld [vmem:[#allocation2 + $0x58] sm:$0xff]
        %v3316 = vadd.f32 %v3314, %v3312
        %v3317 = vadd.f32 %v3315, %v3313
        %v3318 = vxor.u32 %v3316, 2147483648
        %v3319 = vxor.u32 %v3317, 2147483648
        %v3320 = vmul.f32 %v3318, 1.442695
        %v3321 = vpow.pop %v3320
        %v3322 = vmul.f32 %v3319, 1.442695
        %v3323 = vpow.pop %v3322
        %v3324 = vadd.f32 %v3321, 1.0
        %v3325 = vadd.f32 %v3323, 1.0
        %v3326 = vrcp.pop %v3324
        %v3327 = vmul.f32 1.0, %v3326
        %v3328 = vrcp.pop %v3325
        %v3329 = vmul.f32 1.0, %v3328
        %v3330 = vtanh.pop %v3316
        %v3331 = vtanh.pop %v3317
        %v3332 = vmul.f32 %v3327, %v3149
        %v3333 = vmul.f32 %v3329, %v3150
        %3336 = vrot.lane.b32.xlu0 %v3330, 124
        %v3337 = vpop.permute.xlu0 %3336
        %3338 = vrot.lane.b32.xlu0 %v3331, 124
        %v3339 = vpop.permute.xlu0 %3338
        %v3342 = vmul.f32 %v3327, %v3337
        %v3343 = vmul.f32 %v3329, %v3339
        %3346 = vrot.lane.b32.xlu0 %v3342, 124
        %v3347 = vpop.permute.xlu0 %3346
        %3348 = vrot.lane.b32.xlu0 %v3343, 124
        %v3349 = vpop.permute.xlu0 %3348
        %v3352 = vadd.f32 %v3332, %v3347
        %v3353 = vadd.f32 %v3333, %v3349
        %v3354 = vtanh.pop %v3352
        %v3355 = vtanh.pop %v3353
        %3358 = vrot.lane.b32.xlu0 %v3354, 124
        %v3359 = vpop.permute.xlu0 %3358
        %3360 = vrot.lane.b32.xlu0 %v3355, 124
        %v3361 = vpop.permute.xlu0 %3360
        %v3364 = vmul.f32 %v3327, %v3359
        %v3365 = vmul.f32 %v3329, %v3361
        %3366 = vst.msk [vmem:[#allocation3 + $0x50] sm:$0xff] %vm2153, %v3364
        %3367 = vst.msk [vmem:[#allocation3 + $0x58] sm:$0xff] %vm2153, %v3365
        %v3368 = vrot.slane %v3364, 7
        %v3369 = vrot.slane %v3365, 7
        %v3370 = vsel %vm1030, %v3368, %v3369
        %v3371 = vsel %vm1030, %v3369, %v3368
        %v3372 = vsel %vm1095, 0.0, %v3371
        %v3373 = vsel %vm1096, 0.0, %v3370
        %v3374 = vrot.slane %v3364, 1
        %v3375 = vrot.slane %v3365, 1
        %v3376 = vsel %vm1223, %v3374, %v3375
        %v3377 = vsel %vm1223, %v3375, %v3374
        %v3378 = vsel %vm1288, 0.0, %v3376
        %v3379 = vsel %vm1289, 0.0, %v3377
        %v3380 = vpack.c.bf16 %v3373, %v3372
        %v3381 = vpack.c.bf16 %v3365, %v3364
        %v3383 = vsel %vm2153, %v3381, 0
        %3385 = vmatprep.subr.bf16.mxu0 0
        %3386 = vmatpush1.bf16.msra.mxu0 0
        %3387 = vmatprep.subr.bf16.mxu0 0
        %3388 = vmatpush1.bf16.msra.mxu0 0
        %3389 = vmatprep.subr.bf16.mxu0 0
        %3390 = vmatpush1.bf16.msra.mxu0 0
        %3391 = vmatprep.subr.bf16.mxu0 0
        %3392 = vmatpush1.bf16.msra.mxu0 0
        %3393 = vmatprep.subr.bf16.mxu0 0
        %3394 = vmatpush1.bf16.msra.mxu0 0
        %3395 = vmatprep.subr.bf16.mxu0 0
        %3396 = vmatpush1.bf16.msra.mxu0 0
        %3397 = vmatprep.subr.bf16.mxu0 0
        %3398 = vmatpush1.bf16.msra.mxu0 0
        %3399 = vmatprep.subr.bf16.mxu0 0
        %3400 = vmatpush1.bf16.msra.mxu0 %v2159
        %3401 = vmatprep.subr.bf16.mxu0 0
        %3402 = vmatpush2.bf16.msra.mxu0 0
        %3403 = vmatprep.subr.bf16.mxu0 0
        %3404 = vmatpush2.bf16.msra.mxu0 0
        %3405 = vmatprep.subr.bf16.mxu0 0
        %3406 = vmatpush2.bf16.msra.mxu0 0
        %3407 = vmatprep.subr.bf16.mxu0 0
        %3408 = vmatpush2.bf16.msra.mxu0 0
        %3409 = vmatprep.subr.bf16.mxu0 0
        %3410 = vmatpush2.bf16.msra.mxu0 0
        %3411 = vmatprep.subr.bf16.mxu0 0
        %3412 = vmatpush2.bf16.msra.mxu0 0
        %3413 = vmatprep.subr.bf16.mxu0 0
        %3414 = vmatpush2.bf16.msra.mxu0 0
        %3415 = vmatprep.subr.bf16.mxu0 0
        %3416 = vmatpush2.bf16.msra.mxu0 0
        %3417 = vmatprep.mubr.bf16.mxu0 0
        %3418 = vmatmul.mubr.bf16.gmra.mxu0 %v3383
        %v3419 = vpop.f32.mrf.mxu0
        %v3420 = vadd.f32 0.0, %v3419
        %v3421 = vpop.f32.mrf.mxu0
        %v3422 = vpop.f32.mrf.mxu0
        %v3423 = vadd.f32 0.0, %v3422
        %v3424 = vpop.f32.mrf.mxu0
        %3425 = vdwg.mxu0
        %v3427 = vsel %vm2153, %v3380, 0
        %3429 = vmatprep.subr.bf16.mxu0 0
        %3430 = vmatpush1.bf16.msra.mxu0 0
        %3431 = vmatprep.subr.bf16.mxu0 0
        %3432 = vmatpush1.bf16.msra.mxu0 0
        %3433 = vmatprep.subr.bf16.mxu0 0
        %3434 = vmatpush1.bf16.msra.mxu0 0
        %3435 = vmatprep.subr.bf16.mxu0 0
        %3436 = vmatpush1.bf16.msra.mxu0 0
        %3437 = vmatprep.subr.bf16.mxu0 0
        %3438 = vmatpush1.bf16.msra.mxu0 0
        %3439 = vmatprep.subr.bf16.mxu0 0
        %3440 = vmatpush1.bf16.msra.mxu0 0
        %3441 = vmatprep.subr.bf16.mxu0 0
        %3442 = vmatpush1.bf16.msra.mxu0 0
        %3443 = vmatprep.subr.bf16.mxu0 0
        %3444 = vmatpush1.bf16.msra.mxu0 %v2206
        %3445 = vmatprep.subr.bf16.mxu0 0
        %3446 = vmatpush2.bf16.msra.mxu0 0
        %3447 = vmatprep.subr.bf16.mxu0 0
        %3448 = vmatpush2.bf16.msra.mxu0 0
        %3449 = vmatprep.subr.bf16.mxu0 0
        %3450 = vmatpush2.bf16.msra.mxu0 0
        %3451 = vmatprep.subr.bf16.mxu0 0
        %3452 = vmatpush2.bf16.msra.mxu0 0
        %3453 = vmatprep.subr.bf16.mxu0 0
        %3454 = vmatpush2.bf16.msra.mxu0 0
        %3455 = vmatprep.subr.bf16.mxu0 0
        %3456 = vmatpush2.bf16.msra.mxu0 0
        %3457 = vmatprep.subr.bf16.mxu0 0
        %3458 = vmatpush2.bf16.msra.mxu0 0
        %3459 = vmatprep.subr.bf16.mxu0 0
        %3460 = vmatpush2.bf16.msra.mxu0 0
        %3461 = vmatprep.mubr.bf16.mxu0 0
        %3462 = vmatmul.mubr.bf16.gmra.mxu0 %v3427
        %v3463 = vpop.f32.mrf.mxu0
        %v3464 = vadd.f32 %v3420, %v3463
        %v3465 = vpop.f32.mrf.mxu0
        %v3466 = vpop.f32.mrf.mxu0
        %v3467 = vadd.f32 %v3423, %v3466
        %v3468 = vpop.f32.mrf.mxu0
        %3469 = vdwg.mxu0
        %v3470 = vpack.c.bf16 %v3379, %v3378
        %v3472 = vsel %vm2153, %v3470, 0
        %3474 = vmatprep.subr.bf16.mxu0 0
        %3475 = vmatpush1.bf16.msra.mxu0 0
        %3476 = vmatprep.subr.bf16.mxu0 0
        %3477 = vmatpush1.bf16.msra.mxu0 0
        %3478 = vmatprep.subr.bf16.mxu0 0
        %3479 = vmatpush1.bf16.msra.mxu0 0
        %3480 = vmatprep.subr.bf16.mxu0 0
        %3481 = vmatpush1.bf16.msra.mxu0 0
        %3482 = vmatprep.subr.bf16.mxu0 0
        %3483 = vmatpush1.bf16.msra.mxu0 0
        %3484 = vmatprep.subr.bf16.mxu0 0
        %3485 = vmatpush1.bf16.msra.mxu0 0
        %3486 = vmatprep.subr.bf16.mxu0 0
        %3487 = vmatpush1.bf16.msra.mxu0 0
        %3488 = vmatprep.subr.bf16.mxu0 0
        %3489 = vmatpush1.bf16.msra.mxu0 %v2254
        %3490 = vmatprep.subr.bf16.mxu0 0
        %3491 = vmatpush2.bf16.msra.mxu0 0
        %3492 = vmatprep.subr.bf16.mxu0 0
        %3493 = vmatpush2.bf16.msra.mxu0 0
        %3494 = vmatprep.subr.bf16.mxu0 0
        %3495 = vmatpush2.bf16.msra.mxu0 0
        %3496 = vmatprep.subr.bf16.mxu0 0
        %3497 = vmatpush2.bf16.msra.mxu0 0
        %3498 = vmatprep.subr.bf16.mxu0 0
        %3499 = vmatpush2.bf16.msra.mxu0 0
        %3500 = vmatprep.subr.bf16.mxu0 0
        %3501 = vmatpush2.bf16.msra.mxu0 0
        %3502 = vmatprep.subr.bf16.mxu0 0
        %3503 = vmatpush2.bf16.msra.mxu0 0
        %3504 = vmatprep.subr.bf16.mxu0 0
        %3505 = vmatpush2.bf16.msra.mxu0 0
        %3506 = vmatprep.mubr.bf16.mxu0 0
        %3507 = vmatmul.mubr.bf16.gmra.mxu0 %v3472
        %v3508 = vpop.f32.mrf.mxu0
        %v3509 = vadd.f32 0.0, %v3508
        %v3510 = vpop.f32.mrf.mxu0
        %v3511 = vpop.f32.mrf.mxu0
        %v3512 = vadd.f32 0.0, %v3511
        %v3513 = vpop.f32.mrf.mxu0
        %3514 = vdwg.mxu0
        %v3515 = vadd.f32 %v3464, %v3509
        %v3516 = vadd.f32 %v3467, %v3512
        %v3517 = vld [vmem:[#allocation2 + $0x60] sm:$0xff]
        %v3518 = vld [vmem:[#allocation2 + $0x68] sm:$0xff]
        %v3519 = vadd.f32 %v3517, %v3515
        %v3520 = vadd.f32 %v3518, %v3516
        %v3521 = vxor.u32 %v3519, 2147483648
        %v3522 = vxor.u32 %v3520, 2147483648
        %v3523 = vmul.f32 %v3521, 1.442695
        %v3524 = vpow.pop %v3523
        %v3525 = vmul.f32 %v3522, 1.442695
        %v3526 = vpow.pop %v3525
        %v3527 = vadd.f32 %v3524, 1.0
        %v3528 = vadd.f32 %v3526, 1.0
        %v3529 = vrcp.pop %v3527
        %v3530 = vmul.f32 1.0, %v3529
        %v3531 = vrcp.pop %v3528
        %v3532 = vmul.f32 1.0, %v3531
        %v3533 = vtanh.pop %v3519
        %v3534 = vtanh.pop %v3520
        %v3535 = vmul.f32 %v3530, %v3352
        %v3536 = vmul.f32 %v3532, %v3353
        %3539 = vrot.lane.b32.xlu0 %v3533, 124
        %v3540 = vpop.permute.xlu0 %3539
        %3541 = vrot.lane.b32.xlu0 %v3534, 124
        %v3542 = vpop.permute.xlu0 %3541
        %v3545 = vmul.f32 %v3530, %v3540
        %v3546 = vmul.f32 %v3532, %v3542
        %3549 = vrot.lane.b32.xlu0 %v3545, 124
        %v3550 = vpop.permute.xlu0 %3549
        %3551 = vrot.lane.b32.xlu0 %v3546, 124
        %v3552 = vpop.permute.xlu0 %3551
        %v3555 = vadd.f32 %v3535, %v3550
        %v3556 = vadd.f32 %v3536, %v3552
        %v3557 = vtanh.pop %v3555
        %v3558 = vtanh.pop %v3556
        %3561 = vrot.lane.b32.xlu0 %v3557, 124
        %v3562 = vpop.permute.xlu0 %3561
        %3563 = vrot.lane.b32.xlu0 %v3558, 124
        %v3564 = vpop.permute.xlu0 %3563
        %v3567 = vmul.f32 %v3530, %v3562
        %v3568 = vmul.f32 %v3532, %v3564
        %3569 = vst.msk [vmem:[#allocation3 + $0x60] sm:$0xff] %vm2153, %v3567
        %3570 = vst.msk [vmem:[#allocation3 + $0x68] sm:$0xff] %vm2153, %v3568
        %v3571 = vrot.slane %v3567, 7
        %v3572 = vrot.slane %v3568, 7
        %v3573 = vsel %vm1030, %v3571, %v3572
        %v3574 = vsel %vm1030, %v3572, %v3571
        %v3575 = vsel %vm1095, 0.0, %v3574
        %v3576 = vsel %vm1096, 0.0, %v3573
        %v3577 = vrot.slane %v3567, 1
        %v3578 = vrot.slane %v3568, 1
        %v3579 = vsel %vm1223, %v3577, %v3578
        %v3580 = vsel %vm1223, %v3578, %v3577
        %v3581 = vsel %vm1288, 0.0, %v3579
        %v3582 = vsel %vm1289, 0.0, %v3580
        %v3583 = vpack.c.bf16 %v3576, %v3575
        %v3584 = vpack.c.bf16 %v3568, %v3567
        %v3586 = vsel %vm2153, %v3584, 0
        %3588 = vmatprep.subr.bf16.mxu0 0
        %3589 = vmatpush1.bf16.msra.mxu0 0
        %3590 = vmatprep.subr.bf16.mxu0 0
        %3591 = vmatpush1.bf16.msra.mxu0 0
        %3592 = vmatprep.subr.bf16.mxu0 0
        %3593 = vmatpush1.bf16.msra.mxu0 0
        %3594 = vmatprep.subr.bf16.mxu0 0
        %3595 = vmatpush1.bf16.msra.mxu0 0
        %3596 = vmatprep.subr.bf16.mxu0 0
        %3597 = vmatpush1.bf16.msra.mxu0 0
        %3598 = vmatprep.subr.bf16.mxu0 0
        %3599 = vmatpush1.bf16.msra.mxu0 0
        %3600 = vmatprep.subr.bf16.mxu0 0
        %3601 = vmatpush1.bf16.msra.mxu0 0
        %3602 = vmatprep.subr.bf16.mxu0 0
        %3603 = vmatpush1.bf16.msra.mxu0 %v2159
        %3604 = vmatprep.subr.bf16.mxu0 0
        %3605 = vmatpush2.bf16.msra.mxu0 0
        %3606 = vmatprep.subr.bf16.mxu0 0
        %3607 = vmatpush2.bf16.msra.mxu0 0
        %3608 = vmatprep.subr.bf16.mxu0 0
        %3609 = vmatpush2.bf16.msra.mxu0 0
        %3610 = vmatprep.subr.bf16.mxu0 0
        %3611 = vmatpush2.bf16.msra.mxu0 0
        %3612 = vmatprep.subr.bf16.mxu0 0
        %3613 = vmatpush2.bf16.msra.mxu0 0
        %3614 = vmatprep.subr.bf16.mxu0 0
        %3615 = vmatpush2.bf16.msra.mxu0 0
        %3616 = vmatprep.subr.bf16.mxu0 0
        %3617 = vmatpush2.bf16.msra.mxu0 0
        %3618 = vmatprep.subr.bf16.mxu0 0
        %3619 = vmatpush2.bf16.msra.mxu0 0
        %3620 = vmatprep.mubr.bf16.mxu0 0
        %3621 = vmatmul.mubr.bf16.gmra.mxu0 %v3586
        %v3622 = vpop.f32.mrf.mxu0
        %v3623 = vadd.f32 0.0, %v3622
        %v3624 = vpop.f32.mrf.mxu0
        %v3625 = vpop.f32.mrf.mxu0
        %v3626 = vadd.f32 0.0, %v3625
        %v3627 = vpop.f32.mrf.mxu0
        %3628 = vdwg.mxu0
        %v3630 = vsel %vm2153, %v3583, 0
        %3632 = vmatprep.subr.bf16.mxu0 0
        %3633 = vmatpush1.bf16.msra.mxu0 0
        %3634 = vmatprep.subr.bf16.mxu0 0
        %3635 = vmatpush1.bf16.msra.mxu0 0
        %3636 = vmatprep.subr.bf16.mxu0 0
        %3637 = vmatpush1.bf16.msra.mxu0 0
        %3638 = vmatprep.subr.bf16.mxu0 0
        %3639 = vmatpush1.bf16.msra.mxu0 0
        %3640 = vmatprep.subr.bf16.mxu0 0
        %3641 = vmatpush1.bf16.msra.mxu0 0
        %3642 = vmatprep.subr.bf16.mxu0 0
        %3643 = vmatpush1.bf16.msra.mxu0 0
        %3644 = vmatprep.subr.bf16.mxu0 0
        %3645 = vmatpush1.bf16.msra.mxu0 0
        %3646 = vmatprep.subr.bf16.mxu0 0
        %3647 = vmatpush1.bf16.msra.mxu0 %v2206
        %3648 = vmatprep.subr.bf16.mxu0 0
        %3649 = vmatpush2.bf16.msra.mxu0 0
        %3650 = vmatprep.subr.bf16.mxu0 0
        %3651 = vmatpush2.bf16.msra.mxu0 0
        %3652 = vmatprep.subr.bf16.mxu0 0
        %3653 = vmatpush2.bf16.msra.mxu0 0
        %3654 = vmatprep.subr.bf16.mxu0 0
        %3655 = vmatpush2.bf16.msra.mxu0 0
        %3656 = vmatprep.subr.bf16.mxu0 0
        %3657 = vmatpush2.bf16.msra.mxu0 0
        %3658 = vmatprep.subr.bf16.mxu0 0
        %3659 = vmatpush2.bf16.msra.mxu0 0
        %3660 = vmatprep.subr.bf16.mxu0 0
        %3661 = vmatpush2.bf16.msra.mxu0 0
        %3662 = vmatprep.subr.bf16.mxu0 0
        %3663 = vmatpush2.bf16.msra.mxu0 0
        %3664 = vmatprep.mubr.bf16.mxu0 0
        %3665 = vmatmul.mubr.bf16.gmra.mxu0 %v3630
        %v3666 = vpop.f32.mrf.mxu0
        %v3667 = vadd.f32 %v3623, %v3666
        %v3668 = vpop.f32.mrf.mxu0
        %v3669 = vpop.f32.mrf.mxu0
        %v3670 = vadd.f32 %v3626, %v3669
        %v3671 = vpop.f32.mrf.mxu0
        %3672 = vdwg.mxu0
        %v3673 = vpack.c.bf16 %v3582, %v3581
        %v3675 = vsel %vm2153, %v3673, 0
        %3677 = vmatprep.subr.bf16.mxu0 0
        %3678 = vmatpush1.bf16.msra.mxu0 0
        %3679 = vmatprep.subr.bf16.mxu0 0
        %3680 = vmatpush1.bf16.msra.mxu0 0
        %3681 = vmatprep.subr.bf16.mxu0 0
        %3682 = vmatpush1.bf16.msra.mxu0 0
        %3683 = vmatprep.subr.bf16.mxu0 0
        %3684 = vmatpush1.bf16.msra.mxu0 0
        %3685 = vmatprep.subr.bf16.mxu0 0
        %3686 = vmatpush1.bf16.msra.mxu0 0
        %3687 = vmatprep.subr.bf16.mxu0 0
        %3688 = vmatpush1.bf16.msra.mxu0 0
        %3689 = vmatprep.subr.bf16.mxu0 0
        %3690 = vmatpush1.bf16.msra.mxu0 0
        %3691 = vmatprep.subr.bf16.mxu0 0
        %3692 = vmatpush1.bf16.msra.mxu0 %v2254
        %3693 = vmatprep.subr.bf16.mxu0 0
        %3694 = vmatpush2.bf16.msra.mxu0 0
        %3695 = vmatprep.subr.bf16.mxu0 0
        %3696 = vmatpush2.bf16.msra.mxu0 0
        %3697 = vmatprep.subr.bf16.mxu0 0
        %3698 = vmatpush2.bf16.msra.mxu0 0
        %3699 = vmatprep.subr.bf16.mxu0 0
        %3700 = vmatpush2.bf16.msra.mxu0 0
        %3701 = vmatprep.subr.bf16.mxu0 0
        %3702 = vmatpush2.bf16.msra.mxu0 0
        %3703 = vmatprep.subr.bf16.mxu0 0
        %3704 = vmatpush2.bf16.msra.mxu0 0
        %3705 = vmatprep.subr.bf16.mxu0 0
        %3706 = vmatpush2.bf16.msra.mxu0 0
        %3707 = vmatprep.subr.bf16.mxu0 0
        %3708 = vmatpush2.bf16.msra.mxu0 0
        %3709 = vmatprep.mubr.bf16.mxu0 0
        %3710 = vmatmul.mubr.bf16.gmra.mxu0 %v3675
        %v3711 = vpop.f32.mrf.mxu0
        %v3712 = vadd.f32 0.0, %v3711
        %v3713 = vpop.f32.mrf.mxu0
        %v3714 = vpop.f32.mrf.mxu0
        %v3715 = vadd.f32 0.0, %v3714
        %v3716 = vpop.f32.mrf.mxu0
        %3717 = vdwg.mxu0
        %v3718 = vadd.f32 %v3667, %v3712
        %v3719 = vadd.f32 %v3670, %v3715
        %v3720 = vld [vmem:[#allocation2 + $0x70] sm:$0xff]
        %v3721 = vld [vmem:[#allocation2 + $0x78] sm:$0xff]
        %v3722 = vadd.f32 %v3720, %v3718
        %v3723 = vadd.f32 %v3721, %v3719
        %v3724 = vxor.u32 %v3722, 2147483648
        %v3725 = vxor.u32 %v3723, 2147483648
        %v3726 = vmul.f32 %v3724, 1.442695
        %v3727 = vpow.pop %v3726
        %v3728 = vmul.f32 %v3725, 1.442695
        %v3729 = vpow.pop %v3728
        %v3730 = vadd.f32 %v3727, 1.0
        %v3731 = vadd.f32 %v3729, 1.0
        %v3732 = vrcp.pop %v3730
        %v3733 = vmul.f32 1.0, %v3732
        %v3734 = vrcp.pop %v3731
        %v3735 = vmul.f32 1.0, %v3734
        %v3736 = vtanh.pop %v3722
        %v3737 = vtanh.pop %v3723
        %v3738 = vmul.f32 %v3733, %v3555
        %v3739 = vmul.f32 %v3735, %v3556
        %3742 = vrot.lane.b32.xlu0 %v3736, 124
        %v3743 = vpop.permute.xlu0 %3742
        %3744 = vrot.lane.b32.xlu0 %v3737, 124
        %v3745 = vpop.permute.xlu0 %3744
        %v3748 = vmul.f32 %v3733, %v3743
        %v3749 = vmul.f32 %v3735, %v3745
        %3752 = vrot.lane.b32.xlu0 %v3748, 124
        %v3753 = vpop.permute.xlu0 %3752
        %3754 = vrot.lane.b32.xlu0 %v3749, 124
        %v3755 = vpop.permute.xlu0 %3754
        %v3758 = vadd.f32 %v3738, %v3753
        %v3759 = vadd.f32 %v3739, %v3755
        %v3760 = vtanh.pop %v3758
        %v3761 = vtanh.pop %v3759
        %3764 = vrot.lane.b32.xlu0 %v3760, 124
        %v3765 = vpop.permute.xlu0 %3764
        %3766 = vrot.lane.b32.xlu0 %v3761, 124
        %v3767 = vpop.permute.xlu0 %3766
        %v3770 = vmul.f32 %v3733, %v3765
        %v3771 = vmul.f32 %v3735, %v3767
        %3772 = vst.msk [vmem:[#allocation3 + $0x70] sm:$0xff] %vm2153, %v3770
        %3773 = vst.msk [vmem:[#allocation3 + $0x78] sm:$0xff] %vm2153, %v3771
        %v3774 = vrot.slane %v3770, 7
        %v3775 = vrot.slane %v3771, 7
        %v3776 = vsel %vm1030, %v3774, %v3775
        %v3777 = vsel %vm1030, %v3775, %v3774
        %v3778 = vsel %vm1095, 0.0, %v3777
        %v3779 = vsel %vm1096, 0.0, %v3776
        %v3780 = vrot.slane %v3770, 1
        %v3781 = vrot.slane %v3771, 1
        %v3782 = vsel %vm1223, %v3780, %v3781
        %v3783 = vsel %vm1223, %v3781, %v3780
        %v3784 = vsel %vm1288, 0.0, %v3782
        %v3785 = vsel %vm1289, 0.0, %v3783
        %v3786 = vpack.c.bf16 %v3779, %v3778
        %v3787 = vpack.c.bf16 %v3771, %v3770
        %v3789 = vsel %vm2153, %v3787, 0
        %3791 = vmatprep.subr.bf16.mxu0 0
        %3792 = vmatpush1.bf16.msra.mxu0 0
        %3793 = vmatprep.subr.bf16.mxu0 0
        %3794 = vmatpush1.bf16.msra.mxu0 0
        %3795 = vmatprep.subr.bf16.mxu0 0
        %3796 = vmatpush1.bf16.msra.mxu0 0
        %3797 = vmatprep.subr.bf16.mxu0 0
        %3798 = vmatpush1.bf16.msra.mxu0 0
        %3799 = vmatprep.subr.bf16.mxu0 0
        %3800 = vmatpush1.bf16.msra.mxu0 0
        %3801 = vmatprep.subr.bf16.mxu0 0
        %3802 = vmatpush1.bf16.msra.mxu0 0
        %3803 = vmatprep.subr.bf16.mxu0 0
        %3804 = vmatpush1.bf16.msra.mxu0 0
        %3805 = vmatprep.subr.bf16.mxu0 0
        %3806 = vmatpush1.bf16.msra.mxu0 %v2159
        %3807 = vmatprep.subr.bf16.mxu0 0
        %3808 = vmatpush2.bf16.msra.mxu0 0
        %3809 = vmatprep.subr.bf16.mxu0 0
        %3810 = vmatpush2.bf16.msra.mxu0 0
        %3811 = vmatprep.subr.bf16.mxu0 0
        %3812 = vmatpush2.bf16.msra.mxu0 0
        %3813 = vmatprep.subr.bf16.mxu0 0
        %3814 = vmatpush2.bf16.msra.mxu0 0
        %3815 = vmatprep.subr.bf16.mxu0 0
        %3816 = vmatpush2.bf16.msra.mxu0 0
        %3817 = vmatprep.subr.bf16.mxu0 0
        %3818 = vmatpush2.bf16.msra.mxu0 0
        %3819 = vmatprep.subr.bf16.mxu0 0
        %3820 = vmatpush2.bf16.msra.mxu0 0
        %3821 = vmatprep.subr.bf16.mxu0 0
        %3822 = vmatpush2.bf16.msra.mxu0 0
        %3823 = vmatprep.mubr.bf16.mxu0 0
        %3824 = vmatmul.mubr.bf16.gmra.mxu0 %v3789
        %v3825 = vpop.f32.mrf.mxu0
        %v3826 = vadd.f32 0.0, %v3825
        %v3827 = vpop.f32.mrf.mxu0
        %v3828 = vpop.f32.mrf.mxu0
        %v3829 = vadd.f32 0.0, %v3828
        %v3830 = vpop.f32.mrf.mxu0
        %3831 = vdwg.mxu0
        %v3833 = vsel %vm2153, %v3786, 0
        %3835 = vmatprep.subr.bf16.mxu0 0
        %3836 = vmatpush1.bf16.msra.mxu0 0
        %3837 = vmatprep.subr.bf16.mxu0 0
        %3838 = vmatpush1.bf16.msra.mxu0 0
        %3839 = vmatprep.subr.bf16.mxu0 0
        %3840 = vmatpush1.bf16.msra.mxu0 0
        %3841 = vmatprep.subr.bf16.mxu0 0
        %3842 = vmatpush1.bf16.msra.mxu0 0
        %3843 = vmatprep.subr.bf16.mxu0 0
        %3844 = vmatpush1.bf16.msra.mxu0 0
        %3845 = vmatprep.subr.bf16.mxu0 0
        %3846 = vmatpush1.bf16.msra.mxu0 0
        %3847 = vmatprep.subr.bf16.mxu0 0
        %3848 = vmatpush1.bf16.msra.mxu0 0
        %3849 = vmatprep.subr.bf16.mxu0 0
        %3850 = vmatpush1.bf16.msra.mxu0 %v2206
        %3851 = vmatprep.subr.bf16.mxu0 0
        %3852 = vmatpush2.bf16.msra.mxu0 0
        %3853 = vmatprep.subr.bf16.mxu0 0
        %3854 = vmatpush2.bf16.msra.mxu0 0
        %3855 = vmatprep.subr.bf16.mxu0 0
        %3856 = vmatpush2.bf16.msra.mxu0 0
        %3857 = vmatprep.subr.bf16.mxu0 0
        %3858 = vmatpush2.bf16.msra.mxu0 0
        %3859 = vmatprep.subr.bf16.mxu0 0
        %3860 = vmatpush2.bf16.msra.mxu0 0
        %3861 = vmatprep.subr.bf16.mxu0 0
        %3862 = vmatpush2.bf16.msra.mxu0 0
        %3863 = vmatprep.subr.bf16.mxu0 0
        %3864 = vmatpush2.bf16.msra.mxu0 0
        %3865 = vmatprep.subr.bf16.mxu0 0
        %3866 = vmatpush2.bf16.msra.mxu0 0
        %3867 = vmatprep.mubr.bf16.mxu0 0
        %3868 = vmatmul.mubr.bf16.gmra.mxu0 %v3833
        %v3869 = vpop.f32.mrf.mxu0
        %v3870 = vadd.f32 %v3826, %v3869
        %v3871 = vpop.f32.mrf.mxu0
        %v3872 = vpop.f32.mrf.mxu0
        %v3873 = vadd.f32 %v3829, %v3872
        %v3874 = vpop.f32.mrf.mxu0
        %3875 = vdwg.mxu0
        %v3876 = vpack.c.bf16 %v3785, %v3784
        %v3878 = vsel %vm2153, %v3876, 0
        %3880 = vmatprep.subr.bf16.mxu0 0
        %3881 = vmatpush1.bf16.msra.mxu0 0
        %3882 = vmatprep.subr.bf16.mxu0 0
        %3883 = vmatpush1.bf16.msra.mxu0 0
        %3884 = vmatprep.subr.bf16.mxu0 0
        %3885 = vmatpush1.bf16.msra.mxu0 0
        %3886 = vmatprep.subr.bf16.mxu0 0
        %3887 = vmatpush1.bf16.msra.mxu0 0
        %3888 = vmatprep.subr.bf16.mxu0 0
        %3889 = vmatpush1.bf16.msra.mxu0 0
        %3890 = vmatprep.subr.bf16.mxu0 0
        %3891 = vmatpush1.bf16.msra.mxu0 0
        %3892 = vmatprep.subr.bf16.mxu0 0
        %3893 = vmatpush1.bf16.msra.mxu0 0
        %3894 = vmatprep.subr.bf16.mxu0 0
        %3895 = vmatpush1.bf16.msra.mxu0 %v2254
        %3896 = vmatprep.subr.bf16.mxu0 0
        %3897 = vmatpush2.bf16.msra.mxu0 0
        %3898 = vmatprep.subr.bf16.mxu0 0
        %3899 = vmatpush2.bf16.msra.mxu0 0
        %3900 = vmatprep.subr.bf16.mxu0 0
        %3901 = vmatpush2.bf16.msra.mxu0 0
        %3902 = vmatprep.subr.bf16.mxu0 0
        %3903 = vmatpush2.bf16.msra.mxu0 0
        %3904 = vmatprep.subr.bf16.mxu0 0
        %3905 = vmatpush2.bf16.msra.mxu0 0
        %3906 = vmatprep.subr.bf16.mxu0 0
        %3907 = vmatpush2.bf16.msra.mxu0 0
        %3908 = vmatprep.subr.bf16.mxu0 0
        %3909 = vmatpush2.bf16.msra.mxu0 0
        %3910 = vmatprep.subr.bf16.mxu0 0
        %3911 = vmatpush2.bf16.msra.mxu0 0
        %3912 = vmatprep.mubr.bf16.mxu0 0
        %3913 = vmatmul.mubr.bf16.gmra.mxu0 %v3878
        %v3914 = vpop.f32.mrf.mxu0
        %v3915 = vadd.f32 0.0, %v3914
        %v3916 = vpop.f32.mrf.mxu0
        %v3917 = vpop.f32.mrf.mxu0
        %v3918 = vadd.f32 0.0, %v3917
        %v3919 = vpop.f32.mrf.mxu0
        %3920 = vdwg.mxu0
        %v3921 = vadd.f32 %v3870, %v3915
        %v3922 = vadd.f32 %v3873, %v3918
        %v3923 = vld [vmem:[#allocation2 + $0x80] sm:$0xff]
        %v3924 = vld [vmem:[#allocation2 + $0x88] sm:$0xff]
        %v3925 = vadd.f32 %v3923, %v3921
        %v3926 = vadd.f32 %v3924, %v3922
        %v3927 = vxor.u32 %v3925, 2147483648
        %v3928 = vxor.u32 %v3926, 2147483648
        %v3929 = vmul.f32 %v3927, 1.442695
        %v3930 = vpow.pop %v3929
        %v3931 = vmul.f32 %v3928, 1.442695
        %v3932 = vpow.pop %v3931
        %v3933 = vadd.f32 %v3930, 1.0
        %v3934 = vadd.f32 %v3932, 1.0
        %v3935 = vrcp.pop %v3933
        %v3936 = vmul.f32 1.0, %v3935
        %v3937 = vrcp.pop %v3934
        %v3938 = vmul.f32 1.0, %v3937
        %v3939 = vtanh.pop %v3925
        %v3940 = vtanh.pop %v3926
        %v3941 = vmul.f32 %v3936, %v3758
        %v3942 = vmul.f32 %v3938, %v3759
        %3945 = vrot.lane.b32.xlu0 %v3939, 124
        %v3946 = vpop.permute.xlu0 %3945
        %3947 = vrot.lane.b32.xlu0 %v3940, 124
        %v3948 = vpop.permute.xlu0 %3947
        %v3951 = vmul.f32 %v3936, %v3946
        %v3952 = vmul.f32 %v3938, %v3948
        %3955 = vrot.lane.b32.xlu0 %v3951, 124
        %v3956 = vpop.permute.xlu0 %3955
        %3957 = vrot.lane.b32.xlu0 %v3952, 124
        %v3958 = vpop.permute.xlu0 %3957
        %v3961 = vadd.f32 %v3941, %v3956
        %v3962 = vadd.f32 %v3942, %v3958
        %v3963 = vtanh.pop %v3961
        %v3964 = vtanh.pop %v3962
        %3967 = vrot.lane.b32.xlu0 %v3963, 124
        %v3968 = vpop.permute.xlu0 %3967
        %3969 = vrot.lane.b32.xlu0 %v3964, 124
        %v3970 = vpop.permute.xlu0 %3969
        %v3973 = vmul.f32 %v3936, %v3968
        %v3974 = vmul.f32 %v3938, %v3970
        %3975 = vst.msk [vmem:[#allocation3 + $0x80] sm:$0xff] %vm2153, %v3973
        %3976 = vst.msk [vmem:[#allocation3 + $0x88] sm:$0xff] %vm2153, %v3974
        %v3977 = vrot.slane %v3973, 7
        %v3978 = vrot.slane %v3974, 7
        %v3979 = vsel %vm1030, %v3977, %v3978
        %v3980 = vsel %vm1030, %v3978, %v3977
        %v3981 = vsel %vm1095, 0.0, %v3980
        %v3982 = vsel %vm1096, 0.0, %v3979
        %v3983 = vrot.slane %v3973, 1
        %v3984 = vrot.slane %v3974, 1
        %v3985 = vsel %vm1223, %v3983, %v3984
        %v3986 = vsel %vm1223, %v3984, %v3983
        %v3987 = vsel %vm1288, 0.0, %v3985
        %v3988 = vsel %vm1289, 0.0, %v3986
        %v3989 = vpack.c.bf16 %v3982, %v3981
        %v3990 = vpack.c.bf16 %v3974, %v3973
        %v3992 = vsel %vm2153, %v3990, 0
        %3994 = vmatprep.subr.bf16.mxu0 0
        %3995 = vmatpush1.bf16.msra.mxu0 0
        %3996 = vmatprep.subr.bf16.mxu0 0
        %3997 = vmatpush1.bf16.msra.mxu0 0
        %3998 = vmatprep.subr.bf16.mxu0 0
        %3999 = vmatpush1.bf16.msra.mxu0 0
        %4000 = vmatprep.subr.bf16.mxu0 0
        %4001 = vmatpush1.bf16.msra.mxu0 0
        %4002 = vmatprep.subr.bf16.mxu0 0
        %4003 = vmatpush1.bf16.msra.mxu0 0
        %4004 = vmatprep.subr.bf16.mxu0 0
        %4005 = vmatpush1.bf16.msra.mxu0 0
        %4006 = vmatprep.subr.bf16.mxu0 0
        %4007 = vmatpush1.bf16.msra.mxu0 0
        %4008 = vmatprep.subr.bf16.mxu0 0
        %4009 = vmatpush1.bf16.msra.mxu0 %v2159
        %4010 = vmatprep.subr.bf16.mxu0 0
        %4011 = vmatpush2.bf16.msra.mxu0 0
        %4012 = vmatprep.subr.bf16.mxu0 0
        %4013 = vmatpush2.bf16.msra.mxu0 0
        %4014 = vmatprep.subr.bf16.mxu0 0
        %4015 = vmatpush2.bf16.msra.mxu0 0
        %4016 = vmatprep.subr.bf16.mxu0 0
        %4017 = vmatpush2.bf16.msra.mxu0 0
        %4018 = vmatprep.subr.bf16.mxu0 0
        %4019 = vmatpush2.bf16.msra.mxu0 0
        %4020 = vmatprep.subr.bf16.mxu0 0
        %4021 = vmatpush2.bf16.msra.mxu0 0
        %4022 = vmatprep.subr.bf16.mxu0 0
        %4023 = vmatpush2.bf16.msra.mxu0 0
        %4024 = vmatprep.subr.bf16.mxu0 0
        %4025 = vmatpush2.bf16.msra.mxu0 0
        %4026 = vmatprep.mubr.bf16.mxu0 0
        %4027 = vmatmul.mubr.bf16.gmra.mxu0 %v3992
        %v4028 = vpop.f32.mrf.mxu0
        %v4029 = vadd.f32 0.0, %v4028
        %v4030 = vpop.f32.mrf.mxu0
        %v4031 = vpop.f32.mrf.mxu0
        %v4032 = vadd.f32 0.0, %v4031
        %v4033 = vpop.f32.mrf.mxu0
        %4034 = vdwg.mxu0
        %v4036 = vsel %vm2153, %v3989, 0
        %4038 = vmatprep.subr.bf16.mxu0 0
        %4039 = vmatpush1.bf16.msra.mxu0 0
        %4040 = vmatprep.subr.bf16.mxu0 0
        %4041 = vmatpush1.bf16.msra.mxu0 0
        %4042 = vmatprep.subr.bf16.mxu0 0
        %4043 = vmatpush1.bf16.msra.mxu0 0
        %4044 = vmatprep.subr.bf16.mxu0 0
        %4045 = vmatpush1.bf16.msra.mxu0 0
        %4046 = vmatprep.subr.bf16.mxu0 0
        %4047 = vmatpush1.bf16.msra.mxu0 0
        %4048 = vmatprep.subr.bf16.mxu0 0
        %4049 = vmatpush1.bf16.msra.mxu0 0
        %4050 = vmatprep.subr.bf16.mxu0 0
        %4051 = vmatpush1.bf16.msra.mxu0 0
        %4052 = vmatprep.subr.bf16.mxu0 0
        %4053 = vmatpush1.bf16.msra.mxu0 %v2206
        %4054 = vmatprep.subr.bf16.mxu0 0
        %4055 = vmatpush2.bf16.msra.mxu0 0
        %4056 = vmatprep.subr.bf16.mxu0 0
        %4057 = vmatpush2.bf16.msra.mxu0 0
        %4058 = vmatprep.subr.bf16.mxu0 0
        %4059 = vmatpush2.bf16.msra.mxu0 0
        %4060 = vmatprep.subr.bf16.mxu0 0
        %4061 = vmatpush2.bf16.msra.mxu0 0
        %4062 = vmatprep.subr.bf16.mxu0 0
        %4063 = vmatpush2.bf16.msra.mxu0 0
        %4064 = vmatprep.subr.bf16.mxu0 0
        %4065 = vmatpush2.bf16.msra.mxu0 0
        %4066 = vmatprep.subr.bf16.mxu0 0
        %4067 = vmatpush2.bf16.msra.mxu0 0
        %4068 = vmatprep.subr.bf16.mxu0 0
        %4069 = vmatpush2.bf16.msra.mxu0 0
        %4070 = vmatprep.mubr.bf16.mxu0 0
        %4071 = vmatmul.mubr.bf16.gmra.mxu0 %v4036
        %v4072 = vpop.f32.mrf.mxu0
        %v4073 = vadd.f32 %v4029, %v4072
        %v4074 = vpop.f32.mrf.mxu0
        %v4075 = vpop.f32.mrf.mxu0
        %v4076 = vadd.f32 %v4032, %v4075
        %v4077 = vpop.f32.mrf.mxu0
        %4078 = vdwg.mxu0
        %v4079 = vpack.c.bf16 %v3988, %v3987
        %v4081 = vsel %vm2153, %v4079, 0
        %4083 = vmatprep.subr.bf16.mxu0 0
        %4084 = vmatpush1.bf16.msra.mxu0 0
        %4085 = vmatprep.subr.bf16.mxu0 0
        %4086 = vmatpush1.bf16.msra.mxu0 0
        %4087 = vmatprep.subr.bf16.mxu0 0
        %4088 = vmatpush1.bf16.msra.mxu0 0
        %4089 = vmatprep.subr.bf16.mxu0 0
        %4090 = vmatpush1.bf16.msra.mxu0 0
        %4091 = vmatprep.subr.bf16.mxu0 0
        %4092 = vmatpush1.bf16.msra.mxu0 0
        %4093 = vmatprep.subr.bf16.mxu0 0
        %4094 = vmatpush1.bf16.msra.mxu0 0
        %4095 = vmatprep.subr.bf16.mxu0 0
        %4096 = vmatpush1.bf16.msra.mxu0 0
        %4097 = vmatprep.subr.bf16.mxu0 0
        %4098 = vmatpush1.bf16.msra.mxu0 %v2254
        %4099 = vmatprep.subr.bf16.mxu0 0
        %4100 = vmatpush2.bf16.msra.mxu0 0
        %4101 = vmatprep.subr.bf16.mxu0 0
        %4102 = vmatpush2.bf16.msra.mxu0 0
        %4103 = vmatprep.subr.bf16.mxu0 0
        %4104 = vmatpush2.bf16.msra.mxu0 0
        %4105 = vmatprep.subr.bf16.mxu0 0
        %4106 = vmatpush2.bf16.msra.mxu0 0
        %4107 = vmatprep.subr.bf16.mxu0 0
        %4108 = vmatpush2.bf16.msra.mxu0 0
        %4109 = vmatprep.subr.bf16.mxu0 0
        %4110 = vmatpush2.bf16.msra.mxu0 0
        %4111 = vmatprep.subr.bf16.mxu0 0
        %4112 = vmatpush2.bf16.msra.mxu0 0
        %4113 = vmatprep.subr.bf16.mxu0 0
        %4114 = vmatpush2.bf16.msra.mxu0 0
        %4115 = vmatprep.mubr.bf16.mxu0 0
        %4116 = vmatmul.mubr.bf16.gmra.mxu0 %v4081
        %v4117 = vpop.f32.mrf.mxu0
        %v4118 = vadd.f32 0.0, %v4117
        %v4119 = vpop.f32.mrf.mxu0
        %v4120 = vpop.f32.mrf.mxu0
        %v4121 = vadd.f32 0.0, %v4120
        %v4122 = vpop.f32.mrf.mxu0
        %4123 = vdwg.mxu0
        %v4124 = vadd.f32 %v4073, %v4118
        %v4125 = vadd.f32 %v4076, %v4121
        %v4126 = vld [vmem:[#allocation2 + $0x90] sm:$0xff]
        %v4127 = vld [vmem:[#allocation2 + $0x98] sm:$0xff]
        %v4128 = vadd.f32 %v4126, %v4124
        %v4129 = vadd.f32 %v4127, %v4125
        %v4130 = vxor.u32 %v4128, 2147483648
        %v4131 = vxor.u32 %v4129, 2147483648
        %v4132 = vmul.f32 %v4130, 1.442695
        %v4133 = vpow.pop %v4132
        %v4134 = vmul.f32 %v4131, 1.442695
        %v4135 = vpow.pop %v4134
        %v4136 = vadd.f32 %v4133, 1.0
        %v4137 = vadd.f32 %v4135, 1.0
        %v4138 = vrcp.pop %v4136
        %v4139 = vmul.f32 1.0, %v4138
        %v4140 = vrcp.pop %v4137
        %v4141 = vmul.f32 1.0, %v4140
        %v4142 = vtanh.pop %v4128
        %v4143 = vtanh.pop %v4129
        %v4144 = vmul.f32 %v4139, %v3961
        %v4145 = vmul.f32 %v4141, %v3962
        %4148 = vrot.lane.b32.xlu0 %v4142, 124
        %v4149 = vpop.permute.xlu0 %4148
        %4150 = vrot.lane.b32.xlu0 %v4143, 124
        %v4151 = vpop.permute.xlu0 %4150
        %v4154 = vmul.f32 %v4139, %v4149
        %v4155 = vmul.f32 %v4141, %v4151
        %4158 = vrot.lane.b32.xlu0 %v4154, 124
        %v4159 = vpop.permute.xlu0 %4158
        %4160 = vrot.lane.b32.xlu0 %v4155, 124
        %v4161 = vpop.permute.xlu0 %4160
        %v4164 = vadd.f32 %v4144, %v4159
        %v4165 = vadd.f32 %v4145, %v4161
        %v4166 = vtanh.pop %v4164
        %v4167 = vtanh.pop %v4165
        %4170 = vrot.lane.b32.xlu0 %v4166, 124
        %v4171 = vpop.permute.xlu0 %4170
        %4172 = vrot.lane.b32.xlu0 %v4167, 124
        %v4173 = vpop.permute.xlu0 %4172
        %v4176 = vmul.f32 %v4139, %v4171
        %v4177 = vmul.f32 %v4141, %v4173
        %4178 = vst.msk [vmem:[#allocation3 + $0x90] sm:$0xff] %vm2153, %v4176
        %4179 = vst.msk [vmem:[#allocation3 + $0x98] sm:$0xff] %vm2153, %v4177
        %v4180 = vrot.slane %v4176, 7
        %v4181 = vrot.slane %v4177, 7
        %v4182 = vsel %vm1030, %v4180, %v4181
        %v4183 = vsel %vm1030, %v4181, %v4180
        %v4184 = vsel %vm1095, 0.0, %v4183
        %v4185 = vsel %vm1096, 0.0, %v4182
        %v4186 = vrot.slane %v4176, 1
        %v4187 = vrot.slane %v4177, 1
        %v4188 = vsel %vm1223, %v4186, %v4187
        %v4189 = vsel %vm1223, %v4187, %v4186
        %v4190 = vsel %vm1288, 0.0, %v4188
        %v4191 = vsel %vm1289, 0.0, %v4189
        %v4192 = vpack.c.bf16 %v4185, %v4184
        %v4193 = vpack.c.bf16 %v4177, %v4176
        %v4195 = vsel %vm2153, %v4193, 0
        %4197 = vmatprep.subr.bf16.mxu0 0
        %4198 = vmatpush1.bf16.msra.mxu0 0
        %4199 = vmatprep.subr.bf16.mxu0 0
        %4200 = vmatpush1.bf16.msra.mxu0 0
        %4201 = vmatprep.subr.bf16.mxu0 0
        %4202 = vmatpush1.bf16.msra.mxu0 0
        %4203 = vmatprep.subr.bf16.mxu0 0
        %4204 = vmatpush1.bf16.msra.mxu0 0
        %4205 = vmatprep.subr.bf16.mxu0 0
        %4206 = vmatpush1.bf16.msra.mxu0 0
        %4207 = vmatprep.subr.bf16.mxu0 0
        %4208 = vmatpush1.bf16.msra.mxu0 0
        %4209 = vmatprep.subr.bf16.mxu0 0
        %4210 = vmatpush1.bf16.msra.mxu0 0
        %4211 = vmatprep.subr.bf16.mxu0 0
        %4212 = vmatpush1.bf16.msra.mxu0 %v2159
        %4213 = vmatprep.subr.bf16.mxu0 0
        %4214 = vmatpush2.bf16.msra.mxu0 0
        %4215 = vmatprep.subr.bf16.mxu0 0
        %4216 = vmatpush2.bf16.msra.mxu0 0
        %4217 = vmatprep.subr.bf16.mxu0 0
        %4218 = vmatpush2.bf16.msra.mxu0 0
        %4219 = vmatprep.subr.bf16.mxu0 0
        %4220 = vmatpush2.bf16.msra.mxu0 0
        %4221 = vmatprep.subr.bf16.mxu0 0
        %4222 = vmatpush2.bf16.msra.mxu0 0
        %4223 = vmatprep.subr.bf16.mxu0 0
        %4224 = vmatpush2.bf16.msra.mxu0 0
        %4225 = vmatprep.subr.bf16.mxu0 0
        %4226 = vmatpush2.bf16.msra.mxu0 0
        %4227 = vmatprep.subr.bf16.mxu0 0
        %4228 = vmatpush2.bf16.msra.mxu0 0
        %4229 = vmatprep.mubr.bf16.mxu0 0
        %4230 = vmatmul.mubr.bf16.gmra.mxu0 %v4195
        %v4231 = vpop.f32.mrf.mxu0
        %v4232 = vadd.f32 0.0, %v4231
        %v4233 = vpop.f32.mrf.mxu0
        %v4234 = vpop.f32.mrf.mxu0
        %v4235 = vadd.f32 0.0, %v4234
        %v4236 = vpop.f32.mrf.mxu0
        %4237 = vdwg.mxu0
        %v4239 = vsel %vm2153, %v4192, 0
        %4241 = vmatprep.subr.bf16.mxu0 0
        %4242 = vmatpush1.bf16.msra.mxu0 0
        %4243 = vmatprep.subr.bf16.mxu0 0
        %4244 = vmatpush1.bf16.msra.mxu0 0
        %4245 = vmatprep.subr.bf16.mxu0 0
        %4246 = vmatpush1.bf16.msra.mxu0 0
        %4247 = vmatprep.subr.bf16.mxu0 0
        %4248 = vmatpush1.bf16.msra.mxu0 0
        %4249 = vmatprep.subr.bf16.mxu0 0
        %4250 = vmatpush1.bf16.msra.mxu0 0
        %4251 = vmatprep.subr.bf16.mxu0 0
        %4252 = vmatpush1.bf16.msra.mxu0 0
        %4253 = vmatprep.subr.bf16.mxu0 0
        %4254 = vmatpush1.bf16.msra.mxu0 0
        %4255 = vmatprep.subr.bf16.mxu0 0
        %4256 = vmatpush1.bf16.msra.mxu0 %v2206
        %4257 = vmatprep.subr.bf16.mxu0 0
        %4258 = vmatpush2.bf16.msra.mxu0 0
        %4259 = vmatprep.subr.bf16.mxu0 0
        %4260 = vmatpush2.bf16.msra.mxu0 0
        %4261 = vmatprep.subr.bf16.mxu0 0
        %4262 = vmatpush2.bf16.msra.mxu0 0
        %4263 = vmatprep.subr.bf16.mxu0 0
        %4264 = vmatpush2.bf16.msra.mxu0 0
        %4265 = vmatprep.subr.bf16.mxu0 0
        %4266 = vmatpush2.bf16.msra.mxu0 0
        %4267 = vmatprep.subr.bf16.mxu0 0
        %4268 = vmatpush2.bf16.msra.mxu0 0
        %4269 = vmatprep.subr.bf16.mxu0 0
        %4270 = vmatpush2.bf16.msra.mxu0 0
        %4271 = vmatprep.subr.bf16.mxu0 0
        %4272 = vmatpush2.bf16.msra.mxu0 0
        %4273 = vmatprep.mubr.bf16.mxu0 0
        %4274 = vmatmul.mubr.bf16.gmra.mxu0 %v4239
        %v4275 = vpop.f32.mrf.mxu0
        %v4276 = vadd.f32 %v4232, %v4275
        %v4277 = vpop.f32.mrf.mxu0
        %v4278 = vpop.f32.mrf.mxu0
        %v4279 = vadd.f32 %v4235, %v4278
        %v4280 = vpop.f32.mrf.mxu0
        %4281 = vdwg.mxu0
        %v4282 = vpack.c.bf16 %v4191, %v4190
        %v4284 = vsel %vm2153, %v4282, 0
        %4286 = vmatprep.subr.bf16.mxu0 0
        %4287 = vmatpush1.bf16.msra.mxu0 0
        %4288 = vmatprep.subr.bf16.mxu0 0
        %4289 = vmatpush1.bf16.msra.mxu0 0
        %4290 = vmatprep.subr.bf16.mxu0 0
        %4291 = vmatpush1.bf16.msra.mxu0 0
        %4292 = vmatprep.subr.bf16.mxu0 0
        %4293 = vmatpush1.bf16.msra.mxu0 0
        %4294 = vmatprep.subr.bf16.mxu0 0
        %4295 = vmatpush1.bf16.msra.mxu0 0
        %4296 = vmatprep.subr.bf16.mxu0 0
        %4297 = vmatpush1.bf16.msra.mxu0 0
        %4298 = vmatprep.subr.bf16.mxu0 0
        %4299 = vmatpush1.bf16.msra.mxu0 0
        %4300 = vmatprep.subr.bf16.mxu0 0
        %4301 = vmatpush1.bf16.msra.mxu0 %v2254
        %4302 = vmatprep.subr.bf16.mxu0 0
        %4303 = vmatpush2.bf16.msra.mxu0 0
        %4304 = vmatprep.subr.bf16.mxu0 0
        %4305 = vmatpush2.bf16.msra.mxu0 0
        %4306 = vmatprep.subr.bf16.mxu0 0
        %4307 = vmatpush2.bf16.msra.mxu0 0
        %4308 = vmatprep.subr.bf16.mxu0 0
        %4309 = vmatpush2.bf16.msra.mxu0 0
        %4310 = vmatprep.subr.bf16.mxu0 0
        %4311 = vmatpush2.bf16.msra.mxu0 0
        %4312 = vmatprep.subr.bf16.mxu0 0
        %4313 = vmatpush2.bf16.msra.mxu0 0
        %4314 = vmatprep.subr.bf16.mxu0 0
        %4315 = vmatpush2.bf16.msra.mxu0 0
        %4316 = vmatprep.subr.bf16.mxu0 0
        %4317 = vmatpush2.bf16.msra.mxu0 0
        %4318 = vmatprep.mubr.bf16.mxu0 0
        %4319 = vmatmul.mubr.bf16.gmra.mxu0 %v4284
        %v4320 = vpop.f32.mrf.mxu0
        %v4321 = vadd.f32 0.0, %v4320
        %v4322 = vpop.f32.mrf.mxu0
        %v4323 = vpop.f32.mrf.mxu0
        %v4324 = vadd.f32 0.0, %v4323
        %v4325 = vpop.f32.mrf.mxu0
        %4326 = vdwg.mxu0
        %v4327 = vadd.f32 %v4276, %v4321
        %v4328 = vadd.f32 %v4279, %v4324
        %v4329 = vld [vmem:[#allocation2 + $0xa0] sm:$0xff]
        %v4330 = vld [vmem:[#allocation2 + $0xa8] sm:$0xff]
        %v4331 = vadd.f32 %v4329, %v4327
        %v4332 = vadd.f32 %v4330, %v4328
        %v4333 = vxor.u32 %v4331, 2147483648
        %v4334 = vxor.u32 %v4332, 2147483648
        %v4335 = vmul.f32 %v4333, 1.442695
        %v4336 = vpow.pop %v4335
        %v4337 = vmul.f32 %v4334, 1.442695
        %v4338 = vpow.pop %v4337
        %v4339 = vadd.f32 %v4336, 1.0
        %v4340 = vadd.f32 %v4338, 1.0
        %v4341 = vrcp.pop %v4339
        %v4342 = vmul.f32 1.0, %v4341
        %v4343 = vrcp.pop %v4340
        %v4344 = vmul.f32 1.0, %v4343
        %v4345 = vtanh.pop %v4331
        %v4346 = vtanh.pop %v4332
        %v4347 = vmul.f32 %v4342, %v4164
        %v4348 = vmul.f32 %v4344, %v4165
        %4351 = vrot.lane.b32.xlu0 %v4345, 124
        %v4352 = vpop.permute.xlu0 %4351
        %4353 = vrot.lane.b32.xlu0 %v4346, 124
        %v4354 = vpop.permute.xlu0 %4353
        %v4357 = vmul.f32 %v4342, %v4352
        %v4358 = vmul.f32 %v4344, %v4354
        %4361 = vrot.lane.b32.xlu0 %v4357, 124
        %v4362 = vpop.permute.xlu0 %4361
        %4363 = vrot.lane.b32.xlu0 %v4358, 124
        %v4364 = vpop.permute.xlu0 %4363
        %v4367 = vadd.f32 %v4347, %v4362
        %v4368 = vadd.f32 %v4348, %v4364
        %v4369 = vtanh.pop %v4367
        %v4370 = vtanh.pop %v4368
        %4373 = vrot.lane.b32.xlu0 %v4369, 124
        %v4374 = vpop.permute.xlu0 %4373
        %4375 = vrot.lane.b32.xlu0 %v4370, 124
        %v4376 = vpop.permute.xlu0 %4375
        %v4379 = vmul.f32 %v4342, %v4374
        %v4380 = vmul.f32 %v4344, %v4376
        %4381 = vst.msk [vmem:[#allocation3 + $0xa0] sm:$0xff] %vm2153, %v4379
        %4382 = vst.msk [vmem:[#allocation3 + $0xa8] sm:$0xff] %vm2153, %v4380
        %v4383 = vrot.slane %v4379, 7
        %v4384 = vrot.slane %v4380, 7
        %v4385 = vsel %vm1030, %v4383, %v4384
        %v4386 = vsel %vm1030, %v4384, %v4383
        %v4387 = vsel %vm1095, 0.0, %v4386
        %v4388 = vsel %vm1096, 0.0, %v4385
        %v4389 = vrot.slane %v4379, 1
        %v4390 = vrot.slane %v4380, 1
        %v4391 = vsel %vm1223, %v4389, %v4390
        %v4392 = vsel %vm1223, %v4390, %v4389
        %v4393 = vsel %vm1288, 0.0, %v4391
        %v4394 = vsel %vm1289, 0.0, %v4392
        %v4395 = vpack.c.bf16 %v4388, %v4387
        %v4396 = vpack.c.bf16 %v4380, %v4379
        %v4398 = vsel %vm2153, %v4396, 0
        %4400 = vmatprep.subr.bf16.mxu0 0
        %4401 = vmatpush1.bf16.msra.mxu0 0
        %4402 = vmatprep.subr.bf16.mxu0 0
        %4403 = vmatpush1.bf16.msra.mxu0 0
        %4404 = vmatprep.subr.bf16.mxu0 0
        %4405 = vmatpush1.bf16.msra.mxu0 0
        %4406 = vmatprep.subr.bf16.mxu0 0
        %4407 = vmatpush1.bf16.msra.mxu0 0
        %4408 = vmatprep.subr.bf16.mxu0 0
        %4409 = vmatpush1.bf16.msra.mxu0 0
        %4410 = vmatprep.subr.bf16.mxu0 0
        %4411 = vmatpush1.bf16.msra.mxu0 0
        %4412 = vmatprep.subr.bf16.mxu0 0
        %4413 = vmatpush1.bf16.msra.mxu0 0
        %4414 = vmatprep.subr.bf16.mxu0 0
        %4415 = vmatpush1.bf16.msra.mxu0 %v2159
        %4416 = vmatprep.subr.bf16.mxu0 0
        %4417 = vmatpush2.bf16.msra.mxu0 0
        %4418 = vmatprep.subr.bf16.mxu0 0
        %4419 = vmatpush2.bf16.msra.mxu0 0
        %4420 = vmatprep.subr.bf16.mxu0 0
        %4421 = vmatpush2.bf16.msra.mxu0 0
        %4422 = vmatprep.subr.bf16.mxu0 0
        %4423 = vmatpush2.bf16.msra.mxu0 0
        %4424 = vmatprep.subr.bf16.mxu0 0
        %4425 = vmatpush2.bf16.msra.mxu0 0
        %4426 = vmatprep.subr.bf16.mxu0 0
        %4427 = vmatpush2.bf16.msra.mxu0 0
        %4428 = vmatprep.subr.bf16.mxu0 0
        %4429 = vmatpush2.bf16.msra.mxu0 0
        %4430 = vmatprep.subr.bf16.mxu0 0
        %4431 = vmatpush2.bf16.msra.mxu0 0
        %4432 = vmatprep.mubr.bf16.mxu0 0
        %4433 = vmatmul.mubr.bf16.gmra.mxu0 %v4398
        %v4434 = vpop.f32.mrf.mxu0
        %v4435 = vadd.f32 0.0, %v4434
        %v4436 = vpop.f32.mrf.mxu0
        %v4437 = vpop.f32.mrf.mxu0
        %v4438 = vadd.f32 0.0, %v4437
        %v4439 = vpop.f32.mrf.mxu0
        %4440 = vdwg.mxu0
        %v4442 = vsel %vm2153, %v4395, 0
        %4444 = vmatprep.subr.bf16.mxu0 0
        %4445 = vmatpush1.bf16.msra.mxu0 0
        %4446 = vmatprep.subr.bf16.mxu0 0
        %4447 = vmatpush1.bf16.msra.mxu0 0
        %4448 = vmatprep.subr.bf16.mxu0 0
        %4449 = vmatpush1.bf16.msra.mxu0 0
        %4450 = vmatprep.subr.bf16.mxu0 0
        %4451 = vmatpush1.bf16.msra.mxu0 0
        %4452 = vmatprep.subr.bf16.mxu0 0
        %4453 = vmatpush1.bf16.msra.mxu0 0
        %4454 = vmatprep.subr.bf16.mxu0 0
        %4455 = vmatpush1.bf16.msra.mxu0 0
        %4456 = vmatprep.subr.bf16.mxu0 0
        %4457 = vmatpush1.bf16.msra.mxu0 0
        %4458 = vmatprep.subr.bf16.mxu0 0
        %4459 = vmatpush1.bf16.msra.mxu0 %v2206
        %4460 = vmatprep.subr.bf16.mxu0 0
        %4461 = vmatpush2.bf16.msra.mxu0 0
        %4462 = vmatprep.subr.bf16.mxu0 0
        %4463 = vmatpush2.bf16.msra.mxu0 0
        %4464 = vmatprep.subr.bf16.mxu0 0
        %4465 = vmatpush2.bf16.msra.mxu0 0
        %4466 = vmatprep.subr.bf16.mxu0 0
        %4467 = vmatpush2.bf16.msra.mxu0 0
        %4468 = vmatprep.subr.bf16.mxu0 0
        %4469 = vmatpush2.bf16.msra.mxu0 0
        %4470 = vmatprep.subr.bf16.mxu0 0
        %4471 = vmatpush2.bf16.msra.mxu0 0
        %4472 = vmatprep.subr.bf16.mxu0 0
        %4473 = vmatpush2.bf16.msra.mxu0 0
        %4474 = vmatprep.subr.bf16.mxu0 0
        %4475 = vmatpush2.bf16.msra.mxu0 0
        %4476 = vmatprep.mubr.bf16.mxu0 0
        %4477 = vmatmul.mubr.bf16.gmra.mxu0 %v4442
        %v4478 = vpop.f32.mrf.mxu0
        %v4479 = vadd.f32 %v4435, %v4478
        %v4480 = vpop.f32.mrf.mxu0
        %v4481 = vpop.f32.mrf.mxu0
        %v4482 = vadd.f32 %v4438, %v4481
        %v4483 = vpop.f32.mrf.mxu0
        %4484 = vdwg.mxu0
        %v4485 = vpack.c.bf16 %v4394, %v4393
        %v4487 = vsel %vm2153, %v4485, 0
        %4489 = vmatprep.subr.bf16.mxu0 0
        %4490 = vmatpush1.bf16.msra.mxu0 0
        %4491 = vmatprep.subr.bf16.mxu0 0
        %4492 = vmatpush1.bf16.msra.mxu0 0
        %4493 = vmatprep.subr.bf16.mxu0 0
        %4494 = vmatpush1.bf16.msra.mxu0 0
        %4495 = vmatprep.subr.bf16.mxu0 0
        %4496 = vmatpush1.bf16.msra.mxu0 0
        %4497 = vmatprep.subr.bf16.mxu0 0
        %4498 = vmatpush1.bf16.msra.mxu0 0
        %4499 = vmatprep.subr.bf16.mxu0 0
        %4500 = vmatpush1.bf16.msra.mxu0 0
        %4501 = vmatprep.subr.bf16.mxu0 0
        %4502 = vmatpush1.bf16.msra.mxu0 0
        %4503 = vmatprep.subr.bf16.mxu0 0
        %4504 = vmatpush1.bf16.msra.mxu0 %v2254
        %4505 = vmatprep.subr.bf16.mxu0 0
        %4506 = vmatpush2.bf16.msra.mxu0 0
        %4507 = vmatprep.subr.bf16.mxu0 0
        %4508 = vmatpush2.bf16.msra.mxu0 0
        %4509 = vmatprep.subr.bf16.mxu0 0
        %4510 = vmatpush2.bf16.msra.mxu0 0
        %4511 = vmatprep.subr.bf16.mxu0 0
        %4512 = vmatpush2.bf16.msra.mxu0 0
        %4513 = vmatprep.subr.bf16.mxu0 0
        %4514 = vmatpush2.bf16.msra.mxu0 0
        %4515 = vmatprep.subr.bf16.mxu0 0
        %4516 = vmatpush2.bf16.msra.mxu0 0
        %4517 = vmatprep.subr.bf16.mxu0 0
        %4518 = vmatpush2.bf16.msra.mxu0 0
        %4519 = vmatprep.subr.bf16.mxu0 0
        %4520 = vmatpush2.bf16.msra.mxu0 0
        %4521 = vmatprep.mubr.bf16.mxu0 0
        %4522 = vmatmul.mubr.bf16.gmra.mxu0 %v4487
        %v4523 = vpop.f32.mrf.mxu0
        %v4524 = vadd.f32 0.0, %v4523
        %v4525 = vpop.f32.mrf.mxu0
        %v4526 = vpop.f32.mrf.mxu0
        %v4527 = vadd.f32 0.0, %v4526
        %v4528 = vpop.f32.mrf.mxu0
        %4529 = vdwg.mxu0
        %v4530 = vadd.f32 %v4479, %v4524
        %v4531 = vadd.f32 %v4482, %v4527
        %v4532 = vld [vmem:[#allocation2 + $0xb0] sm:$0xff]
        %v4533 = vld [vmem:[#allocation2 + $0xb8] sm:$0xff]
        %v4534 = vadd.f32 %v4532, %v4530
        %v4535 = vadd.f32 %v4533, %v4531
        %v4536 = vxor.u32 %v4534, 2147483648
        %v4537 = vxor.u32 %v4535, 2147483648
        %v4538 = vmul.f32 %v4536, 1.442695
        %v4539 = vpow.pop %v4538
        %v4540 = vmul.f32 %v4537, 1.442695
        %v4541 = vpow.pop %v4540
        %v4542 = vadd.f32 %v4539, 1.0
        %v4543 = vadd.f32 %v4541, 1.0
        %v4544 = vrcp.pop %v4542
        %v4545 = vmul.f32 1.0, %v4544
        %v4546 = vrcp.pop %v4543
        %v4547 = vmul.f32 1.0, %v4546
        %v4548 = vtanh.pop %v4534
        %v4549 = vtanh.pop %v4535
        %v4550 = vmul.f32 %v4545, %v4367
        %v4551 = vmul.f32 %v4547, %v4368
        %4554 = vrot.lane.b32.xlu0 %v4548, 124
        %v4555 = vpop.permute.xlu0 %4554
        %4556 = vrot.lane.b32.xlu0 %v4549, 124
        %v4557 = vpop.permute.xlu0 %4556
        %v4560 = vmul.f32 %v4545, %v4555
        %v4561 = vmul.f32 %v4547, %v4557
        %4564 = vrot.lane.b32.xlu0 %v4560, 124
        %v4565 = vpop.permute.xlu0 %4564
        %4566 = vrot.lane.b32.xlu0 %v4561, 124
        %v4567 = vpop.permute.xlu0 %4566
        %v4570 = vadd.f32 %v4550, %v4565
        %v4571 = vadd.f32 %v4551, %v4567
        %v4572 = vtanh.pop %v4570
        %v4573 = vtanh.pop %v4571
        %4576 = vrot.lane.b32.xlu0 %v4572, 124
        %v4577 = vpop.permute.xlu0 %4576
        %4578 = vrot.lane.b32.xlu0 %v4573, 124
        %v4579 = vpop.permute.xlu0 %4578
        %v4582 = vmul.f32 %v4545, %v4577
        %v4583 = vmul.f32 %v4547, %v4579
        %4584 = vst.msk [vmem:[#allocation3 + $0xb0] sm:$0xff] %vm2153, %v4582
        %4585 = vst.msk [vmem:[#allocation3 + $0xb8] sm:$0xff] %vm2153, %v4583
        %v4586 = vrot.slane %v4582, 7
        %v4587 = vrot.slane %v4583, 7
        %v4588 = vsel %vm1030, %v4586, %v4587
        %v4589 = vsel %vm1030, %v4587, %v4586
        %v4590 = vsel %vm1095, 0.0, %v4589
        %v4591 = vsel %vm1096, 0.0, %v4588
        %v4592 = vrot.slane %v4582, 1
        %v4593 = vrot.slane %v4583, 1
        %v4594 = vsel %vm1223, %v4592, %v4593
        %v4595 = vsel %vm1223, %v4593, %v4592
        %v4596 = vsel %vm1288, 0.0, %v4594
        %v4597 = vsel %vm1289, 0.0, %v4595
        %v4598 = vpack.c.bf16 %v4591, %v4590
        %v4599 = vpack.c.bf16 %v4583, %v4582
        %v4601 = vsel %vm2153, %v4599, 0
        %4603 = vmatprep.subr.bf16.mxu0 0
        %4604 = vmatpush1.bf16.msra.mxu0 0
        %4605 = vmatprep.subr.bf16.mxu0 0
        %4606 = vmatpush1.bf16.msra.mxu0 0
        %4607 = vmatprep.subr.bf16.mxu0 0
        %4608 = vmatpush1.bf16.msra.mxu0 0
        %4609 = vmatprep.subr.bf16.mxu0 0
        %4610 = vmatpush1.bf16.msra.mxu0 0
        %4611 = vmatprep.subr.bf16.mxu0 0
        %4612 = vmatpush1.bf16.msra.mxu0 0
        %4613 = vmatprep.subr.bf16.mxu0 0
        %4614 = vmatpush1.bf16.msra.mxu0 0
        %4615 = vmatprep.subr.bf16.mxu0 0
        %4616 = vmatpush1.bf16.msra.mxu0 0
        %4617 = vmatprep.subr.bf16.mxu0 0
        %4618 = vmatpush1.bf16.msra.mxu0 %v2159
        %4619 = vmatprep.subr.bf16.mxu0 0
        %4620 = vmatpush2.bf16.msra.mxu0 0
        %4621 = vmatprep.subr.bf16.mxu0 0
        %4622 = vmatpush2.bf16.msra.mxu0 0
        %4623 = vmatprep.subr.bf16.mxu0 0
        %4624 = vmatpush2.bf16.msra.mxu0 0
        %4625 = vmatprep.subr.bf16.mxu0 0
        %4626 = vmatpush2.bf16.msra.mxu0 0
        %4627 = vmatprep.subr.bf16.mxu0 0
        %4628 = vmatpush2.bf16.msra.mxu0 0
        %4629 = vmatprep.subr.bf16.mxu0 0
        %4630 = vmatpush2.bf16.msra.mxu0 0
        %4631 = vmatprep.subr.bf16.mxu0 0
        %4632 = vmatpush2.bf16.msra.mxu0 0
        %4633 = vmatprep.subr.bf16.mxu0 0
        %4634 = vmatpush2.bf16.msra.mxu0 0
        %4635 = vmatprep.mubr.bf16.mxu0 0
        %4636 = vmatmul.mubr.bf16.gmra.mxu0 %v4601
        %v4637 = vpop.f32.mrf.mxu0
        %v4638 = vadd.f32 0.0, %v4637
        %v4639 = vpop.f32.mrf.mxu0
        %v4640 = vpop.f32.mrf.mxu0
        %v4641 = vadd.f32 0.0, %v4640
        %v4642 = vpop.f32.mrf.mxu0
        %4643 = vdwg.mxu0
        %v4645 = vsel %vm2153, %v4598, 0
        %4647 = vmatprep.subr.bf16.mxu0 0
        %4648 = vmatpush1.bf16.msra.mxu0 0
        %4649 = vmatprep.subr.bf16.mxu0 0
        %4650 = vmatpush1.bf16.msra.mxu0 0
        %4651 = vmatprep.subr.bf16.mxu0 0
        %4652 = vmatpush1.bf16.msra.mxu0 0
        %4653 = vmatprep.subr.bf16.mxu0 0
        %4654 = vmatpush1.bf16.msra.mxu0 0
        %4655 = vmatprep.subr.bf16.mxu0 0
        %4656 = vmatpush1.bf16.msra.mxu0 0
        %4657 = vmatprep.subr.bf16.mxu0 0
        %4658 = vmatpush1.bf16.msra.mxu0 0
        %4659 = vmatprep.subr.bf16.mxu0 0
        %4660 = vmatpush1.bf16.msra.mxu0 0
        %4661 = vmatprep.subr.bf16.mxu0 0
        %4662 = vmatpush1.bf16.msra.mxu0 %v2206
        %4663 = vmatprep.subr.bf16.mxu0 0
        %4664 = vmatpush2.bf16.msra.mxu0 0
        %4665 = vmatprep.subr.bf16.mxu0 0
        %4666 = vmatpush2.bf16.msra.mxu0 0
        %4667 = vmatprep.subr.bf16.mxu0 0
        %4668 = vmatpush2.bf16.msra.mxu0 0
        %4669 = vmatprep.subr.bf16.mxu0 0
        %4670 = vmatpush2.bf16.msra.mxu0 0
        %4671 = vmatprep.subr.bf16.mxu0 0
        %4672 = vmatpush2.bf16.msra.mxu0 0
        %4673 = vmatprep.subr.bf16.mxu0 0
        %4674 = vmatpush2.bf16.msra.mxu0 0
        %4675 = vmatprep.subr.bf16.mxu0 0
        %4676 = vmatpush2.bf16.msra.mxu0 0
        %4677 = vmatprep.subr.bf16.mxu0 0
        %4678 = vmatpush2.bf16.msra.mxu0 0
        %4679 = vmatprep.mubr.bf16.mxu0 0
        %4680 = vmatmul.mubr.bf16.gmra.mxu0 %v4645
        %v4681 = vpop.f32.mrf.mxu0
        %v4682 = vadd.f32 %v4638, %v4681
        %v4683 = vpop.f32.mrf.mxu0
        %v4684 = vpop.f32.mrf.mxu0
        %v4685 = vadd.f32 %v4641, %v4684
        %v4686 = vpop.f32.mrf.mxu0
        %4687 = vdwg.mxu0
        %v4688 = vpack.c.bf16 %v4597, %v4596
        %v4690 = vsel %vm2153, %v4688, 0
        %4692 = vmatprep.subr.bf16.mxu0 0
        %4693 = vmatpush1.bf16.msra.mxu0 0
        %4694 = vmatprep.subr.bf16.mxu0 0
        %4695 = vmatpush1.bf16.msra.mxu0 0
        %4696 = vmatprep.subr.bf16.mxu0 0
        %4697 = vmatpush1.bf16.msra.mxu0 0
        %4698 = vmatprep.subr.bf16.mxu0 0
        %4699 = vmatpush1.bf16.msra.mxu0 0
        %4700 = vmatprep.subr.bf16.mxu0 0
        %4701 = vmatpush1.bf16.msra.mxu0 0
        %4702 = vmatprep.subr.bf16.mxu0 0
        %4703 = vmatpush1.bf16.msra.mxu0 0
        %4704 = vmatprep.subr.bf16.mxu0 0
        %4705 = vmatpush1.bf16.msra.mxu0 0
        %4706 = vmatprep.subr.bf16.mxu0 0
        %4707 = vmatpush1.bf16.msra.mxu0 %v2254
        %4708 = vmatprep.subr.bf16.mxu0 0
        %4709 = vmatpush2.bf16.msra.mxu0 0
        %4710 = vmatprep.subr.bf16.mxu0 0
        %4711 = vmatpush2.bf16.msra.mxu0 0
        %4712 = vmatprep.subr.bf16.mxu0 0
        %4713 = vmatpush2.bf16.msra.mxu0 0
        %4714 = vmatprep.subr.bf16.mxu0 0
        %4715 = vmatpush2.bf16.msra.mxu0 0
        %4716 = vmatprep.subr.bf16.mxu0 0
        %4717 = vmatpush2.bf16.msra.mxu0 0
        %4718 = vmatprep.subr.bf16.mxu0 0
        %4719 = vmatpush2.bf16.msra.mxu0 0
        %4720 = vmatprep.subr.bf16.mxu0 0
        %4721 = vmatpush2.bf16.msra.mxu0 0
        %4722 = vmatprep.subr.bf16.mxu0 0
        %4723 = vmatpush2.bf16.msra.mxu0 0
        %4724 = vmatprep.mubr.bf16.mxu0 0
        %4725 = vmatmul.mubr.bf16.gmra.mxu0 %v4690
        %v4726 = vpop.f32.mrf.mxu0
        %v4727 = vadd.f32 0.0, %v4726
        %v4728 = vpop.f32.mrf.mxu0
        %v4729 = vpop.f32.mrf.mxu0
        %v4730 = vadd.f32 0.0, %v4729
        %v4731 = vpop.f32.mrf.mxu0
        %4732 = vdwg.mxu0
        %v4733 = vadd.f32 %v4682, %v4727
        %v4734 = vadd.f32 %v4685, %v4730
        %v4735 = vld [vmem:[#allocation2 + $0xc0] sm:$0xff]
        %v4736 = vld [vmem:[#allocation2 + $0xc8] sm:$0xff]
        %v4737 = vadd.f32 %v4735, %v4733
        %v4738 = vadd.f32 %v4736, %v4734
        %v4739 = vxor.u32 %v4737, 2147483648
        %v4740 = vxor.u32 %v4738, 2147483648
        %v4741 = vmul.f32 %v4739, 1.442695
        %v4742 = vpow.pop %v4741
        %v4743 = vmul.f32 %v4740, 1.442695
        %v4744 = vpow.pop %v4743
        %v4745 = vadd.f32 %v4742, 1.0
        %v4746 = vadd.f32 %v4744, 1.0
        %v4747 = vrcp.pop %v4745
        %v4748 = vmul.f32 1.0, %v4747
        %v4749 = vrcp.pop %v4746
        %v4750 = vmul.f32 1.0, %v4749
        %v4751 = vtanh.pop %v4737
        %v4752 = vtanh.pop %v4738
        %v4753 = vmul.f32 %v4748, %v4570
        %v4754 = vmul.f32 %v4750, %v4571
        %4757 = vrot.lane.b32.xlu0 %v4751, 124
        %v4758 = vpop.permute.xlu0 %4757
        %4759 = vrot.lane.b32.xlu0 %v4752, 124
        %v4760 = vpop.permute.xlu0 %4759
        %v4763 = vmul.f32 %v4748, %v4758
        %v4764 = vmul.f32 %v4750, %v4760
        %4767 = vrot.lane.b32.xlu0 %v4763, 124
        %v4768 = vpop.permute.xlu0 %4767
        %4769 = vrot.lane.b32.xlu0 %v4764, 124
        %v4770 = vpop.permute.xlu0 %4769
        %v4773 = vadd.f32 %v4753, %v4768
        %v4774 = vadd.f32 %v4754, %v4770
        %v4775 = vtanh.pop %v4773
        %v4776 = vtanh.pop %v4774
        %4779 = vrot.lane.b32.xlu0 %v4775, 124
        %v4780 = vpop.permute.xlu0 %4779
        %4781 = vrot.lane.b32.xlu0 %v4776, 124
        %v4782 = vpop.permute.xlu0 %4781
        %v4785 = vmul.f32 %v4748, %v4780
        %v4786 = vmul.f32 %v4750, %v4782
        %4787 = vst.msk [vmem:[#allocation3 + $0xc0] sm:$0xff] %vm2153, %v4785
        %4788 = vst.msk [vmem:[#allocation3 + $0xc8] sm:$0xff] %vm2153, %v4786
        %v4789 = vrot.slane %v4785, 7
        %v4790 = vrot.slane %v4786, 7
        %v4791 = vsel %vm1030, %v4789, %v4790
        %v4792 = vsel %vm1030, %v4790, %v4789
        %v4793 = vsel %vm1095, 0.0, %v4792
        %v4794 = vsel %vm1096, 0.0, %v4791
        %v4795 = vrot.slane %v4785, 1
        %v4796 = vrot.slane %v4786, 1
        %v4797 = vsel %vm1223, %v4795, %v4796
        %v4798 = vsel %vm1223, %v4796, %v4795
        %v4799 = vsel %vm1288, 0.0, %v4797
        %v4800 = vsel %vm1289, 0.0, %v4798
        %v4801 = vpack.c.bf16 %v4794, %v4793
        %v4802 = vpack.c.bf16 %v4786, %v4785
        %v4804 = vsel %vm2153, %v4802, 0
        %4806 = vmatprep.subr.bf16.mxu0 0
        %4807 = vmatpush1.bf16.msra.mxu0 0
        %4808 = vmatprep.subr.bf16.mxu0 0
        %4809 = vmatpush1.bf16.msra.mxu0 0
        %4810 = vmatprep.subr.bf16.mxu0 0
        %4811 = vmatpush1.bf16.msra.mxu0 0
        %4812 = vmatprep.subr.bf16.mxu0 0
        %4813 = vmatpush1.bf16.msra.mxu0 0
        %4814 = vmatprep.subr.bf16.mxu0 0
        %4815 = vmatpush1.bf16.msra.mxu0 0
        %4816 = vmatprep.subr.bf16.mxu0 0
        %4817 = vmatpush1.bf16.msra.mxu0 0
        %4818 = vmatprep.subr.bf16.mxu0 0
        %4819 = vmatpush1.bf16.msra.mxu0 0
        %4820 = vmatprep.subr.bf16.mxu0 0
        %4821 = vmatpush1.bf16.msra.mxu0 %v2159
        %4822 = vmatprep.subr.bf16.mxu0 0
        %4823 = vmatpush2.bf16.msra.mxu0 0
        %4824 = vmatprep.subr.bf16.mxu0 0
        %4825 = vmatpush2.bf16.msra.mxu0 0
        %4826 = vmatprep.subr.bf16.mxu0 0
        %4827 = vmatpush2.bf16.msra.mxu0 0
        %4828 = vmatprep.subr.bf16.mxu0 0
        %4829 = vmatpush2.bf16.msra.mxu0 0
        %4830 = vmatprep.subr.bf16.mxu0 0
        %4831 = vmatpush2.bf16.msra.mxu0 0
        %4832 = vmatprep.subr.bf16.mxu0 0
        %4833 = vmatpush2.bf16.msra.mxu0 0
        %4834 = vmatprep.subr.bf16.mxu0 0
        %4835 = vmatpush2.bf16.msra.mxu0 0
        %4836 = vmatprep.subr.bf16.mxu0 0
        %4837 = vmatpush2.bf16.msra.mxu0 0
        %4838 = vmatprep.mubr.bf16.mxu0 0
        %4839 = vmatmul.mubr.bf16.gmra.mxu0 %v4804
        %v4840 = vpop.f32.mrf.mxu0
        %v4841 = vadd.f32 0.0, %v4840
        %v4842 = vpop.f32.mrf.mxu0
        %v4843 = vpop.f32.mrf.mxu0
        %v4844 = vadd.f32 0.0, %v4843
        %v4845 = vpop.f32.mrf.mxu0
        %4846 = vdwg.mxu0
        %v4848 = vsel %vm2153, %v4801, 0
        %4850 = vmatprep.subr.bf16.mxu0 0
        %4851 = vmatpush1.bf16.msra.mxu0 0
        %4852 = vmatprep.subr.bf16.mxu0 0
        %4853 = vmatpush1.bf16.msra.mxu0 0
        %4854 = vmatprep.subr.bf16.mxu0 0
        %4855 = vmatpush1.bf16.msra.mxu0 0
        %4856 = vmatprep.subr.bf16.mxu0 0
        %4857 = vmatpush1.bf16.msra.mxu0 0
        %4858 = vmatprep.subr.bf16.mxu0 0
        %4859 = vmatpush1.bf16.msra.mxu0 0
        %4860 = vmatprep.subr.bf16.mxu0 0
        %4861 = vmatpush1.bf16.msra.mxu0 0
        %4862 = vmatprep.subr.bf16.mxu0 0
        %4863 = vmatpush1.bf16.msra.mxu0 0
        %4864 = vmatprep.subr.bf16.mxu0 0
        %4865 = vmatpush1.bf16.msra.mxu0 %v2206
        %4866 = vmatprep.subr.bf16.mxu0 0
        %4867 = vmatpush2.bf16.msra.mxu0 0
        %4868 = vmatprep.subr.bf16.mxu0 0
        %4869 = vmatpush2.bf16.msra.mxu0 0
        %4870 = vmatprep.subr.bf16.mxu0 0
        %4871 = vmatpush2.bf16.msra.mxu0 0
        %4872 = vmatprep.subr.bf16.mxu0 0
        %4873 = vmatpush2.bf16.msra.mxu0 0
        %4874 = vmatprep.subr.bf16.mxu0 0
        %4875 = vmatpush2.bf16.msra.mxu0 0
        %4876 = vmatprep.subr.bf16.mxu0 0
        %4877 = vmatpush2.bf16.msra.mxu0 0
        %4878 = vmatprep.subr.bf16.mxu0 0
        %4879 = vmatpush2.bf16.msra.mxu0 0
        %4880 = vmatprep.subr.bf16.mxu0 0
        %4881 = vmatpush2.bf16.msra.mxu0 0
        %4882 = vmatprep.mubr.bf16.mxu0 0
        %4883 = vmatmul.mubr.bf16.gmra.mxu0 %v4848
        %v4884 = vpop.f32.mrf.mxu0
        %v4885 = vadd.f32 %v4841, %v4884
        %v4886 = vpop.f32.mrf.mxu0
        %v4887 = vpop.f32.mrf.mxu0
        %v4888 = vadd.f32 %v4844, %v4887
        %v4889 = vpop.f32.mrf.mxu0
        %4890 = vdwg.mxu0
        %v4891 = vpack.c.bf16 %v4800, %v4799
        %v4893 = vsel %vm2153, %v4891, 0
        %4895 = vmatprep.subr.bf16.mxu0 0
        %4896 = vmatpush1.bf16.msra.mxu0 0
        %4897 = vmatprep.subr.bf16.mxu0 0
        %4898 = vmatpush1.bf16.msra.mxu0 0
        %4899 = vmatprep.subr.bf16.mxu0 0
        %4900 = vmatpush1.bf16.msra.mxu0 0
        %4901 = vmatprep.subr.bf16.mxu0 0
        %4902 = vmatpush1.bf16.msra.mxu0 0
        %4903 = vmatprep.subr.bf16.mxu0 0
        %4904 = vmatpush1.bf16.msra.mxu0 0
        %4905 = vmatprep.subr.bf16.mxu0 0
        %4906 = vmatpush1.bf16.msra.mxu0 0
        %4907 = vmatprep.subr.bf16.mxu0 0
        %4908 = vmatpush1.bf16.msra.mxu0 0
        %4909 = vmatprep.subr.bf16.mxu0 0
        %4910 = vmatpush1.bf16.msra.mxu0 %v2254
        %4911 = vmatprep.subr.bf16.mxu0 0
        %4912 = vmatpush2.bf16.msra.mxu0 0
        %4913 = vmatprep.subr.bf16.mxu0 0
        %4914 = vmatpush2.bf16.msra.mxu0 0
        %4915 = vmatprep.subr.bf16.mxu0 0
        %4916 = vmatpush2.bf16.msra.mxu0 0
        %4917 = vmatprep.subr.bf16.mxu0 0
        %4918 = vmatpush2.bf16.msra.mxu0 0
        %4919 = vmatprep.subr.bf16.mxu0 0
        %4920 = vmatpush2.bf16.msra.mxu0 0
        %4921 = vmatprep.subr.bf16.mxu0 0
        %4922 = vmatpush2.bf16.msra.mxu0 0
        %4923 = vmatprep.subr.bf16.mxu0 0
        %4924 = vmatpush2.bf16.msra.mxu0 0
        %4925 = vmatprep.subr.bf16.mxu0 0
        %4926 = vmatpush2.bf16.msra.mxu0 0
        %4927 = vmatprep.mubr.bf16.mxu0 0
        %4928 = vmatmul.mubr.bf16.gmra.mxu0 %v4893
        %v4929 = vpop.f32.mrf.mxu0
        %v4930 = vadd.f32 0.0, %v4929
        %v4931 = vpop.f32.mrf.mxu0
        %v4932 = vpop.f32.mrf.mxu0
        %v4933 = vadd.f32 0.0, %v4932
        %v4934 = vpop.f32.mrf.mxu0
        %4935 = vdwg.mxu0
        %v4936 = vadd.f32 %v4885, %v4930
        %v4937 = vadd.f32 %v4888, %v4933
        %v4938 = vld [vmem:[#allocation2 + $0xd0] sm:$0xff]
        %v4939 = vld [vmem:[#allocation2 + $0xd8] sm:$0xff]
        %v4940 = vadd.f32 %v4938, %v4936
        %v4941 = vadd.f32 %v4939, %v4937
        %v4942 = vxor.u32 %v4940, 2147483648
        %v4943 = vxor.u32 %v4941, 2147483648
        %v4944 = vmul.f32 %v4942, 1.442695
        %v4945 = vpow.pop %v4944
        %v4946 = vmul.f32 %v4943, 1.442695
        %v4947 = vpow.pop %v4946
        %v4948 = vadd.f32 %v4945, 1.0
        %v4949 = vadd.f32 %v4947, 1.0
        %v4950 = vrcp.pop %v4948
        %v4951 = vmul.f32 1.0, %v4950
        %v4952 = vrcp.pop %v4949
        %v4953 = vmul.f32 1.0, %v4952
        %v4954 = vtanh.pop %v4940
        %v4955 = vtanh.pop %v4941
        %v4956 = vmul.f32 %v4951, %v4773
        %v4957 = vmul.f32 %v4953, %v4774
        %4960 = vrot.lane.b32.xlu0 %v4954, 124
        %v4961 = vpop.permute.xlu0 %4960
        %4962 = vrot.lane.b32.xlu0 %v4955, 124
        %v4963 = vpop.permute.xlu0 %4962
        %v4966 = vmul.f32 %v4951, %v4961
        %v4967 = vmul.f32 %v4953, %v4963
        %4970 = vrot.lane.b32.xlu0 %v4966, 124
        %v4971 = vpop.permute.xlu0 %4970
        %4972 = vrot.lane.b32.xlu0 %v4967, 124
        %v4973 = vpop.permute.xlu0 %4972
        %v4976 = vadd.f32 %v4956, %v4971
        %v4977 = vadd.f32 %v4957, %v4973
        %v4978 = vtanh.pop %v4976
        %v4979 = vtanh.pop %v4977
        %4982 = vrot.lane.b32.xlu0 %v4978, 124
        %v4983 = vpop.permute.xlu0 %4982
        %4984 = vrot.lane.b32.xlu0 %v4979, 124
        %v4985 = vpop.permute.xlu0 %4984
        %v4988 = vmul.f32 %v4951, %v4983
        %v4989 = vmul.f32 %v4953, %v4985
        %4990 = vst.msk [vmem:[#allocation3 + $0xd0] sm:$0xff] %vm2153, %v4988
        %4991 = vst.msk [vmem:[#allocation3 + $0xd8] sm:$0xff] %vm2153, %v4989
        %v4992 = vrot.slane %v4988, 7
        %v4993 = vrot.slane %v4989, 7
        %v4994 = vsel %vm1030, %v4992, %v4993
        %v4995 = vsel %vm1030, %v4993, %v4992
        %v4996 = vsel %vm1095, 0.0, %v4995
        %v4997 = vsel %vm1096, 0.0, %v4994
        %v4998 = vrot.slane %v4988, 1
        %v4999 = vrot.slane %v4989, 1
        %v5000 = vsel %vm1223, %v4998, %v4999
        %v5001 = vsel %vm1223, %v4999, %v4998
        %v5002 = vsel %vm1288, 0.0, %v5000
        %v5003 = vsel %vm1289, 0.0, %v5001
        %v5004 = vpack.c.bf16 %v4997, %v4996
        %v5005 = vpack.c.bf16 %v4989, %v4988
        %v5007 = vsel %vm2153, %v5005, 0
        %5009 = vmatprep.subr.bf16.mxu0 0
        %5010 = vmatpush1.bf16.msra.mxu0 0
        %5011 = vmatprep.subr.bf16.mxu0 0
        %5012 = vmatpush1.bf16.msra.mxu0 0
        %5013 = vmatprep.subr.bf16.mxu0 0
        %5014 = vmatpush1.bf16.msra.mxu0 0
        %5015 = vmatprep.subr.bf16.mxu0 0
        %5016 = vmatpush1.bf16.msra.mxu0 0
        %5017 = vmatprep.subr.bf16.mxu0 0
        %5018 = vmatpush1.bf16.msra.mxu0 0
        %5019 = vmatprep.subr.bf16.mxu0 0
        %5020 = vmatpush1.bf16.msra.mxu0 0
        %5021 = vmatprep.subr.bf16.mxu0 0
        %5022 = vmatpush1.bf16.msra.mxu0 0
        %5023 = vmatprep.subr.bf16.mxu0 0
        %5024 = vmatpush1.bf16.msra.mxu0 %v2159
        %5025 = vmatprep.subr.bf16.mxu0 0
        %5026 = vmatpush2.bf16.msra.mxu0 0
        %5027 = vmatprep.subr.bf16.mxu0 0
        %5028 = vmatpush2.bf16.msra.mxu0 0
        %5029 = vmatprep.subr.bf16.mxu0 0
        %5030 = vmatpush2.bf16.msra.mxu0 0
        %5031 = vmatprep.subr.bf16.mxu0 0
        %5032 = vmatpush2.bf16.msra.mxu0 0
        %5033 = vmatprep.subr.bf16.mxu0 0
        %5034 = vmatpush2.bf16.msra.mxu0 0
        %5035 = vmatprep.subr.bf16.mxu0 0
        %5036 = vmatpush2.bf16.msra.mxu0 0
        %5037 = vmatprep.subr.bf16.mxu0 0
        %5038 = vmatpush2.bf16.msra.mxu0 0
        %5039 = vmatprep.subr.bf16.mxu0 0
        %5040 = vmatpush2.bf16.msra.mxu0 0
        %5041 = vmatprep.mubr.bf16.mxu0 0
        %5042 = vmatmul.mubr.bf16.gmra.mxu0 %v5007
        %v5043 = vpop.f32.mrf.mxu0
        %v5044 = vadd.f32 0.0, %v5043
        %v5045 = vpop.f32.mrf.mxu0
        %v5046 = vpop.f32.mrf.mxu0
        %v5047 = vadd.f32 0.0, %v5046
        %v5048 = vpop.f32.mrf.mxu0
        %5049 = vdwg.mxu0
        %v5051 = vsel %vm2153, %v5004, 0
        %5053 = vmatprep.subr.bf16.mxu0 0
        %5054 = vmatpush1.bf16.msra.mxu0 0
        %5055 = vmatprep.subr.bf16.mxu0 0
        %5056 = vmatpush1.bf16.msra.mxu0 0
        %5057 = vmatprep.subr.bf16.mxu0 0
        %5058 = vmatpush1.bf16.msra.mxu0 0
        %5059 = vmatprep.subr.bf16.mxu0 0
        %5060 = vmatpush1.bf16.msra.mxu0 0
        %5061 = vmatprep.subr.bf16.mxu0 0
        %5062 = vmatpush1.bf16.msra.mxu0 0
        %5063 = vmatprep.subr.bf16.mxu0 0
        %5064 = vmatpush1.bf16.msra.mxu0 0
        %5065 = vmatprep.subr.bf16.mxu0 0
        %5066 = vmatpush1.bf16.msra.mxu0 0
        %5067 = vmatprep.subr.bf16.mxu0 0
        %5068 = vmatpush1.bf16.msra.mxu0 %v2206
        %5069 = vmatprep.subr.bf16.mxu0 0
        %5070 = vmatpush2.bf16.msra.mxu0 0
        %5071 = vmatprep.subr.bf16.mxu0 0
        %5072 = vmatpush2.bf16.msra.mxu0 0
        %5073 = vmatprep.subr.bf16.mxu0 0
        %5074 = vmatpush2.bf16.msra.mxu0 0
        %5075 = vmatprep.subr.bf16.mxu0 0
        %5076 = vmatpush2.bf16.msra.mxu0 0
        %5077 = vmatprep.subr.bf16.mxu0 0
        %5078 = vmatpush2.bf16.msra.mxu0 0
        %5079 = vmatprep.subr.bf16.mxu0 0
        %5080 = vmatpush2.bf16.msra.mxu0 0
        %5081 = vmatprep.subr.bf16.mxu0 0
        %5082 = vmatpush2.bf16.msra.mxu0 0
        %5083 = vmatprep.subr.bf16.mxu0 0
        %5084 = vmatpush2.bf16.msra.mxu0 0
        %5085 = vmatprep.mubr.bf16.mxu0 0
        %5086 = vmatmul.mubr.bf16.gmra.mxu0 %v5051
        %v5087 = vpop.f32.mrf.mxu0
        %v5088 = vadd.f32 %v5044, %v5087
        %v5089 = vpop.f32.mrf.mxu0
        %v5090 = vpop.f32.mrf.mxu0
        %v5091 = vadd.f32 %v5047, %v5090
        %v5092 = vpop.f32.mrf.mxu0
        %5093 = vdwg.mxu0
        %v5094 = vpack.c.bf16 %v5003, %v5002
        %v5096 = vsel %vm2153, %v5094, 0
        %5098 = vmatprep.subr.bf16.mxu0 0
        %5099 = vmatpush1.bf16.msra.mxu0 0
        %5100 = vmatprep.subr.bf16.mxu0 0
        %5101 = vmatpush1.bf16.msra.mxu0 0
        %5102 = vmatprep.subr.bf16.mxu0 0
        %5103 = vmatpush1.bf16.msra.mxu0 0
        %5104 = vmatprep.subr.bf16.mxu0 0
        %5105 = vmatpush1.bf16.msra.mxu0 0
        %5106 = vmatprep.subr.bf16.mxu0 0
        %5107 = vmatpush1.bf16.msra.mxu0 0
        %5108 = vmatprep.subr.bf16.mxu0 0
        %5109 = vmatpush1.bf16.msra.mxu0 0
        %5110 = vmatprep.subr.bf16.mxu0 0
        %5111 = vmatpush1.bf16.msra.mxu0 0
        %5112 = vmatprep.subr.bf16.mxu0 0
        %5113 = vmatpush1.bf16.msra.mxu0 %v2254
        %5114 = vmatprep.subr.bf16.mxu0 0
        %5115 = vmatpush2.bf16.msra.mxu0 0
        %5116 = vmatprep.subr.bf16.mxu0 0
        %5117 = vmatpush2.bf16.msra.mxu0 0
        %5118 = vmatprep.subr.bf16.mxu0 0
        %5119 = vmatpush2.bf16.msra.mxu0 0
        %5120 = vmatprep.subr.bf16.mxu0 0
        %5121 = vmatpush2.bf16.msra.mxu0 0
        %5122 = vmatprep.subr.bf16.mxu0 0
        %5123 = vmatpush2.bf16.msra.mxu0 0
        %5124 = vmatprep.subr.bf16.mxu0 0
        %5125 = vmatpush2.bf16.msra.mxu0 0
        %5126 = vmatprep.subr.bf16.mxu0 0
        %5127 = vmatpush2.bf16.msra.mxu0 0
        %5128 = vmatprep.subr.bf16.mxu0 0
        %5129 = vmatpush2.bf16.msra.mxu0 0
        %5130 = vmatprep.mubr.bf16.mxu0 0
        %5131 = vmatmul.mubr.bf16.gmra.mxu0 %v5096
        %v5132 = vpop.f32.mrf.mxu0
        %v5133 = vadd.f32 0.0, %v5132
        %v5134 = vpop.f32.mrf.mxu0
        %v5135 = vpop.f32.mrf.mxu0
        %v5136 = vadd.f32 0.0, %v5135
        %v5137 = vpop.f32.mrf.mxu0
        %5138 = vdwg.mxu0
        %v5139 = vadd.f32 %v5088, %v5133
        %v5140 = vadd.f32 %v5091, %v5136
        %v5141 = vld [vmem:[#allocation2 + $0xe0] sm:$0xff]
        %v5142 = vld [vmem:[#allocation2 + $0xe8] sm:$0xff]
        %v5143 = vadd.f32 %v5141, %v5139
        %v5144 = vadd.f32 %v5142, %v5140
        %v5145 = vxor.u32 %v5143, 2147483648
        %v5146 = vxor.u32 %v5144, 2147483648
        %v5147 = vmul.f32 %v5145, 1.442695
        %v5148 = vpow.pop %v5147
        %v5149 = vmul.f32 %v5146, 1.442695
        %v5150 = vpow.pop %v5149
        %v5151 = vadd.f32 %v5148, 1.0
        %v5152 = vadd.f32 %v5150, 1.0
        %v5153 = vrcp.pop %v5151
        %v5154 = vmul.f32 1.0, %v5153
        %v5155 = vrcp.pop %v5152
        %v5156 = vmul.f32 1.0, %v5155
        %v5157 = vtanh.pop %v5143
        %v5158 = vtanh.pop %v5144
        %v5159 = vmul.f32 %v5154, %v4976
        %v5160 = vmul.f32 %v5156, %v4977
        %5163 = vrot.lane.b32.xlu0 %v5157, 124
        %v5164 = vpop.permute.xlu0 %5163
        %5165 = vrot.lane.b32.xlu0 %v5158, 124
        %v5166 = vpop.permute.xlu0 %5165
        %v5169 = vmul.f32 %v5154, %v5164
        %v5170 = vmul.f32 %v5156, %v5166
        %5173 = vrot.lane.b32.xlu0 %v5169, 124
        %v5174 = vpop.permute.xlu0 %5173
        %5175 = vrot.lane.b32.xlu0 %v5170, 124
        %v5176 = vpop.permute.xlu0 %5175
        %v5179 = vadd.f32 %v5159, %v5174
        %v5180 = vadd.f32 %v5160, %v5176
        %v5181 = vtanh.pop %v5179
        %v5182 = vtanh.pop %v5180
        %5185 = vrot.lane.b32.xlu0 %v5181, 124
        %v5186 = vpop.permute.xlu0 %5185
        %5187 = vrot.lane.b32.xlu0 %v5182, 124
        %v5188 = vpop.permute.xlu0 %5187
        %v5191 = vmul.f32 %v5154, %v5186
        %v5192 = vmul.f32 %v5156, %v5188
        %5193 = vst.msk [vmem:[#allocation3 + $0xe0] sm:$0xff] %vm2153, %v5191
        %5194 = vst.msk [vmem:[#allocation3 + $0xe8] sm:$0xff] %vm2153, %v5192
        %v5195 = vrot.slane %v5191, 7
        %v5196 = vrot.slane %v5192, 7
        %v5197 = vsel %vm1030, %v5195, %v5196
        %v5198 = vsel %vm1030, %v5196, %v5195
        %v5199 = vsel %vm1095, 0.0, %v5198
        %v5200 = vsel %vm1096, 0.0, %v5197
        %v5201 = vrot.slane %v5191, 1
        %v5202 = vrot.slane %v5192, 1
        %v5203 = vsel %vm1223, %v5201, %v5202
        %v5204 = vsel %vm1223, %v5202, %v5201
        %v5205 = vsel %vm1288, 0.0, %v5203
        %v5206 = vsel %vm1289, 0.0, %v5204
        %v5207 = vpack.c.bf16 %v5200, %v5199
        %v5208 = vpack.c.bf16 %v5192, %v5191
        %v5210 = vsel %vm2153, %v5208, 0
        %5212 = vmatprep.subr.bf16.mxu0 0
        %5213 = vmatpush1.bf16.msra.mxu0 0
        %5214 = vmatprep.subr.bf16.mxu0 0
        %5215 = vmatpush1.bf16.msra.mxu0 0
        %5216 = vmatprep.subr.bf16.mxu0 0
        %5217 = vmatpush1.bf16.msra.mxu0 0
        %5218 = vmatprep.subr.bf16.mxu0 0
        %5219 = vmatpush1.bf16.msra.mxu0 0
        %5220 = vmatprep.subr.bf16.mxu0 0
        %5221 = vmatpush1.bf16.msra.mxu0 0
        %5222 = vmatprep.subr.bf16.mxu0 0
        %5223 = vmatpush1.bf16.msra.mxu0 0
        %5224 = vmatprep.subr.bf16.mxu0 0
        %5225 = vmatpush1.bf16.msra.mxu0 0
        %5226 = vmatprep.subr.bf16.mxu0 0
        %5227 = vmatpush1.bf16.msra.mxu0 %v2159
        %5228 = vmatprep.subr.bf16.mxu0 0
        %5229 = vmatpush2.bf16.msra.mxu0 0
        %5230 = vmatprep.subr.bf16.mxu0 0
        %5231 = vmatpush2.bf16.msra.mxu0 0
        %5232 = vmatprep.subr.bf16.mxu0 0
        %5233 = vmatpush2.bf16.msra.mxu0 0
        %5234 = vmatprep.subr.bf16.mxu0 0
        %5235 = vmatpush2.bf16.msra.mxu0 0
        %5236 = vmatprep.subr.bf16.mxu0 0
        %5237 = vmatpush2.bf16.msra.mxu0 0
        %5238 = vmatprep.subr.bf16.mxu0 0
        %5239 = vmatpush2.bf16.msra.mxu0 0
        %5240 = vmatprep.subr.bf16.mxu0 0
        %5241 = vmatpush2.bf16.msra.mxu0 0
        %5242 = vmatprep.subr.bf16.mxu0 0
        %5243 = vmatpush2.bf16.msra.mxu0 0
        %5244 = vmatprep.mubr.bf16.mxu0 0
        %5245 = vmatmul.mubr.bf16.gmra.mxu0 %v5210
        %v5246 = vpop.f32.mrf.mxu0
        %v5247 = vadd.f32 0.0, %v5246
        %v5248 = vpop.f32.mrf.mxu0
        %v5249 = vpop.f32.mrf.mxu0
        %v5250 = vadd.f32 0.0, %v5249
        %v5251 = vpop.f32.mrf.mxu0
        %5252 = vdwg.mxu0
        %v5254 = vsel %vm2153, %v5207, 0
        %5256 = vmatprep.subr.bf16.mxu0 0
        %5257 = vmatpush1.bf16.msra.mxu0 0
        %5258 = vmatprep.subr.bf16.mxu0 0
        %5259 = vmatpush1.bf16.msra.mxu0 0
        %5260 = vmatprep.subr.bf16.mxu0 0
        %5261 = vmatpush1.bf16.msra.mxu0 0
        %5262 = vmatprep.subr.bf16.mxu0 0
        %5263 = vmatpush1.bf16.msra.mxu0 0
        %5264 = vmatprep.subr.bf16.mxu0 0
        %5265 = vmatpush1.bf16.msra.mxu0 0
        %5266 = vmatprep.subr.bf16.mxu0 0
        %5267 = vmatpush1.bf16.msra.mxu0 0
        %5268 = vmatprep.subr.bf16.mxu0 0
        %5269 = vmatpush1.bf16.msra.mxu0 0
        %5270 = vmatprep.subr.bf16.mxu0 0
        %5271 = vmatpush1.bf16.msra.mxu0 %v2206
        %5272 = vmatprep.subr.bf16.mxu0 0
        %5273 = vmatpush2.bf16.msra.mxu0 0
        %5274 = vmatprep.subr.bf16.mxu0 0
        %5275 = vmatpush2.bf16.msra.mxu0 0
        %5276 = vmatprep.subr.bf16.mxu0 0
        %5277 = vmatpush2.bf16.msra.mxu0 0
        %5278 = vmatprep.subr.bf16.mxu0 0
        %5279 = vmatpush2.bf16.msra.mxu0 0
        %5280 = vmatprep.subr.bf16.mxu0 0
        %5281 = vmatpush2.bf16.msra.mxu0 0
        %5282 = vmatprep.subr.bf16.mxu0 0
        %5283 = vmatpush2.bf16.msra.mxu0 0
        %5284 = vmatprep.subr.bf16.mxu0 0
        %5285 = vmatpush2.bf16.msra.mxu0 0
        %5286 = vmatprep.subr.bf16.mxu0 0
        %5287 = vmatpush2.bf16.msra.mxu0 0
        %5288 = vmatprep.mubr.bf16.mxu0 0
        %5289 = vmatmul.mubr.bf16.gmra.mxu0 %v5254
        %v5290 = vpop.f32.mrf.mxu0
        %v5291 = vadd.f32 %v5247, %v5290
        %v5292 = vpop.f32.mrf.mxu0
        %v5293 = vpop.f32.mrf.mxu0
        %v5294 = vadd.f32 %v5250, %v5293
        %v5295 = vpop.f32.mrf.mxu0
        %5296 = vdwg.mxu0
        %v5297 = vpack.c.bf16 %v5206, %v5205
        %v5299 = vsel %vm2153, %v5297, 0
        %5301 = vmatprep.subr.bf16.mxu0 0
        %5302 = vmatpush1.bf16.msra.mxu0 0
        %5303 = vmatprep.subr.bf16.mxu0 0
        %5304 = vmatpush1.bf16.msra.mxu0 0
        %5305 = vmatprep.subr.bf16.mxu0 0
        %5306 = vmatpush1.bf16.msra.mxu0 0
        %5307 = vmatprep.subr.bf16.mxu0 0
        %5308 = vmatpush1.bf16.msra.mxu0 0
        %5309 = vmatprep.subr.bf16.mxu0 0
        %5310 = vmatpush1.bf16.msra.mxu0 0
        %5311 = vmatprep.subr.bf16.mxu0 0
        %5312 = vmatpush1.bf16.msra.mxu0 0
        %5313 = vmatprep.subr.bf16.mxu0 0
        %5314 = vmatpush1.bf16.msra.mxu0 0
        %5315 = vmatprep.subr.bf16.mxu0 0
        %5316 = vmatpush1.bf16.msra.mxu0 %v2254
        %5317 = vmatprep.subr.bf16.mxu0 0
        %5318 = vmatpush2.bf16.msra.mxu0 0
        %5319 = vmatprep.subr.bf16.mxu0 0
        %5320 = vmatpush2.bf16.msra.mxu0 0
        %5321 = vmatprep.subr.bf16.mxu0 0
        %5322 = vmatpush2.bf16.msra.mxu0 0
        %5323 = vmatprep.subr.bf16.mxu0 0
        %5324 = vmatpush2.bf16.msra.mxu0 0
        %5325 = vmatprep.subr.bf16.mxu0 0
        %5326 = vmatpush2.bf16.msra.mxu0 0
        %5327 = vmatprep.subr.bf16.mxu0 0
        %5328 = vmatpush2.bf16.msra.mxu0 0
        %5329 = vmatprep.subr.bf16.mxu0 0
        %5330 = vmatpush2.bf16.msra.mxu0 0
        %5331 = vmatprep.subr.bf16.mxu0 0
        %5332 = vmatpush2.bf16.msra.mxu0 0
        %5333 = vmatprep.mubr.bf16.mxu0 0
        %5334 = vmatmul.mubr.bf16.gmra.mxu0 %v5299
        %v5335 = vpop.f32.mrf.mxu0
        %v5336 = vadd.f32 0.0, %v5335
        %v5337 = vpop.f32.mrf.mxu0
        %v5338 = vpop.f32.mrf.mxu0
        %v5339 = vadd.f32 0.0, %v5338
        %v5340 = vpop.f32.mrf.mxu0
        %5341 = vdwg.mxu0
        %v5342 = vadd.f32 %v5291, %v5336
        %v5343 = vadd.f32 %v5294, %v5339
        %v5344 = vld [vmem:[#allocation2 + $0xf0] sm:$0xff]
        %v5345 = vld [vmem:[#allocation2 + $0xf8] sm:$0xff]
        %v5346 = vadd.f32 %v5344, %v5342
        %v5347 = vadd.f32 %v5345, %v5343
        %v5348 = vxor.u32 %v5346, 2147483648
        %v5349 = vxor.u32 %v5347, 2147483648
        %v5350 = vmul.f32 %v5348, 1.442695
        %v5351 = vpow.pop %v5350
        %v5352 = vmul.f32 %v5349, 1.442695
        %v5353 = vpow.pop %v5352
        %v5354 = vadd.f32 %v5351, 1.0
        %v5355 = vadd.f32 %v5353, 1.0
        %v5356 = vrcp.pop %v5354
        %v5357 = vmul.f32 1.0, %v5356
        %v5358 = vrcp.pop %v5355
        %v5359 = vmul.f32 1.0, %v5358
        %v5360 = vtanh.pop %v5346
        %v5361 = vtanh.pop %v5347
        %v5362 = vmul.f32 %v5357, %v5179
        %v5363 = vmul.f32 %v5359, %v5180
        %5366 = vrot.lane.b32.xlu0 %v5360, 124
        %v5367 = vpop.permute.xlu0 %5366
        %5368 = vrot.lane.b32.xlu0 %v5361, 124
        %v5369 = vpop.permute.xlu0 %5368
        %v5372 = vmul.f32 %v5357, %v5367
        %v5373 = vmul.f32 %v5359, %v5369
        %5376 = vrot.lane.b32.xlu0 %v5372, 124
        %v5377 = vpop.permute.xlu0 %5376
        %5378 = vrot.lane.b32.xlu0 %v5373, 124
        %v5379 = vpop.permute.xlu0 %5378
        %v5382 = vadd.f32 %v5362, %v5377
        %v5383 = vadd.f32 %v5363, %v5379
        %v5384 = vtanh.pop %v5382
        %v5385 = vtanh.pop %v5383
        %5388 = vrot.lane.b32.xlu0 %v5384, 124
        %v5389 = vpop.permute.xlu0 %5388
        %5390 = vrot.lane.b32.xlu0 %v5385, 124
        %v5391 = vpop.permute.xlu0 %5390
        %v5394 = vmul.f32 %v5357, %v5389
        %v5395 = vmul.f32 %v5359, %v5391
        %5396 = vst.msk [vmem:[#allocation3 + $0xf0] sm:$0xff] %vm2153, %v5394
        %5397 = vst.msk [vmem:[#allocation3 + $0xf8] sm:$0xff] %vm2153, %v5395
        %v5398 = vld [vmem:[#allocation3] sm:$0xff]
        %v5399 = vld [vmem:[#allocation3 + $0x8] sm:$0xff]
        %v5400 = vld [vmem:[#allocation3 + $0x10] sm:$0xff]
        %v5401 = vld [vmem:[#allocation3 + $0x18] sm:$0xff]
        %v5402 = vld [vmem:[#allocation3 + $0x20] sm:$0xff]
        %v5403 = vld [vmem:[#allocation3 + $0x28] sm:$0xff]
        %v5404 = vld [vmem:[#allocation3 + $0x30] sm:$0xff]
        %v5405 = vld [vmem:[#allocation3 + $0x38] sm:$0xff]
        %v5406 = vld [vmem:[#allocation3 + $0x40] sm:$0xff]
        %v5407 = vld [vmem:[#allocation3 + $0x48] sm:$0xff]
        %v5408 = vld [vmem:[#allocation3 + $0x50] sm:$0xff]
        %v5409 = vld [vmem:[#allocation3 + $0x58] sm:$0xff]
        %v5410 = vld [vmem:[#allocation3 + $0x60] sm:$0xff]
        %v5411 = vld [vmem:[#allocation3 + $0x68] sm:$0xff]
        %v5412 = vld [vmem:[#allocation3 + $0x70] sm:$0xff]
        %v5413 = vld [vmem:[#allocation3 + $0x78] sm:$0xff]
        %v5414 = vld [vmem:[#allocation3 + $0x80] sm:$0xff]
        %v5415 = vld [vmem:[#allocation3 + $0x88] sm:$0xff]
        %v5416 = vld [vmem:[#allocation3 + $0x90] sm:$0xff]
        %v5417 = vld [vmem:[#allocation3 + $0x98] sm:$0xff]
        %v5418 = vld [vmem:[#allocation3 + $0xa0] sm:$0xff]
        %v5419 = vld [vmem:[#allocation3 + $0xa8] sm:$0xff]
        %v5420 = vld [vmem:[#allocation3 + $0xb0] sm:$0xff]
        %v5421 = vld [vmem:[#allocation3 + $0xb8] sm:$0xff]
        %v5422 = vld [vmem:[#allocation3 + $0xc0] sm:$0xff]
        %v5423 = vld [vmem:[#allocation3 + $0xc8] sm:$0xff]
        %v5424 = vld [vmem:[#allocation3 + $0xd0] sm:$0xff]
        %v5425 = vld [vmem:[#allocation3 + $0xd8] sm:$0xff]
        %v5426 = vld [vmem:[#allocation3 + $0xe0] sm:$0xff]
        %v5427 = vld [vmem:[#allocation3 + $0xe8] sm:$0xff]
        %v5428 = vld [vmem:[#allocation3 + $0xf0] sm:$0xff]
        %v5429 = vld [vmem:[#allocation3 + $0xf8] sm:$0xff]
        %v5430 = vpack.c.bf16 %v5399, %v5398
        %v5431 = vpack.c.bf16 %v5401, %v5400
        %v5432 = vpack.c.bf16 %v5403, %v5402
        %v5433 = vpack.c.bf16 %v5405, %v5404
        %v5434 = vpack.c.bf16 %v5407, %v5406
        %v5435 = vpack.c.bf16 %v5409, %v5408
        %v5436 = vpack.c.bf16 %v5411, %v5410
        %v5437 = vpack.c.bf16 %v5413, %v5412
        %v5438 = vpack.c.bf16 %v5415, %v5414
        %v5439 = vpack.c.bf16 %v5417, %v5416
        %v5440 = vpack.c.bf16 %v5419, %v5418
        %v5441 = vpack.c.bf16 %v5421, %v5420
        %v5442 = vpack.c.bf16 %v5423, %v5422
        %v5443 = vpack.c.bf16 %v5425, %v5424
        %v5444 = vpack.c.bf16 %v5427, %v5426
        %v5445 = vpack.c.bf16 %v5429, %v5428
        %v5446 = vld [vmem:[%s8] sm:$0x3]
        %v5447 = vld [vmem:[%s9] sm:$0x1]
        %v5449 = vlaneseq
        %v5450 = vshrl.u32 %v5449, 7
        %v5451 = vsub.s32 0, %v5450
        %v5452 = vrot.slane %v5447, %v5451
        %v5455 = vsel %vm2153, %v5430, 0
        %v5458 = vsel %vm2153, %v5431, 0
        %v5461 = vsel %vm2153, %v5432, 0
        %v5464 = vsel %vm2153, %v5433, 0
        %v5467 = vsel %vm2153, %v5434, 0
        %v5470 = vsel %vm2153, %v5435, 0
        %v5473 = vsel %vm2153, %v5436, 0
        %v5476 = vsel %vm2153, %v5437, 0
        %v5479 = vsel %vm2153, %v5438, 0
        %v5482 = vsel %vm2153, %v5439, 0
        %v5485 = vsel %vm2153, %v5440, 0
        %v5488 = vsel %vm2153, %v5441, 0
        %v5491 = vsel %vm2153, %v5442, 0
        %v5494 = vsel %vm2153, %v5443, 0
        %v5497 = vsel %vm2153, %v5444, 0
        %v5500 = vsel %vm2153, %v5445, 0
        %v5503 = vsel %vm2157, %v5446, 0
        %5505 = vmatprep.subr.bf16.mxu0 0
        %5506 = vmatpush1.bf16.msra.mxu0 0
        %5507 = vmatprep.subr.bf16.mxu0 0
        %5508 = vmatpush1.bf16.msra.mxu0 0
        %5509 = vmatprep.subr.bf16.mxu0 0
        %5510 = vmatpush1.bf16.msra.mxu0 0
        %5511 = vmatprep.subr.bf16.mxu0 0
        %5512 = vmatpush1.bf16.msra.mxu0 0
        %5513 = vmatprep.subr.bf16.mxu0 0
        %5514 = vmatpush1.bf16.msra.mxu0 0
        %5515 = vmatprep.subr.bf16.mxu0 0
        %5516 = vmatpush1.bf16.msra.mxu0 0
        %5517 = vmatprep.subr.bf16.mxu0 0
        %5518 = vmatpush1.bf16.msra.mxu0 0
        %5519 = vmatprep.subr.bf16.mxu0 0
        %5520 = vmatpush1.bf16.msra.mxu0 %v5503
        %5521 = vmatprep.subr.bf16.mxu0 0
        %5522 = vmatpush2.bf16.msra.mxu0 0
        %5523 = vmatprep.subr.bf16.mxu0 0
        %5524 = vmatpush2.bf16.msra.mxu0 0
        %5525 = vmatprep.subr.bf16.mxu0 0
        %5526 = vmatpush2.bf16.msra.mxu0 0
        %5527 = vmatprep.subr.bf16.mxu0 0
        %5528 = vmatpush2.bf16.msra.mxu0 0
        %5529 = vmatprep.subr.bf16.mxu0 0
        %5530 = vmatpush2.bf16.msra.mxu0 0
        %5531 = vmatprep.subr.bf16.mxu0 0
        %5532 = vmatpush2.bf16.msra.mxu0 0
        %5533 = vmatprep.subr.bf16.mxu0 0
        %5534 = vmatpush2.bf16.msra.mxu0 0
        %5535 = vmatprep.subr.bf16.mxu0 0
        %5536 = vmatpush2.bf16.msra.mxu0 0
        %5537 = vmatprep.mubr.bf16.mxu0 0
        %5538 = vmatmul.mubr.bf16.gmra.mxu0 %v5455
        %v5539 = vpop.f32.mrf.mxu0
        %v5540 = vadd.f32 %v5452, %v5539
        %v5541 = vpop.f32.mrf.mxu0
        %v5542 = vpop.f32.mrf.mxu0
        %v5543 = vadd.f32 %v5452, %v5542
        %v5544 = vpop.f32.mrf.mxu0
        %5545 = vmatprep.mubr.bf16.mxu0 0
        %5546 = vmatmul.mubr.bf16.gmra.mxu0 %v5458
        %v5547 = vpop.f32.mrf.mxu0
        %v5548 = vadd.f32 %v5452, %v5547
        %v5549 = vpop.f32.mrf.mxu0
        %v5550 = vpop.f32.mrf.mxu0
        %v5551 = vadd.f32 %v5452, %v5550
        %v5552 = vpop.f32.mrf.mxu0
        %5553 = vmatprep.mubr.bf16.mxu0 0
        %5554 = vmatmul.mubr.bf16.gmra.mxu0 %v5461
        %v5555 = vpop.f32.mrf.mxu0
        %v5556 = vadd.f32 %v5452, %v5555
        %v5557 = vpop.f32.mrf.mxu0
        %v5558 = vpop.f32.mrf.mxu0
        %v5559 = vadd.f32 %v5452, %v5558
        %v5560 = vpop.f32.mrf.mxu0
        %5561 = vmatprep.mubr.bf16.mxu0 0
        %5562 = vmatmul.mubr.bf16.gmra.mxu0 %v5464
        %v5563 = vpop.f32.mrf.mxu0
        %v5564 = vadd.f32 %v5452, %v5563
        %v5565 = vpop.f32.mrf.mxu0
        %v5566 = vpop.f32.mrf.mxu0
        %v5567 = vadd.f32 %v5452, %v5566
        %v5568 = vpop.f32.mrf.mxu0
        %5569 = vmatprep.mubr.bf16.mxu0 0
        %5570 = vmatmul.mubr.bf16.gmra.mxu0 %v5467
        %v5571 = vpop.f32.mrf.mxu0
        %v5572 = vadd.f32 %v5452, %v5571
        %v5573 = vpop.f32.mrf.mxu0
        %v5574 = vpop.f32.mrf.mxu0
        %v5575 = vadd.f32 %v5452, %v5574
        %v5576 = vpop.f32.mrf.mxu0
        %5577 = vmatprep.mubr.bf16.mxu0 0
        %5578 = vmatmul.mubr.bf16.gmra.mxu0 %v5470
        %v5579 = vpop.f32.mrf.mxu0
        %v5580 = vadd.f32 %v5452, %v5579
        %v5581 = vpop.f32.mrf.mxu0
        %v5582 = vpop.f32.mrf.mxu0
        %v5583 = vadd.f32 %v5452, %v5582
        %v5584 = vpop.f32.mrf.mxu0
        %5585 = vmatprep.mubr.bf16.mxu0 0
        %5586 = vmatmul.mubr.bf16.gmra.mxu0 %v5473
        %v5587 = vpop.f32.mrf.mxu0
        %v5588 = vadd.f32 %v5452, %v5587
        %v5589 = vpop.f32.mrf.mxu0
        %v5590 = vpop.f32.mrf.mxu0
        %v5591 = vadd.f32 %v5452, %v5590
        %v5592 = vpop.f32.mrf.mxu0
        %5593 = vmatprep.mubr.bf16.mxu0 0
        %5594 = vmatmul.mubr.bf16.gmra.mxu0 %v5476
        %v5595 = vpop.f32.mrf.mxu0
        %v5596 = vadd.f32 %v5452, %v5595
        %v5597 = vpop.f32.mrf.mxu0
        %v5598 = vpop.f32.mrf.mxu0
        %v5599 = vadd.f32 %v5452, %v5598
        %v5600 = vpop.f32.mrf.mxu0
        %5601 = vmatprep.mubr.bf16.mxu0 0
        %5602 = vmatmul.mubr.bf16.gmra.mxu0 %v5479
        %v5603 = vpop.f32.mrf.mxu0
        %v5604 = vadd.f32 %v5452, %v5603
        %v5605 = vpop.f32.mrf.mxu0
        %v5606 = vpop.f32.mrf.mxu0
        %v5607 = vadd.f32 %v5452, %v5606
        %v5608 = vpop.f32.mrf.mxu0
        %5609 = vmatprep.mubr.bf16.mxu0 0
        %5610 = vmatmul.mubr.bf16.gmra.mxu0 %v5482
        %v5611 = vpop.f32.mrf.mxu0
        %v5612 = vadd.f32 %v5452, %v5611
        %v5613 = vpop.f32.mrf.mxu0
        %v5614 = vpop.f32.mrf.mxu0
        %v5615 = vadd.f32 %v5452, %v5614
        %v5616 = vpop.f32.mrf.mxu0
        %5617 = vmatprep.mubr.bf16.mxu0 0
        %5618 = vmatmul.mubr.bf16.gmra.mxu0 %v5485
        %v5619 = vpop.f32.mrf.mxu0
        %v5620 = vadd.f32 %v5452, %v5619
        %v5621 = vpop.f32.mrf.mxu0
        %v5622 = vpop.f32.mrf.mxu0
        %v5623 = vadd.f32 %v5452, %v5622
        %v5624 = vpop.f32.mrf.mxu0
        %5625 = vmatprep.mubr.bf16.mxu0 0
        %5626 = vmatmul.mubr.bf16.gmra.mxu0 %v5488
        %v5627 = vpop.f32.mrf.mxu0
        %v5628 = vadd.f32 %v5452, %v5627
        %v5629 = vpop.f32.mrf.mxu0
        %v5630 = vpop.f32.mrf.mxu0
        %v5631 = vadd.f32 %v5452, %v5630
        %v5632 = vpop.f32.mrf.mxu0
        %5633 = vmatprep.mubr.bf16.mxu0 0
        %5634 = vmatmul.mubr.bf16.gmra.mxu0 %v5491
        %v5635 = vpop.f32.mrf.mxu0
        %v5636 = vadd.f32 %v5452, %v5635
        %v5637 = vpop.f32.mrf.mxu0
        %v5638 = vpop.f32.mrf.mxu0
        %v5639 = vadd.f32 %v5452, %v5638
        %v5640 = vpop.f32.mrf.mxu0
        %5641 = vmatprep.mubr.bf16.mxu0 0
        %5642 = vmatmul.mubr.bf16.gmra.mxu0 %v5494
        %v5643 = vpop.f32.mrf.mxu0
        %v5644 = vadd.f32 %v5452, %v5643
        %v5645 = vpop.f32.mrf.mxu0
        %v5646 = vpop.f32.mrf.mxu0
        %v5647 = vadd.f32 %v5452, %v5646
        %v5648 = vpop.f32.mrf.mxu0
        %5649 = vmatprep.mubr.bf16.mxu0 0
        %5650 = vmatmul.mubr.bf16.gmra.mxu0 %v5497
        %v5651 = vpop.f32.mrf.mxu0
        %v5652 = vadd.f32 %v5452, %v5651
        %v5653 = vpop.f32.mrf.mxu0
        %v5654 = vpop.f32.mrf.mxu0
        %v5655 = vadd.f32 %v5452, %v5654
        %v5656 = vpop.f32.mrf.mxu0
        %5657 = vmatprep.mubr.bf16.mxu0 0
        %5658 = vmatmul.mubr.bf16.gmra.mxu0 %v5500
        %v5659 = vpop.f32.mrf.mxu0
        %v5660 = vadd.f32 %v5452, %v5659
        %v5661 = vpop.f32.mrf.mxu0
        %v5662 = vpop.f32.mrf.mxu0
        %v5663 = vadd.f32 %v5452, %v5662
        %v5664 = vpop.f32.mrf.mxu0
        %5665 = vdwg.mxu0
        %v5666 = vld [vmem:[%s480] sm:$0xff]
        %v5667 = vld [vmem:[%s480 + $0x8] sm:$0xff]
        %v5668 = vld [vmem:[%s480 + $0x10] sm:$0xff]
        %v5669 = vld [vmem:[%s480 + $0x18] sm:$0xff]
        %v5670 = vld [vmem:[%s480 + $0x20] sm:$0xff]
        %v5671 = vld [vmem:[%s480 + $0x28] sm:$0xff]
        %v5672 = vld [vmem:[%s480 + $0x30] sm:$0xff]
        %v5673 = vld [vmem:[%s480 + $0x38] sm:$0xff]
        %v5674 = vld [vmem:[%s480 + $0x40] sm:$0xff]
        %v5675 = vld [vmem:[%s480 + $0x48] sm:$0xff]
        %v5676 = vld [vmem:[%s480 + $0x50] sm:$0xff]
        %v5677 = vld [vmem:[%s480 + $0x58] sm:$0xff]
        %v5678 = vld [vmem:[%s480 + $0x60] sm:$0xff]
        %v5679 = vld [vmem:[%s480 + $0x68] sm:$0xff]
        %v5680 = vld [vmem:[%s480 + $0x70] sm:$0xff]
        %v5681 = vld [vmem:[%s480 + $0x78] sm:$0xff]
        %v5682 = vld [vmem:[%s480 + $0x80] sm:$0xff]
        %v5683 = vld [vmem:[%s480 + $0x88] sm:$0xff]
        %v5684 = vld [vmem:[%s480 + $0x90] sm:$0xff]
        %v5685 = vld [vmem:[%s480 + $0x98] sm:$0xff]
        %v5686 = vld [vmem:[%s480 + $0xa0] sm:$0xff]
        %v5687 = vld [vmem:[%s480 + $0xa8] sm:$0xff]
        %v5688 = vld [vmem:[%s480 + $0xb0] sm:$0xff]
        %v5689 = vld [vmem:[%s480 + $0xb8] sm:$0xff]
        %v5690 = vld [vmem:[%s480 + $0xc0] sm:$0xff]
        %v5691 = vld [vmem:[%s480 + $0xc8] sm:$0xff]
        %v5692 = vld [vmem:[%s480 + $0xd0] sm:$0xff]
        %v5693 = vld [vmem:[%s480 + $0xd8] sm:$0xff]
        %v5694 = vld [vmem:[%s480 + $0xe0] sm:$0xff]
        %v5695 = vld [vmem:[%s480 + $0xe8] sm:$0xff]
        %v5696 = vld [vmem:[%s480 + $0xf0] sm:$0xff]
        %v5697 = vld [vmem:[%s480 + $0xf8] sm:$0xff]
        %v5698 = vadd.f32 %v5666, %v5540
        %v5699 = vadd.f32 %v5667, %v5543
        %v5700 = vadd.f32 %v5668, %v5548
        %v5701 = vadd.f32 %v5669, %v5551
        %v5702 = vadd.f32 %v5670, %v5556
        %v5703 = vadd.f32 %v5671, %v5559
        %v5704 = vadd.f32 %v5672, %v5564
        %v5705 = vadd.f32 %v5673, %v5567
        %v5706 = vadd.f32 %v5674, %v5572
        %v5707 = vadd.f32 %v5675, %v5575
        %v5708 = vadd.f32 %v5676, %v5580
        %v5709 = vadd.f32 %v5677, %v5583
        %v5710 = vadd.f32 %v5678, %v5588
        %v5711 = vadd.f32 %v5679, %v5591
        %v5712 = vadd.f32 %v5680, %v5596
        %v5713 = vadd.f32 %v5681, %v5599
        %v5714 = vadd.f32 %v5682, %v5604
        %v5715 = vadd.f32 %v5683, %v5607
        %v5716 = vadd.f32 %v5684, %v5612
        %v5717 = vadd.f32 %v5685, %v5615
        %v5718 = vadd.f32 %v5686, %v5620
        %v5719 = vadd.f32 %v5687, %v5623
        %v5720 = vadd.f32 %v5688, %v5628
        %v5721 = vadd.f32 %v5689, %v5631
        %v5722 = vadd.f32 %v5690, %v5636
        %v5723 = vadd.f32 %v5691, %v5639
        %v5724 = vadd.f32 %v5692, %v5644
        %v5725 = vadd.f32 %v5693, %v5647
        %v5726 = vadd.f32 %v5694, %v5652
        %v5727 = vadd.f32 %v5695, %v5655
        %v5728 = vadd.f32 %v5696, %v5660
        %v5729 = vadd.f32 %v5697, %v5663
        %5730 = vst.msk [vmem:[%s513] sm:$0xff] %vm1386, %v5698
        %5731 = vst.msk [vmem:[%s513 + $0x8] sm:$0xff] %vm1386, %v5699
        %5732 = vst.msk [vmem:[%s513 + $0x10] sm:$0xff] %vm1386, %v5700
        %5733 = vst.msk [vmem:[%s513 + $0x18] sm:$0xff] %vm1386, %v5701
        %5734 = vst.msk [vmem:[%s513 + $0x20] sm:$0xff] %vm1386, %v5702
        %5735 = vst.msk [vmem:[%s513 + $0x28] sm:$0xff] %vm1386, %v5703
        %5736 = vst.msk [vmem:[%s513 + $0x30] sm:$0xff] %vm1386, %v5704
        %5737 = vst.msk [vmem:[%s513 + $0x38] sm:$0xff] %vm1386, %v5705
        %5738 = vst.msk [vmem:[%s513 + $0x40] sm:$0xff] %vm1386, %v5706
        %5739 = vst.msk [vmem:[%s513 + $0x48] sm:$0xff] %vm1386, %v5707
        %5740 = vst.msk [vmem:[%s513 + $0x50] sm:$0xff] %vm1386, %v5708
        %5741 = vst.msk [vmem:[%s513 + $0x58] sm:$0xff] %vm1386, %v5709
        %5742 = vst.msk [vmem:[%s513 + $0x60] sm:$0xff] %vm1386, %v5710
        %5743 = vst.msk [vmem:[%s513 + $0x68] sm:$0xff] %vm1386, %v5711
        %5744 = vst.msk [vmem:[%s513 + $0x70] sm:$0xff] %vm1386, %v5712
        %5745 = vst.msk [vmem:[%s513 + $0x78] sm:$0xff] %vm1386, %v5713
        %5746 = vst.msk [vmem:[%s513 + $0x80] sm:$0xff] %vm1386, %v5714
        %5747 = vst.msk [vmem:[%s513 + $0x88] sm:$0xff] %vm1386, %v5715
        %5748 = vst.msk [vmem:[%s513 + $0x90] sm:$0xff] %vm1386, %v5716
        %5749 = vst.msk [vmem:[%s513 + $0x98] sm:$0xff] %vm1386, %v5717
        %5750 = vst.msk [vmem:[%s513 + $0xa0] sm:$0xff] %vm1386, %v5718
        %5751 = vst.msk [vmem:[%s513 + $0xa8] sm:$0xff] %vm1386, %v5719
        %5752 = vst.msk [vmem:[%s513 + $0xb0] sm:$0xff] %vm1386, %v5720
        %5753 = vst.msk [vmem:[%s513 + $0xb8] sm:$0xff] %vm1386, %v5721
        %5754 = vst.msk [vmem:[%s513 + $0xc0] sm:$0xff] %vm1386, %v5722
        %5755 = vst.msk [vmem:[%s513 + $0xc8] sm:$0xff] %vm1386, %v5723
        %5756 = vst.msk [vmem:[%s513 + $0xd0] sm:$0xff] %vm1386, %v5724
        %5757 = vst.msk [vmem:[%s513 + $0xd8] sm:$0xff] %vm1386, %v5725
        %5758 = vst.msk [vmem:[%s513 + $0xe0] sm:$0xff] %vm1386, %v5726
        %5759 = vst.msk [vmem:[%s513 + $0xe8] sm:$0xff] %vm1386, %v5727
        %5760 = vst.msk [vmem:[%s513 + $0xf0] sm:$0xff] %vm1386, %v5728
        %5761 = vst.msk [vmem:[%s513 + $0xf8] sm:$0xff] %vm1386, %v5729
        %s5762 = sand.u32 %s244, 1
        %s5763 = sand.u32 %s244, 1
        %s5764 = smul.addr %s5763, 256
        %s5765 = scalar_lea.vmem [#allocation5], %s5764
        // Predicated region
        $region99: #{tpu_custom_call.1} parent=93 // pred_check
          %p5766 = pneg %p254
        $region100: #{tpu_custom_call.1} parent=93 // pred_check_branch
          %5768 = sbr.rel (%p5766) target = $region102
        $region101: #{tpu_custom_call.1} parent=93 // pred_region
          %s5769 = smul.u32 2, %s21
          %s5770 = smul.addr %s5769, 8
          %s5771 = scalar_lea.vmem %s10, %s5770
          // Predicated region
          $region103: #{tpu_custom_call.1} parent=101 // pred_check
            _
          $region104: #{tpu_custom_call.1} parent=101 // pred_check_branch
            %5773 = sbr.rel (0) target = $region106
          $region105: #{tpu_custom_call.1} parent=101 // pred_region
            // Predicated region
            $region107: #{tpu_custom_call.1} parent=105 // pred_check
              _
            $region108: #{tpu_custom_call.1} parent=105 // pred_check_branch
              %5775 = sbr.rel (0) target = $region110
            $region109: #{tpu_custom_call.1} parent=105 // pred_region
              // Predicated region
              $region122: #{tpu_custom_call.1} parent=109 // pred_check
                _
              $region123: #{tpu_custom_call.1} parent=109 // pred_check_branch
                %5853 = sbr.rel (0) target = $region125
              $region124: #{tpu_custom_call.1} parent=109 // pred_region
                loop: start=0, step=1, limit=1
                $region126: #{tpu_custom_call.1} parent=124 // loop_pre_header
                  _
                $region127: #{tpu_custom_call.1} parent=124 // loop_header
                  %s5855 = sphi 0, %s5859
                  %p5856 = scmp.ge.s32.totalorder %s5855, 1
                  %s5860 = sphi %s5765, %s5765
                  %s5861 = sphi %s5771, %s5771
                $region128: #{tpu_custom_call.1} parent=124 // loop_header_branch
                  %5858 = sbr.rel (%p5856) target = $region132
                $region129: #{tpu_custom_call.1} parent=124 // loop_body
                  %v5862 = vld [vmem:[%s5860] sm:$0xff]
                  %5863 = vst [vmem:[%s5861] sm:$0xff] %v5862
                  %v5864 = vld [vmem:[%s5860 + $0x8] sm:$0xff]
                  %5865 = vst [vmem:[%s5861 + $0x8] sm:$0xff] %v5864
                  %v5866 = vld [vmem:[%s5860 + $0x10] sm:$0xff]
                  %5867 = vst [vmem:[%s5861 + $0x20] sm:$0xff] %v5866
                  %v5868 = vld [vmem:[%s5860 + $0x18] sm:$0xff]
                  %5869 = vst [vmem:[%s5861 + $0x28] sm:$0xff] %v5868
                  %v5870 = vld [vmem:[%s5860 + $0x20] sm:$0xff]
                  %5871 = vst [vmem:[%s5861 + $0x40] sm:$0xff] %v5870
                  %v5872 = vld [vmem:[%s5860 + $0x28] sm:$0xff]
                  %5873 = vst [vmem:[%s5861 + $0x48] sm:$0xff] %v5872
                  %v5874 = vld [vmem:[%s5860 + $0x30] sm:$0xff]
                  %5875 = vst [vmem:[%s5861 + $0x60] sm:$0xff] %v5874
                  %v5876 = vld [vmem:[%s5860 + $0x38] sm:$0xff]
                  %5877 = vst [vmem:[%s5861 + $0x68] sm:$0xff] %v5876
                  %v5878 = vld [vmem:[%s5860 + $0x40] sm:$0xff]
                  %5879 = vst [vmem:[%s5861 + $0x80] sm:$0xff] %v5878
                  %v5880 = vld [vmem:[%s5860 + $0x48] sm:$0xff]
                  %5881 = vst [vmem:[%s5861 + $0x88] sm:$0xff] %v5880
                  %v5882 = vld [vmem:[%s5860 + $0x50] sm:$0xff]
                  %5883 = vst [vmem:[%s5861 + $0xa0] sm:$0xff] %v5882
                  %v5884 = vld [vmem:[%s5860 + $0x58] sm:$0xff]
                  %5885 = vst [vmem:[%s5861 + $0xa8] sm:$0xff] %v5884
                  %v5886 = vld [vmem:[%s5860 + $0x60] sm:$0xff]
                  %5887 = vst [vmem:[%s5861 + $0xc0] sm:$0xff] %v5886
                  %v5888 = vld [vmem:[%s5860 + $0x68] sm:$0xff]
                  %5889 = vst [vmem:[%s5861 + $0xc8] sm:$0xff] %v5888
                  %v5890 = vld [vmem:[%s5860 + $0x70] sm:$0xff]
                  %5891 = vst [vmem:[%s5861 + $0xe0] sm:$0xff] %v5890
                  %v5892 = vld [vmem:[%s5860 + $0x78] sm:$0xff]
                  %5893 = vst [vmem:[%s5861 + $0xe8] sm:$0xff] %v5892
                  %v5894 = vld [vmem:[%s5860 + $0x80] sm:$0xff]
                  %5895 = vst [vmem:[%s5861 + $0x100] sm:$0xff] %v5894
                  %v5896 = vld [vmem:[%s5860 + $0x88] sm:$0xff]
                  %5897 = vst [vmem:[%s5861 + $0x108] sm:$0xff] %v5896
                  %v5898 = vld [vmem:[%s5860 + $0x90] sm:$0xff]
                  %5899 = vst [vmem:[%s5861 + $0x120] sm:$0xff] %v5898
                  %v5900 = vld [vmem:[%s5860 + $0x98] sm:$0xff]
                  %5901 = vst [vmem:[%s5861 + $0x128] sm:$0xff] %v5900
                  %v5902 = vld [vmem:[%s5860 + $0xa0] sm:$0xff]
                  %5903 = vst [vmem:[%s5861 + $0x140] sm:$0xff] %v5902
                  %v5904 = vld [vmem:[%s5860 + $0xa8] sm:$0xff]
                  %5905 = vst [vmem:[%s5861 + $0x148] sm:$0xff] %v5904
                  %v5906 = vld [vmem:[%s5860 + $0xb0] sm:$0xff]
                  %5907 = vst [vmem:[%s5861 + $0x160] sm:$0xff] %v5906
                  %v5908 = vld [vmem:[%s5860 + $0xb8] sm:$0xff]
                  %5909 = vst [vmem:[%s5861 + $0x168] sm:$0xff] %v5908
                  %v5910 = vld [vmem:[%s5860 + $0xc0] sm:$0xff]
                  %5911 = vst [vmem:[%s5861 + $0x180] sm:$0xff] %v5910
                  %v5912 = vld [vmem:[%s5860 + $0xc8] sm:$0xff]
                  %5913 = vst [vmem:[%s5861 + $0x188] sm:$0xff] %v5912
                  %v5914 = vld [vmem:[%s5860 + $0xd0] sm:$0xff]
                  %5915 = vst [vmem:[%s5861 + $0x1a0] sm:$0xff] %v5914
                  %v5916 = vld [vmem:[%s5860 + $0xd8] sm:$0xff]
                  %5917 = vst [vmem:[%s5861 + $0x1a8] sm:$0xff] %v5916
                  %v5918 = vld [vmem:[%s5860 + $0xe0] sm:$0xff]
                  %5919 = vst [vmem:[%s5861 + $0x1c0] sm:$0xff] %v5918
                  %v5920 = vld [vmem:[%s5860 + $0xe8] sm:$0xff]
                  %5921 = vst [vmem:[%s5861 + $0x1c8] sm:$0xff] %v5920
                  %v5922 = vld [vmem:[%s5860 + $0xf0] sm:$0xff]
                  %5923 = vst [vmem:[%s5861 + $0x1e0] sm:$0xff] %v5922
                  %v5924 = vld [vmem:[%s5860 + $0xf8] sm:$0xff]
                  %5925 = vst [vmem:[%s5861 + $0x1e8] sm:$0xff] %v5924
                $region130: #{tpu_custom_call.1} parent=124 // loop_footer
                  %s5859 = sadd.s32 1, %s5855
                $region131: #{tpu_custom_call.1} parent=124 // loop_footer_branch
                  %5854 = sbr.rel target = $region127
                $region132: #{tpu_custom_call.1} parent=124 // loop_exit
                  _
              $region125: #{tpu_custom_call.1} parent=109 // pred_fallthru
                _
              // Predicated region
              $region133: #{tpu_custom_call.1} parent=109 // pred_check
                _
              $region134: #{tpu_custom_call.1} parent=109 // pred_check_branch
                %5927 = sbr.rel target = $region136
              $region135: #{tpu_custom_call.1} parent=109 // pred_region
                _
              $region136: #{tpu_custom_call.1} parent=109 // pred_fallthru
                _
            $region110: #{tpu_custom_call.1} parent=105 // pred_fallthru
              _
            // Predicated region
            $region111: #{tpu_custom_call.1} parent=105 // pred_check
              _
            $region112: #{tpu_custom_call.1} parent=105 // pred_check_branch
              %5777 = sbr.rel target = $region114
            $region113: #{tpu_custom_call.1} parent=105 // pred_region
              %s5779 = ssub.s32 256, 1
              loop: start=0, step=1, limit=1
              $region115: #{tpu_custom_call.1} parent=113 // loop_pre_header
                _
              $region116: #{tpu_custom_call.1} parent=113 // loop_header
                %s5781 = sphi 0, %s5785
                %p5782 = scmp.ge.s32.totalorder %s5781, 1
                %s5786 = sphi %s5765, %s5765
                %s5787 = sphi %s5771, %s5771
              $region117: #{tpu_custom_call.1} parent=113 // loop_header_branch
                %5784 = sbr.rel (%p5782) target = $region121
              $region118: #{tpu_custom_call.1} parent=113 // loop_body
                %v5788 = vld [vmem:[%s5786] sm:%s5779]
                %5789 = vst [vmem:[%s5787] sm:%s5779] %v5788
                %v5790 = vld [vmem:[%s5786 + $0x8] sm:%s5779]
                %5791 = vst [vmem:[%s5787 + $0x8] sm:%s5779] %v5790
                %v5792 = vld [vmem:[%s5786 + $0x10] sm:%s5779]
                %5793 = vst [vmem:[%s5787 + $0x20] sm:%s5779] %v5792
                %v5794 = vld [vmem:[%s5786 + $0x18] sm:%s5779]
                %5795 = vst [vmem:[%s5787 + $0x28] sm:%s5779] %v5794
                %v5796 = vld [vmem:[%s5786 + $0x20] sm:%s5779]
                %5797 = vst [vmem:[%s5787 + $0x40] sm:%s5779] %v5796
                %v5798 = vld [vmem:[%s5786 + $0x28] sm:%s5779]
                %5799 = vst [vmem:[%s5787 + $0x48] sm:%s5779] %v5798
                %v5800 = vld [vmem:[%s5786 + $0x30] sm:%s5779]
                %5801 = vst [vmem:[%s5787 + $0x60] sm:%s5779] %v5800
                %v5802 = vld [vmem:[%s5786 + $0x38] sm:%s5779]
                %5803 = vst [vmem:[%s5787 + $0x68] sm:%s5779] %v5802
                %v5804 = vld [vmem:[%s5786 + $0x40] sm:%s5779]
                %5805 = vst [vmem:[%s5787 + $0x80] sm:%s5779] %v5804
                %v5806 = vld [vmem:[%s5786 + $0x48] sm:%s5779]
                %5807 = vst [vmem:[%s5787 + $0x88] sm:%s5779] %v5806
                %v5808 = vld [vmem:[%s5786 + $0x50] sm:%s5779]
                %5809 = vst [vmem:[%s5787 + $0xa0] sm:%s5779] %v5808
                %v5810 = vld [vmem:[%s5786 + $0x58] sm:%s5779]
                %5811 = vst [vmem:[%s5787 + $0xa8] sm:%s5779] %v5810
                %v5812 = vld [vmem:[%s5786 + $0x60] sm:%s5779]
                %5813 = vst [vmem:[%s5787 + $0xc0] sm:%s5779] %v5812
                %v5814 = vld [vmem:[%s5786 + $0x68] sm:%s5779]
                %5815 = vst [vmem:[%s5787 + $0xc8] sm:%s5779] %v5814
                %v5816 = vld [vmem:[%s5786 + $0x70] sm:%s5779]
                %5817 = vst [vmem:[%s5787 + $0xe0] sm:%s5779] %v5816
                %v5818 = vld [vmem:[%s5786 + $0x78] sm:%s5779]
                %5819 = vst [vmem:[%s5787 + $0xe8] sm:%s5779] %v5818
                %v5820 = vld [vmem:[%s5786 + $0x80] sm:%s5779]
                %5821 = vst [vmem:[%s5787 + $0x100] sm:%s5779] %v5820
                %v5822 = vld [vmem:[%s5786 + $0x88] sm:%s5779]
                %5823 = vst [vmem:[%s5787 + $0x108] sm:%s5779] %v5822
                %v5824 = vld [vmem:[%s5786 + $0x90] sm:%s5779]
                %5825 = vst [vmem:[%s5787 + $0x120] sm:%s5779] %v5824
                %v5826 = vld [vmem:[%s5786 + $0x98] sm:%s5779]
                %5827 = vst [vmem:[%s5787 + $0x128] sm:%s5779] %v5826
                %v5828 = vld [vmem:[%s5786 + $0xa0] sm:%s5779]
                %5829 = vst [vmem:[%s5787 + $0x140] sm:%s5779] %v5828
                %v5830 = vld [vmem:[%s5786 + $0xa8] sm:%s5779]
                %5831 = vst [vmem:[%s5787 + $0x148] sm:%s5779] %v5830
                %v5832 = vld [vmem:[%s5786 + $0xb0] sm:%s5779]
                %5833 = vst [vmem:[%s5787 + $0x160] sm:%s5779] %v5832
                %v5834 = vld [vmem:[%s5786 + $0xb8] sm:%s5779]
                %5835 = vst [vmem:[%s5787 + $0x168] sm:%s5779] %v5834
                %v5836 = vld [vmem:[%s5786 + $0xc0] sm:%s5779]
                %5837 = vst [vmem:[%s5787 + $0x180] sm:%s5779] %v5836
                %v5838 = vld [vmem:[%s5786 + $0xc8] sm:%s5779]
                %5839 = vst [vmem:[%s5787 + $0x188] sm:%s5779] %v5838
                %v5840 = vld [vmem:[%s5786 + $0xd0] sm:%s5779]
                %5841 = vst [vmem:[%s5787 + $0x1a0] sm:%s5779] %v5840
                %v5842 = vld [vmem:[%s5786 + $0xd8] sm:%s5779]
                %5843 = vst [vmem:[%s5787 + $0x1a8] sm:%s5779] %v5842
                %v5844 = vld [vmem:[%s5786 + $0xe0] sm:%s5779]
                %5845 = vst [vmem:[%s5787 + $0x1c0] sm:%s5779] %v5844
                %v5846 = vld [vmem:[%s5786 + $0xe8] sm:%s5779]
                %5847 = vst [vmem:[%s5787 + $0x1c8] sm:%s5779] %v5846
                %v5848 = vld [vmem:[%s5786 + $0xf0] sm:%s5779]
                %5849 = vst [vmem:[%s5787 + $0x1e0] sm:%s5779] %v5848
                %v5850 = vld [vmem:[%s5786 + $0xf8] sm:%s5779]
                %5851 = vst [vmem:[%s5787 + $0x1e8] sm:%s5779] %v5850
              $region119: #{tpu_custom_call.1} parent=113 // loop_footer
                %s5785 = sadd.s32 1, %s5781
              $region120: #{tpu_custom_call.1} parent=113 // loop_footer_branch
                %5780 = sbr.rel target = $region116
              $region121: #{tpu_custom_call.1} parent=113 // loop_exit
                _
            $region114: #{tpu_custom_call.1} parent=105 // pred_fallthru
              _
          $region106: #{tpu_custom_call.1} parent=101 // pred_fallthru
            _
          %5928 = vnop
        $region102: #{tpu_custom_call.1} parent=93 // pred_fallthru
          _
      $region94: #{tpu_custom_call.1} parent=5 // pred_fallthru
        _
      %p5929 = scmp.le.s32.totalorder 2, %s16
      // Predicated region
      $region137: #{tpu_custom_call.1} parent=5 // pred_check
        %p5930 = pneg %p5929
      $region138: #{tpu_custom_call.1} parent=5 // pred_check_branch
        %5932 = sbr.rel (%p5930) target = $region140
      $region139: #{tpu_custom_call.1} parent=5 // pred_region
        %s5933 = ssub.s32 %s16, 2
        // Predicated region
        $region141: #{tpu_custom_call.1} parent=139 // pred_check
          %p5934 = pneg %p260
        $region142: #{tpu_custom_call.1} parent=139 // pred_check_branch
          %5936 = sbr.rel (%p5934) target = $region144
        $region143: #{tpu_custom_call.1} parent=139 // pred_region
          %s5937 = sand.u32 %s245, 1
          %s5938 = sand.u32 %s245, 1
          %s5939 = smul.addr %s5938, 256
          %s5940 = scalar_lea.vmem [#allocation5], %s5939
        $region144: #{tpu_custom_call.1} parent=139 // pred_fallthru
          _
      $region140: #{tpu_custom_call.1} parent=5 // pred_fallthru
        _
    $region6: #{tpu_custom_call.1} parent=1 // loop_footer
      %s20 = sadd.s32 1, %s16
    $region7: #{tpu_custom_call.1} parent=1 // loop_footer_branch
      %15 = sbr.rel target = $region3
    $region8: #{tpu_custom_call.1} parent=1 // loop_exit
      _

</llo_original>
